<compile_context>
chip_gen: v7x
topology: tpu7x:2x2x1
jax: 0.10.0
libtpu: 0.0.40
codegen_flags: <defaults>
</compile_context>

<pallas_src>
import functools

import jax
import jax.numpy as jnp
import numpy as np
from jax import lax
from jax.experimental import pallas as pl
from jax.experimental.pallas import tpu as pltpu


# ------------------------------ fused kernel ------------------------------- #

def _dncnn_fused_kernel(x_ref, w_ref, shift_ref, o_ref,
                        buf_a, buf_b, patch_ref, *,
                        H, W, Cimg, Cmax, relu_flags, residual):
    """One image, all conv layers fused.

    x_ref:     (H, W, Cimg)          input image block (VMEM)
    w_ref:     (L, 9*Cmax, Cmax)     per-layer weights, (dy,dx,ci)-major, scale folded
    shift_ref: (L, 1, Cmax)          per-layer per-channel shift (bias / BN shift)
    o_ref:     (H, W, Cimg)          output block
    buf_a/b:   (H+2, W+2, Cmax)      ping-pong padded activation buffers (VMEM scratch)
    patch_ref: (H*W, 9*Cmax)         im2col patch buffer (VMEM scratch)
    """
    n_layers = len(relu_flags)
    K = 3  # conv kernel size

    # Zero both activation buffers: the 1-pixel halo must stay zero ("same" padding)
    # and the first layer needs channels [Cimg, Cmax) zero.  Scratch persists across
    # grid steps, so re-zero every step (tiny: ~2 x 42 KiB at these shapes).
    buf_a[...] = jnp.zeros_like(buf_a)
    buf_b[...] = jnp.zeros_like(buf_b)

    # Place the input image into channels [0, Cimg) of buf_a's interior.
    x = x_ref[...]                                     # (H, W, Cimg)
    buf_a[1:H + 1, 1:W + 1, 0:Cimg] = x

    bufs = (buf_a, buf_b)
    y = None
    for l in range(n_layers):                          # static unroll over layers
        src = bufs[l % 2]
        xpad = src[...]                                # (H+2, W+2, Cmax)

        # Build im2col patch: contraction dim 9*Cmax (K-dense single MXU matmul).
        # Hoist the dx (sublane) shift out of the tap loop: 3 relayouts, not 9.
        for dx in range(K):
            col = xpad[:, dx:dx + W, :]                # (H+2, W, Cmax)
            for dy in range(K):
                k = dy * K + dx                        # matches weight (dy,dx,ci) order
                slab = col[dy:dy + H].reshape(H * W, Cmax)
                patch_ref[:, k * Cmax:(k + 1) * Cmax] = slab

        y = lax.dot_general(
            patch_ref[...], w_ref[l],
            dimension_numbers=(((1,), (0,)), ((), ())),
            preferred_element_type=jnp.float32)        # (H*W, Cmax)
        y = y + shift_ref[l]                           # (1, Cmax) broadcast
        if relu_flags[l]:
            y = jnp.maximum(y, 0.0)

        if l < n_layers - 1:
            dst = bufs[(l + 1) % 2]
            dst[1:H + 1, 1:W + 1, :] = y.reshape(H, W, Cmax)

    # Final layer output: only channels [0, Cimg) are meaningful (rest padded-zero).
    y_img = y[:, 0:Cimg].reshape(H, W, Cimg)
    out = (x - y_img) if residual else y_img
    o_ref[...] = out.astype(o_ref.dtype)


def dncnn_forward(x_nchw, params, residual=True):
    """x_nchw: (N, C, H, W) like PyTorch. Returns (N, C, H, W)."""
    x_nhwc = jnp.transpose(x_nchw, (0, 2, 3, 1)).astype(jnp.float32)
    N, H, W, Cimg = x_nhwc.shape
    w_stack = params["w_stack"]                        # (L, 9*Cmax, Cmax)
    shift_stack = params["shift_stack"]                # (L, 1, Cmax)
    relu_flags = tuple(params["relu"])
    Cmax = params["Cmax"]
    L = w_stack.shape[0]

    kernel = functools.partial(
        _dncnn_fused_kernel, H=H, W=W, Cimg=Cimg, Cmax=Cmax,
        relu_flags=relu_flags, residual=residual)

    out_nhwc = pl.pallas_call(
        kernel,
        out_shape=jax.ShapeDtypeStruct((N, H, W, Cimg), jnp.float32),
        grid=(N,),
        in_specs=[
            pl.BlockSpec((None, H, W, Cimg), lambda n: (n, 0, 0, 0)),
            pl.BlockSpec((L, 9 * Cmax, Cmax), lambda n: (0, 0, 0)),
            pl.BlockSpec((L, 1, Cmax), lambda n: (0, 0, 0)),
        ],
        out_specs=pl.BlockSpec((None, H, W, Cimg), lambda n: (n, 0, 0, 0)),
        scratch_shapes=[
            pltpu.VMEM((H + 2, W + 2, Cmax), jnp.float32),   # activation buffer A
            pltpu.VMEM((H + 2, W + 2, Cmax), jnp.float32),   # activation buffer B
            pltpu.VMEM((H * W, 9 * Cmax), jnp.float32),      # im2col patch
        ],
        compiler_params=pltpu.CompilerParams(
            dimension_semantics=("parallel",)),
    )(x_nhwc, w_stack, shift_stack)
    return jnp.transpose(out_nhwc, (0, 3, 1, 2))


# --------------------------- parameter building ---------------------------- #

def _orthogonal(key, rows, cols):
    """Deterministic orthogonal init (same scheme as torch.nn.init.orthogonal_)."""
    big, small = max(rows, cols), min(rows, cols)
    a = jax.random.normal(key, (big, small), dtype=jnp.float32)
    q, r = jnp.linalg.qr(a)
    q = q * jnp.sign(jnp.diagonal(r))
    if rows < cols:
        q = q.T
    return q  # (rows, cols)


def make_dncnn_params(key, depth=5, n_channels=32, image_channels=1):
    """DnCNN params, bnorm_type='full' (eval-mode BN folded), bias=0, orthogonal conv."""
    eps = 1e-4
    chans = ([(image_channels, n_channels)]
             + [(n_channels, n_channels)] * (depth - 2)
             + [(n_channels, image_channels)])
    L = len(chans)
    Cmax = max(n_channels, image_channels)
    keys = jax.random.split(key, L)

    w_hwio_list, shift_list, relu_flags = [], [], []
    for i, (cin, cout) in enumerate(chans):
        # torch weight layout (Cout, Cin, 3, 3), orthogonal over (Cout, Cin*9)
        m = _orthogonal(keys[i], cout, cin * 9).reshape(cout, cin, 3, 3)
        w_hwio = jnp.transpose(m, (2, 3, 1, 0))        # (3, 3, Cin, Cout)
        first, last = (i == 0), (i == L - 1)
        if first:
            # conv bias=True (init 0), no BN, ReLU
            scale = jnp.ones((cout,), jnp.float32)
            shift = jnp.zeros((cout,), jnp.float32)
            relu = True
        elif last:
            # conv bias=False, no BN, no ReLU
            scale = jnp.ones((cout,), jnp.float32)
            shift = jnp.zeros((cout,), jnp.float32)
            relu = False
        else:
            # conv bias=False, BatchNorm2d(eps=1e-4) eval mode with default stats, ReLU
            gamma = jnp.ones((cout,), jnp.float32)
            beta = jnp.zeros((cout,), jnp.float32)
            run_mean = jnp.zeros((cout,), jnp.float32)
            run_var = jnp.ones((cout,), jnp.float32)
            scale = gamma / jnp.sqrt(run_var + eps)
            shift = beta - run_mean * scale
            relu = True
        # Fold the per-channel scale into the conv weights (kernel only adds shift).
        w_hwio = w_hwio * scale.reshape(1, 1, 1, cout)
        w_hwio_list.append(w_hwio)
        shift_list.append(shift)
        relu_flags.append(relu)

    # Stacked + channel-padded kernel parameters: (L, 9*Cmax, Cmax), (L, 1, Cmax).
    w_stack = jnp.zeros((L, 9 * Cmax, Cmax), jnp.float32)
    shift_stack = jnp.zeros((L, 1, Cmax), jnp.float32)
    for i, w_hwio in enumerate(w_hwio_list):
        cin, cout = w_hwio.shape[2], w_hwio.shape[3]
        wp = jnp.zeros((3, 3, Cmax, Cmax), jnp.float32)
        wp = wp.at[:, :, :cin, :cout].set(w_hwio)      # (dy, dx, ci, co)
        w_stack = w_stack.at[i].set(wp.reshape(9 * Cmax, Cmax))
        shift_stack = shift_stack.at[i, 0, :cout].set(shift_list[i])

    return {"w_hwio": w_hwio_list, "shift": shift_list, "relu": relu_flags,
            "w_stack": w_stack, "shift_stack": shift_stack, "Cmax": Cmax}


# ------------------------------ reference ---------------------------------- #

def dncnn_reference(x_nchw, params, residual=True):
    """Pure-JAX reference using lax.conv for validation (same folded weights)."""
    h = jnp.transpose(x_nchw, (0, 2, 3, 1)).astype(jnp.float32)
    for w_hwio, shift, relu in zip(params["w_hwio"], params["shift"], params["relu"]):
        h = lax.conv_general_dilated(
            h, w_hwio, window_strides=(1, 1), padding=((1, 1), (1, 1)),
            dimension_numbers=('NHWC', 'HWIO', 'NHWC'),
            precision=lax.Precision.HIGHEST)
        h = h + shift.reshape(1, 1, 1, -1)
        if relu:
            h = jnp.maximum(h, 0.0)
    out = jnp.transpose(h, (0, 3, 1, 2))
    return x_nchw - out if residual else out


# ---------------------------------- main ------------------------------------ #

if __name__ == "__main__":
    key = jax.random.PRNGKey(0)
    k_x, k_p = jax.random.split(key)

    N, C, H, W = 2, 1, 16, 16           # image_channels=1 (DnCNN default)
    depth, n_channels = 5, 32           # small but structurally faithful DnCNN

    x = jax.random.normal(k_x, (N, C, H, W), dtype=jnp.float32)
    params = make_dncnn_params(k_p, depth=depth, n_channels=n_channels,
                               image_channels=C)

    y = jax.block_until_ready(dncnn_forward(x, params, residual=True))
    y_ref = jax.block_until_ready(dncnn_reference(x, params, residual=True))

    assert y.shape == (N, C, H, W)
    np.testing.assert_allclose(np.asarray(y), np.asarray(y_ref),
                               rtol=1e-4, atol=1e-4)
    print("KERNEL_OK")
</pallas_src>

<mosaic_0001>
module attributes {stable_mosaic.version = 11 : i64} {
  func.func @_dncnn_fused_kernel(%arg0: i32, %arg1: memref<1x16x16x1xf32, #tpu.memory_space<vmem>>, %arg2: memref<5x288x32xf32, #tpu.memory_space<vmem>>, %arg3: memref<5x1x32xf32, #tpu.memory_space<vmem>>, %arg4: memref<1x16x16x1xf32, #tpu.memory_space<vmem>>, %arg5: memref<18x18x32xf32, #tpu.memory_space<vmem>>, %arg6: memref<18x18x32xf32, #tpu.memory_space<vmem>>, %arg7: memref<256x288xf32, #tpu.memory_space<vmem>>) attributes {dimension_semantics = [#tpu.dimension_semantics<parallel>], iteration_bounds = array<i64: 2>, scalar_prefetch = 0 : i64, scratch_operands = 3 : i64, tpu.core_type = #tpu.core_type<tc>, window_params = [{transform_indices = @transform_0, window_bounds = array<i64: 1, 16, 16, 1>}, {pipeline_mode = #tpu.pipeline_mode<synchronous>, transform_indices = @transform_1, window_bounds = array<i64: 5, 288, 32>}, {pipeline_mode = #tpu.pipeline_mode<synchronous>, transform_indices = @transform_2, window_bounds = array<i64: 5, 1, 32>}, {transform_indices = @transform_3, window_bounds = array<i64: 1, 16, 16, 1>}]} {
    %cst = arith.constant 0.000000e+00 : f32
    %0 = vector.broadcast %cst : f32 to vector<18x18x32xf32>
    %c0 = arith.constant 0 : index
    %c0_0 = arith.constant 0 : index
    %c0_1 = arith.constant 0 : index
    %1 = vector.load %arg5[%c0, %c0_0, %c0_1] : memref<18x18x32xf32, #tpu.memory_space<vmem>>, vector<18x18x32xf32>
    tpu.vector_store %arg5[%c0, %c0_0, %c0_1], %0 {strides = array<i32>} : memref<18x18x32xf32, #tpu.memory_space<vmem>>, vector<18x18x32xf32>,
    %cst_2 = arith.constant 0.000000e+00 : f32
    %2 = vector.broadcast %cst_2 : f32 to vector<18x18x32xf32>
    %c0_3 = arith.constant 0 : index
    %c0_4 = arith.constant 0 : index
    %c0_5 = arith.constant 0 : index
    %3 = vector.load %arg6[%c0_3, %c0_4, %c0_5] : memref<18x18x32xf32, #tpu.memory_space<vmem>>, vector<18x18x32xf32>
    tpu.vector_store %arg6[%c0_3, %c0_4, %c0_5], %2 {strides = array<i32>} : memref<18x18x32xf32, #tpu.memory_space<vmem>>, vector<18x18x32xf32>,
    %c0_6 = arith.constant 0 : index
    %c0_7 = arith.constant 0 : index
    %c0_8 = arith.constant 0 : index
    %c0_9 = arith.constant 0 : index
    %4 = vector.load %arg1[%c0_6, %c0_7, %c0_8, %c0_9] : memref<1x16x16x1xf32, #tpu.memory_space<vmem>>, vector<1x16x16x1xf32>
    %5 = vector.shape_cast %4 : vector<1x16x16x1xf32> to vector<16x16x1xf32>
    %c1 = arith.constant 1 : index
    %c1_10 = arith.constant 1 : index
    %c0_11 = arith.constant 0 : index
    %6 = vector.load %arg5[%c1, %c1_10, %c0_11] : memref<18x18x32xf32, #tpu.memory_space<vmem>>, vector<16x16x1xf32>
    tpu.vector_store %arg5[%c1, %c1_10, %c0_11], %5 {strides = array<i32>} : memref<18x18x32xf32, #tpu.memory_space<vmem>>, vector<16x16x1xf32>,
    %c0_12 = arith.constant 0 : index
    %c0_13 = arith.constant 0 : index
    %c0_14 = arith.constant 0 : index
    %7 = vector.load %arg5[%c0_12, %c0_13, %c0_14] : memref<18x18x32xf32, #tpu.memory_space<vmem>>, vector<18x18x32xf32>
    %8 = vector.extract_strided_slice %7 {offsets = [0, 0, 0], sizes = [18, 16, 32], strides = [1, 1, 1]} : vector<18x18x32xf32> to vector<18x16x32xf32>
    %9 = vector.extract_strided_slice %8 {offsets = [0, 0, 0], sizes = [16, 16, 32], strides = [1, 1, 1]} : vector<18x16x32xf32> to vector<16x16x32xf32>
    %10 = vector.shape_cast %9 : vector<16x16x32xf32> to vector<256x32xf32>
    %c0_15 = arith.constant 0 : index
    %c0_16 = arith.constant 0 : index
    %11 = vector.load %arg7[%c0_15, %c0_16] : memref<256x288xf32, #tpu.memory_space<vmem>>, vector<256x32xf32>
    tpu.vector_store %arg7[%c0_15, %c0_16], %10 {strides = array<i32>} : memref<256x288xf32, #tpu.memory_space<vmem>>, vector<256x32xf32>,
    %12 = vector.extract_strided_slice %8 {offsets = [1, 0, 0], sizes = [16, 16, 32], strides = [1, 1, 1]} : vector<18x16x32xf32> to vector<16x16x32xf32>
    %13 = vector.shape_cast %12 : vector<16x16x32xf32> to vector<256x32xf32>
    %c0_17 = arith.constant 0 : index
    %c96 = arith.constant 96 : index
    %14 = vector.load %arg7[%c0_17, %c96] : memref<256x288xf32, #tpu.memory_space<vmem>>, vector<256x32xf32>
    tpu.vector_store %arg7[%c0_17, %c96], %13 {strides = array<i32>} : memref<256x288xf32, #tpu.memory_space<vmem>>, vector<256x32xf32>,
    %15 = vector.extract_strided_slice %8 {offsets = [2, 0, 0], sizes = [16, 16, 32], strides = [1, 1, 1]} : vector<18x16x32xf32> to vector<16x16x32xf32>
    %16 = vector.shape_cast %15 : vector<16x16x32xf32> to vector<256x32xf32>
    %c0_18 = arith.constant 0 : index
    %c192 = arith.constant 192 : index
    %17 = vector.load %arg7[%c0_18, %c192] : memref<256x288xf32, #tpu.memory_space<vmem>>, vector<256x32xf32>
    tpu.vector_store %arg7[%c0_18, %c192], %16 {strides = array<i32>} : memref<256x288xf32, #tpu.memory_space<vmem>>, vector<256x32xf32>,
    %18 = vector.extract_strided_slice %7 {offsets = [0, 1, 0], sizes = [18, 16, 32], strides = [1, 1, 1]} : vector<18x18x32xf32> to vector<18x16x32xf32>
    %19 = vector.extract_strided_slice %18 {offsets = [0, 0, 0], sizes = [16, 16, 32], strides = [1, 1, 1]} : vector<18x16x32xf32> to vector<16x16x32xf32>
    %20 = vector.shape_cast %19 : vector<16x16x32xf32> to vector<256x32xf32>
    %c0_19 = arith.constant 0 : index
    %c32 = arith.constant 32 : index
    %21 = vector.load %arg7[%c0_19, %c32] : memref<256x288xf32, #tpu.memory_space<vmem>>, vector<256x32xf32>
    tpu.vector_store %arg7[%c0_19, %c32], %20 {strides = array<i32>} : memref<256x288xf32, #tpu.memory_space<vmem>>, vector<256x32xf32>,
    %22 = vector.extract_strided_slice %18 {offsets = [1, 0, 0], sizes = [16, 16, 32], strides = [1, 1, 1]} : vector<18x16x32xf32> to vector<16x16x32xf32>
    %23 = vector.shape_cast %22 : vector<16x16x32xf32> to vector<256x32xf32>
    %c0_20 = arith.constant 0 : index
    %c128 = arith.constant 128 : index
    %24 = vector.load %arg7[%c0_20, %c128] : memref<256x288xf32, #tpu.memory_space<vmem>>, vector<256x32xf32>
    tpu.vector_store %arg7[%c0_20, %c128], %23 {strides = array<i32>} : memref<256x288xf32, #tpu.memory_space<vmem>>, vector<256x32xf32>,
    %25 = vector.extract_strided_slice %18 {offsets = [2, 0, 0], sizes = [16, 16, 32], strides = [1, 1, 1]} : vector<18x16x32xf32> to vector<16x16x32xf32>
    %26 = vector.shape_cast %25 : vector<16x16x32xf32> to vector<256x32xf32>
    %c0_21 = arith.constant 0 : index
    %c224 = arith.constant 224 : index
    %27 = vector.load %arg7[%c0_21, %c224] : memref<256x288xf32, #tpu.memory_space<vmem>>, vector<256x32xf32>
    tpu.vector_store %arg7[%c0_21, %c224], %26 {strides = array<i32>} : memref<256x288xf32, #tpu.memory_space<vmem>>, vector<256x32xf32>,
    %28 = vector.extract_strided_slice %7 {offsets = [0, 2, 0], sizes = [18, 16, 32], strides = [1, 1, 1]} : vector<18x18x32xf32> to vector<18x16x32xf32>
    %29 = vector.extract_strided_slice %28 {offsets = [0, 0, 0], sizes = [16, 16, 32], strides = [1, 1, 1]} : vector<18x16x32xf32> to vector<16x16x32xf32>
    %30 = vector.shape_cast %29 : vector<16x16x32xf32> to vector<256x32xf32>
    %c0_22 = arith.constant 0 : index
    %c64 = arith.constant 64 : index
    %31 = vector.load %arg7[%c0_22, %c64] : memref<256x288xf32, #tpu.memory_space<vmem>>, vector<256x32xf32>
    tpu.vector_store %arg7[%c0_22, %c64], %30 {strides = array<i32>} : memref<256x288xf32, #tpu.memory_space<vmem>>, vector<256x32xf32>,
    %32 = vector.extract_strided_slice %28 {offsets = [1, 0, 0], sizes = [16, 16, 32], strides = [1, 1, 1]} : vector<18x16x32xf32> to vector<16x16x32xf32>
    %33 = vector.shape_cast %32 : vector<16x16x32xf32> to vector<256x32xf32>
    %c0_23 = arith.constant 0 : index
    %c160 = arith.constant 160 : index
    %34 = vector.load %arg7[%c0_23, %c160] : memref<256x288xf32, #tpu.memory_space<vmem>>, vector<256x32xf32>
    tpu.vector_store %arg7[%c0_23, %c160], %33 {strides = array<i32>} : memref<256x288xf32, #tpu.memory_space<vmem>>, vector<256x32xf32>,
    %35 = vector.extract_strided_slice %28 {offsets = [2, 0, 0], sizes = [16, 16, 32], strides = [1, 1, 1]} : vector<18x16x32xf32> to vector<16x16x32xf32>
    %36 = vector.shape_cast %35 : vector<16x16x32xf32> to vector<256x32xf32>
    %c0_24 = arith.constant 0 : index
    %c256 = arith.constant 256 : index
    %37 = vector.load %arg7[%c0_24, %c256] : memref<256x288xf32, #tpu.memory_space<vmem>>, vector<256x32xf32>
    tpu.vector_store %arg7[%c0_24, %c256], %36 {strides = array<i32>} : memref<256x288xf32, #tpu.memory_space<vmem>>, vector<256x32xf32>,
    %c0_25 = arith.constant 0 : index
    %c0_26 = arith.constant 0 : index
    %38 = vector.load %arg7[%c0_25, %c0_26] : memref<256x288xf32, #tpu.memory_space<vmem>>, vector<256x288xf32>
    %c0_27 = arith.constant 0 : index
    %c0_28 = arith.constant 0 : index
    %c0_29 = arith.constant 0 : index
    %39 = vector.load %arg2[%c0_27, %c0_28, %c0_29] : memref<5x288x32xf32, #tpu.memory_space<vmem>>, vector<1x288x32xf32>
    %40 = vector.shape_cast %39 : vector<1x288x32xf32> to vector<288x32xf32>
    %cst_30 = arith.constant dense<0.000000e+00> : vector<256x32xf32>
    %41 = tpu.matmul %38, %40, %cst_30 {dimension_numbers = #tpu.dot_dimension_numbers<[1], [0], [0], [1], [0, 0, 1, 1], [], []>} : vector<256x288xf32>, vector<288x32xf32>, vector<256x32xf32> -> vector<256x32xf32>
    %c0_31 = arith.constant 0 : index
    %c0_32 = arith.constant 0 : index
    %c0_33 = arith.constant 0 : index
    %42 = vector.load %arg3[%c0_31, %c0_32, %c0_33] : memref<5x1x32xf32, #tpu.memory_space<vmem>>, vector<1x1x32xf32>
    %43 = vector.shape_cast %42 : vector<1x1x32xf32> to vector<1x32xf32>
    %44 = vector.broadcast %43 : vector<1x32xf32> to vector<256x32xf32>
    %45 = arith.addf %41, %44 : vector<256x32xf32>
    %cst_34 = arith.constant 0.000000e+00 : f32
    %46 = vector.broadcast %cst_34 : f32 to vector<256x32xf32>
    %47 = arith.maximumf %45, %46 : vector<256x32xf32>
    %48 = vector.shape_cast %47 : vector<256x32xf32> to vector<16x16x32xf32>
    %c1_35 = arith.constant 1 : index
    %c1_36 = arith.constant 1 : index
    %c0_37 = arith.constant 0 : index
    %49 = vector.load %arg6[%c1_35, %c1_36, %c0_37] : memref<18x18x32xf32, #tpu.memory_space<vmem>>, vector<16x16x32xf32>
    tpu.vector_store %arg6[%c1_35, %c1_36, %c0_37], %48 {strides = array<i32>} : memref<18x18x32xf32, #tpu.memory_space<vmem>>, vector<16x16x32xf32>,
    %c0_38 = arith.constant 0 : index
    %c0_39 = arith.constant 0 : index
    %c0_40 = arith.constant 0 : index
    %50 = vector.load %arg6[%c0_38, %c0_39, %c0_40] : memref<18x18x32xf32, #tpu.memory_space<vmem>>, vector<18x18x32xf32>
    %51 = vector.extract_strided_slice %50 {offsets = [0, 0, 0], sizes = [18, 16, 32], strides = [1, 1, 1]} : vector<18x18x32xf32> to vector<18x16x32xf32>
    %52 = vector.extract_strided_slice %51 {offsets = [0, 0, 0], sizes = [16, 16, 32], strides = [1, 1, 1]} : vector<18x16x32xf32> to vector<16x16x32xf32>
    %53 = vector.shape_cast %52 : vector<16x16x32xf32> to vector<256x32xf32>
    %c0_41 = arith.constant 0 : index
    %c0_42 = arith.constant 0 : index
    %54 = vector.load %arg7[%c0_41, %c0_42] : memref<256x288xf32, #tpu.memory_space<vmem>>, vector<256x32xf32>
    tpu.vector_store %arg7[%c0_41, %c0_42], %53 {strides = array<i32>} : memref<256x288xf32, #tpu.memory_space<vmem>>, vector<256x32xf32>,
    %55 = vector.extract_strided_slice %51 {offsets = [1, 0, 0], sizes = [16, 16, 32], strides = [1, 1, 1]} : vector<18x16x32xf32> to vector<16x16x32xf32>
    %56 = vector.shape_cast %55 : vector<16x16x32xf32> to vector<256x32xf32>
    %c0_43 = arith.constant 0 : index
    %c96_44 = arith.constant 96 : index
    %57 = vector.load %arg7[%c0_43, %c96_44] : memref<256x288xf32, #tpu.memory_space<vmem>>, vector<256x32xf32>
    tpu.vector_store %arg7[%c0_43, %c96_44], %56 {strides = array<i32>} : memref<256x288xf32, #tpu.memory_space<vmem>>, vector<256x32xf32>,
    %58 = vector.extract_strided_slice %51 {offsets = [2, 0, 0], sizes = [16, 16, 32], strides = [1, 1, 1]} : vector<18x16x32xf32> to vector<16x16x32xf32>
    %59 = vector.shape_cast %58 : vector<16x16x32xf32> to vector<256x32xf32>
    %c0_45 = arith.constant 0 : index
    %c192_46 = arith.constant 192 : index
    %60 = vector.load %arg7[%c0_45, %c192_46] : memref<256x288xf32, #tpu.memory_space<vmem>>, vector<256x32xf32>
    tpu.vector_store %arg7[%c0_45, %c192_46], %59 {strides = array<i32>} : memref<256x288xf32, #tpu.memory_space<vmem>>, vector<256x32xf32>,
    %61 = vector.extract_strided_slice %50 {offsets = [0, 1, 0], sizes = [18, 16, 32], strides = [1, 1, 1]} : vector<18x18x32xf32> to vector<18x16x32xf32>
    %62 = vector.extract_strided_slice %61 {offsets = [0, 0, 0], sizes = [16, 16, 32], strides = [1, 1, 1]} : vector<18x16x32xf32> to vector<16x16x32xf32>
    %63 = vector.shape_cast %62 : vector<16x16x32xf32> to vector<256x32xf32>
    %c0_47 = arith.constant 0 : index
    %c32_48 = arith.constant 32 : index
    %64 = vector.load %arg7[%c0_47, %c32_48] : memref<256x288xf32, #tpu.memory_space<vmem>>, vector<256x32xf32>
    tpu.vector_store %arg7[%c0_47, %c32_48], %63 {strides = array<i32>} : memref<256x288xf32, #tpu.memory_space<vmem>>, vector<256x32xf32>,
    %65 = vector.extract_strided_slice %61 {offsets = [1, 0, 0], sizes = [16, 16, 32], strides = [1, 1, 1]} : vector<18x16x32xf32> to vector<16x16x32xf32>
    %66 = vector.shape_cast %65 : vector<16x16x32xf32> to vector<256x32xf32>
    %c0_49 = arith.constant 0 : index
    %c128_50 = arith.constant 128 : index
    %67 = vector.load %arg7[%c0_49, %c128_50] : memref<256x288xf32, #tpu.memory_space<vmem>>, vector<256x32xf32>
    tpu.vector_store %arg7[%c0_49, %c128_50], %66 {strides = array<i32>} : memref<256x288xf32, #tpu.memory_space<vmem>>, vector<256x32xf32>,
    %68 = vector.extract_strided_slice %61 {offsets = [2, 0, 0], sizes = [16, 16, 32], strides = [1, 1, 1]} : vector<18x16x32xf32> to vector<16x16x32xf32>
    %69 = vector.shape_cast %68 : vector<16x16x32xf32> to vector<256x32xf32>
    %c0_51 = arith.constant 0 : index
    %c224_52 = arith.constant 224 : index
    %70 = vector.load %arg7[%c0_51, %c224_52] : memref<256x288xf32, #tpu.memory_space<vmem>>, vector<256x32xf32>
    tpu.vector_store %arg7[%c0_51, %c224_52], %69 {strides = array<i32>} : memref<256x288xf32, #tpu.memory_space<vmem>>, vector<256x32xf32>,
    %71 = vector.extract_strided_slice %50 {offsets = [0, 2, 0], sizes = [18, 16, 32], strides = [1, 1, 1]} : vector<18x18x32xf32> to vector<18x16x32xf32>
    %72 = vector.extract_strided_slice %71 {offsets = [0, 0, 0], sizes = [16, 16, 32], strides = [1, 1, 1]} : vector<18x16x32xf32> to vector<16x16x32xf32>
    %73 = vector.shape_cast %72 : vector<16x16x32xf32> to vector<256x32xf32>
    %c0_53 = arith.constant 0 : index
    %c64_54 = arith.constant 64 : index
    %74 = vector.load %arg7[%c0_53, %c64_54] : memref<256x288xf32, #tpu.memory_space<vmem>>, vector<256x32xf32>
    tpu.vector_store %arg7[%c0_53, %c64_54], %73 {strides = array<i32>} : memref<256x288xf32, #tpu.memory_space<vmem>>, vector<256x32xf32>,
    %75 = vector.extract_strided_slice %71 {offsets = [1, 0, 0], sizes = [16, 16, 32], strides = [1, 1, 1]} : vector<18x16x32xf32> to vector<16x16x32xf32>
    %76 = vector.shape_cast %75 : vector<16x16x32xf32> to vector<256x32xf32>
    %c0_55 = arith.constant 0 : index
    %c160_56 = arith.constant 160 : index
    %77 = vector.load %arg7[%c0_55, %c160_56] : memref<256x288xf32, #tpu.memory_space<vmem>>, vector<256x32xf32>
    tpu.vector_store %arg7[%c0_55, %c160_56], %76 {strides = array<i32>} : memref<256x288xf32, #tpu.memory_space<vmem>>, vector<256x32xf32>,
    %78 = vector.extract_strided_slice %71 {offsets = [2, 0, 0], sizes = [16, 16, 32], strides = [1, 1, 1]} : vector<18x16x32xf32> to vector<16x16x32xf32>
    %79 = vector.shape_cast %78 : vector<16x16x32xf32> to vector<256x32xf32>
    %c0_57 = arith.constant 0 : index
    %c256_58 = arith.constant 256 : index
    %80 = vector.load %arg7[%c0_57, %c256_58] : memref<256x288xf32, #tpu.memory_space<vmem>>, vector<256x32xf32>
    tpu.vector_store %arg7[%c0_57, %c256_58], %79 {strides = array<i32>} : memref<256x288xf32, #tpu.memory_space<vmem>>, vector<256x32xf32>,
    %c0_59 = arith.constant 0 : index
    %c0_60 = arith.constant 0 : index
    %81 = vector.load %arg7[%c0_59, %c0_60] : memref<256x288xf32, #tpu.memory_space<vmem>>, vector<256x288xf32>
    %c1_61 = arith.constant 1 : index
    %c0_62 = arith.constant 0 : index
    %c0_63 = arith.constant 0 : index
    %82 = vector.load %arg2[%c1_61, %c0_62, %c0_63] : memref<5x288x32xf32, #tpu.memory_space<vmem>>, vector<1x288x32xf32>
    %83 = vector.shape_cast %82 : vector<1x288x32xf32> to vector<288x32xf32>
    %cst_64 = arith.constant dense<0.000000e+00> : vector<256x32xf32>
    %84 = tpu.matmul %81, %83, %cst_64 {dimension_numbers = #tpu.dot_dimension_numbers<[1], [0], [0], [1], [0, 0, 1, 1], [], []>} : vector<256x288xf32>, vector<288x32xf32>, vector<256x32xf32> -> vector<256x32xf32>
    %c1_65 = arith.constant 1 : index
    %c0_66 = arith.constant 0 : index
    %c0_67 = arith.constant 0 : index
    %85 = vector.load %arg3[%c1_65, %c0_66, %c0_67] : memref<5x1x32xf32, #tpu.memory_space<vmem>>, vector<1x1x32xf32>
    %86 = vector.shape_cast %85 : vector<1x1x32xf32> to vector<1x32xf32>
    %87 = vector.broadcast %86 : vector<1x32xf32> to vector<256x32xf32>
    %88 = arith.addf %84, %87 : vector<256x32xf32>
    %cst_68 = arith.constant 0.000000e+00 : f32
    %89 = vector.broadcast %cst_68 : f32 to vector<256x32xf32>
    %90 = arith.maximumf %88, %89 : vector<256x32xf32>
    %91 = vector.shape_cast %90 : vector<256x32xf32> to vector<16x16x32xf32>
    %c1_69 = arith.constant 1 : index
    %c1_70 = arith.constant 1 : index
    %c0_71 = arith.constant 0 : index
    %92 = vector.load %arg5[%c1_69, %c1_70, %c0_71] : memref<18x18x32xf32, #tpu.memory_space<vmem>>, vector<16x16x32xf32>
    tpu.vector_store %arg5[%c1_69, %c1_70, %c0_71], %91 {strides = array<i32>} : memref<18x18x32xf32, #tpu.memory_space<vmem>>, vector<16x16x32xf32>,
    %c0_72 = arith.constant 0 : index
    %c0_73 = arith.constant 0 : index
    %c0_74 = arith.constant 0 : index
    %93 = vector.load %arg5[%c0_72, %c0_73, %c0_74] : memref<18x18x32xf32, #tpu.memory_space<vmem>>, vector<18x18x32xf32>
    %94 = vector.extract_strided_slice %93 {offsets = [0, 0, 0], sizes = [18, 16, 32], strides = [1, 1, 1]} : vector<18x18x32xf32> to vector<18x16x32xf32>
    %95 = vector.extract_strided_slice %94 {offsets = [0, 0, 0], sizes = [16, 16, 32], strides = [1, 1, 1]} : vector<18x16x32xf32> to vector<16x16x32xf32>
    %96 = vector.shape_cast %95 : vector<16x16x32xf32> to vector<256x32xf32>
    %c0_75 = arith.constant 0 : index
    %c0_76 = arith.constant 0 : index
    %97 = vector.load %arg7[%c0_75, %c0_76] : memref<256x288xf32, #tpu.memory_space<vmem>>, vector<256x32xf32>
    tpu.vector_store %arg7[%c0_75, %c0_76], %96 {strides = array<i32>} : memref<256x288xf32, #tpu.memory_space<vmem>>, vector<256x32xf32>,
    %98 = vector.extract_strided_slice %94 {offsets = [1, 0, 0], sizes = [16, 16, 32], strides = [1, 1, 1]} : vector<18x16x32xf32> to vector<16x16x32xf32>
    %99 = vector.shape_cast %98 : vector<16x16x32xf32> to vector<256x32xf32>
    %c0_77 = arith.constant 0 : index
    %c96_78 = arith.constant 96 : index
    %100 = vector.load %arg7[%c0_77, %c96_78] : memref<256x288xf32, #tpu.memory_space<vmem>>, vector<256x32xf32>
    tpu.vector_store %arg7[%c0_77, %c96_78], %99 {strides = array<i32>} : memref<256x288xf32, #tpu.memory_space<vmem>>, vector<256x32xf32>,
    %101 = vector.extract_strided_slice %94 {offsets = [2, 0, 0], sizes = [16, 16, 32], strides = [1, 1, 1]} : vector<18x16x32xf32> to vector<16x16x32xf32>
    %102 = vector.shape_cast %101 : vector<16x16x32xf32> to vector<256x32xf32>
    %c0_79 = arith.constant 0 : index
    %c192_80 = arith.constant 192 : index
    %103 = vector.load %arg7[%c0_79, %c192_80] : memref<256x288xf32, #tpu.memory_space<vmem>>, vector<256x32xf32>
    tpu.vector_store %arg7[%c0_79, %c192_80], %102 {strides = array<i32>} : memref<256x288xf32, #tpu.memory_space<vmem>>, vector<256x32xf32>,
    %104 = vector.extract_strided_slice %93 {offsets = [0, 1, 0], sizes = [18, 16, 32], strides = [1, 1, 1]} : vector<18x18x32xf32> to vector<18x16x32xf32>
    %105 = vector.extract_strided_slice %104 {offsets = [0, 0, 0], sizes = [16, 16, 32], strides = [1, 1, 1]} : vector<18x16x32xf32> to vector<16x16x32xf32>
    %106 = vector.shape_cast %105 : vector<16x16x32xf32> to vector<256x32xf32>
    %c0_81 = arith.constant 0 : index
    %c32_82 = arith.constant 32 : index
    %107 = vector.load %arg7[%c0_81, %c32_82] : memref<256x288xf32, #tpu.memory_space<vmem>>, vector<256x32xf32>
    tpu.vector_store %arg7[%c0_81, %c32_82], %106 {strides = array<i32>} : memref<256x288xf32, #tpu.memory_space<vmem>>, vector<256x32xf32>,
    %108 = vector.extract_strided_slice %104 {offsets = [1, 0, 0], sizes = [16, 16, 32], strides = [1, 1, 1]} : vector<18x16x32xf32> to vector<16x16x32xf32>
    %109 = vector.shape_cast %108 : vector<16x16x32xf32> to vector<256x32xf32>
    %c0_83 = arith.constant 0 : index
    %c128_84 = arith.constant 128 : index
    %110 = vector.load %arg7[%c0_83, %c128_84] : memref<256x288xf32, #tpu.memory_space<vmem>>, vector<256x32xf32>
    tpu.vector_store %arg7[%c0_83, %c128_84], %109 {strides = array<i32>} : memref<256x288xf32, #tpu.memory_space<vmem>>, vector<256x32xf32>,
    %111 = vector.extract_strided_slice %104 {offsets = [2, 0, 0], sizes = [16, 16, 32], strides = [1, 1, 1]} : vector<18x16x32xf32> to vector<16x16x32xf32>
    %112 = vector.shape_cast %111 : vector<16x16x32xf32> to vector<256x32xf32>
    %c0_85 = arith.constant 0 : index
    %c224_86 = arith.constant 224 : index
    %113 = vector.load %arg7[%c0_85, %c224_86] : memref<256x288xf32, #tpu.memory_space<vmem>>, vector<256x32xf32>
    tpu.vector_store %arg7[%c0_85, %c224_86], %112 {strides = array<i32>} : memref<256x288xf32, #tpu.memory_space<vmem>>, vector<256x32xf32>,
    %114 = vector.extract_strided_slice %93 {offsets = [0, 2, 0], sizes = [18, 16, 32], strides = [1, 1, 1]} : vector<18x18x32xf32> to vector<18x16x32xf32>
    %115 = vector.extract_strided_slice %114 {offsets = [0, 0, 0], sizes = [16, 16, 32], strides = [1, 1, 1]} : vector<18x16x32xf32> to vector<16x16x32xf32>
    %116 = vector.shape_cast %115 : vector<16x16x32xf32> to vector<256x32xf32>
    %c0_87 = arith.constant 0 : index
    %c64_88 = arith.constant 64 : index
    %117 = vector.load %arg7[%c0_87, %c64_88] : memref<256x288xf32, #tpu.memory_space<vmem>>, vector<256x32xf32>
    tpu.vector_store %arg7[%c0_87, %c64_88], %116 {strides = array<i32>} : memref<256x288xf32, #tpu.memory_space<vmem>>, vector<256x32xf32>,
    %118 = vector.extract_strided_slice %114 {offsets = [1, 0, 0], sizes = [16, 16, 32], strides = [1, 1, 1]} : vector<18x16x32xf32> to vector<16x16x32xf32>
    %119 = vector.shape_cast %118 : vector<16x16x32xf32> to vector<256x32xf32>
    %c0_89 = arith.constant 0 : index
    %c160_90 = arith.constant 160 : index
    %120 = vector.load %arg7[%c0_89, %c160_90] : memref<256x288xf32, #tpu.memory_space<vmem>>, vector<256x32xf32>
    tpu.vector_store %arg7[%c0_89, %c160_90], %119 {strides = array<i32>} : memref<256x288xf32, #tpu.memory_space<vmem>>, vector<256x32xf32>,
    %121 = vector.extract_strided_slice %114 {offsets = [2, 0, 0], sizes = [16, 16, 32], strides = [1, 1, 1]} : vector<18x16x32xf32> to vector<16x16x32xf32>
    %122 = vector.shape_cast %121 : vector<16x16x32xf32> to vector<256x32xf32>
    %c0_91 = arith.constant 0 : index
    %c256_92 = arith.constant 256 : index
    %123 = vector.load %arg7[%c0_91, %c256_92] : memref<256x288xf32, #tpu.memory_space<vmem>>, vector<256x32xf32>
    tpu.vector_store %arg7[%c0_91, %c256_92], %122 {strides = array<i32>} : memref<256x288xf32, #tpu.memory_space<vmem>>, vector<256x32xf32>,
    %c0_93 = arith.constant 0 : index
    %c0_94 = arith.constant 0 : index
    %124 = vector.load %arg7[%c0_93, %c0_94] : memref<256x288xf32, #tpu.memory_space<vmem>>, vector<256x288xf32>
    %c2 = arith.constant 2 : index
    %c0_95 = arith.constant 0 : index
    %c0_96 = arith.constant 0 : index
    %125 = vector.load %arg2[%c2, %c0_95, %c0_96] : memref<5x288x32xf32, #tpu.memory_space<vmem>>, vector<1x288x32xf32>
    %126 = vector.shape_cast %125 : vector<1x288x32xf32> to vector<288x32xf32>
    %cst_97 = arith.constant dense<0.000000e+00> : vector<256x32xf32>
    %127 = tpu.matmul %124, %126, %cst_97 {dimension_numbers = #tpu.dot_dimension_numbers<[1], [0], [0], [1], [0, 0, 1, 1], [], []>} : vector<256x288xf32>, vector<288x32xf32>, vector<256x32xf32> -> vector<256x32xf32>
    %c2_98 = arith.constant 2 : index
    %c0_99 = arith.constant 0 : index
    %c0_100 = arith.constant 0 : index
    %128 = vector.load %arg3[%c2_98, %c0_99, %c0_100] : memref<5x1x32xf32, #tpu.memory_space<vmem>>, vector<1x1x32xf32>
    %129 = vector.shape_cast %128 : vector<1x1x32xf32> to vector<1x32xf32>
    %130 = vector.broadcast %129 : vector<1x32xf32> to vector<256x32xf32>
    %131 = arith.addf %127, %130 : vector<256x32xf32>
    %cst_101 = arith.constant 0.000000e+00 : f32
    %132 = vector.broadcast %cst_101 : f32 to vector<256x32xf32>
    %133 = arith.maximumf %131, %132 : vector<256x32xf32>
    %134 = vector.shape_cast %133 : vector<256x32xf32> to vector<16x16x32xf32>
    %c1_102 = arith.constant 1 : index
    %c1_103 = arith.constant 1 : index
    %c0_104 = arith.constant 0 : index
    %135 = vector.load %arg6[%c1_102, %c1_103, %c0_104] : memref<18x18x32xf32, #tpu.memory_space<vmem>>, vector<16x16x32xf32>
    tpu.vector_store %arg6[%c1_102, %c1_103, %c0_104], %134 {strides = array<i32>} : memref<18x18x32xf32, #tpu.memory_space<vmem>>, vector<16x16x32xf32>,
    %c0_105 = arith.constant 0 : index
    %c0_106 = arith.constant 0 : index
    %c0_107 = arith.constant 0 : index
    %136 = vector.load %arg6[%c0_105, %c0_106, %c0_107] : memref<18x18x32xf32, #tpu.memory_space<vmem>>, vector<18x18x32xf32>
    %137 = vector.extract_strided_slice %136 {offsets = [0, 0, 0], sizes = [18, 16, 32], strides = [1, 1, 1]} : vector<18x18x32xf32> to vector<18x16x32xf32>
    %138 = vector.extract_strided_slice %137 {offsets = [0, 0, 0], sizes = [16, 16, 32], strides = [1, 1, 1]} : vector<18x16x32xf32> to vector<16x16x32xf32>
    %139 = vector.shape_cast %138 : vector<16x16x32xf32> to vector<256x32xf32>
    %c0_108 = arith.constant 0 : index
    %c0_109 = arith.constant 0 : index
    %140 = vector.load %arg7[%c0_108, %c0_109] : memref<256x288xf32, #tpu.memory_space<vmem>>, vector<256x32xf32>
    tpu.vector_store %arg7[%c0_108, %c0_109], %139 {strides = array<i32>} : memref<256x288xf32, #tpu.memory_space<vmem>>, vector<256x32xf32>,
    %141 = vector.extract_strided_slice %137 {offsets = [1, 0, 0], sizes = [16, 16, 32], strides = [1, 1, 1]} : vector<18x16x32xf32> to vector<16x16x32xf32>
    %142 = vector.shape_cast %141 : vector<16x16x32xf32> to vector<256x32xf32>
    %c0_110 = arith.constant 0 : index
    %c96_111 = arith.constant 96 : index
    %143 = vector.load %arg7[%c0_110, %c96_111] : memref<256x288xf32, #tpu.memory_space<vmem>>, vector<256x32xf32>
    tpu.vector_store %arg7[%c0_110, %c96_111], %142 {strides = array<i32>} : memref<256x288xf32, #tpu.memory_space<vmem>>, vector<256x32xf32>,
    %144 = vector.extract_strided_slice %137 {offsets = [2, 0, 0], sizes = [16, 16, 32], strides = [1, 1, 1]} : vector<18x16x32xf32> to vector<16x16x32xf32>
    %145 = vector.shape_cast %144 : vector<16x16x32xf32> to vector<256x32xf32>
    %c0_112 = arith.constant 0 : index
    %c192_113 = arith.constant 192 : index
    %146 = vector.load %arg7[%c0_112, %c192_113] : memref<256x288xf32, #tpu.memory_space<vmem>>, vector<256x32xf32>
    tpu.vector_store %arg7[%c0_112, %c192_113], %145 {strides = array<i32>} : memref<256x288xf32, #tpu.memory_space<vmem>>, vector<256x32xf32>,
    %147 = vector.extract_strided_slice %136 {offsets = [0, 1, 0], sizes = [18, 16, 32], strides = [1, 1, 1]} : vector<18x18x32xf32> to vector<18x16x32xf32>
    %148 = vector.extract_strided_slice %147 {offsets = [0, 0, 0], sizes = [16, 16, 32], strides = [1, 1, 1]} : vector<18x16x32xf32> to vector<16x16x32xf32>
    %149 = vector.shape_cast %148 : vector<16x16x32xf32> to vector<256x32xf32>
    %c0_114 = arith.constant 0 : index
    %c32_115 = arith.constant 32 : index
    %150 = vector.load %arg7[%c0_114, %c32_115] : memref<256x288xf32, #tpu.memory_space<vmem>>, vector<256x32xf32>
    tpu.vector_store %arg7[%c0_114, %c32_115], %149 {strides = array<i32>} : memref<256x288xf32, #tpu.memory_space<vmem>>, vector<256x32xf32>,
    %151 = vector.extract_strided_slice %147 {offsets = [1, 0, 0], sizes = [16, 16, 32], strides = [1, 1, 1]} : vector<18x16x32xf32> to vector<16x16x32xf32>
    %152 = vector.shape_cast %151 : vector<16x16x32xf32> to vector<256x32xf32>
    %c0_116 = arith.constant 0 : index
    %c128_117 = arith.constant 128 : index
    %153 = vector.load %arg7[%c0_116, %c128_117] : memref<256x288xf32, #tpu.memory_space<vmem>>, vector<256x32xf32>
    tpu.vector_store %arg7[%c0_116, %c128_117], %152 {strides = array<i32>} : memref<256x288xf32, #tpu.memory_space<vmem>>, vector<256x32xf32>,
    %154 = vector.extract_strided_slice %147 {offsets = [2, 0, 0], sizes = [16, 16, 32], strides = [1, 1, 1]} : vector<18x16x32xf32> to vector<16x16x32xf32>
    %155 = vector.shape_cast %154 : vector<16x16x32xf32> to vector<256x32xf32>
    %c0_118 = arith.constant 0 : index
    %c224_119 = arith.constant 224 : index
    %156 = vector.load %arg7[%c0_118, %c224_119] : memref<256x288xf32, #tpu.memory_space<vmem>>, vector<256x32xf32>
    tpu.vector_store %arg7[%c0_118, %c224_119], %155 {strides = array<i32>} : memref<256x288xf32, #tpu.memory_space<vmem>>, vector<256x32xf32>,
    %157 = vector.extract_strided_slice %136 {offsets = [0, 2, 0], sizes = [18, 16, 32], strides = [1, 1, 1]} : vector<18x18x32xf32> to vector<18x16x32xf32>
    %158 = vector.extract_strided_slice %157 {offsets = [0, 0, 0], sizes = [16, 16, 32], strides = [1, 1, 1]} : vector<18x16x32xf32> to vector<16x16x32xf32>
    %159 = vector.shape_cast %158 : vector<16x16x32xf32> to vector<256x32xf32>
    %c0_120 = arith.constant 0 : index
    %c64_121 = arith.constant 64 : index
    %160 = vector.load %arg7[%c0_120, %c64_121] : memref<256x288xf32, #tpu.memory_space<vmem>>, vector<256x32xf32>
    tpu.vector_store %arg7[%c0_120, %c64_121], %159 {strides = array<i32>} : memref<256x288xf32, #tpu.memory_space<vmem>>, vector<256x32xf32>,
    %161 = vector.extract_strided_slice %157 {offsets = [1, 0, 0], sizes = [16, 16, 32], strides = [1, 1, 1]} : vector<18x16x32xf32> to vector<16x16x32xf32>
    %162 = vector.shape_cast %161 : vector<16x16x32xf32> to vector<256x32xf32>
    %c0_122 = arith.constant 0 : index
    %c160_123 = arith.constant 160 : index
    %163 = vector.load %arg7[%c0_122, %c160_123] : memref<256x288xf32, #tpu.memory_space<vmem>>, vector<256x32xf32>
    tpu.vector_store %arg7[%c0_122, %c160_123], %162 {strides = array<i32>} : memref<256x288xf32, #tpu.memory_space<vmem>>, vector<256x32xf32>,
    %164 = vector.extract_strided_slice %157 {offsets = [2, 0, 0], sizes = [16, 16, 32], strides = [1, 1, 1]} : vector<18x16x32xf32> to vector<16x16x32xf32>
    %165 = vector.shape_cast %164 : vector<16x16x32xf32> to vector<256x32xf32>
    %c0_124 = arith.constant 0 : index
    %c256_125 = arith.constant 256 : index
    %166 = vector.load %arg7[%c0_124, %c256_125] : memref<256x288xf32, #tpu.memory_space<vmem>>, vector<256x32xf32>
    tpu.vector_store %arg7[%c0_124, %c256_125], %165 {strides = array<i32>} : memref<256x288xf32, #tpu.memory_space<vmem>>, vector<256x32xf32>,
    %c0_126 = arith.constant 0 : index
    %c0_127 = arith.constant 0 : index
    %167 = vector.load %arg7[%c0_126, %c0_127] : memref<256x288xf32, #tpu.memory_space<vmem>>, vector<256x288xf32>
    %c3 = arith.constant 3 : index
    %c0_128 = arith.constant 0 : index
    %c0_129 = arith.constant 0 : index
    %168 = vector.load %arg2[%c3, %c0_128, %c0_129] : memref<5x288x32xf32, #tpu.memory_space<vmem>>, vector<1x288x32xf32>
    %169 = vector.shape_cast %168 : vector<1x288x32xf32> to vector<288x32xf32>
    %cst_130 = arith.constant dense<0.000000e+00> : vector<256x32xf32>
    %170 = tpu.matmul %167, %169, %cst_130 {dimension_numbers = #tpu.dot_dimension_numbers<[1], [0], [0], [1], [0, 0, 1, 1], [], []>} : vector<256x288xf32>, vector<288x32xf32>, vector<256x32xf32> -> vector<256x32xf32>
    %c3_131 = arith.constant 3 : index
    %c0_132 = arith.constant 0 : index
    %c0_133 = arith.constant 0 : index
    %171 = vector.load %arg3[%c3_131, %c0_132, %c0_133] : memref<5x1x32xf32, #tpu.memory_space<vmem>>, vector<1x1x32xf32>
    %172 = vector.shape_cast %171 : vector<1x1x32xf32> to vector<1x32xf32>
    %173 = vector.broadcast %172 : vector<1x32xf32> to vector<256x32xf32>
    %174 = arith.addf %170, %173 : vector<256x32xf32>
    %cst_134 = arith.constant 0.000000e+00 : f32
    %175 = vector.broadcast %cst_134 : f32 to vector<256x32xf32>
    %176 = arith.maximumf %174, %175 : vector<256x32xf32>
    %177 = vector.shape_cast %176 : vector<256x32xf32> to vector<16x16x32xf32>
    %c1_135 = arith.constant 1 : index
    %c1_136 = arith.constant 1 : index
    %c0_137 = arith.constant 0 : index
    %178 = vector.load %arg5[%c1_135, %c1_136, %c0_137] : memref<18x18x32xf32, #tpu.memory_space<vmem>>, vector<16x16x32xf32>
    tpu.vector_store %arg5[%c1_135, %c1_136, %c0_137], %177 {strides = array<i32>} : memref<18x18x32xf32, #tpu.memory_space<vmem>>, vector<16x16x32xf32>,
    %c0_138 = arith.constant 0 : index
    %c0_139 = arith.constant 0 : index
    %c0_140 = arith.constant 0 : index
    %179 = vector.load %arg5[%c0_138, %c0_139, %c0_140] : memref<18x18x32xf32, #tpu.memory_space<vmem>>, vector<18x18x32xf32>
    %180 = vector.extract_strided_slice %179 {offsets = [0, 0, 0], sizes = [18, 16, 32], strides = [1, 1, 1]} : vector<18x18x32xf32> to vector<18x16x32xf32>
    %181 = vector.extract_strided_slice %180 {offsets = [0, 0, 0], sizes = [16, 16, 32], strides = [1, 1, 1]} : vector<18x16x32xf32> to vector<16x16x32xf32>
    %182 = vector.shape_cast %181 : vector<16x16x32xf32> to vector<256x32xf32>
    %c0_141 = arith.constant 0 : index
    %c0_142 = arith.constant 0 : index
    %183 = vector.load %arg7[%c0_141, %c0_142] : memref<256x288xf32, #tpu.memory_space<vmem>>, vector<256x32xf32>
    tpu.vector_store %arg7[%c0_141, %c0_142], %182 {strides = array<i32>} : memref<256x288xf32, #tpu.memory_space<vmem>>, vector<256x32xf32>,
    %184 = vector.extract_strided_slice %180 {offsets = [1, 0, 0], sizes = [16, 16, 32], strides = [1, 1, 1]} : vector<18x16x32xf32> to vector<16x16x32xf32>
    %185 = vector.shape_cast %184 : vector<16x16x32xf32> to vector<256x32xf32>
    %c0_143 = arith.constant 0 : index
    %c96_144 = arith.constant 96 : index
    %186 = vector.load %arg7[%c0_143, %c96_144] : memref<256x288xf32, #tpu.memory_space<vmem>>, vector<256x32xf32>
    tpu.vector_store %arg7[%c0_143, %c96_144], %185 {strides = array<i32>} : memref<256x288xf32, #tpu.memory_space<vmem>>, vector<256x32xf32>,
    %187 = vector.extract_strided_slice %180 {offsets = [2, 0, 0], sizes = [16, 16, 32], strides = [1, 1, 1]} : vector<18x16x32xf32> to vector<16x16x32xf32>
    %188 = vector.shape_cast %187 : vector<16x16x32xf32> to vector<256x32xf32>
    %c0_145 = arith.constant 0 : index
    %c192_146 = arith.constant 192 : index
    %189 = vector.load %arg7[%c0_145, %c192_146] : memref<256x288xf32, #tpu.memory_space<vmem>>, vector<256x32xf32>
    tpu.vector_store %arg7[%c0_145, %c192_146], %188 {strides = array<i32>} : memref<256x288xf32, #tpu.memory_space<vmem>>, vector<256x32xf32>,
    %190 = vector.extract_strided_slice %179 {offsets = [0, 1, 0], sizes = [18, 16, 32], strides = [1, 1, 1]} : vector<18x18x32xf32> to vector<18x16x32xf32>
    %191 = vector.extract_strided_slice %190 {offsets = [0, 0, 0], sizes = [16, 16, 32], strides = [1, 1, 1]} : vector<18x16x32xf32> to vector<16x16x32xf32>
    %192 = vector.shape_cast %191 : vector<16x16x32xf32> to vector<256x32xf32>
    %c0_147 = arith.constant 0 : index
    %c32_148 = arith.constant 32 : index
    %193 = vector.load %arg7[%c0_147, %c32_148] : memref<256x288xf32, #tpu.memory_space<vmem>>, vector<256x32xf32>
    tpu.vector_store %arg7[%c0_147, %c32_148], %192 {strides = array<i32>} : memref<256x288xf32, #tpu.memory_space<vmem>>, vector<256x32xf32>,
    %194 = vector.extract_strided_slice %190 {offsets = [1, 0, 0], sizes = [16, 16, 32], strides = [1, 1, 1]} : vector<18x16x32xf32> to vector<16x16x32xf32>
    %195 = vector.shape_cast %194 : vector<16x16x32xf32> to vector<256x32xf32>
    %c0_149 = arith.constant 0 : index
    %c128_150 = arith.constant 128 : index
    %196 = vector.load %arg7[%c0_149, %c128_150] : memref<256x288xf32, #tpu.memory_space<vmem>>, vector<256x32xf32>
    tpu.vector_store %arg7[%c0_149, %c128_150], %195 {strides = array<i32>} : memref<256x288xf32, #tpu.memory_space<vmem>>, vector<256x32xf32>,
    %197 = vector.extract_strided_slice %190 {offsets = [2, 0, 0], sizes = [16, 16, 32], strides = [1, 1, 1]} : vector<18x16x32xf32> to vector<16x16x32xf32>
    %198 = vector.shape_cast %197 : vector<16x16x32xf32> to vector<256x32xf32>
    %c0_151 = arith.constant 0 : index
    %c224_152 = arith.constant 224 : index
    %199 = vector.load %arg7[%c0_151, %c224_152] : memref<256x288xf32, #tpu.memory_space<vmem>>, vector<256x32xf32>
    tpu.vector_store %arg7[%c0_151, %c224_152], %198 {strides = array<i32>} : memref<256x288xf32, #tpu.memory_space<vmem>>, vector<256x32xf32>,
    %200 = vector.extract_strided_slice %179 {offsets = [0, 2, 0], sizes = [18, 16, 32], strides = [1, 1, 1]} : vector<18x18x32xf32> to vector<18x16x32xf32>
    %201 = vector.extract_strided_slice %200 {offsets = [0, 0, 0], sizes = [16, 16, 32], strides = [1, 1, 1]} : vector<18x16x32xf32> to vector<16x16x32xf32>
    %202 = vector.shape_cast %201 : vector<16x16x32xf32> to vector<256x32xf32>
    %c0_153 = arith.constant 0 : index
    %c64_154 = arith.constant 64 : index
    %203 = vector.load %arg7[%c0_153, %c64_154] : memref<256x288xf32, #tpu.memory_space<vmem>>, vector<256x32xf32>
    tpu.vector_store %arg7[%c0_153, %c64_154], %202 {strides = array<i32>} : memref<256x288xf32, #tpu.memory_space<vmem>>, vector<256x32xf32>,
    %204 = vector.extract_strided_slice %200 {offsets = [1, 0, 0], sizes = [16, 16, 32], strides = [1, 1, 1]} : vector<18x16x32xf32> to vector<16x16x32xf32>
    %205 = vector.shape_cast %204 : vector<16x16x32xf32> to vector<256x32xf32>
    %c0_155 = arith.constant 0 : index
    %c160_156 = arith.constant 160 : index
    %206 = vector.load %arg7[%c0_155, %c160_156] : memref<256x288xf32, #tpu.memory_space<vmem>>, vector<256x32xf32>
    tpu.vector_store %arg7[%c0_155, %c160_156], %205 {strides = array<i32>} : memref<256x288xf32, #tpu.memory_space<vmem>>, vector<256x32xf32>,
    %207 = vector.extract_strided_slice %200 {offsets = [2, 0, 0], sizes = [16, 16, 32], strides = [1, 1, 1]} : vector<18x16x32xf32> to vector<16x16x32xf32>
    %208 = vector.shape_cast %207 : vector<16x16x32xf32> to vector<256x32xf32>
    %c0_157 = arith.constant 0 : index
    %c256_158 = arith.constant 256 : index
    %209 = vector.load %arg7[%c0_157, %c256_158] : memref<256x288xf32, #tpu.memory_space<vmem>>, vector<256x32xf32>
    tpu.vector_store %arg7[%c0_157, %c256_158], %208 {strides = array<i32>} : memref<256x288xf32, #tpu.memory_space<vmem>>, vector<256x32xf32>,
    %c0_159 = arith.constant 0 : index
    %c0_160 = arith.constant 0 : index
    %210 = vector.load %arg7[%c0_159, %c0_160] : memref<256x288xf32, #tpu.memory_space<vmem>>, vector<256x288xf32>
    %c4 = arith.constant 4 : index
    %c0_161 = arith.constant 0 : index
    %c0_162 = arith.constant 0 : index
    %211 = vector.load %arg2[%c4, %c0_161, %c0_162] : memref<5x288x32xf32, #tpu.memory_space<vmem>>, vector<1x288x32xf32>
    %212 = vector.shape_cast %211 : vector<1x288x32xf32> to vector<288x32xf32>
    %cst_163 = arith.constant dense<0.000000e+00> : vector<256x32xf32>
    %213 = tpu.matmul %210, %212, %cst_163 {dimension_numbers = #tpu.dot_dimension_numbers<[1], [0], [0], [1], [0, 0, 1, 1], [], []>} : vector<256x288xf32>, vector<288x32xf32>, vector<256x32xf32> -> vector<256x32xf32>
    %c4_164 = arith.constant 4 : index
    %c0_165 = arith.constant 0 : index
    %c0_166 = arith.constant 0 : index
    %214 = vector.load %arg3[%c4_164, %c0_165, %c0_166] : memref<5x1x32xf32, #tpu.memory_space<vmem>>, vector<1x1x32xf32>
    %215 = vector.shape_cast %214 : vector<1x1x32xf32> to vector<1x32xf32>
    %216 = vector.broadcast %215 : vector<1x32xf32> to vector<256x32xf32>
    %217 = arith.addf %213, %216 : vector<256x32xf32>
    %218 = vector.extract_strided_slice %217 {offsets = [0, 0], sizes = [256, 1], strides = [1, 1]} : vector<256x32xf32> to vector<256x1xf32>
    %219 = vector.shape_cast %218 : vector<256x1xf32> to vector<16x16x1xf32>
    %220 = arith.subf %5, %219 : vector<16x16x1xf32>
    %c0_167 = arith.constant 0 : index
    %c0_168 = arith.constant 0 : index
    %c0_169 = arith.constant 0 : index
    %c0_170 = arith.constant 0 : index
    %221 = vector.load %arg4[%c0_167, %c0_168, %c0_169, %c0_170] : memref<1x16x16x1xf32, #tpu.memory_space<vmem>>, vector<1x16x16x1xf32>
    %222 = vector.shape_cast %221 : vector<1x16x16x1xf32> to vector<16x16x1xf32>
    %223 = vector.shape_cast %220 : vector<16x16x1xf32> to vector<1x16x16x1xf32>
    tpu.vector_store %arg4[%c0_167, %c0_168, %c0_169, %c0_170], %223 {strides = array<i32>} : memref<1x16x16x1xf32, #tpu.memory_space<vmem>>, vector<1x16x16x1xf32>,
    return
  }
  func.func @transform_0(%arg0: i32) -> (i32, i32, i32, i32) {
    %c0_i32 = arith.constant 0 : i32
    %c0_i32_0 = arith.constant 0 : i32
    %c0_i32_1 = arith.constant 0 : i32
    %c0_i32_2 = arith.constant 0 : i32
    return %arg0, %c0_i32, %c0_i32_0, %c0_i32_1 : i32, i32, i32, i32
  }
  func.func @transform_1(%arg0: i32) -> (i32, i32, i32) {
    %c0_i32 = arith.constant 0 : i32
    %c0_i32_0 = arith.constant 0 : i32
    %c0_i32_1 = arith.constant 0 : i32
    %c0_i32_2 = arith.constant 0 : i32
    return %c0_i32, %c0_i32_0, %c0_i32_1 : i32, i32, i32
  }
  func.func @transform_2(%arg0: i32) -> (i32, i32, i32) {
    %c0_i32 = arith.constant 0 : i32
    %c0_i32_0 = arith.constant 0 : i32
    %c0_i32_1 = arith.constant 0 : i32
    %c0_i32_2 = arith.constant 0 : i32
    return %c0_i32, %c0_i32_0, %c0_i32_1 : i32, i32, i32
  }
  func.func @transform_3(%arg0: i32) -> (i32, i32, i32, i32) {
    %c0_i32 = arith.constant 0 : i32
    %c0_i32_0 = arith.constant 0 : i32
    %c0_i32_1 = arith.constant 0 : i32
    %c0_i32_2 = arith.constant 0 : i32
    return %arg0, %c0_i32, %c0_i32_0, %c0_i32_1 : i32, i32, i32, i32
  }
}

</mosaic_0001>

<llo_original>
// kernel: tpu_custom_call.1
$region0: #{tpu_custom_call.1}
  #allocation0 [shape = 'u32[]', space=smem, size = 0x4, offset = 0x4, fixed_abs, tag = 'smem constant byte address 0x4 - core index']
  #allocation1 [shape = 'u32[144,128]{1,0:T(1,128)}', space=vmem, size = 0x12000, scoped, tag = 'internal scratch']
  #allocation2 [shape = 'f32[18,18,32]{2,1,0:T(8,128)}', space=vmem, size = 0x36000, scoped, tag = 'scratch operand']
  #allocation3 [shape = 'f32[18,18,32]{2,1,0:T(8,128)}', space=vmem, size = 0x36000, scoped, tag = 'scratch operand']
  #allocation4 [shape = 'f32[256,288]{1,0:T(8,128)}', space=vmem, size = 0x60000, scoped, tag = 'scratch operand']
  %s0 = inlined_call_operand.vmem [shape: f32[2,16,16,1], index: 0, kind: input, shape index: {}]
  %s1 = inlined_call_operand.vmem [shape: f32[5,288,32], index: 1, kind: input, shape index: {}]
  %s2 = inlined_call_operand.vmem [shape: f32[5,1,32], index: 2, kind: input, shape index: {}]
  %s3 = inlined_call_operand.vmem [shape: f32[2,16,16,1], index: 3, kind: output, shape index: {}]
  %s4 = sld [smem:[#allocation0]]
  $region45: #{tpu_custom_call.1} parent=0
    _
  %s6 = ssub.s32 1, %s4
  %s7 = scalar_select 0, %s6, %s4
  loop: start=0, step=1, limit=4
  $region2: #{tpu_custom_call.1} parent=0 // loop_pre_header
    _
  $region3: #{tpu_custom_call.1} parent=0 // loop_header
    %s9 = sphi 0, %s13
    %p10 = scmp.ge.s32.totalorder %s9, 4
    %s19 = sphi 0, %s21
    %s22 = sphi 0, %s19
    %s23 = sphi 0, %s22
    %s39 = sphi 0, %s23
    %s43 = sphi 0, %s43
    %s45 = sphi 0, %s43
    %s46 = sphi 0, %s45
    %s60 = sphi 0, %s46
    %s64 = sphi 0, %s64
    %s66 = sphi 0, %s64
    %s67 = sphi 0, %s66
    %s81 = sphi 0, %s67
    %s87 = sphi 0, %s89
    %s90 = sphi 0, %s87
    %s91 = sphi 0, %s90
    %s107 = sphi 0, %s91
  $region4: #{tpu_custom_call.1} parent=0 // loop_header_branch
    %12 = sbr.rel (%p10) target = $region8
  $region5: #{tpu_custom_call.1} parent=0 // loop_body
    %s14 = ssub.s32 %s9, 1
    %s15 = ssub.s32 %s9, 2
    %s16 = sadd.s32 %s9, 1
    %s17 = ssub.s32 %s9, %s16
    %p18 = scmp.eq.s32.totalorder %s17, 0
    %s20 = sadd.s32 %s19, 1
    %s21 = scalar_select %p18, %s19, %s20
    %p24 = pneg %p18
    %p25 = scmp.eq.s32.totalorder %s9, 1
    %p26 = por %p24, %p25
    %p27 = scmp.ne.s32.totalorder %s19, %s22
    %p28 = scmp.eq.s32.totalorder %s9, 0
    %p29 = por %p27, %p28
    %p30 = scmp.ne.s32.totalorder %s19, %s22
    %p31 = scmp.eq.s32.totalorder %s14, 1
    %p32 = por %p30, %p31
    %p33 = scmp.ne.s32.totalorder %s22, %s23
    %p34 = scmp.eq.s32.totalorder %s14, 0
    %p35 = por %p33, %p34
    %p36 = scmp.ne.s32.totalorder %s22, %s23
    %p37 = scmp.eq.s32.totalorder %s15, 1
    %p38 = por %p36, %p37
    %p40 = scmp.ne.s32.totalorder %s23, %s39
    %p41 = scmp.eq.s32.totalorder %s15, 0
    %p42 = por %p40, %p41
    %s44 = sadd.s32 %s43, 1
    %p47 = scmp.eq.s32.totalorder %s9, 1
    %p48 = scmp.ne.s32.totalorder %s43, %s45
    %p49 = scmp.eq.s32.totalorder %s9, 0
    %p50 = por %p48, %p49
    %p51 = scmp.ne.s32.totalorder %s43, %s45
    %p52 = scmp.eq.s32.totalorder %s14, 1
    %p53 = por %p51, %p52
    %p54 = scmp.ne.s32.totalorder %s45, %s46
    %p55 = scmp.eq.s32.totalorder %s14, 0
    %p56 = por %p54, %p55
    %p57 = scmp.ne.s32.totalorder %s45, %s46
    %p58 = scmp.eq.s32.totalorder %s15, 1
    %p59 = por %p57, %p58
    %p61 = scmp.ne.s32.totalorder %s46, %s60
    %p62 = scmp.eq.s32.totalorder %s15, 0
    %p63 = por %p61, %p62
    %s65 = sadd.s32 %s64, 1
    %p68 = scmp.eq.s32.totalorder %s9, 1
    %p69 = scmp.ne.s32.totalorder %s64, %s66
    %p70 = scmp.eq.s32.totalorder %s9, 0
    %p71 = por %p69, %p70
    %p72 = scmp.ne.s32.totalorder %s64, %s66
    %p73 = scmp.eq.s32.totalorder %s14, 1
    %p74 = por %p72, %p73
    %p75 = scmp.ne.s32.totalorder %s66, %s67
    %p76 = scmp.eq.s32.totalorder %s14, 0
    %p77 = por %p75, %p76
    %p78 = scmp.ne.s32.totalorder %s66, %s67
    %p79 = scmp.eq.s32.totalorder %s15, 1
    %p80 = por %p78, %p79
    %p82 = scmp.ne.s32.totalorder %s67, %s81
    %p83 = scmp.eq.s32.totalorder %s15, 0
    %p84 = por %p82, %p83
    %s85 = ssub.s32 %s9, %s16
    %p86 = scmp.eq.s32.totalorder %s85, 0
    %s88 = sadd.s32 %s87, 1
    %s89 = scalar_select %p86, %s87, %s88
    %p92 = pneg %p86
    %p93 = scmp.eq.s32.totalorder %s9, 1
    %p94 = por %p92, %p93
    %p95 = scmp.ne.s32.totalorder %s87, %s90
    %p96 = scmp.eq.s32.totalorder %s9, 0
    %p97 = por %p95, %p96
    %p98 = scmp.ne.s32.totalorder %s87, %s90
    %p99 = scmp.eq.s32.totalorder %s14, 1
    %p100 = por %p98, %p99
    %p101 = scmp.ne.s32.totalorder %s90, %s91
    %p102 = scmp.eq.s32.totalorder %s14, 0
    %p103 = por %p101, %p102
    %p104 = scmp.ne.s32.totalorder %s90, %s91
    %p105 = scmp.eq.s32.totalorder %s15, 1
    %p106 = por %p104, %p105
    %p108 = scmp.ne.s32.totalorder %s91, %s107
    %p109 = scmp.eq.s32.totalorder %s15, 0
    %p110 = por %p108, %p109
    %p111 = scmp.le.s32.totalorder 1, %s9
    %p112 = scmp.lt.s32.totalorder %s9, 3
    %p113 = pnand %p111, %p112
    %p114 = pneg %p113
    // Predicated region
    $region9: #{tpu_custom_call.1} parent=5 // pred_check
      _
    $region10: #{tpu_custom_call.1} parent=5 // pred_check_branch
      %116 = sbr.rel (%p113) target = $region12
    $region11: #{tpu_custom_call.1} parent=5 // pred_region
      %s117 = ssub.s32 %s9, 1
      // Predicated region
      $region13: #{tpu_custom_call.1} parent=11 // pred_check
        %p118 = pneg %p56
      $region14: #{tpu_custom_call.1} parent=11 // pred_check_branch
        %120 = sbr.rel (%p118) target = $region16
      $region15: #{tpu_custom_call.1} parent=11 // pred_region
        _
      $region16: #{tpu_custom_call.1} parent=11 // pred_fallthru
        _
      // Predicated region
      $region17: #{tpu_custom_call.1} parent=11 // pred_check
        %p121 = pneg %p77
      $region18: #{tpu_custom_call.1} parent=11 // pred_check_branch
        %123 = sbr.rel (%p121) target = $region20
      $region19: #{tpu_custom_call.1} parent=11 // pred_region
        _
      $region20: #{tpu_custom_call.1} parent=11 // pred_fallthru
        _
    $region12: #{tpu_custom_call.1} parent=5 // pred_fallthru
      _
    %p124 = scmp.lt.s32.totalorder %s9, 2
    // Predicated region
    $region21: #{tpu_custom_call.1} parent=5 // pred_check
      %p125 = pneg %p124
    $region22: #{tpu_custom_call.1} parent=5 // pred_check_branch
      %127 = sbr.rel (%p125) target = $region24
    $region23: #{tpu_custom_call.1} parent=5 // pred_region
      // Predicated region
      $region25: #{tpu_custom_call.1} parent=23 // pred_check
        %p128 = pneg %p29
      $region26: #{tpu_custom_call.1} parent=23 // pred_check_branch
        %130 = sbr.rel (%p128) target = $region28
      $region27: #{tpu_custom_call.1} parent=23 // pred_region
        %p131 = scmp.lt.s32.totalorder %s9, 1
        %s132 = scalar_select %p131, %s9, 1
        %s133 = smul.addr %s132, 32
        %s134 = smul.addr %s133, 8
        %s135 = scalar_lea.vmem %s0, %s134
      $region28: #{tpu_custom_call.1} parent=23 // pred_fallthru
        _
    $region24: #{tpu_custom_call.1} parent=5 // pred_fallthru
      _
    %p136 = scmp.le.s32.totalorder 1, %s9
    %p137 = scmp.lt.s32.totalorder %s9, 3
    %p138 = pnand %p136, %p137
    %p139 = pneg %p138
    // Predicated region
    $region29: #{tpu_custom_call.1} parent=5 // pred_check
      _
    $region30: #{tpu_custom_call.1} parent=5 // pred_check_branch
      %141 = sbr.rel (%p138) target = $region32
    $region31: #{tpu_custom_call.1} parent=5 // pred_region
      %s142 = ssub.s32 %s9, 1
      %p143 = scmp.lt.s32.totalorder %s14, 1
      %s144 = scalar_select %p143, %s14, 1
      %s145 = smul.addr %s144, 32
      %s146 = smul.addr %s145, 8
      %s147 = scalar_lea.vmem %s0, %s146
      %p148 = pneg %p35
      %p149 = pneg %p32
      %p150 = pneg %p56
      %p151 = pneg %p53
      %p152 = pneg %p77
      %p153 = pneg %p74
      %p154 = pneg %p103
      %p155 = pneg %p100
      %p156 = scmp.lt.s32.totalorder %s14, 1
      %s157 = scalar_select %p156, %s14, 1
      %s158 = smul.addr %s157, 32
      %s159 = smul.addr %s158, 8
      %s160 = scalar_lea.vmem %s3, %s159
      %p161 = scmp.lt.s32.totalorder %s14, 1
      %s162 = scalar_select %p161, %s14, 1
      %s163 = smul.addr %s162, 32
      %s164 = smul.addr %s163, 8
      %s165 = scalar_lea.vmem %s0, %s164
      %p166 = scmp.lt.s32.totalorder %s14, 1
      %s167 = scalar_select %p166, %s14, 1
      %s168 = smul.addr %s167, 32
      %s169 = smul.addr %s168, 8
      %s170 = scalar_lea.vmem %s3, %s169
      %vm171 = vcmask 261120
      %172 = vst.msk [vmem:[#allocation2] sm:$0xff] %vm171, 0.0
      %173 = vst.msk [vmem:[#allocation2 + $0x8] sm:$0xff] %vm171, 0.0
      %vm174 = vcmask 254976
      %175 = vst.msk [vmem:[#allocation2 + $0x10] sm:$0x3] %vm174, 0.0
      %176 = vst.msk [vmem:[#allocation2 + $0x18] sm:$0xff] %vm171, 0.0
      %177 = vst.msk [vmem:[#allocation2 + $0x20] sm:$0xff] %vm171, 0.0
      %178 = vst.msk [vmem:[#allocation2 + $0x28] sm:$0x3] %vm174, 0.0
      %179 = vst.msk [vmem:[#allocation2 + $0x30] sm:$0xff] %vm171, 0.0
      %180 = vst.msk [vmem:[#allocation2 + $0x38] sm:$0xff] %vm171, 0.0
      %181 = vst.msk [vmem:[#allocation2 + $0x40] sm:$0x3] %vm174, 0.0
      %182 = vst.msk [vmem:[#allocation2 + $0x48] sm:$0xff] %vm171, 0.0
      %183 = vst.msk [vmem:[#allocation2 + $0x50] sm:$0xff] %vm171, 0.0
      %184 = vst.msk [vmem:[#allocation2 + $0x58] sm:$0x3] %vm174, 0.0
      %185 = vst.msk [vmem:[#allocation2 + $0x60] sm:$0xff] %vm171, 0.0
      %186 = vst.msk [vmem:[#allocation2 + $0x68] sm:$0xff] %vm171, 0.0
      %187 = vst.msk [vmem:[#allocation2 + $0x70] sm:$0x3] %vm174, 0.0
      %188 = vst.msk [vmem:[#allocation2 + $0x78] sm:$0xff] %vm171, 0.0
      %189 = vst.msk [vmem:[#allocation2 + $0x80] sm:$0xff] %vm171, 0.0
      %190 = vst.msk [vmem:[#allocation2 + $0x88] sm:$0x3] %vm174, 0.0
      %191 = vst.msk [vmem:[#allocation2 + $0x90] sm:$0xff] %vm171, 0.0
      %192 = vst.msk [vmem:[#allocation2 + $0x98] sm:$0xff] %vm171, 0.0
      %193 = vst.msk [vmem:[#allocation2 + $0xa0] sm:$0x3] %vm174, 0.0
      %194 = vst.msk [vmem:[#allocation2 + $0xa8] sm:$0xff] %vm171, 0.0
      %195 = vst.msk [vmem:[#allocation2 + $0xb0] sm:$0xff] %vm171, 0.0
      %196 = vst.msk [vmem:[#allocation2 + $0xb8] sm:$0x3] %vm174, 0.0
      %197 = vst.msk [vmem:[#allocation2 + $0xc0] sm:$0xff] %vm171, 0.0
      %198 = vst.msk [vmem:[#allocation2 + $0xc8] sm:$0xff] %vm171, 0.0
      %199 = vst.msk [vmem:[#allocation2 + $0xd0] sm:$0x3] %vm174, 0.0
      %200 = vst.msk [vmem:[#allocation2 + $0xd8] sm:$0xff] %vm171, 0.0
      %201 = vst.msk [vmem:[#allocation2 + $0xe0] sm:$0xff] %vm171, 0.0
      %202 = vst.msk [vmem:[#allocation2 + $0xe8] sm:$0x3] %vm174, 0.0
      %203 = vst.msk [vmem:[#allocation2 + $0xf0] sm:$0xff] %vm171, 0.0
      %204 = vst.msk [vmem:[#allocation2 + $0xf8] sm:$0xff] %vm171, 0.0
      %205 = vst.msk [vmem:[#allocation2 + $0x100] sm:$0x3] %vm174, 0.0
      %206 = vst.msk [vmem:[#allocation2 + $0x108] sm:$0xff] %vm171, 0.0
      %207 = vst.msk [vmem:[#allocation2 + $0x110] sm:$0xff] %vm171, 0.0
      %208 = vst.msk [vmem:[#allocation2 + $0x118] sm:$0x3] %vm174, 0.0
      %209 = vst.msk [vmem:[#allocation2 + $0x120] sm:$0xff] %vm171, 0.0
      %210 = vst.msk [vmem:[#allocation2 + $0x128] sm:$0xff] %vm171, 0.0
      %211 = vst.msk [vmem:[#allocation2 + $0x130] sm:$0x3] %vm174, 0.0
      %212 = vst.msk [vmem:[#allocation2 + $0x138] sm:$0xff] %vm171, 0.0
      %213 = vst.msk [vmem:[#allocation2 + $0x140] sm:$0xff] %vm171, 0.0
      %214 = vst.msk [vmem:[#allocation2 + $0x148] sm:$0x3] %vm174, 0.0
      %215 = vst.msk [vmem:[#allocation2 + $0x150] sm:$0xff] %vm171, 0.0
      %216 = vst.msk [vmem:[#allocation2 + $0x158] sm:$0xff] %vm171, 0.0
      %217 = vst.msk [vmem:[#allocation2 + $0x160] sm:$0x3] %vm174, 0.0
      %218 = vst.msk [vmem:[#allocation2 + $0x168] sm:$0xff] %vm171, 0.0
      %219 = vst.msk [vmem:[#allocation2 + $0x170] sm:$0xff] %vm171, 0.0
      %220 = vst.msk [vmem:[#allocation2 + $0x178] sm:$0x3] %vm174, 0.0
      %221 = vst.msk [vmem:[#allocation2 + $0x180] sm:$0xff] %vm171, 0.0
      %222 = vst.msk [vmem:[#allocation2 + $0x188] sm:$0xff] %vm171, 0.0
      %223 = vst.msk [vmem:[#allocation2 + $0x190] sm:$0x3] %vm174, 0.0
      %224 = vst.msk [vmem:[#allocation2 + $0x198] sm:$0xff] %vm171, 0.0
      %225 = vst.msk [vmem:[#allocation2 + $0x1a0] sm:$0xff] %vm171, 0.0
      %226 = vst.msk [vmem:[#allocation2 + $0x1a8] sm:$0x3] %vm174, 0.0
      %227 = vst.msk [vmem:[#allocation3] sm:$0xff] %vm171, 0.0
      %228 = vst.msk [vmem:[#allocation3 + $0x8] sm:$0xff] %vm171, 0.0
      %229 = vst.msk [vmem:[#allocation3 + $0x10] sm:$0x3] %vm174, 0.0
      %230 = vst.msk [vmem:[#allocation3 + $0x18] sm:$0xff] %vm171, 0.0
      %231 = vst.msk [vmem:[#allocation3 + $0x20] sm:$0xff] %vm171, 0.0
      %232 = vst.msk [vmem:[#allocation3 + $0x28] sm:$0x3] %vm174, 0.0
      %233 = vst.msk [vmem:[#allocation3 + $0x30] sm:$0xff] %vm171, 0.0
      %234 = vst.msk [vmem:[#allocation3 + $0x38] sm:$0xff] %vm171, 0.0
      %235 = vst.msk [vmem:[#allocation3 + $0x40] sm:$0x3] %vm174, 0.0
      %236 = vst.msk [vmem:[#allocation3 + $0x48] sm:$0xff] %vm171, 0.0
      %237 = vst.msk [vmem:[#allocation3 + $0x50] sm:$0xff] %vm171, 0.0
      %238 = vst.msk [vmem:[#allocation3 + $0x58] sm:$0x3] %vm174, 0.0
      %239 = vst.msk [vmem:[#allocation3 + $0x60] sm:$0xff] %vm171, 0.0
      %240 = vst.msk [vmem:[#allocation3 + $0x68] sm:$0xff] %vm171, 0.0
      %241 = vst.msk [vmem:[#allocation3 + $0x70] sm:$0x3] %vm174, 0.0
      %242 = vst.msk [vmem:[#allocation3 + $0x78] sm:$0xff] %vm171, 0.0
      %243 = vst.msk [vmem:[#allocation3 + $0x80] sm:$0xff] %vm171, 0.0
      %244 = vst.msk [vmem:[#allocation3 + $0x88] sm:$0x3] %vm174, 0.0
      %245 = vst.msk [vmem:[#allocation3 + $0x90] sm:$0xff] %vm171, 0.0
      %246 = vst.msk [vmem:[#allocation3 + $0x98] sm:$0xff] %vm171, 0.0
      %247 = vst.msk [vmem:[#allocation3 + $0xa0] sm:$0x3] %vm174, 0.0
      %248 = vst.msk [vmem:[#allocation3 + $0xa8] sm:$0xff] %vm171, 0.0
      %249 = vst.msk [vmem:[#allocation3 + $0xb0] sm:$0xff] %vm171, 0.0
      %250 = vst.msk [vmem:[#allocation3 + $0xb8] sm:$0x3] %vm174, 0.0
      %251 = vst.msk [vmem:[#allocation3 + $0xc0] sm:$0xff] %vm171, 0.0
      %252 = vst.msk [vmem:[#allocation3 + $0xc8] sm:$0xff] %vm171, 0.0
      %253 = vst.msk [vmem:[#allocation3 + $0xd0] sm:$0x3] %vm174, 0.0
      %254 = vst.msk [vmem:[#allocation3 + $0xd8] sm:$0xff] %vm171, 0.0
      %255 = vst.msk [vmem:[#allocation3 + $0xe0] sm:$0xff] %vm171, 0.0
      %256 = vst.msk [vmem:[#allocation3 + $0xe8] sm:$0x3] %vm174, 0.0
      %257 = vst.msk [vmem:[#allocation3 + $0xf0] sm:$0xff] %vm171, 0.0
      %258 = vst.msk [vmem:[#allocation3 + $0xf8] sm:$0xff] %vm171, 0.0
      %259 = vst.msk [vmem:[#allocation3 + $0x100] sm:$0x3] %vm174, 0.0
      %260 = vst.msk [vmem:[#allocation3 + $0x108] sm:$0xff] %vm171, 0.0
      %261 = vst.msk [vmem:[#allocation3 + $0x110] sm:$0xff] %vm171, 0.0
      %262 = vst.msk [vmem:[#allocation3 + $0x118] sm:$0x3] %vm174, 0.0
      %263 = vst.msk [vmem:[#allocation3 + $0x120] sm:$0xff] %vm171, 0.0
      %264 = vst.msk [vmem:[#allocation3 + $0x128] sm:$0xff] %vm171, 0.0
      %265 = vst.msk [vmem:[#allocation3 + $0x130] sm:$0x3] %vm174, 0.0
      %266 = vst.msk [vmem:[#allocation3 + $0x138] sm:$0xff] %vm171, 0.0
      %267 = vst.msk [vmem:[#allocation3 + $0x140] sm:$0xff] %vm171, 0.0
      %268 = vst.msk [vmem:[#allocation3 + $0x148] sm:$0x3] %vm174, 0.0
      %269 = vst.msk [vmem:[#allocation3 + $0x150] sm:$0xff] %vm171, 0.0
      %270 = vst.msk [vmem:[#allocation3 + $0x158] sm:$0xff] %vm171, 0.0
      %271 = vst.msk [vmem:[#allocation3 + $0x160] sm:$0x3] %vm174, 0.0
      %272 = vst.msk [vmem:[#allocation3 + $0x168] sm:$0xff] %vm171, 0.0
      %273 = vst.msk [vmem:[#allocation3 + $0x170] sm:$0xff] %vm171, 0.0
      %274 = vst.msk [vmem:[#allocation3 + $0x178] sm:$0x3] %vm174, 0.0
      %275 = vst.msk [vmem:[#allocation3 + $0x180] sm:$0xff] %vm171, 0.0
      %276 = vst.msk [vmem:[#allocation3 + $0x188] sm:$0xff] %vm171, 0.0
      %277 = vst.msk [vmem:[#allocation3 + $0x190] sm:$0x3] %vm174, 0.0
      %278 = vst.msk [vmem:[#allocation3 + $0x198] sm:$0xff] %vm171, 0.0
      %279 = vst.msk [vmem:[#allocation3 + $0x1a0] sm:$0xff] %vm171, 0.0
      %280 = vst.msk [vmem:[#allocation3 + $0x1a8] sm:$0x3] %vm174, 0.0
      %v281 = vld [vmem:[%s165] sm:$0xff]
      %v282 = vld [vmem:[%s165 + $0x8] sm:$0xff]
      %v283 = vld [vmem:[%s165 + $0x10] sm:$0xff]
      %v284 = vld [vmem:[%s165 + $0x18] sm:$0xff]
      %v285 = vld [vmem:[%s165 + $0x20] sm:$0xff]
      %v286 = vld [vmem:[%s165 + $0x28] sm:$0xff]
      %v287 = vld [vmem:[%s165 + $0x30] sm:$0xff]
      %v288 = vld [vmem:[%s165 + $0x38] sm:$0xff]
      %v289 = vld [vmem:[%s165 + $0x40] sm:$0xff]
      %v290 = vld [vmem:[%s165 + $0x48] sm:$0xff]
      %v291 = vld [vmem:[%s165 + $0x50] sm:$0xff]
      %v292 = vld [vmem:[%s165 + $0x58] sm:$0xff]
      %v293 = vld [vmem:[%s165 + $0x60] sm:$0xff]
      %v294 = vld [vmem:[%s165 + $0x68] sm:$0xff]
      %v295 = vld [vmem:[%s165 + $0x70] sm:$0xff]
      %v296 = vld [vmem:[%s165 + $0x78] sm:$0xff]
      %v297 = vld [vmem:[%s165 + $0x80] sm:$0xff]
      %v298 = vld [vmem:[%s165 + $0x88] sm:$0xff]
      %v299 = vld [vmem:[%s165 + $0x90] sm:$0xff]
      %v300 = vld [vmem:[%s165 + $0x98] sm:$0xff]
      %v301 = vld [vmem:[%s165 + $0xa0] sm:$0xff]
      %v302 = vld [vmem:[%s165 + $0xa8] sm:$0xff]
      %v303 = vld [vmem:[%s165 + $0xb0] sm:$0xff]
      %v304 = vld [vmem:[%s165 + $0xb8] sm:$0xff]
      %v305 = vld [vmem:[%s165 + $0xc0] sm:$0xff]
      %v306 = vld [vmem:[%s165 + $0xc8] sm:$0xff]
      %v307 = vld [vmem:[%s165 + $0xd0] sm:$0xff]
      %v308 = vld [vmem:[%s165 + $0xd8] sm:$0xff]
      %v309 = vld [vmem:[%s165 + $0xe0] sm:$0xff]
      %v310 = vld [vmem:[%s165 + $0xe8] sm:$0xff]
      %v311 = vld [vmem:[%s165 + $0xf0] sm:$0xff]
      %v312 = vld [vmem:[%s165 + $0xf8] sm:$0xff]
      %s313 = scalar_lea.vmem [#allocation2], 24
      %vm314 = vcmask 7168
      %315 = vst.msk [vmem:[%s313 + $0x1] sm:$0xff] %vm314, %v281
      %316 = vst.msk [vmem:[%s313 + $0x9] sm:$0xff] %vm314, %v282
      %317 = vst.msk [vmem:[%s313 + $0x19] sm:$0xff] %vm314, %v283
      %318 = vst.msk [vmem:[%s313 + $0x21] sm:$0xff] %vm314, %v284
      %319 = vst.msk [vmem:[%s313 + $0x31] sm:$0xff] %vm314, %v285
      %320 = vst.msk [vmem:[%s313 + $0x39] sm:$0xff] %vm314, %v286
      %321 = vst.msk [vmem:[%s313 + $0x49] sm:$0xff] %vm314, %v287
      %322 = vst.msk [vmem:[%s313 + $0x51] sm:$0xff] %vm314, %v288
      %323 = vst.msk [vmem:[%s313 + $0x61] sm:$0xff] %vm314, %v289
      %324 = vst.msk [vmem:[%s313 + $0x69] sm:$0xff] %vm314, %v290
      %325 = vst.msk [vmem:[%s313 + $0x79] sm:$0xff] %vm314, %v291
      %326 = vst.msk [vmem:[%s313 + $0x81] sm:$0xff] %vm314, %v292
      %327 = vst.msk [vmem:[%s313 + $0x91] sm:$0xff] %vm314, %v293
      %328 = vst.msk [vmem:[%s313 + $0x99] sm:$0xff] %vm314, %v294
      %329 = vst.msk [vmem:[%s313 + $0xa9] sm:$0xff] %vm314, %v295
      %330 = vst.msk [vmem:[%s313 + $0xb1] sm:$0xff] %vm314, %v296
      %331 = vst.msk [vmem:[%s313 + $0xc1] sm:$0xff] %vm314, %v297
      %332 = vst.msk [vmem:[%s313 + $0xc9] sm:$0xff] %vm314, %v298
      %333 = vst.msk [vmem:[%s313 + $0xd9] sm:$0xff] %vm314, %v299
      %334 = vst.msk [vmem:[%s313 + $0xe1] sm:$0xff] %vm314, %v300
      %335 = vst.msk [vmem:[%s313 + $0xf1] sm:$0xff] %vm314, %v301
      %336 = vst.msk [vmem:[%s313 + $0xf9] sm:$0xff] %vm314, %v302
      %337 = vst.msk [vmem:[%s313 + $0x109] sm:$0xff] %vm314, %v303
      %338 = vst.msk [vmem:[%s313 + $0x111] sm:$0xff] %vm314, %v304
      %339 = vst.msk [vmem:[%s313 + $0x121] sm:$0xff] %vm314, %v305
      %340 = vst.msk [vmem:[%s313 + $0x129] sm:$0xff] %vm314, %v306
      %341 = vst.msk [vmem:[%s313 + $0x139] sm:$0xff] %vm314, %v307
      %342 = vst.msk [vmem:[%s313 + $0x141] sm:$0xff] %vm314, %v308
      %343 = vst.msk [vmem:[%s313 + $0x151] sm:$0xff] %vm314, %v309
      %344 = vst.msk [vmem:[%s313 + $0x159] sm:$0xff] %vm314, %v310
      %345 = vst.msk [vmem:[%s313 + $0x169] sm:$0xff] %vm314, %v311
      %346 = vst.msk [vmem:[%s313 + $0x171] sm:$0xff] %vm314, %v312
      %v347 = vld [vmem:[#allocation2] sm:$0xff]
      %v348 = vld [vmem:[#allocation2 + $0x8] sm:$0xff]
      %v349 = vld [vmem:[#allocation2 + $0x10] sm:$0x3]
      %v350 = vld [vmem:[#allocation2 + $0x18] sm:$0xff]
      %v351 = vld [vmem:[#allocation2 + $0x20] sm:$0xff]
      %v352 = vld [vmem:[#allocation2 + $0x28] sm:$0x3]
      %v353 = vld [vmem:[#allocation2 + $0x30] sm:$0xff]
      %v354 = vld [vmem:[#allocation2 + $0x38] sm:$0xff]
      %v355 = vld [vmem:[#allocation2 + $0x40] sm:$0x3]
      %v356 = vld [vmem:[#allocation2 + $0x48] sm:$0xff]
      %v357 = vld [vmem:[#allocation2 + $0x50] sm:$0xff]
      %v358 = vld [vmem:[#allocation2 + $0x58] sm:$0x3]
      %v359 = vld [vmem:[#allocation2 + $0x60] sm:$0xff]
      %v360 = vld [vmem:[#allocation2 + $0x68] sm:$0xff]
      %v361 = vld [vmem:[#allocation2 + $0x70] sm:$0x3]
      %v362 = vld [vmem:[#allocation2 + $0x78] sm:$0xff]
      %v363 = vld [vmem:[#allocation2 + $0x80] sm:$0xff]
      %v364 = vld [vmem:[#allocation2 + $0x88] sm:$0x3]
      %v365 = vld [vmem:[#allocation2 + $0x90] sm:$0xff]
      %v366 = vld [vmem:[#allocation2 + $0x98] sm:$0xff]
      %v367 = vld [vmem:[#allocation2 + $0xa0] sm:$0x3]
      %v368 = vld [vmem:[#allocation2 + $0xa8] sm:$0xff]
      %v369 = vld [vmem:[#allocation2 + $0xb0] sm:$0xff]
      %v370 = vld [vmem:[#allocation2 + $0xb8] sm:$0x3]
      %v371 = vld [vmem:[#allocation2 + $0xc0] sm:$0xff]
      %v372 = vld [vmem:[#allocation2 + $0xc8] sm:$0xff]
      %v373 = vld [vmem:[#allocation2 + $0xd0] sm:$0x3]
      %v374 = vld [vmem:[#allocation2 + $0xd8] sm:$0xff]
      %v375 = vld [vmem:[#allocation2 + $0xe0] sm:$0xff]
      %v376 = vld [vmem:[#allocation2 + $0xe8] sm:$0x3]
      %v377 = vld [vmem:[#allocation2 + $0xf0] sm:$0xff]
      %v378 = vld [vmem:[#allocation2 + $0xf8] sm:$0xff]
      %v379 = vld [vmem:[#allocation2 + $0x100] sm:$0x3]
      %v380 = vld [vmem:[#allocation2 + $0x108] sm:$0xff]
      %v381 = vld [vmem:[#allocation2 + $0x110] sm:$0xff]
      %v382 = vld [vmem:[#allocation2 + $0x118] sm:$0x3]
      %v383 = vld [vmem:[#allocation2 + $0x120] sm:$0xff]
      %v384 = vld [vmem:[#allocation2 + $0x128] sm:$0xff]
      %v385 = vld [vmem:[#allocation2 + $0x130] sm:$0x3]
      %v386 = vld [vmem:[#allocation2 + $0x138] sm:$0xff]
      %v387 = vld [vmem:[#allocation2 + $0x140] sm:$0xff]
      %v388 = vld [vmem:[#allocation2 + $0x148] sm:$0x3]
      %v389 = vld [vmem:[#allocation2 + $0x150] sm:$0xff]
      %v390 = vld [vmem:[#allocation2 + $0x158] sm:$0xff]
      %v391 = vld [vmem:[#allocation2 + $0x160] sm:$0x3]
      %v392 = vld [vmem:[#allocation2 + $0x168] sm:$0xff]
      %v393 = vld [vmem:[#allocation2 + $0x170] sm:$0xff]
      %v394 = vld [vmem:[#allocation2 + $0x178] sm:$0x3]
      %v395 = vld [vmem:[#allocation2 + $0x180] sm:$0xff]
      %v396 = vld [vmem:[#allocation2 + $0x188] sm:$0xff]
      %v397 = vld [vmem:[#allocation2 + $0x190] sm:$0x3]
      %v398 = vld [vmem:[#allocation2 + $0x198] sm:$0xff]
      %v399 = vld [vmem:[#allocation2 + $0x1a0] sm:$0xff]
      %v400 = vld [vmem:[#allocation2 + $0x1a8] sm:$0x3]
      %401 = vst.msk [vmem:[#allocation4] sm:$0xff] %vm171, %v347
      %402 = vst.msk [vmem:[#allocation4 + $0x18] sm:$0xff] %vm171, %v348
      %403 = vst.msk [vmem:[#allocation4 + $0x30] sm:$0xff] %vm171, %v350
      %404 = vst.msk [vmem:[#allocation4 + $0x48] sm:$0xff] %vm171, %v351
      %405 = vst.msk [vmem:[#allocation4 + $0x60] sm:$0xff] %vm171, %v353
      %406 = vst.msk [vmem:[#allocation4 + $0x78] sm:$0xff] %vm171, %v354
      %407 = vst.msk [vmem:[#allocation4 + $0x90] sm:$0xff] %vm171, %v356
      %408 = vst.msk [vmem:[#allocation4 + $0xa8] sm:$0xff] %vm171, %v357
      %409 = vst.msk [vmem:[#allocation4 + $0xc0] sm:$0xff] %vm171, %v359
      %410 = vst.msk [vmem:[#allocation4 + $0xd8] sm:$0xff] %vm171, %v360
      %411 = vst.msk [vmem:[#allocation4 + $0xf0] sm:$0xff] %vm171, %v362
      %412 = vst.msk [vmem:[#allocation4 + $0x108] sm:$0xff] %vm171, %v363
      %413 = vst.msk [vmem:[#allocation4 + $0x120] sm:$0xff] %vm171, %v365
      %414 = vst.msk [vmem:[#allocation4 + $0x138] sm:$0xff] %vm171, %v366
      %415 = vst.msk [vmem:[#allocation4 + $0x150] sm:$0xff] %vm171, %v368
      %416 = vst.msk [vmem:[#allocation4 + $0x168] sm:$0xff] %vm171, %v369
      %417 = vst.msk [vmem:[#allocation4 + $0x180] sm:$0xff] %vm171, %v371
      %418 = vst.msk [vmem:[#allocation4 + $0x198] sm:$0xff] %vm171, %v372
      %419 = vst.msk [vmem:[#allocation4 + $0x1b0] sm:$0xff] %vm171, %v374
      %420 = vst.msk [vmem:[#allocation4 + $0x1c8] sm:$0xff] %vm171, %v375
      %421 = vst.msk [vmem:[#allocation4 + $0x1e0] sm:$0xff] %vm171, %v377
      %422 = vst.msk [vmem:[#allocation4 + $0x1f8] sm:$0xff] %vm171, %v378
      %423 = vst.msk [vmem:[#allocation4 + $0x210] sm:$0xff] %vm171, %v380
      %424 = vst.msk [vmem:[#allocation4 + $0x228] sm:$0xff] %vm171, %v381
      %425 = vst.msk [vmem:[#allocation4 + $0x240] sm:$0xff] %vm171, %v383
      %426 = vst.msk [vmem:[#allocation4 + $0x258] sm:$0xff] %vm171, %v384
      %427 = vst.msk [vmem:[#allocation4 + $0x270] sm:$0xff] %vm171, %v386
      %428 = vst.msk [vmem:[#allocation4 + $0x288] sm:$0xff] %vm171, %v387
      %429 = vst.msk [vmem:[#allocation4 + $0x2a0] sm:$0xff] %vm171, %v389
      %430 = vst.msk [vmem:[#allocation4 + $0x2b8] sm:$0xff] %vm171, %v390
      %431 = vst.msk [vmem:[#allocation4 + $0x2d0] sm:$0xff] %vm171, %v392
      %432 = vst.msk [vmem:[#allocation4 + $0x2e8] sm:$0xff] %vm171, %v393
      %465 = vrot.lane.b32.xlu0 %v350, 96
      %v466 = vpop.permute.xlu0 %465
      %467 = vrot.lane.b32.xlu0 %v351, 96
      %v468 = vpop.permute.xlu0 %467
      %469 = vrot.lane.b32.xlu0 %v353, 96
      %v470 = vpop.permute.xlu0 %469
      %471 = vrot.lane.b32.xlu0 %v354, 96
      %v472 = vpop.permute.xlu0 %471
      %473 = vrot.lane.b32.xlu0 %v356, 96
      %v474 = vpop.permute.xlu0 %473
      %475 = vrot.lane.b32.xlu0 %v357, 96
      %v476 = vpop.permute.xlu0 %475
      %477 = vrot.lane.b32.xlu0 %v359, 96
      %v478 = vpop.permute.xlu0 %477
      %479 = vrot.lane.b32.xlu0 %v360, 96
      %v480 = vpop.permute.xlu0 %479
      %481 = vrot.lane.b32.xlu0 %v362, 96
      %v482 = vpop.permute.xlu0 %481
      %483 = vrot.lane.b32.xlu0 %v363, 96
      %v484 = vpop.permute.xlu0 %483
      %485 = vrot.lane.b32.xlu0 %v365, 96
      %v486 = vpop.permute.xlu0 %485
      %487 = vrot.lane.b32.xlu0 %v366, 96
      %v488 = vpop.permute.xlu0 %487
      %489 = vrot.lane.b32.xlu0 %v368, 96
      %v490 = vpop.permute.xlu0 %489
      %491 = vrot.lane.b32.xlu0 %v369, 96
      %v492 = vpop.permute.xlu0 %491
      %493 = vrot.lane.b32.xlu0 %v371, 96
      %v494 = vpop.permute.xlu0 %493
      %495 = vrot.lane.b32.xlu0 %v372, 96
      %v496 = vpop.permute.xlu0 %495
      %497 = vrot.lane.b32.xlu0 %v374, 96
      %v498 = vpop.permute.xlu0 %497
      %499 = vrot.lane.b32.xlu0 %v375, 96
      %v500 = vpop.permute.xlu0 %499
      %501 = vrot.lane.b32.xlu0 %v377, 96
      %v502 = vpop.permute.xlu0 %501
      %503 = vrot.lane.b32.xlu0 %v378, 96
      %v504 = vpop.permute.xlu0 %503
      %505 = vrot.lane.b32.xlu0 %v380, 96
      %v506 = vpop.permute.xlu0 %505
      %507 = vrot.lane.b32.xlu0 %v381, 96
      %v508 = vpop.permute.xlu0 %507
      %509 = vrot.lane.b32.xlu0 %v383, 96
      %v510 = vpop.permute.xlu0 %509
      %511 = vrot.lane.b32.xlu0 %v384, 96
      %v512 = vpop.permute.xlu0 %511
      %513 = vrot.lane.b32.xlu0 %v386, 96
      %v514 = vpop.permute.xlu0 %513
      %515 = vrot.lane.b32.xlu0 %v387, 96
      %v516 = vpop.permute.xlu0 %515
      %517 = vrot.lane.b32.xlu0 %v389, 96
      %v518 = vpop.permute.xlu0 %517
      %519 = vrot.lane.b32.xlu0 %v390, 96
      %v520 = vpop.permute.xlu0 %519
      %521 = vrot.lane.b32.xlu0 %v392, 96
      %v522 = vpop.permute.xlu0 %521
      %523 = vrot.lane.b32.xlu0 %v393, 96
      %v524 = vpop.permute.xlu0 %523
      %525 = vrot.lane.b32.xlu0 %v395, 96
      %v526 = vpop.permute.xlu0 %525
      %527 = vrot.lane.b32.xlu0 %v396, 96
      %v528 = vpop.permute.xlu0 %527
      %vm561 = vcmask 1048320
      %562 = vst.msk [vmem:[#allocation4] sm:$0xff] %vm561, %v466
      %563 = vst.msk [vmem:[#allocation4 + $0x18] sm:$0xff] %vm561, %v468
      %564 = vst.msk [vmem:[#allocation4 + $0x30] sm:$0xff] %vm561, %v470
      %565 = vst.msk [vmem:[#allocation4 + $0x48] sm:$0xff] %vm561, %v472
      %566 = vst.msk [vmem:[#allocation4 + $0x60] sm:$0xff] %vm561, %v474
      %567 = vst.msk [vmem:[#allocation4 + $0x78] sm:$0xff] %vm561, %v476
      %568 = vst.msk [vmem:[#allocation4 + $0x90] sm:$0xff] %vm561, %v478
      %569 = vst.msk [vmem:[#allocation4 + $0xa8] sm:$0xff] %vm561, %v480
      %570 = vst.msk [vmem:[#allocation4 + $0xc0] sm:$0xff] %vm561, %v482
      %571 = vst.msk [vmem:[#allocation4 + $0xd8] sm:$0xff] %vm561, %v484
      %572 = vst.msk [vmem:[#allocation4 + $0xf0] sm:$0xff] %vm561, %v486
      %573 = vst.msk [vmem:[#allocation4 + $0x108] sm:$0xff] %vm561, %v488
      %574 = vst.msk [vmem:[#allocation4 + $0x120] sm:$0xff] %vm561, %v490
      %575 = vst.msk [vmem:[#allocation4 + $0x138] sm:$0xff] %vm561, %v492
      %576 = vst.msk [vmem:[#allocation4 + $0x150] sm:$0xff] %vm561, %v494
      %577 = vst.msk [vmem:[#allocation4 + $0x168] sm:$0xff] %vm561, %v496
      %578 = vst.msk [vmem:[#allocation4 + $0x180] sm:$0xff] %vm561, %v498
      %579 = vst.msk [vmem:[#allocation4 + $0x198] sm:$0xff] %vm561, %v500
      %580 = vst.msk [vmem:[#allocation4 + $0x1b0] sm:$0xff] %vm561, %v502
      %581 = vst.msk [vmem:[#allocation4 + $0x1c8] sm:$0xff] %vm561, %v504
      %582 = vst.msk [vmem:[#allocation4 + $0x1e0] sm:$0xff] %vm561, %v506
      %583 = vst.msk [vmem:[#allocation4 + $0x1f8] sm:$0xff] %vm561, %v508
      %584 = vst.msk [vmem:[#allocation4 + $0x210] sm:$0xff] %vm561, %v510
      %585 = vst.msk [vmem:[#allocation4 + $0x228] sm:$0xff] %vm561, %v512
      %586 = vst.msk [vmem:[#allocation4 + $0x240] sm:$0xff] %vm561, %v514
      %587 = vst.msk [vmem:[#allocation4 + $0x258] sm:$0xff] %vm561, %v516
      %588 = vst.msk [vmem:[#allocation4 + $0x270] sm:$0xff] %vm561, %v518
      %589 = vst.msk [vmem:[#allocation4 + $0x288] sm:$0xff] %vm561, %v520
      %590 = vst.msk [vmem:[#allocation4 + $0x2a0] sm:$0xff] %vm561, %v522
      %591 = vst.msk [vmem:[#allocation4 + $0x2b8] sm:$0xff] %vm561, %v524
      %592 = vst.msk [vmem:[#allocation4 + $0x2d0] sm:$0xff] %vm561, %v526
      %593 = vst.msk [vmem:[#allocation4 + $0x2e8] sm:$0xff] %vm561, %v528
      %596 = vrot.lane.b32.xlu0 %v353, 64
      %v597 = vpop.permute.xlu0 %596
      %598 = vrot.lane.b32.xlu0 %v354, 64
      %v599 = vpop.permute.xlu0 %598
      %600 = vrot.lane.b32.xlu0 %v356, 64
      %v601 = vpop.permute.xlu0 %600
      %602 = vrot.lane.b32.xlu0 %v357, 64
      %v603 = vpop.permute.xlu0 %602
      %604 = vrot.lane.b32.xlu0 %v359, 64
      %v605 = vpop.permute.xlu0 %604
      %606 = vrot.lane.b32.xlu0 %v360, 64
      %v607 = vpop.permute.xlu0 %606
      %608 = vrot.lane.b32.xlu0 %v362, 64
      %v609 = vpop.permute.xlu0 %608
      %610 = vrot.lane.b32.xlu0 %v363, 64
      %v611 = vpop.permute.xlu0 %610
      %612 = vrot.lane.b32.xlu0 %v365, 64
      %v613 = vpop.permute.xlu0 %612
      %614 = vrot.lane.b32.xlu0 %v366, 64
      %v615 = vpop.permute.xlu0 %614
      %616 = vrot.lane.b32.xlu0 %v368, 64
      %v617 = vpop.permute.xlu0 %616
      %618 = vrot.lane.b32.xlu0 %v369, 64
      %v619 = vpop.permute.xlu0 %618
      %620 = vrot.lane.b32.xlu0 %v371, 64
      %v621 = vpop.permute.xlu0 %620
      %622 = vrot.lane.b32.xlu0 %v372, 64
      %v623 = vpop.permute.xlu0 %622
      %624 = vrot.lane.b32.xlu0 %v374, 64
      %v625 = vpop.permute.xlu0 %624
      %626 = vrot.lane.b32.xlu0 %v375, 64
      %v627 = vpop.permute.xlu0 %626
      %628 = vrot.lane.b32.xlu0 %v377, 64
      %v629 = vpop.permute.xlu0 %628
      %630 = vrot.lane.b32.xlu0 %v378, 64
      %v631 = vpop.permute.xlu0 %630
      %632 = vrot.lane.b32.xlu0 %v380, 64
      %v633 = vpop.permute.xlu0 %632
      %634 = vrot.lane.b32.xlu0 %v381, 64
      %v635 = vpop.permute.xlu0 %634
      %636 = vrot.lane.b32.xlu0 %v383, 64
      %v637 = vpop.permute.xlu0 %636
      %638 = vrot.lane.b32.xlu0 %v384, 64
      %v639 = vpop.permute.xlu0 %638
      %640 = vrot.lane.b32.xlu0 %v386, 64
      %v641 = vpop.permute.xlu0 %640
      %642 = vrot.lane.b32.xlu0 %v387, 64
      %v643 = vpop.permute.xlu0 %642
      %644 = vrot.lane.b32.xlu0 %v389, 64
      %v645 = vpop.permute.xlu0 %644
      %646 = vrot.lane.b32.xlu0 %v390, 64
      %v647 = vpop.permute.xlu0 %646
      %648 = vrot.lane.b32.xlu0 %v392, 64
      %v649 = vpop.permute.xlu0 %648
      %650 = vrot.lane.b32.xlu0 %v393, 64
      %v651 = vpop.permute.xlu0 %650
      %652 = vrot.lane.b32.xlu0 %v395, 64
      %v653 = vpop.permute.xlu0 %652
      %654 = vrot.lane.b32.xlu0 %v396, 64
      %v655 = vpop.permute.xlu0 %654
      %656 = vrot.lane.b32.xlu0 %v398, 64
      %v657 = vpop.permute.xlu0 %656
      %658 = vrot.lane.b32.xlu0 %v399, 64
      %v659 = vpop.permute.xlu0 %658
      %vm692 = vcmask 785920
      %693 = vst.msk [vmem:[#allocation4 + $0x8] sm:$0xff] %vm692, %v597
      %694 = vst.msk [vmem:[#allocation4 + $0x20] sm:$0xff] %vm692, %v599
      %695 = vst.msk [vmem:[#allocation4 + $0x38] sm:$0xff] %vm692, %v601
      %696 = vst.msk [vmem:[#allocation4 + $0x50] sm:$0xff] %vm692, %v603
      %697 = vst.msk [vmem:[#allocation4 + $0x68] sm:$0xff] %vm692, %v605
      %698 = vst.msk [vmem:[#allocation4 + $0x80] sm:$0xff] %vm692, %v607
      %699 = vst.msk [vmem:[#allocation4 + $0x98] sm:$0xff] %vm692, %v609
      %700 = vst.msk [vmem:[#allocation4 + $0xb0] sm:$0xff] %vm692, %v611
      %701 = vst.msk [vmem:[#allocation4 + $0xc8] sm:$0xff] %vm692, %v613
      %702 = vst.msk [vmem:[#allocation4 + $0xe0] sm:$0xff] %vm692, %v615
      %703 = vst.msk [vmem:[#allocation4 + $0xf8] sm:$0xff] %vm692, %v617
      %704 = vst.msk [vmem:[#allocation4 + $0x110] sm:$0xff] %vm692, %v619
      %705 = vst.msk [vmem:[#allocation4 + $0x128] sm:$0xff] %vm692, %v621
      %706 = vst.msk [vmem:[#allocation4 + $0x140] sm:$0xff] %vm692, %v623
      %707 = vst.msk [vmem:[#allocation4 + $0x158] sm:$0xff] %vm692, %v625
      %708 = vst.msk [vmem:[#allocation4 + $0x170] sm:$0xff] %vm692, %v627
      %709 = vst.msk [vmem:[#allocation4 + $0x188] sm:$0xff] %vm692, %v629
      %710 = vst.msk [vmem:[#allocation4 + $0x1a0] sm:$0xff] %vm692, %v631
      %711 = vst.msk [vmem:[#allocation4 + $0x1b8] sm:$0xff] %vm692, %v633
      %712 = vst.msk [vmem:[#allocation4 + $0x1d0] sm:$0xff] %vm692, %v635
      %713 = vst.msk [vmem:[#allocation4 + $0x1e8] sm:$0xff] %vm692, %v637
      %714 = vst.msk [vmem:[#allocation4 + $0x200] sm:$0xff] %vm692, %v639
      %715 = vst.msk [vmem:[#allocation4 + $0x218] sm:$0xff] %vm692, %v641
      %716 = vst.msk [vmem:[#allocation4 + $0x230] sm:$0xff] %vm692, %v643
      %717 = vst.msk [vmem:[#allocation4 + $0x248] sm:$0xff] %vm692, %v645
      %718 = vst.msk [vmem:[#allocation4 + $0x260] sm:$0xff] %vm692, %v647
      %719 = vst.msk [vmem:[#allocation4 + $0x278] sm:$0xff] %vm692, %v649
      %720 = vst.msk [vmem:[#allocation4 + $0x290] sm:$0xff] %vm692, %v651
      %721 = vst.msk [vmem:[#allocation4 + $0x2a8] sm:$0xff] %vm692, %v653
      %722 = vst.msk [vmem:[#allocation4 + $0x2c0] sm:$0xff] %vm692, %v655
      %723 = vst.msk [vmem:[#allocation4 + $0x2d8] sm:$0xff] %vm692, %v657
      %724 = vst.msk [vmem:[#allocation4 + $0x2f0] sm:$0xff] %vm692, %v659
      %vm743 = vcmask 1046528
      %v744 = vrot.slane %v347, 1
      %v745 = vrot.slane %v348, 1
      %v746 = vsel %vm743, %v744, %v745
      %v747 = vrot.slane %v349, 1
      %v748 = vsel %vm743, %v745, %v747
      %v749 = vrot.slane %v350, 1
      %v750 = vrot.slane %v351, 1
      %v751 = vsel %vm743, %v749, %v750
      %v752 = vrot.slane %v352, 1
      %v753 = vsel %vm743, %v750, %v752
      %v754 = vrot.slane %v353, 1
      %v755 = vrot.slane %v354, 1
      %v756 = vsel %vm743, %v754, %v755
      %v757 = vrot.slane %v355, 1
      %v758 = vsel %vm743, %v755, %v757
      %v759 = vrot.slane %v356, 1
      %v760 = vrot.slane %v357, 1
      %v761 = vsel %vm743, %v759, %v760
      %v762 = vrot.slane %v358, 1
      %v763 = vsel %vm743, %v760, %v762
      %v764 = vrot.slane %v359, 1
      %v765 = vrot.slane %v360, 1
      %v766 = vsel %vm743, %v764, %v765
      %v767 = vrot.slane %v361, 1
      %v768 = vsel %vm743, %v765, %v767
      %v769 = vrot.slane %v362, 1
      %v770 = vrot.slane %v363, 1
      %v771 = vsel %vm743, %v769, %v770
      %v772 = vrot.slane %v364, 1
      %v773 = vsel %vm743, %v770, %v772
      %v774 = vrot.slane %v365, 1
      %v775 = vrot.slane %v366, 1
      %v776 = vsel %vm743, %v774, %v775
      %v777 = vrot.slane %v367, 1
      %v778 = vsel %vm743, %v775, %v777
      %v779 = vrot.slane %v368, 1
      %v780 = vrot.slane %v369, 1
      %v781 = vsel %vm743, %v779, %v780
      %v782 = vrot.slane %v370, 1
      %v783 = vsel %vm743, %v780, %v782
      %v784 = vrot.slane %v371, 1
      %v785 = vrot.slane %v372, 1
      %v786 = vsel %vm743, %v784, %v785
      %v787 = vrot.slane %v373, 1
      %v788 = vsel %vm743, %v785, %v787
      %v789 = vrot.slane %v374, 1
      %v790 = vrot.slane %v375, 1
      %v791 = vsel %vm743, %v789, %v790
      %v792 = vrot.slane %v376, 1
      %v793 = vsel %vm743, %v790, %v792
      %v794 = vrot.slane %v377, 1
      %v795 = vrot.slane %v378, 1
      %v796 = vsel %vm743, %v794, %v795
      %v797 = vrot.slane %v379, 1
      %v798 = vsel %vm743, %v795, %v797
      %v799 = vrot.slane %v380, 1
      %v800 = vrot.slane %v381, 1
      %v801 = vsel %vm743, %v799, %v800
      %v802 = vrot.slane %v382, 1
      %v803 = vsel %vm743, %v800, %v802
      %v804 = vrot.slane %v383, 1
      %v805 = vrot.slane %v384, 1
      %v806 = vsel %vm743, %v804, %v805
      %v807 = vrot.slane %v385, 1
      %v808 = vsel %vm743, %v805, %v807
      %v809 = vrot.slane %v386, 1
      %v810 = vrot.slane %v387, 1
      %v811 = vsel %vm743, %v809, %v810
      %v812 = vrot.slane %v388, 1
      %v813 = vsel %vm743, %v810, %v812
      %v814 = vrot.slane %v389, 1
      %v815 = vrot.slane %v390, 1
      %v816 = vsel %vm743, %v814, %v815
      %v817 = vrot.slane %v391, 1
      %v818 = vsel %vm743, %v815, %v817
      %v819 = vrot.slane %v392, 1
      %v820 = vrot.slane %v393, 1
      %v821 = vsel %vm743, %v819, %v820
      %v822 = vrot.slane %v394, 1
      %v823 = vsel %vm743, %v820, %v822
      %824 = vrot.lane.b32.xlu0 %v746, 32
      %v825 = vpop.permute.xlu0 %824
      %826 = vrot.lane.b32.xlu0 %v748, 32
      %v827 = vpop.permute.xlu0 %826
      %828 = vrot.lane.b32.xlu0 %v751, 32
      %v829 = vpop.permute.xlu0 %828
      %830 = vrot.lane.b32.xlu0 %v753, 32
      %v831 = vpop.permute.xlu0 %830
      %832 = vrot.lane.b32.xlu0 %v756, 32
      %v833 = vpop.permute.xlu0 %832
      %834 = vrot.lane.b32.xlu0 %v758, 32
      %v835 = vpop.permute.xlu0 %834
      %836 = vrot.lane.b32.xlu0 %v761, 32
      %v837 = vpop.permute.xlu0 %836
      %838 = vrot.lane.b32.xlu0 %v763, 32
      %v839 = vpop.permute.xlu0 %838
      %840 = vrot.lane.b32.xlu0 %v766, 32
      %v841 = vpop.permute.xlu0 %840
      %842 = vrot.lane.b32.xlu0 %v768, 32
      %v843 = vpop.permute.xlu0 %842
      %844 = vrot.lane.b32.xlu0 %v771, 32
      %v845 = vpop.permute.xlu0 %844
      %846 = vrot.lane.b32.xlu0 %v773, 32
      %v847 = vpop.permute.xlu0 %846
      %848 = vrot.lane.b32.xlu0 %v776, 32
      %v849 = vpop.permute.xlu0 %848
      %850 = vrot.lane.b32.xlu0 %v778, 32
      %v851 = vpop.permute.xlu0 %850
      %852 = vrot.lane.b32.xlu0 %v781, 32
      %v853 = vpop.permute.xlu0 %852
      %854 = vrot.lane.b32.xlu0 %v783, 32
      %v855 = vpop.permute.xlu0 %854
      %856 = vrot.lane.b32.xlu0 %v786, 32
      %v857 = vpop.permute.xlu0 %856
      %858 = vrot.lane.b32.xlu0 %v788, 32
      %v859 = vpop.permute.xlu0 %858
      %860 = vrot.lane.b32.xlu0 %v791, 32
      %v861 = vpop.permute.xlu0 %860
      %862 = vrot.lane.b32.xlu0 %v793, 32
      %v863 = vpop.permute.xlu0 %862
      %864 = vrot.lane.b32.xlu0 %v796, 32
      %v865 = vpop.permute.xlu0 %864
      %866 = vrot.lane.b32.xlu0 %v798, 32
      %v867 = vpop.permute.xlu0 %866
      %868 = vrot.lane.b32.xlu0 %v801, 32
      %v869 = vpop.permute.xlu0 %868
      %870 = vrot.lane.b32.xlu0 %v803, 32
      %v871 = vpop.permute.xlu0 %870
      %872 = vrot.lane.b32.xlu0 %v806, 32
      %v873 = vpop.permute.xlu0 %872
      %874 = vrot.lane.b32.xlu0 %v808, 32
      %v875 = vpop.permute.xlu0 %874
      %876 = vrot.lane.b32.xlu0 %v811, 32
      %v877 = vpop.permute.xlu0 %876
      %878 = vrot.lane.b32.xlu0 %v813, 32
      %v879 = vpop.permute.xlu0 %878
      %880 = vrot.lane.b32.xlu0 %v816, 32
      %v881 = vpop.permute.xlu0 %880
      %882 = vrot.lane.b32.xlu0 %v818, 32
      %v883 = vpop.permute.xlu0 %882
      %884 = vrot.lane.b32.xlu0 %v821, 32
      %v885 = vpop.permute.xlu0 %884
      %886 = vrot.lane.b32.xlu0 %v823, 32
      %v887 = vpop.permute.xlu0 %886
      %vm920 = vcmask 523520
      %921 = vst.msk [vmem:[#allocation4] sm:$0xff] %vm920, %v825
      %922 = vst.msk [vmem:[#allocation4 + $0x18] sm:$0xff] %vm920, %v827
      %923 = vst.msk [vmem:[#allocation4 + $0x30] sm:$0xff] %vm920, %v829
      %924 = vst.msk [vmem:[#allocation4 + $0x48] sm:$0xff] %vm920, %v831
      %925 = vst.msk [vmem:[#allocation4 + $0x60] sm:$0xff] %vm920, %v833
      %926 = vst.msk [vmem:[#allocation4 + $0x78] sm:$0xff] %vm920, %v835
      %927 = vst.msk [vmem:[#allocation4 + $0x90] sm:$0xff] %vm920, %v837
      %928 = vst.msk [vmem:[#allocation4 + $0xa8] sm:$0xff] %vm920, %v839
      %929 = vst.msk [vmem:[#allocation4 + $0xc0] sm:$0xff] %vm920, %v841
      %930 = vst.msk [vmem:[#allocation4 + $0xd8] sm:$0xff] %vm920, %v843
      %931 = vst.msk [vmem:[#allocation4 + $0xf0] sm:$0xff] %vm920, %v845
      %932 = vst.msk [vmem:[#allocation4 + $0x108] sm:$0xff] %vm920, %v847
      %933 = vst.msk [vmem:[#allocation4 + $0x120] sm:$0xff] %vm920, %v849
      %934 = vst.msk [vmem:[#allocation4 + $0x138] sm:$0xff] %vm920, %v851
      %935 = vst.msk [vmem:[#allocation4 + $0x150] sm:$0xff] %vm920, %v853
      %936 = vst.msk [vmem:[#allocation4 + $0x168] sm:$0xff] %vm920, %v855
      %937 = vst.msk [vmem:[#allocation4 + $0x180] sm:$0xff] %vm920, %v857
      %938 = vst.msk [vmem:[#allocation4 + $0x198] sm:$0xff] %vm920, %v859
      %939 = vst.msk [vmem:[#allocation4 + $0x1b0] sm:$0xff] %vm920, %v861
      %940 = vst.msk [vmem:[#allocation4 + $0x1c8] sm:$0xff] %vm920, %v863
      %941 = vst.msk [vmem:[#allocation4 + $0x1e0] sm:$0xff] %vm920, %v865
      %942 = vst.msk [vmem:[#allocation4 + $0x1f8] sm:$0xff] %vm920, %v867
      %943 = vst.msk [vmem:[#allocation4 + $0x210] sm:$0xff] %vm920, %v869
      %944 = vst.msk [vmem:[#allocation4 + $0x228] sm:$0xff] %vm920, %v871
      %945 = vst.msk [vmem:[#allocation4 + $0x240] sm:$0xff] %vm920, %v873
      %946 = vst.msk [vmem:[#allocation4 + $0x258] sm:$0xff] %vm920, %v875
      %947 = vst.msk [vmem:[#allocation4 + $0x270] sm:$0xff] %vm920, %v877
      %948 = vst.msk [vmem:[#allocation4 + $0x288] sm:$0xff] %vm920, %v879
      %949 = vst.msk [vmem:[#allocation4 + $0x2a0] sm:$0xff] %vm920, %v881
      %950 = vst.msk [vmem:[#allocation4 + $0x2b8] sm:$0xff] %vm920, %v883
      %951 = vst.msk [vmem:[#allocation4 + $0x2d0] sm:$0xff] %vm920, %v885
      %952 = vst.msk [vmem:[#allocation4 + $0x2e8] sm:$0xff] %vm920, %v887
      %v954 = vrot.slane %v395, 1
      %v955 = vrot.slane %v396, 1
      %v956 = vsel %vm743, %v954, %v955
      %v957 = vrot.slane %v397, 1
      %v958 = vsel %vm743, %v955, %v957
      %991 = vst.msk [vmem:[#allocation4 + $0x8] sm:$0xff] %vm171, %v751
      %992 = vst.msk [vmem:[#allocation4 + $0x20] sm:$0xff] %vm171, %v753
      %993 = vst.msk [vmem:[#allocation4 + $0x38] sm:$0xff] %vm171, %v756
      %994 = vst.msk [vmem:[#allocation4 + $0x50] sm:$0xff] %vm171, %v758
      %995 = vst.msk [vmem:[#allocation4 + $0x68] sm:$0xff] %vm171, %v761
      %996 = vst.msk [vmem:[#allocation4 + $0x80] sm:$0xff] %vm171, %v763
      %997 = vst.msk [vmem:[#allocation4 + $0x98] sm:$0xff] %vm171, %v766
      %998 = vst.msk [vmem:[#allocation4 + $0xb0] sm:$0xff] %vm171, %v768
      %999 = vst.msk [vmem:[#allocation4 + $0xc8] sm:$0xff] %vm171, %v771
      %1000 = vst.msk [vmem:[#allocation4 + $0xe0] sm:$0xff] %vm171, %v773
      %1001 = vst.msk [vmem:[#allocation4 + $0xf8] sm:$0xff] %vm171, %v776
      %1002 = vst.msk [vmem:[#allocation4 + $0x110] sm:$0xff] %vm171, %v778
      %1003 = vst.msk [vmem:[#allocation4 + $0x128] sm:$0xff] %vm171, %v781
      %1004 = vst.msk [vmem:[#allocation4 + $0x140] sm:$0xff] %vm171, %v783
      %1005 = vst.msk [vmem:[#allocation4 + $0x158] sm:$0xff] %vm171, %v786
      %1006 = vst.msk [vmem:[#allocation4 + $0x170] sm:$0xff] %vm171, %v788
      %1007 = vst.msk [vmem:[#allocation4 + $0x188] sm:$0xff] %vm171, %v791
      %1008 = vst.msk [vmem:[#allocation4 + $0x1a0] sm:$0xff] %vm171, %v793
      %1009 = vst.msk [vmem:[#allocation4 + $0x1b8] sm:$0xff] %vm171, %v796
      %1010 = vst.msk [vmem:[#allocation4 + $0x1d0] sm:$0xff] %vm171, %v798
      %1011 = vst.msk [vmem:[#allocation4 + $0x1e8] sm:$0xff] %vm171, %v801
      %1012 = vst.msk [vmem:[#allocation4 + $0x200] sm:$0xff] %vm171, %v803
      %1013 = vst.msk [vmem:[#allocation4 + $0x218] sm:$0xff] %vm171, %v806
      %1014 = vst.msk [vmem:[#allocation4 + $0x230] sm:$0xff] %vm171, %v808
      %1015 = vst.msk [vmem:[#allocation4 + $0x248] sm:$0xff] %vm171, %v811
      %1016 = vst.msk [vmem:[#allocation4 + $0x260] sm:$0xff] %vm171, %v813
      %1017 = vst.msk [vmem:[#allocation4 + $0x278] sm:$0xff] %vm171, %v816
      %1018 = vst.msk [vmem:[#allocation4 + $0x290] sm:$0xff] %vm171, %v818
      %1019 = vst.msk [vmem:[#allocation4 + $0x2a8] sm:$0xff] %vm171, %v821
      %1020 = vst.msk [vmem:[#allocation4 + $0x2c0] sm:$0xff] %vm171, %v823
      %1021 = vst.msk [vmem:[#allocation4 + $0x2d8] sm:$0xff] %vm171, %v956
      %1022 = vst.msk [vmem:[#allocation4 + $0x2f0] sm:$0xff] %vm171, %v958
      %v1024 = vrot.slane %v398, 1
      %v1025 = vrot.slane %v399, 1
      %v1026 = vsel %vm743, %v1024, %v1025
      %v1027 = vrot.slane %v400, 1
      %v1028 = vsel %vm743, %v1025, %v1027
      %1029 = vrot.lane.b32.xlu0 %v756, 96
      %v1030 = vpop.permute.xlu0 %1029
      %1031 = vrot.lane.b32.xlu0 %v758, 96
      %v1032 = vpop.permute.xlu0 %1031
      %1033 = vrot.lane.b32.xlu0 %v761, 96
      %v1034 = vpop.permute.xlu0 %1033
      %1035 = vrot.lane.b32.xlu0 %v763, 96
      %v1036 = vpop.permute.xlu0 %1035
      %1037 = vrot.lane.b32.xlu0 %v766, 96
      %v1038 = vpop.permute.xlu0 %1037
      %1039 = vrot.lane.b32.xlu0 %v768, 96
      %v1040 = vpop.permute.xlu0 %1039
      %1041 = vrot.lane.b32.xlu0 %v771, 96
      %v1042 = vpop.permute.xlu0 %1041
      %1043 = vrot.lane.b32.xlu0 %v773, 96
      %v1044 = vpop.permute.xlu0 %1043
      %1045 = vrot.lane.b32.xlu0 %v776, 96
      %v1046 = vpop.permute.xlu0 %1045
      %1047 = vrot.lane.b32.xlu0 %v778, 96
      %v1048 = vpop.permute.xlu0 %1047
      %1049 = vrot.lane.b32.xlu0 %v781, 96
      %v1050 = vpop.permute.xlu0 %1049
      %1051 = vrot.lane.b32.xlu0 %v783, 96
      %v1052 = vpop.permute.xlu0 %1051
      %1053 = vrot.lane.b32.xlu0 %v786, 96
      %v1054 = vpop.permute.xlu0 %1053
      %1055 = vrot.lane.b32.xlu0 %v788, 96
      %v1056 = vpop.permute.xlu0 %1055
      %1057 = vrot.lane.b32.xlu0 %v791, 96
      %v1058 = vpop.permute.xlu0 %1057
      %1059 = vrot.lane.b32.xlu0 %v793, 96
      %v1060 = vpop.permute.xlu0 %1059
      %1061 = vrot.lane.b32.xlu0 %v796, 96
      %v1062 = vpop.permute.xlu0 %1061
      %1063 = vrot.lane.b32.xlu0 %v798, 96
      %v1064 = vpop.permute.xlu0 %1063
      %1065 = vrot.lane.b32.xlu0 %v801, 96
      %v1066 = vpop.permute.xlu0 %1065
      %1067 = vrot.lane.b32.xlu0 %v803, 96
      %v1068 = vpop.permute.xlu0 %1067
      %1069 = vrot.lane.b32.xlu0 %v806, 96
      %v1070 = vpop.permute.xlu0 %1069
      %1071 = vrot.lane.b32.xlu0 %v808, 96
      %v1072 = vpop.permute.xlu0 %1071
      %1073 = vrot.lane.b32.xlu0 %v811, 96
      %v1074 = vpop.permute.xlu0 %1073
      %1075 = vrot.lane.b32.xlu0 %v813, 96
      %v1076 = vpop.permute.xlu0 %1075
      %1077 = vrot.lane.b32.xlu0 %v816, 96
      %v1078 = vpop.permute.xlu0 %1077
      %1079 = vrot.lane.b32.xlu0 %v818, 96
      %v1080 = vpop.permute.xlu0 %1079
      %1081 = vrot.lane.b32.xlu0 %v821, 96
      %v1082 = vpop.permute.xlu0 %1081
      %1083 = vrot.lane.b32.xlu0 %v823, 96
      %v1084 = vpop.permute.xlu0 %1083
      %1085 = vrot.lane.b32.xlu0 %v956, 96
      %v1086 = vpop.permute.xlu0 %1085
      %1087 = vrot.lane.b32.xlu0 %v958, 96
      %v1088 = vpop.permute.xlu0 %1087
      %1089 = vrot.lane.b32.xlu0 %v1026, 96
      %v1090 = vpop.permute.xlu0 %1089
      %1091 = vrot.lane.b32.xlu0 %v1028, 96
      %v1092 = vpop.permute.xlu0 %1091
      %1125 = vst.msk [vmem:[#allocation4 + $0x8] sm:$0xff] %vm561, %v1030
      %1126 = vst.msk [vmem:[#allocation4 + $0x20] sm:$0xff] %vm561, %v1032
      %1127 = vst.msk [vmem:[#allocation4 + $0x38] sm:$0xff] %vm561, %v1034
      %1128 = vst.msk [vmem:[#allocation4 + $0x50] sm:$0xff] %vm561, %v1036
      %1129 = vst.msk [vmem:[#allocation4 + $0x68] sm:$0xff] %vm561, %v1038
      %1130 = vst.msk [vmem:[#allocation4 + $0x80] sm:$0xff] %vm561, %v1040
      %1131 = vst.msk [vmem:[#allocation4 + $0x98] sm:$0xff] %vm561, %v1042
      %1132 = vst.msk [vmem:[#allocation4 + $0xb0] sm:$0xff] %vm561, %v1044
      %1133 = vst.msk [vmem:[#allocation4 + $0xc8] sm:$0xff] %vm561, %v1046
      %1134 = vst.msk [vmem:[#allocation4 + $0xe0] sm:$0xff] %vm561, %v1048
      %1135 = vst.msk [vmem:[#allocation4 + $0xf8] sm:$0xff] %vm561, %v1050
      %1136 = vst.msk [vmem:[#allocation4 + $0x110] sm:$0xff] %vm561, %v1052
      %1137 = vst.msk [vmem:[#allocation4 + $0x128] sm:$0xff] %vm561, %v1054
      %1138 = vst.msk [vmem:[#allocation4 + $0x140] sm:$0xff] %vm561, %v1056
      %1139 = vst.msk [vmem:[#allocation4 + $0x158] sm:$0xff] %vm561, %v1058
      %1140 = vst.msk [vmem:[#allocation4 + $0x170] sm:$0xff] %vm561, %v1060
      %1141 = vst.msk [vmem:[#allocation4 + $0x188] sm:$0xff] %vm561, %v1062
      %1142 = vst.msk [vmem:[#allocation4 + $0x1a0] sm:$0xff] %vm561, %v1064
      %1143 = vst.msk [vmem:[#allocation4 + $0x1b8] sm:$0xff] %vm561, %v1066
      %1144 = vst.msk [vmem:[#allocation4 + $0x1d0] sm:$0xff] %vm561, %v1068
      %1145 = vst.msk [vmem:[#allocation4 + $0x1e8] sm:$0xff] %vm561, %v1070
      %1146 = vst.msk [vmem:[#allocation4 + $0x200] sm:$0xff] %vm561, %v1072
      %1147 = vst.msk [vmem:[#allocation4 + $0x218] sm:$0xff] %vm561, %v1074
      %1148 = vst.msk [vmem:[#allocation4 + $0x230] sm:$0xff] %vm561, %v1076
      %1149 = vst.msk [vmem:[#allocation4 + $0x248] sm:$0xff] %vm561, %v1078
      %1150 = vst.msk [vmem:[#allocation4 + $0x260] sm:$0xff] %vm561, %v1080
      %1151 = vst.msk [vmem:[#allocation4 + $0x278] sm:$0xff] %vm561, %v1082
      %1152 = vst.msk [vmem:[#allocation4 + $0x290] sm:$0xff] %vm561, %v1084
      %1153 = vst.msk [vmem:[#allocation4 + $0x2a8] sm:$0xff] %vm561, %v1086
      %1154 = vst.msk [vmem:[#allocation4 + $0x2c0] sm:$0xff] %vm561, %v1088
      %1155 = vst.msk [vmem:[#allocation4 + $0x2d8] sm:$0xff] %vm561, %v1090
      %1156 = vst.msk [vmem:[#allocation4 + $0x2f0] sm:$0xff] %vm561, %v1092
      %vm1157 = vcmask 1045504
      %v1158 = vrot.slane %v347, 2
      %v1159 = vrot.slane %v348, 2
      %v1160 = vsel %vm1157, %v1158, %v1159
      %v1161 = vrot.slane %v349, 2
      %v1162 = vsel %vm1157, %v1159, %v1161
      %v1163 = vrot.slane %v350, 2
      %v1164 = vrot.slane %v351, 2
      %v1165 = vsel %vm1157, %v1163, %v1164
      %v1166 = vrot.slane %v352, 2
      %v1167 = vsel %vm1157, %v1164, %v1166
      %v1168 = vrot.slane %v353, 2
      %v1169 = vrot.slane %v354, 2
      %v1170 = vsel %vm1157, %v1168, %v1169
      %v1171 = vrot.slane %v355, 2
      %v1172 = vsel %vm1157, %v1169, %v1171
      %v1173 = vrot.slane %v356, 2
      %v1174 = vrot.slane %v357, 2
      %v1175 = vsel %vm1157, %v1173, %v1174
      %v1176 = vrot.slane %v358, 2
      %v1177 = vsel %vm1157, %v1174, %v1176
      %v1178 = vrot.slane %v359, 2
      %v1179 = vrot.slane %v360, 2
      %v1180 = vsel %vm1157, %v1178, %v1179
      %v1181 = vrot.slane %v361, 2
      %v1182 = vsel %vm1157, %v1179, %v1181
      %v1183 = vrot.slane %v362, 2
      %v1184 = vrot.slane %v363, 2
      %v1185 = vsel %vm1157, %v1183, %v1184
      %v1186 = vrot.slane %v364, 2
      %v1187 = vsel %vm1157, %v1184, %v1186
      %v1188 = vrot.slane %v365, 2
      %v1189 = vrot.slane %v366, 2
      %v1190 = vsel %vm1157, %v1188, %v1189
      %v1191 = vrot.slane %v367, 2
      %v1192 = vsel %vm1157, %v1189, %v1191
      %v1193 = vrot.slane %v368, 2
      %v1194 = vrot.slane %v369, 2
      %v1195 = vsel %vm1157, %v1193, %v1194
      %v1196 = vrot.slane %v370, 2
      %v1197 = vsel %vm1157, %v1194, %v1196
      %v1198 = vrot.slane %v371, 2
      %v1199 = vrot.slane %v372, 2
      %v1200 = vsel %vm1157, %v1198, %v1199
      %v1201 = vrot.slane %v373, 2
      %v1202 = vsel %vm1157, %v1199, %v1201
      %v1203 = vrot.slane %v374, 2
      %v1204 = vrot.slane %v375, 2
      %v1205 = vsel %vm1157, %v1203, %v1204
      %v1206 = vrot.slane %v376, 2
      %v1207 = vsel %vm1157, %v1204, %v1206
      %v1208 = vrot.slane %v377, 2
      %v1209 = vrot.slane %v378, 2
      %v1210 = vsel %vm1157, %v1208, %v1209
      %v1211 = vrot.slane %v379, 2
      %v1212 = vsel %vm1157, %v1209, %v1211
      %v1213 = vrot.slane %v380, 2
      %v1214 = vrot.slane %v381, 2
      %v1215 = vsel %vm1157, %v1213, %v1214
      %v1216 = vrot.slane %v382, 2
      %v1217 = vsel %vm1157, %v1214, %v1216
      %v1218 = vrot.slane %v383, 2
      %v1219 = vrot.slane %v384, 2
      %v1220 = vsel %vm1157, %v1218, %v1219
      %v1221 = vrot.slane %v385, 2
      %v1222 = vsel %vm1157, %v1219, %v1221
      %v1223 = vrot.slane %v386, 2
      %v1224 = vrot.slane %v387, 2
      %v1225 = vsel %vm1157, %v1223, %v1224
      %v1226 = vrot.slane %v388, 2
      %v1227 = vsel %vm1157, %v1224, %v1226
      %v1228 = vrot.slane %v389, 2
      %v1229 = vrot.slane %v390, 2
      %v1230 = vsel %vm1157, %v1228, %v1229
      %v1231 = vrot.slane %v391, 2
      %v1232 = vsel %vm1157, %v1229, %v1231
      %v1233 = vrot.slane %v392, 2
      %v1234 = vrot.slane %v393, 2
      %v1235 = vsel %vm1157, %v1233, %v1234
      %v1236 = vrot.slane %v394, 2
      %v1237 = vsel %vm1157, %v1234, %v1236
      %1238 = vrot.lane.b32.xlu0 %v1160, 64
      %v1239 = vpop.permute.xlu0 %1238
      %1240 = vrot.lane.b32.xlu0 %v1162, 64
      %v1241 = vpop.permute.xlu0 %1240
      %1242 = vrot.lane.b32.xlu0 %v1165, 64
      %v1243 = vpop.permute.xlu0 %1242
      %1244 = vrot.lane.b32.xlu0 %v1167, 64
      %v1245 = vpop.permute.xlu0 %1244
      %1246 = vrot.lane.b32.xlu0 %v1170, 64
      %v1247 = vpop.permute.xlu0 %1246
      %1248 = vrot.lane.b32.xlu0 %v1172, 64
      %v1249 = vpop.permute.xlu0 %1248
      %1250 = vrot.lane.b32.xlu0 %v1175, 64
      %v1251 = vpop.permute.xlu0 %1250
      %1252 = vrot.lane.b32.xlu0 %v1177, 64
      %v1253 = vpop.permute.xlu0 %1252
      %1254 = vrot.lane.b32.xlu0 %v1180, 64
      %v1255 = vpop.permute.xlu0 %1254
      %1256 = vrot.lane.b32.xlu0 %v1182, 64
      %v1257 = vpop.permute.xlu0 %1256
      %1258 = vrot.lane.b32.xlu0 %v1185, 64
      %v1259 = vpop.permute.xlu0 %1258
      %1260 = vrot.lane.b32.xlu0 %v1187, 64
      %v1261 = vpop.permute.xlu0 %1260
      %1262 = vrot.lane.b32.xlu0 %v1190, 64
      %v1263 = vpop.permute.xlu0 %1262
      %1264 = vrot.lane.b32.xlu0 %v1192, 64
      %v1265 = vpop.permute.xlu0 %1264
      %1266 = vrot.lane.b32.xlu0 %v1195, 64
      %v1267 = vpop.permute.xlu0 %1266
      %1268 = vrot.lane.b32.xlu0 %v1197, 64
      %v1269 = vpop.permute.xlu0 %1268
      %1270 = vrot.lane.b32.xlu0 %v1200, 64
      %v1271 = vpop.permute.xlu0 %1270
      %1272 = vrot.lane.b32.xlu0 %v1202, 64
      %v1273 = vpop.permute.xlu0 %1272
      %1274 = vrot.lane.b32.xlu0 %v1205, 64
      %v1275 = vpop.permute.xlu0 %1274
      %1276 = vrot.lane.b32.xlu0 %v1207, 64
      %v1277 = vpop.permute.xlu0 %1276
      %1278 = vrot.lane.b32.xlu0 %v1210, 64
      %v1279 = vpop.permute.xlu0 %1278
      %1280 = vrot.lane.b32.xlu0 %v1212, 64
      %v1281 = vpop.permute.xlu0 %1280
      %1282 = vrot.lane.b32.xlu0 %v1215, 64
      %v1283 = vpop.permute.xlu0 %1282
      %1284 = vrot.lane.b32.xlu0 %v1217, 64
      %v1285 = vpop.permute.xlu0 %1284
      %1286 = vrot.lane.b32.xlu0 %v1220, 64
      %v1287 = vpop.permute.xlu0 %1286
      %1288 = vrot.lane.b32.xlu0 %v1222, 64
      %v1289 = vpop.permute.xlu0 %1288
      %1290 = vrot.lane.b32.xlu0 %v1225, 64
      %v1291 = vpop.permute.xlu0 %1290
      %1292 = vrot.lane.b32.xlu0 %v1227, 64
      %v1293 = vpop.permute.xlu0 %1292
      %1294 = vrot.lane.b32.xlu0 %v1230, 64
      %v1295 = vpop.permute.xlu0 %1294
      %1296 = vrot.lane.b32.xlu0 %v1232, 64
      %v1297 = vpop.permute.xlu0 %1296
      %1298 = vrot.lane.b32.xlu0 %v1235, 64
      %v1299 = vpop.permute.xlu0 %1298
      %1300 = vrot.lane.b32.xlu0 %v1237, 64
      %v1301 = vpop.permute.xlu0 %1300
      %1334 = vst.msk [vmem:[#allocation4] sm:$0xff] %vm692, %v1239
      %1335 = vst.msk [vmem:[#allocation4 + $0x18] sm:$0xff] %vm692, %v1241
      %1336 = vst.msk [vmem:[#allocation4 + $0x30] sm:$0xff] %vm692, %v1243
      %1337 = vst.msk [vmem:[#allocation4 + $0x48] sm:$0xff] %vm692, %v1245
      %1338 = vst.msk [vmem:[#allocation4 + $0x60] sm:$0xff] %vm692, %v1247
      %1339 = vst.msk [vmem:[#allocation4 + $0x78] sm:$0xff] %vm692, %v1249
      %1340 = vst.msk [vmem:[#allocation4 + $0x90] sm:$0xff] %vm692, %v1251
      %1341 = vst.msk [vmem:[#allocation4 + $0xa8] sm:$0xff] %vm692, %v1253
      %1342 = vst.msk [vmem:[#allocation4 + $0xc0] sm:$0xff] %vm692, %v1255
      %1343 = vst.msk [vmem:[#allocation4 + $0xd8] sm:$0xff] %vm692, %v1257
      %1344 = vst.msk [vmem:[#allocation4 + $0xf0] sm:$0xff] %vm692, %v1259
      %1345 = vst.msk [vmem:[#allocation4 + $0x108] sm:$0xff] %vm692, %v1261
      %1346 = vst.msk [vmem:[#allocation4 + $0x120] sm:$0xff] %vm692, %v1263
      %1347 = vst.msk [vmem:[#allocation4 + $0x138] sm:$0xff] %vm692, %v1265
      %1348 = vst.msk [vmem:[#allocation4 + $0x150] sm:$0xff] %vm692, %v1267
      %1349 = vst.msk [vmem:[#allocation4 + $0x168] sm:$0xff] %vm692, %v1269
      %1350 = vst.msk [vmem:[#allocation4 + $0x180] sm:$0xff] %vm692, %v1271
      %1351 = vst.msk [vmem:[#allocation4 + $0x198] sm:$0xff] %vm692, %v1273
      %1352 = vst.msk [vmem:[#allocation4 + $0x1b0] sm:$0xff] %vm692, %v1275
      %1353 = vst.msk [vmem:[#allocation4 + $0x1c8] sm:$0xff] %vm692, %v1277
      %1354 = vst.msk [vmem:[#allocation4 + $0x1e0] sm:$0xff] %vm692, %v1279
      %1355 = vst.msk [vmem:[#allocation4 + $0x1f8] sm:$0xff] %vm692, %v1281
      %1356 = vst.msk [vmem:[#allocation4 + $0x210] sm:$0xff] %vm692, %v1283
      %1357 = vst.msk [vmem:[#allocation4 + $0x228] sm:$0xff] %vm692, %v1285
      %1358 = vst.msk [vmem:[#allocation4 + $0x240] sm:$0xff] %vm692, %v1287
      %1359 = vst.msk [vmem:[#allocation4 + $0x258] sm:$0xff] %vm692, %v1289
      %1360 = vst.msk [vmem:[#allocation4 + $0x270] sm:$0xff] %vm692, %v1291
      %1361 = vst.msk [vmem:[#allocation4 + $0x288] sm:$0xff] %vm692, %v1293
      %1362 = vst.msk [vmem:[#allocation4 + $0x2a0] sm:$0xff] %vm692, %v1295
      %1363 = vst.msk [vmem:[#allocation4 + $0x2b8] sm:$0xff] %vm692, %v1297
      %1364 = vst.msk [vmem:[#allocation4 + $0x2d0] sm:$0xff] %vm692, %v1299
      %1365 = vst.msk [vmem:[#allocation4 + $0x2e8] sm:$0xff] %vm692, %v1301
      %v1366 = vrot.slane %v395, 2
      %v1367 = vrot.slane %v396, 2
      %v1368 = vsel %vm1157, %v1366, %v1367
      %v1369 = vrot.slane %v397, 2
      %v1370 = vsel %vm1157, %v1367, %v1369
      %1371 = vrot.lane.b32.xlu0 %v1165, 32
      %v1372 = vpop.permute.xlu0 %1371
      %1373 = vrot.lane.b32.xlu0 %v1167, 32
      %v1374 = vpop.permute.xlu0 %1373
      %1375 = vrot.lane.b32.xlu0 %v1170, 32
      %v1376 = vpop.permute.xlu0 %1375
      %1377 = vrot.lane.b32.xlu0 %v1172, 32
      %v1378 = vpop.permute.xlu0 %1377
      %1379 = vrot.lane.b32.xlu0 %v1175, 32
      %v1380 = vpop.permute.xlu0 %1379
      %1381 = vrot.lane.b32.xlu0 %v1177, 32
      %v1382 = vpop.permute.xlu0 %1381
      %1383 = vrot.lane.b32.xlu0 %v1180, 32
      %v1384 = vpop.permute.xlu0 %1383
      %1385 = vrot.lane.b32.xlu0 %v1182, 32
      %v1386 = vpop.permute.xlu0 %1385
      %1387 = vrot.lane.b32.xlu0 %v1185, 32
      %v1388 = vpop.permute.xlu0 %1387
      %1389 = vrot.lane.b32.xlu0 %v1187, 32
      %v1390 = vpop.permute.xlu0 %1389
      %1391 = vrot.lane.b32.xlu0 %v1190, 32
      %v1392 = vpop.permute.xlu0 %1391
      %1393 = vrot.lane.b32.xlu0 %v1192, 32
      %v1394 = vpop.permute.xlu0 %1393
      %1395 = vrot.lane.b32.xlu0 %v1195, 32
      %v1396 = vpop.permute.xlu0 %1395
      %1397 = vrot.lane.b32.xlu0 %v1197, 32
      %v1398 = vpop.permute.xlu0 %1397
      %1399 = vrot.lane.b32.xlu0 %v1200, 32
      %v1400 = vpop.permute.xlu0 %1399
      %1401 = vrot.lane.b32.xlu0 %v1202, 32
      %v1402 = vpop.permute.xlu0 %1401
      %1403 = vrot.lane.b32.xlu0 %v1205, 32
      %v1404 = vpop.permute.xlu0 %1403
      %1405 = vrot.lane.b32.xlu0 %v1207, 32
      %v1406 = vpop.permute.xlu0 %1405
      %1407 = vrot.lane.b32.xlu0 %v1210, 32
      %v1408 = vpop.permute.xlu0 %1407
      %1409 = vrot.lane.b32.xlu0 %v1212, 32
      %v1410 = vpop.permute.xlu0 %1409
      %1411 = vrot.lane.b32.xlu0 %v1215, 32
      %v1412 = vpop.permute.xlu0 %1411
      %1413 = vrot.lane.b32.xlu0 %v1217, 32
      %v1414 = vpop.permute.xlu0 %1413
      %1415 = vrot.lane.b32.xlu0 %v1220, 32
      %v1416 = vpop.permute.xlu0 %1415
      %1417 = vrot.lane.b32.xlu0 %v1222, 32
      %v1418 = vpop.permute.xlu0 %1417
      %1419 = vrot.lane.b32.xlu0 %v1225, 32
      %v1420 = vpop.permute.xlu0 %1419
      %1421 = vrot.lane.b32.xlu0 %v1227, 32
      %v1422 = vpop.permute.xlu0 %1421
      %1423 = vrot.lane.b32.xlu0 %v1230, 32
      %v1424 = vpop.permute.xlu0 %1423
      %1425 = vrot.lane.b32.xlu0 %v1232, 32
      %v1426 = vpop.permute.xlu0 %1425
      %1427 = vrot.lane.b32.xlu0 %v1235, 32
      %v1428 = vpop.permute.xlu0 %1427
      %1429 = vrot.lane.b32.xlu0 %v1237, 32
      %v1430 = vpop.permute.xlu0 %1429
      %1431 = vrot.lane.b32.xlu0 %v1368, 32
      %v1432 = vpop.permute.xlu0 %1431
      %1433 = vrot.lane.b32.xlu0 %v1370, 32
      %v1434 = vpop.permute.xlu0 %1433
      %1467 = vst.msk [vmem:[#allocation4 + $0x8] sm:$0xff] %vm920, %v1372
      %1468 = vst.msk [vmem:[#allocation4 + $0x20] sm:$0xff] %vm920, %v1374
      %1469 = vst.msk [vmem:[#allocation4 + $0x38] sm:$0xff] %vm920, %v1376
      %1470 = vst.msk [vmem:[#allocation4 + $0x50] sm:$0xff] %vm920, %v1378
      %1471 = vst.msk [vmem:[#allocation4 + $0x68] sm:$0xff] %vm920, %v1380
      %1472 = vst.msk [vmem:[#allocation4 + $0x80] sm:$0xff] %vm920, %v1382
      %1473 = vst.msk [vmem:[#allocation4 + $0x98] sm:$0xff] %vm920, %v1384
      %1474 = vst.msk [vmem:[#allocation4 + $0xb0] sm:$0xff] %vm920, %v1386
      %1475 = vst.msk [vmem:[#allocation4 + $0xc8] sm:$0xff] %vm920, %v1388
      %1476 = vst.msk [vmem:[#allocation4 + $0xe0] sm:$0xff] %vm920, %v1390
      %1477 = vst.msk [vmem:[#allocation4 + $0xf8] sm:$0xff] %vm920, %v1392
      %1478 = vst.msk [vmem:[#allocation4 + $0x110] sm:$0xff] %vm920, %v1394
      %1479 = vst.msk [vmem:[#allocation4 + $0x128] sm:$0xff] %vm920, %v1396
      %1480 = vst.msk [vmem:[#allocation4 + $0x140] sm:$0xff] %vm920, %v1398
      %1481 = vst.msk [vmem:[#allocation4 + $0x158] sm:$0xff] %vm920, %v1400
      %1482 = vst.msk [vmem:[#allocation4 + $0x170] sm:$0xff] %vm920, %v1402
      %1483 = vst.msk [vmem:[#allocation4 + $0x188] sm:$0xff] %vm920, %v1404
      %1484 = vst.msk [vmem:[#allocation4 + $0x1a0] sm:$0xff] %vm920, %v1406
      %1485 = vst.msk [vmem:[#allocation4 + $0x1b8] sm:$0xff] %vm920, %v1408
      %1486 = vst.msk [vmem:[#allocation4 + $0x1d0] sm:$0xff] %vm920, %v1410
      %1487 = vst.msk [vmem:[#allocation4 + $0x1e8] sm:$0xff] %vm920, %v1412
      %1488 = vst.msk [vmem:[#allocation4 + $0x200] sm:$0xff] %vm920, %v1414
      %1489 = vst.msk [vmem:[#allocation4 + $0x218] sm:$0xff] %vm920, %v1416
      %1490 = vst.msk [vmem:[#allocation4 + $0x230] sm:$0xff] %vm920, %v1418
      %1491 = vst.msk [vmem:[#allocation4 + $0x248] sm:$0xff] %vm920, %v1420
      %1492 = vst.msk [vmem:[#allocation4 + $0x260] sm:$0xff] %vm920, %v1422
      %1493 = vst.msk [vmem:[#allocation4 + $0x278] sm:$0xff] %vm920, %v1424
      %1494 = vst.msk [vmem:[#allocation4 + $0x290] sm:$0xff] %vm920, %v1426
      %1495 = vst.msk [vmem:[#allocation4 + $0x2a8] sm:$0xff] %vm920, %v1428
      %1496 = vst.msk [vmem:[#allocation4 + $0x2c0] sm:$0xff] %vm920, %v1430
      %1497 = vst.msk [vmem:[#allocation4 + $0x2d8] sm:$0xff] %vm920, %v1432
      %1498 = vst.msk [vmem:[#allocation4 + $0x2f0] sm:$0xff] %vm920, %v1434
      %v1499 = vrot.slane %v398, 2
      %v1500 = vrot.slane %v399, 2
      %v1501 = vsel %vm1157, %v1499, %v1500
      %v1502 = vrot.slane %v400, 2
      %v1503 = vsel %vm1157, %v1500, %v1502
      %1536 = vst.msk [vmem:[#allocation4 + $0x10] sm:$0xff] %vm171, %v1170
      %1537 = vst.msk [vmem:[#allocation4 + $0x28] sm:$0xff] %vm171, %v1172
      %1538 = vst.msk [vmem:[#allocation4 + $0x40] sm:$0xff] %vm171, %v1175
      %1539 = vst.msk [vmem:[#allocation4 + $0x58] sm:$0xff] %vm171, %v1177
      %1540 = vst.msk [vmem:[#allocation4 + $0x70] sm:$0xff] %vm171, %v1180
      %1541 = vst.msk [vmem:[#allocation4 + $0x88] sm:$0xff] %vm171, %v1182
      %1542 = vst.msk [vmem:[#allocation4 + $0xa0] sm:$0xff] %vm171, %v1185
      %1543 = vst.msk [vmem:[#allocation4 + $0xb8] sm:$0xff] %vm171, %v1187
      %1544 = vst.msk [vmem:[#allocation4 + $0xd0] sm:$0xff] %vm171, %v1190
      %1545 = vst.msk [vmem:[#allocation4 + $0xe8] sm:$0xff] %vm171, %v1192
      %1546 = vst.msk [vmem:[#allocation4 + $0x100] sm:$0xff] %vm171, %v1195
      %1547 = vst.msk [vmem:[#allocation4 + $0x118] sm:$0xff] %vm171, %v1197
      %1548 = vst.msk [vmem:[#allocation4 + $0x130] sm:$0xff] %vm171, %v1200
      %1549 = vst.msk [vmem:[#allocation4 + $0x148] sm:$0xff] %vm171, %v1202
      %1550 = vst.msk [vmem:[#allocation4 + $0x160] sm:$0xff] %vm171, %v1205
      %1551 = vst.msk [vmem:[#allocation4 + $0x178] sm:$0xff] %vm171, %v1207
      %1552 = vst.msk [vmem:[#allocation4 + $0x190] sm:$0xff] %vm171, %v1210
      %1553 = vst.msk [vmem:[#allocation4 + $0x1a8] sm:$0xff] %vm171, %v1212
      %1554 = vst.msk [vmem:[#allocation4 + $0x1c0] sm:$0xff] %vm171, %v1215
      %1555 = vst.msk [vmem:[#allocation4 + $0x1d8] sm:$0xff] %vm171, %v1217
      %1556 = vst.msk [vmem:[#allocation4 + $0x1f0] sm:$0xff] %vm171, %v1220
      %1557 = vst.msk [vmem:[#allocation4 + $0x208] sm:$0xff] %vm171, %v1222
      %1558 = vst.msk [vmem:[#allocation4 + $0x220] sm:$0xff] %vm171, %v1225
      %1559 = vst.msk [vmem:[#allocation4 + $0x238] sm:$0xff] %vm171, %v1227
      %1560 = vst.msk [vmem:[#allocation4 + $0x250] sm:$0xff] %vm171, %v1230
      %1561 = vst.msk [vmem:[#allocation4 + $0x268] sm:$0xff] %vm171, %v1232
      %1562 = vst.msk [vmem:[#allocation4 + $0x280] sm:$0xff] %vm171, %v1235
      %1563 = vst.msk [vmem:[#allocation4 + $0x298] sm:$0xff] %vm171, %v1237
      %1564 = vst.msk [vmem:[#allocation4 + $0x2b0] sm:$0xff] %vm171, %v1368
      %1565 = vst.msk [vmem:[#allocation4 + $0x2c8] sm:$0xff] %vm171, %v1370
      %1566 = vst.msk [vmem:[#allocation4 + $0x2e0] sm:$0xff] %vm171, %v1501
      %1567 = vst.msk [vmem:[#allocation4 + $0x2f8] sm:$0xff] %vm171, %v1503
      %v1568 = vld [vmem:[#allocation4] sm:$0xff]
      %v1569 = vld [vmem:[#allocation4 + $0x8] sm:$0xff]
      %v1570 = vld [vmem:[#allocation4 + $0x10] sm:$0xff]
      %v1571 = vld [vmem:[#allocation4 + $0x18] sm:$0xff]
      %v1572 = vld [vmem:[#allocation4 + $0x20] sm:$0xff]
      %v1573 = vld [vmem:[#allocation4 + $0x28] sm:$0xff]
      %v1574 = vld [vmem:[#allocation4 + $0x30] sm:$0xff]
      %v1575 = vld [vmem:[#allocation4 + $0x38] sm:$0xff]
      %v1576 = vld [vmem:[#allocation4 + $0x40] sm:$0xff]
      %v1577 = vld [vmem:[#allocation4 + $0x48] sm:$0xff]
      %v1578 = vld [vmem:[#allocation4 + $0x50] sm:$0xff]
      %v1579 = vld [vmem:[#allocation4 + $0x58] sm:$0xff]
      %v1580 = vld [vmem:[#allocation4 + $0x60] sm:$0xff]
      %v1581 = vld [vmem:[#allocation4 + $0x68] sm:$0xff]
      %v1582 = vld [vmem:[#allocation4 + $0x70] sm:$0xff]
      %v1583 = vld [vmem:[#allocation4 + $0x78] sm:$0xff]
      %v1584 = vld [vmem:[#allocation4 + $0x80] sm:$0xff]
      %v1585 = vld [vmem:[#allocation4 + $0x88] sm:$0xff]
      %v1586 = vld [vmem:[#allocation4 + $0x90] sm:$0xff]
      %v1587 = vld [vmem:[#allocation4 + $0x98] sm:$0xff]
      %v1588 = vld [vmem:[#allocation4 + $0xa0] sm:$0xff]
      %v1589 = vld [vmem:[#allocation4 + $0xa8] sm:$0xff]
      %v1590 = vld [vmem:[#allocation4 + $0xb0] sm:$0xff]
      %v1591 = vld [vmem:[#allocation4 + $0xb8] sm:$0xff]
      %v1592 = vld [vmem:[#allocation4 + $0xc0] sm:$0xff]
      %v1593 = vld [vmem:[#allocation4 + $0xc8] sm:$0xff]
      %v1594 = vld [vmem:[#allocation4 + $0xd0] sm:$0xff]
      %v1595 = vld [vmem:[#allocation4 + $0xd8] sm:$0xff]
      %v1596 = vld [vmem:[#allocation4 + $0xe0] sm:$0xff]
      %v1597 = vld [vmem:[#allocation4 + $0xe8] sm:$0xff]
      %v1598 = vld [vmem:[#allocation4 + $0xf0] sm:$0xff]
      %v1599 = vld [vmem:[#allocation4 + $0xf8] sm:$0xff]
      %v1600 = vld [vmem:[#allocation4 + $0x100] sm:$0xff]
      %v1601 = vld [vmem:[#allocation4 + $0x108] sm:$0xff]
      %v1602 = vld [vmem:[#allocation4 + $0x110] sm:$0xff]
      %v1603 = vld [vmem:[#allocation4 + $0x118] sm:$0xff]
      %v1604 = vld [vmem:[#allocation4 + $0x120] sm:$0xff]
      %v1605 = vld [vmem:[#allocation4 + $0x128] sm:$0xff]
      %v1606 = vld [vmem:[#allocation4 + $0x130] sm:$0xff]
      %v1607 = vld [vmem:[#allocation4 + $0x138] sm:$0xff]
      %v1608 = vld [vmem:[#allocation4 + $0x140] sm:$0xff]
      %v1609 = vld [vmem:[#allocation4 + $0x148] sm:$0xff]
      %v1610 = vld [vmem:[#allocation4 + $0x150] sm:$0xff]
      %v1611 = vld [vmem:[#allocation4 + $0x158] sm:$0xff]
      %v1612 = vld [vmem:[#allocation4 + $0x160] sm:$0xff]
      %v1613 = vld [vmem:[#allocation4 + $0x168] sm:$0xff]
      %v1614 = vld [vmem:[#allocation4 + $0x170] sm:$0xff]
      %v1615 = vld [vmem:[#allocation4 + $0x178] sm:$0xff]
      %v1616 = vld [vmem:[#allocation4 + $0x180] sm:$0xff]
      %v1617 = vld [vmem:[#allocation4 + $0x188] sm:$0xff]
      %v1618 = vld [vmem:[#allocation4 + $0x190] sm:$0xff]
      %v1619 = vld [vmem:[#allocation4 + $0x198] sm:$0xff]
      %v1620 = vld [vmem:[#allocation4 + $0x1a0] sm:$0xff]
      %v1621 = vld [vmem:[#allocation4 + $0x1a8] sm:$0xff]
      %v1622 = vld [vmem:[#allocation4 + $0x1b0] sm:$0xff]
      %v1623 = vld [vmem:[#allocation4 + $0x1b8] sm:$0xff]
      %v1624 = vld [vmem:[#allocation4 + $0x1c0] sm:$0xff]
      %v1625 = vld [vmem:[#allocation4 + $0x1c8] sm:$0xff]
      %v1626 = vld [vmem:[#allocation4 + $0x1d0] sm:$0xff]
      %v1627 = vld [vmem:[#allocation4 + $0x1d8] sm:$0xff]
      %v1628 = vld [vmem:[#allocation4 + $0x1e0] sm:$0xff]
      %v1629 = vld [vmem:[#allocation4 + $0x1e8] sm:$0xff]
      %v1630 = vld [vmem:[#allocation4 + $0x1f0] sm:$0xff]
      %v1631 = vld [vmem:[#allocation4 + $0x1f8] sm:$0xff]
      %v1632 = vld [vmem:[#allocation4 + $0x200] sm:$0xff]
      %v1633 = vld [vmem:[#allocation4 + $0x208] sm:$0xff]
      %v1634 = vld [vmem:[#allocation4 + $0x210] sm:$0xff]
      %v1635 = vld [vmem:[#allocation4 + $0x218] sm:$0xff]
      %v1636 = vld [vmem:[#allocation4 + $0x220] sm:$0xff]
      %v1637 = vld [vmem:[#allocation4 + $0x228] sm:$0xff]
      %v1638 = vld [vmem:[#allocation4 + $0x230] sm:$0xff]
      %v1639 = vld [vmem:[#allocation4 + $0x238] sm:$0xff]
      %v1640 = vld [vmem:[#allocation4 + $0x240] sm:$0xff]
      %v1641 = vld [vmem:[#allocation4 + $0x248] sm:$0xff]
      %v1642 = vld [vmem:[#allocation4 + $0x250] sm:$0xff]
      %v1643 = vld [vmem:[#allocation4 + $0x258] sm:$0xff]
      %v1644 = vld [vmem:[#allocation4 + $0x260] sm:$0xff]
      %v1645 = vld [vmem:[#allocation4 + $0x268] sm:$0xff]
      %v1646 = vld [vmem:[#allocation4 + $0x270] sm:$0xff]
      %v1647 = vld [vmem:[#allocation4 + $0x278] sm:$0xff]
      %v1648 = vld [vmem:[#allocation4 + $0x280] sm:$0xff]
      %v1649 = vld [vmem:[#allocation4 + $0x288] sm:$0xff]
      %v1650 = vld [vmem:[#allocation4 + $0x290] sm:$0xff]
      %v1651 = vld [vmem:[#allocation4 + $0x298] sm:$0xff]
      %v1652 = vld [vmem:[#allocation4 + $0x2a0] sm:$0xff]
      %v1653 = vld [vmem:[#allocation4 + $0x2a8] sm:$0xff]
      %v1654 = vld [vmem:[#allocation4 + $0x2b0] sm:$0xff]
      %v1655 = vld [vmem:[#allocation4 + $0x2b8] sm:$0xff]
      %v1656 = vld [vmem:[#allocation4 + $0x2c0] sm:$0xff]
      %v1657 = vld [vmem:[#allocation4 + $0x2c8] sm:$0xff]
      %v1658 = vld [vmem:[#allocation4 + $0x2d0] sm:$0xff]
      %v1659 = vld [vmem:[#allocation4 + $0x2d8] sm:$0xff]
      %v1660 = vld [vmem:[#allocation4 + $0x2e0] sm:$0xff]
      %v1661 = vld [vmem:[#allocation4 + $0x2e8] sm:$0xff]
      %v1662 = vld [vmem:[#allocation4 + $0x2f0] sm:$0xff]
      %v1663 = vld [vmem:[#allocation4 + $0x2f8] sm:$0xff]
      %v1664 = vld [vmem:[%s1] sm:$0xff]
      %v1665 = vld [vmem:[%s1 + $0x8] sm:$0xff]
      %v1666 = vld [vmem:[%s1 + $0x10] sm:$0xff]
      %v1667 = vld [vmem:[%s1 + $0x18] sm:$0xff]
      %v1668 = vld [vmem:[%s1 + $0x20] sm:$0xff]
      %v1669 = vld [vmem:[%s1 + $0x28] sm:$0xff]
      %v1670 = vld [vmem:[%s1 + $0x30] sm:$0xff]
      %v1671 = vld [vmem:[%s1 + $0x38] sm:$0xff]
      %v1672 = vld [vmem:[%s1 + $0x40] sm:$0xff]
      %v1673 = vld [vmem:[%s1 + $0x48] sm:$0xff]
      %v1674 = vld [vmem:[%s1 + $0x50] sm:$0xff]
      %v1675 = vld [vmem:[%s1 + $0x58] sm:$0xff]
      %v1676 = vld [vmem:[%s1 + $0x60] sm:$0xff]
      %v1677 = vld [vmem:[%s1 + $0x68] sm:$0xff]
      %v1678 = vld [vmem:[%s1 + $0x70] sm:$0xff]
      %v1679 = vld [vmem:[%s1 + $0x78] sm:$0xff]
      %v1680 = vld [vmem:[%s1 + $0x80] sm:$0xff]
      %v1681 = vld [vmem:[%s1 + $0x88] sm:$0xff]
      %v1682 = vld [vmem:[%s1 + $0x90] sm:$0xff]
      %v1683 = vld [vmem:[%s1 + $0x98] sm:$0xff]
      %v1684 = vld [vmem:[%s1 + $0xa0] sm:$0xff]
      %v1685 = vld [vmem:[%s1 + $0xa8] sm:$0xff]
      %v1686 = vld [vmem:[%s1 + $0xb0] sm:$0xff]
      %v1687 = vld [vmem:[%s1 + $0xb8] sm:$0xff]
      %v1688 = vld [vmem:[%s1 + $0xc0] sm:$0xff]
      %v1689 = vld [vmem:[%s1 + $0xc8] sm:$0xff]
      %v1690 = vld [vmem:[%s1 + $0xd0] sm:$0xff]
      %v1691 = vld [vmem:[%s1 + $0xd8] sm:$0xff]
      %v1692 = vld [vmem:[%s1 + $0xe0] sm:$0xff]
      %v1693 = vld [vmem:[%s1 + $0xe8] sm:$0xff]
      %v1694 = vld [vmem:[%s1 + $0xf0] sm:$0xff]
      %v1695 = vld [vmem:[%s1 + $0xf8] sm:$0xff]
      %v1696 = vld [vmem:[%s1 + $0x100] sm:$0xff]
      %v1697 = vld [vmem:[%s1 + $0x108] sm:$0xff]
      %v1698 = vld [vmem:[%s1 + $0x110] sm:$0xff]
      %v1699 = vld [vmem:[%s1 + $0x118] sm:$0xff]
      %v1700 = vld [vmem:[%s2] sm:$0x1]
      %v1702 = vlaneseq
      %v1703 = vshrl.u32 %v1702, 7
      %v1704 = vsub.s32 0, %v1703
      %v1705 = vrot.slane %v1700, %v1704
      %v1708 = vsel %vm171, %v1570, 0
      %v1711 = vsel %vm171, %v1573, 0
      %v1714 = vsel %vm171, %v1576, 0
      %v1717 = vsel %vm171, %v1579, 0
      %v1720 = vsel %vm171, %v1582, 0
      %v1723 = vsel %vm171, %v1585, 0
      %v1726 = vsel %vm171, %v1588, 0
      %v1729 = vsel %vm171, %v1591, 0
      %v1732 = vsel %vm171, %v1594, 0
      %v1735 = vsel %vm171, %v1597, 0
      %v1738 = vsel %vm171, %v1600, 0
      %v1741 = vsel %vm171, %v1603, 0
      %v1744 = vsel %vm171, %v1606, 0
      %v1747 = vsel %vm171, %v1609, 0
      %v1750 = vsel %vm171, %v1612, 0
      %v1753 = vsel %vm171, %v1615, 0
      %v1756 = vsel %vm171, %v1618, 0
      %v1759 = vsel %vm171, %v1621, 0
      %v1762 = vsel %vm171, %v1624, 0
      %v1765 = vsel %vm171, %v1627, 0
      %v1768 = vsel %vm171, %v1630, 0
      %v1771 = vsel %vm171, %v1633, 0
      %v1774 = vsel %vm171, %v1636, 0
      %v1777 = vsel %vm171, %v1639, 0
      %v1780 = vsel %vm171, %v1642, 0
      %v1783 = vsel %vm171, %v1645, 0
      %v1786 = vsel %vm171, %v1648, 0
      %v1789 = vsel %vm171, %v1651, 0
      %v1792 = vsel %vm171, %v1654, 0
      %v1795 = vsel %vm171, %v1657, 0
      %v1798 = vsel %vm171, %v1660, 0
      %v1801 = vsel %vm171, %v1663, 0
      %1803 = vmatprep.subr.mxu0 0.0
      %1804 = vmatpush1.msra.mxu0 %v1664
      %1805 = vmatprep.subr.mxu0 0.0
      %1806 = vmatpush1.msra.mxu0 %v1665
      %1807 = vmatprep.subr.mxu0 0.0
      %1808 = vmatpush1.msra.mxu0 %v1666
      %1809 = vmatprep.subr.mxu0 0.0
      %1810 = vmatpush1.msra.mxu0 %v1667
      %1811 = vmatprep.subr.mxu0 0.0
      %1812 = vmatpush1.msra.mxu0 %v1668
      %1813 = vmatprep.subr.mxu0 0.0
      %1814 = vmatpush1.msra.mxu0 %v1669
      %1815 = vmatprep.subr.mxu0 0.0
      %1816 = vmatpush1.msra.mxu0 %v1670
      %1817 = vmatprep.subr.mxu0 0.0
      %1818 = vmatpush1.msra.mxu0 %v1671
      %1819 = vmatprep.subr.mxu0 0.0
      %1820 = vmatpush1.msra.mxu0 %v1672
      %1821 = vmatprep.subr.mxu0 0.0
      %1822 = vmatpush1.msra.mxu0 %v1673
      %1823 = vmatprep.subr.mxu0 0.0
      %1824 = vmatpush1.msra.mxu0 %v1674
      %1825 = vmatprep.subr.mxu0 0.0
      %1826 = vmatpush1.msra.mxu0 %v1675
      %1827 = vmatprep.subr.mxu0 0.0
      %1828 = vmatpush1.msra.mxu0 %v1676
      %1829 = vmatprep.subr.mxu0 0.0
      %1830 = vmatpush1.msra.mxu0 %v1677
      %1831 = vmatprep.subr.mxu0 0.0
      %1832 = vmatpush1.msra.mxu0 %v1678
      %1833 = vmatprep.subr.mxu0 0.0
      %1834 = vmatpush1.msra.mxu0 %v1679
      %1835 = vmatprep.subr.mxu0 0.0
      %1836 = vmatpush1.msra.mxu0 %v1680
      %1837 = vmatprep.subr.mxu0 0.0
      %1838 = vmatpush1.msra.mxu0 %v1681
      %1839 = vmatprep.subr.mxu0 0.0
      %1840 = vmatpush1.msra.mxu0 %v1682
      %1841 = vmatprep.subr.mxu0 0.0
      %1842 = vmatpush1.msra.mxu0 %v1683
      %1843 = vmatprep.subr.mxu0 0.0
      %1844 = vmatpush1.msra.mxu0 %v1684
      %1845 = vmatprep.subr.mxu0 0.0
      %1846 = vmatpush1.msra.mxu0 %v1685
      %1847 = vmatprep.subr.mxu0 0.0
      %1848 = vmatpush1.msra.mxu0 %v1686
      %1849 = vmatprep.subr.mxu0 0.0
      %1850 = vmatpush1.msra.mxu0 %v1687
      %1851 = vmatprep.subr.mxu0 0.0
      %1852 = vmatpush1.msra.mxu0 %v1688
      %1853 = vmatprep.subr.mxu0 0.0
      %1854 = vmatpush1.msra.mxu0 %v1689
      %1855 = vmatprep.subr.mxu0 0.0
      %1856 = vmatpush1.msra.mxu0 %v1690
      %1857 = vmatprep.subr.mxu0 0.0
      %1858 = vmatpush1.msra.mxu0 %v1691
      %1859 = vmatprep.subr.mxu0 0.0
      %1860 = vmatpush1.msra.mxu0 %v1692
      %1861 = vmatprep.subr.mxu0 0.0
      %1862 = vmatpush1.msra.mxu0 %v1693
      %1863 = vmatprep.subr.mxu0 0.0
      %1864 = vmatpush1.msra.mxu0 %v1694
      %1865 = vmatprep.subr.mxu0 0.0
      %1866 = vmatpush1.msra.mxu0 %v1695
      %1867 = vmatprep.mubr.f32.mxu0 %v1569
      %1868 = vmatmul.mubr.f32.gmra.mrb[0].mxu0 %v1568
      %v1869 = vpop.f32.mrb[0].mxu0
      %v1870 = vadd.f32 %v1705, %v1869
      %v1871 = vpop.f32.mrb[0].mxu0
      %1872 = vmatprep.mubr.f32.mxu0 %v1572
      %1873 = vmatmul.mubr.f32.gmra.mrb[0].mxu0 %v1571
      %v1874 = vpop.f32.mrb[0].mxu0
      %v1875 = vadd.f32 %v1705, %v1874
      %v1876 = vpop.f32.mrb[0].mxu0
      %1877 = vmatprep.mubr.f32.mxu0 %v1575
      %1878 = vmatmul.mubr.f32.gmra.mrb[0].mxu0 %v1574
      %v1879 = vpop.f32.mrb[0].mxu0
      %v1880 = vadd.f32 %v1705, %v1879
      %v1881 = vpop.f32.mrb[0].mxu0
      %1882 = vmatprep.mubr.f32.mxu0 %v1578
      %1883 = vmatmul.mubr.f32.gmra.mrb[0].mxu0 %v1577
      %v1884 = vpop.f32.mrb[0].mxu0
      %v1885 = vadd.f32 %v1705, %v1884
      %v1886 = vpop.f32.mrb[0].mxu0
      %1887 = vmatprep.mubr.f32.mxu0 %v1581
      %1888 = vmatmul.mubr.f32.gmra.mrb[0].mxu0 %v1580
      %v1889 = vpop.f32.mrb[0].mxu0
      %v1890 = vadd.f32 %v1705, %v1889
      %v1891 = vpop.f32.mrb[0].mxu0
      %1892 = vmatprep.mubr.f32.mxu0 %v1584
      %1893 = vmatmul.mubr.f32.gmra.mrb[0].mxu0 %v1583
      %v1894 = vpop.f32.mrb[0].mxu0
      %v1895 = vadd.f32 %v1705, %v1894
      %v1896 = vpop.f32.mrb[0].mxu0
      %1897 = vmatprep.mubr.f32.mxu0 %v1587
      %1898 = vmatmul.mubr.f32.gmra.mrb[0].mxu0 %v1586
      %v1899 = vpop.f32.mrb[0].mxu0
      %v1900 = vadd.f32 %v1705, %v1899
      %v1901 = vpop.f32.mrb[0].mxu0
      %1902 = vmatprep.mubr.f32.mxu0 %v1590
      %1903 = vmatmul.mubr.f32.gmra.mrb[0].mxu0 %v1589
      %v1904 = vpop.f32.mrb[0].mxu0
      %v1905 = vadd.f32 %v1705, %v1904
      %v1906 = vpop.f32.mrb[0].mxu0
      %1907 = vmatprep.mubr.f32.mxu0 %v1593
      %1908 = vmatmul.mubr.f32.gmra.mrb[0].mxu0 %v1592
      %v1909 = vpop.f32.mrb[0].mxu0
      %v1910 = vadd.f32 %v1705, %v1909
      %v1911 = vpop.f32.mrb[0].mxu0
      %1912 = vmatprep.mubr.f32.mxu0 %v1596
      %1913 = vmatmul.mubr.f32.gmra.mrb[0].mxu0 %v1595
      %v1914 = vpop.f32.mrb[0].mxu0
      %v1915 = vadd.f32 %v1705, %v1914
      %v1916 = vpop.f32.mrb[0].mxu0
      %1917 = vmatprep.mubr.f32.mxu0 %v1599
      %1918 = vmatmul.mubr.f32.gmra.mrb[0].mxu0 %v1598
      %v1919 = vpop.f32.mrb[0].mxu0
      %v1920 = vadd.f32 %v1705, %v1919
      %v1921 = vpop.f32.mrb[0].mxu0
      %1922 = vmatprep.mubr.f32.mxu0 %v1602
      %1923 = vmatmul.mubr.f32.gmra.mrb[0].mxu0 %v1601
      %v1924 = vpop.f32.mrb[0].mxu0
      %v1925 = vadd.f32 %v1705, %v1924
      %v1926 = vpop.f32.mrb[0].mxu0
      %1927 = vmatprep.mubr.f32.mxu0 %v1605
      %1928 = vmatmul.mubr.f32.gmra.mrb[0].mxu0 %v1604
      %v1929 = vpop.f32.mrb[0].mxu0
      %v1930 = vadd.f32 %v1705, %v1929
      %v1931 = vpop.f32.mrb[0].mxu0
      %1932 = vmatprep.mubr.f32.mxu0 %v1608
      %1933 = vmatmul.mubr.f32.gmra.mrb[0].mxu0 %v1607
      %v1934 = vpop.f32.mrb[0].mxu0
      %v1935 = vadd.f32 %v1705, %v1934
      %v1936 = vpop.f32.mrb[0].mxu0
      %1937 = vmatprep.mubr.f32.mxu0 %v1611
      %1938 = vmatmul.mubr.f32.gmra.mrb[0].mxu0 %v1610
      %v1939 = vpop.f32.mrb[0].mxu0
      %v1940 = vadd.f32 %v1705, %v1939
      %v1941 = vpop.f32.mrb[0].mxu0
      %1942 = vmatprep.mubr.f32.mxu0 %v1614
      %1943 = vmatmul.mubr.f32.gmra.mrb[0].mxu0 %v1613
      %v1944 = vpop.f32.mrb[0].mxu0
      %v1945 = vadd.f32 %v1705, %v1944
      %v1946 = vpop.f32.mrb[0].mxu0
      %1947 = vmatprep.mubr.f32.mxu0 %v1617
      %1948 = vmatmul.mubr.f32.gmra.mrb[0].mxu0 %v1616
      %v1949 = vpop.f32.mrb[0].mxu0
      %v1950 = vadd.f32 %v1705, %v1949
      %v1951 = vpop.f32.mrb[0].mxu0
      %1952 = vmatprep.mubr.f32.mxu0 %v1620
      %1953 = vmatmul.mubr.f32.gmra.mrb[0].mxu0 %v1619
      %v1954 = vpop.f32.mrb[0].mxu0
      %v1955 = vadd.f32 %v1705, %v1954
      %v1956 = vpop.f32.mrb[0].mxu0
      %1957 = vmatprep.mubr.f32.mxu0 %v1623
      %1958 = vmatmul.mubr.f32.gmra.mrb[0].mxu0 %v1622
      %v1959 = vpop.f32.mrb[0].mxu0
      %v1960 = vadd.f32 %v1705, %v1959
      %v1961 = vpop.f32.mrb[0].mxu0
      %1962 = vmatprep.mubr.f32.mxu0 %v1626
      %1963 = vmatmul.mubr.f32.gmra.mrb[0].mxu0 %v1625
      %v1964 = vpop.f32.mrb[0].mxu0
      %v1965 = vadd.f32 %v1705, %v1964
      %v1966 = vpop.f32.mrb[0].mxu0
      %1967 = vmatprep.mubr.f32.mxu0 %v1629
      %1968 = vmatmul.mubr.f32.gmra.mrb[0].mxu0 %v1628
      %v1969 = vpop.f32.mrb[0].mxu0
      %v1970 = vadd.f32 %v1705, %v1969
      %v1971 = vpop.f32.mrb[0].mxu0
      %1972 = vmatprep.mubr.f32.mxu0 %v1632
      %1973 = vmatmul.mubr.f32.gmra.mrb[0].mxu0 %v1631
      %v1974 = vpop.f32.mrb[0].mxu0
      %v1975 = vadd.f32 %v1705, %v1974
      %v1976 = vpop.f32.mrb[0].mxu0
      %1977 = vmatprep.mubr.f32.mxu0 %v1635
      %1978 = vmatmul.mubr.f32.gmra.mrb[0].mxu0 %v1634
      %v1979 = vpop.f32.mrb[0].mxu0
      %v1980 = vadd.f32 %v1705, %v1979
      %v1981 = vpop.f32.mrb[0].mxu0
      %1982 = vmatprep.mubr.f32.mxu0 %v1638
      %1983 = vmatmul.mubr.f32.gmra.mrb[0].mxu0 %v1637
      %v1984 = vpop.f32.mrb[0].mxu0
      %v1985 = vadd.f32 %v1705, %v1984
      %v1986 = vpop.f32.mrb[0].mxu0
      %1987 = vmatprep.mubr.f32.mxu0 %v1641
      %1988 = vmatmul.mubr.f32.gmra.mrb[0].mxu0 %v1640
      %v1989 = vpop.f32.mrb[0].mxu0
      %v1990 = vadd.f32 %v1705, %v1989
      %v1991 = vpop.f32.mrb[0].mxu0
      %1992 = vmatprep.mubr.f32.mxu0 %v1644
      %1993 = vmatmul.mubr.f32.gmra.mrb[0].mxu0 %v1643
      %v1994 = vpop.f32.mrb[0].mxu0
      %v1995 = vadd.f32 %v1705, %v1994
      %v1996 = vpop.f32.mrb[0].mxu0
      %1997 = vmatprep.mubr.f32.mxu0 %v1647
      %1998 = vmatmul.mubr.f32.gmra.mrb[0].mxu0 %v1646
      %v1999 = vpop.f32.mrb[0].mxu0
      %v2000 = vadd.f32 %v1705, %v1999
      %v2001 = vpop.f32.mrb[0].mxu0
      %2002 = vmatprep.mubr.f32.mxu0 %v1650
      %2003 = vmatmul.mubr.f32.gmra.mrb[0].mxu0 %v1649
      %v2004 = vpop.f32.mrb[0].mxu0
      %v2005 = vadd.f32 %v1705, %v2004
      %v2006 = vpop.f32.mrb[0].mxu0
      %2007 = vmatprep.mubr.f32.mxu0 %v1653
      %2008 = vmatmul.mubr.f32.gmra.mrb[0].mxu0 %v1652
      %v2009 = vpop.f32.mrb[0].mxu0
      %v2010 = vadd.f32 %v1705, %v2009
      %v2011 = vpop.f32.mrb[0].mxu0
      %2012 = vmatprep.mubr.f32.mxu0 %v1656
      %2013 = vmatmul.mubr.f32.gmra.mrb[0].mxu0 %v1655
      %v2014 = vpop.f32.mrb[0].mxu0
      %v2015 = vadd.f32 %v1705, %v2014
      %v2016 = vpop.f32.mrb[0].mxu0
      %2017 = vmatprep.mubr.f32.mxu0 %v1659
      %2018 = vmatmul.mubr.f32.gmra.mrb[0].mxu0 %v1658
      %v2019 = vpop.f32.mrb[0].mxu0
      %v2020 = vadd.f32 %v1705, %v2019
      %v2021 = vpop.f32.mrb[0].mxu0
      %2022 = vmatprep.mubr.f32.mxu0 %v1662
      %2023 = vmatmul.mubr.f32.gmra.mrb[0].mxu0 %v1661
      %v2024 = vpop.f32.mrb[0].mxu0
      %v2025 = vadd.f32 %v1705, %v2024
      %v2026 = vpop.f32.mrb[0].mxu0
      %2027 = vdwg.mxu0
      %2028 = vmatprep.subr.mxu0 0.0
      %2029 = vmatpush1.msra.mxu0 %v1696
      %2030 = vmatprep.subr.mxu0 0.0
      %2031 = vmatpush1.msra.mxu0 %v1697
      %2032 = vmatprep.subr.mxu0 0.0
      %2033 = vmatpush1.msra.mxu0 %v1698
      %2034 = vmatprep.subr.mxu0 0.0
      %2035 = vmatpush1.msra.mxu0 %v1699
      %2036 = vmatprep.subr.mxu0 0.0
      %2037 = vmatpush1.msra.mxu0 0.0
      %2038 = vmatprep.subr.mxu0 0.0
      %2039 = vmatpush1.msra.mxu0 0.0
      %2040 = vmatprep.subr.mxu0 0.0
      %2041 = vmatpush1.msra.mxu0 0.0
      %2042 = vmatprep.subr.mxu0 0.0
      %2043 = vmatpush1.msra.mxu0 0.0
      %2044 = vmatprep.subr.mxu0 0.0
      %2045 = vmatpush1.msra.mxu0 0.0
      %2046 = vmatprep.subr.mxu0 0.0
      %2047 = vmatpush1.msra.mxu0 0.0
      %2048 = vmatprep.subr.mxu0 0.0
      %2049 = vmatpush1.msra.mxu0 0.0
      %2050 = vmatprep.subr.mxu0 0.0
      %2051 = vmatpush1.msra.mxu0 0.0
      %2052 = vmatprep.subr.mxu0 0.0
      %2053 = vmatpush1.msra.mxu0 0.0
      %2054 = vmatprep.subr.mxu0 0.0
      %2055 = vmatpush1.msra.mxu0 0.0
      %2056 = vmatprep.subr.mxu0 0.0
      %2057 = vmatpush1.msra.mxu0 0.0
      %2058 = vmatprep.subr.mxu0 0.0
      %2059 = vmatpush1.msra.mxu0 0.0
      %2060 = vmatprep.subr.mxu0 0.0
      %2061 = vmatpush1.msra.mxu0 0.0
      %2062 = vmatprep.subr.mxu0 0.0
      %2063 = vmatpush1.msra.mxu0 0.0
      %2064 = vmatprep.subr.mxu0 0.0
      %2065 = vmatpush1.msra.mxu0 0.0
      %2066 = vmatprep.subr.mxu0 0.0
      %2067 = vmatpush1.msra.mxu0 0.0
      %2068 = vmatprep.subr.mxu0 0.0
      %2069 = vmatpush1.msra.mxu0 0.0
      %2070 = vmatprep.subr.mxu0 0.0
      %2071 = vmatpush1.msra.mxu0 0.0
      %2072 = vmatprep.subr.mxu0 0.0
      %2073 = vmatpush1.msra.mxu0 0.0
      %2074 = vmatprep.subr.mxu0 0.0
      %2075 = vmatpush1.msra.mxu0 0.0
      %2076 = vmatprep.subr.mxu0 0.0
      %2077 = vmatpush1.msra.mxu0 0.0
      %2078 = vmatprep.subr.mxu0 0.0
      %2079 = vmatpush1.msra.mxu0 0.0
      %2080 = vmatprep.subr.mxu0 0.0
      %2081 = vmatpush1.msra.mxu0 0.0
      %2082 = vmatprep.subr.mxu0 0.0
      %2083 = vmatpush1.msra.mxu0 0.0
      %2084 = vmatprep.subr.mxu0 0.0
      %2085 = vmatpush1.msra.mxu0 0.0
      %2086 = vmatprep.subr.mxu0 0.0
      %2087 = vmatpush1.msra.mxu0 0.0
      %2088 = vmatprep.subr.mxu0 0.0
      %2089 = vmatpush1.msra.mxu0 0.0
      %2090 = vmatprep.subr.mxu0 0.0
      %2091 = vmatpush1.msra.mxu0 0.0
      %2092 = vmatprep.mubr.f32.mxu0 0.0
      %2093 = vmatmul.mubr.f32.gmra.mrb[0].mxu0 %v1708
      %v2094 = vpop.f32.mrb[0].mxu0
      %v2095 = vadd.f32 %v1870, %v2094
      %v2096 = vpop.f32.mrb[0].mxu0
      %2097 = vmatprep.mubr.f32.mxu0 0.0
      %2098 = vmatmul.mubr.f32.gmra.mrb[0].mxu0 %v1711
      %v2099 = vpop.f32.mrb[0].mxu0
      %v2100 = vadd.f32 %v1875, %v2099
      %v2101 = vpop.f32.mrb[0].mxu0
      %2102 = vmatprep.mubr.f32.mxu0 0.0
      %2103 = vmatmul.mubr.f32.gmra.mrb[0].mxu0 %v1714
      %v2104 = vpop.f32.mrb[0].mxu0
      %v2105 = vadd.f32 %v1880, %v2104
      %v2106 = vpop.f32.mrb[0].mxu0
      %2107 = vmatprep.mubr.f32.mxu0 0.0
      %2108 = vmatmul.mubr.f32.gmra.mrb[0].mxu0 %v1717
      %v2109 = vpop.f32.mrb[0].mxu0
      %v2110 = vadd.f32 %v1885, %v2109
      %v2111 = vpop.f32.mrb[0].mxu0
      %2112 = vmatprep.mubr.f32.mxu0 0.0
      %2113 = vmatmul.mubr.f32.gmra.mrb[0].mxu0 %v1720
      %v2114 = vpop.f32.mrb[0].mxu0
      %v2115 = vadd.f32 %v1890, %v2114
      %v2116 = vpop.f32.mrb[0].mxu0
      %2117 = vmatprep.mubr.f32.mxu0 0.0
      %2118 = vmatmul.mubr.f32.gmra.mrb[0].mxu0 %v1723
      %v2119 = vpop.f32.mrb[0].mxu0
      %v2120 = vadd.f32 %v1895, %v2119
      %v2121 = vpop.f32.mrb[0].mxu0
      %2122 = vmatprep.mubr.f32.mxu0 0.0
      %2123 = vmatmul.mubr.f32.gmra.mrb[0].mxu0 %v1726
      %v2124 = vpop.f32.mrb[0].mxu0
      %v2125 = vadd.f32 %v1900, %v2124
      %v2126 = vpop.f32.mrb[0].mxu0
      %2127 = vmatprep.mubr.f32.mxu0 0.0
      %2128 = vmatmul.mubr.f32.gmra.mrb[0].mxu0 %v1729
      %v2129 = vpop.f32.mrb[0].mxu0
      %v2130 = vadd.f32 %v1905, %v2129
      %v2131 = vpop.f32.mrb[0].mxu0
      %2132 = vmatprep.mubr.f32.mxu0 0.0
      %2133 = vmatmul.mubr.f32.gmra.mrb[0].mxu0 %v1732
      %v2134 = vpop.f32.mrb[0].mxu0
      %v2135 = vadd.f32 %v1910, %v2134
      %v2136 = vpop.f32.mrb[0].mxu0
      %2137 = vmatprep.mubr.f32.mxu0 0.0
      %2138 = vmatmul.mubr.f32.gmra.mrb[0].mxu0 %v1735
      %v2139 = vpop.f32.mrb[0].mxu0
      %v2140 = vadd.f32 %v1915, %v2139
      %v2141 = vpop.f32.mrb[0].mxu0
      %2142 = vmatprep.mubr.f32.mxu0 0.0
      %2143 = vmatmul.mubr.f32.gmra.mrb[0].mxu0 %v1738
      %v2144 = vpop.f32.mrb[0].mxu0
      %v2145 = vadd.f32 %v1920, %v2144
      %v2146 = vpop.f32.mrb[0].mxu0
      %2147 = vmatprep.mubr.f32.mxu0 0.0
      %2148 = vmatmul.mubr.f32.gmra.mrb[0].mxu0 %v1741
      %v2149 = vpop.f32.mrb[0].mxu0
      %v2150 = vadd.f32 %v1925, %v2149
      %v2151 = vpop.f32.mrb[0].mxu0
      %2152 = vmatprep.mubr.f32.mxu0 0.0
      %2153 = vmatmul.mubr.f32.gmra.mrb[0].mxu0 %v1744
      %v2154 = vpop.f32.mrb[0].mxu0
      %v2155 = vadd.f32 %v1930, %v2154
      %v2156 = vpop.f32.mrb[0].mxu0
      %2157 = vmatprep.mubr.f32.mxu0 0.0
      %2158 = vmatmul.mubr.f32.gmra.mrb[0].mxu0 %v1747
      %v2159 = vpop.f32.mrb[0].mxu0
      %v2160 = vadd.f32 %v1935, %v2159
      %v2161 = vpop.f32.mrb[0].mxu0
      %2162 = vmatprep.mubr.f32.mxu0 0.0
      %2163 = vmatmul.mubr.f32.gmra.mrb[0].mxu0 %v1750
      %v2164 = vpop.f32.mrb[0].mxu0
      %v2165 = vadd.f32 %v1940, %v2164
      %v2166 = vpop.f32.mrb[0].mxu0
      %2167 = vmatprep.mubr.f32.mxu0 0.0
      %2168 = vmatmul.mubr.f32.gmra.mrb[0].mxu0 %v1753
      %v2169 = vpop.f32.mrb[0].mxu0
      %v2170 = vadd.f32 %v1945, %v2169
      %v2171 = vpop.f32.mrb[0].mxu0
      %2172 = vmatprep.mubr.f32.mxu0 0.0
      %2173 = vmatmul.mubr.f32.gmra.mrb[0].mxu0 %v1756
      %v2174 = vpop.f32.mrb[0].mxu0
      %v2175 = vadd.f32 %v1950, %v2174
      %v2176 = vpop.f32.mrb[0].mxu0
      %2177 = vmatprep.mubr.f32.mxu0 0.0
      %2178 = vmatmul.mubr.f32.gmra.mrb[0].mxu0 %v1759
      %v2179 = vpop.f32.mrb[0].mxu0
      %v2180 = vadd.f32 %v1955, %v2179
      %v2181 = vpop.f32.mrb[0].mxu0
      %2182 = vmatprep.mubr.f32.mxu0 0.0
      %2183 = vmatmul.mubr.f32.gmra.mrb[0].mxu0 %v1762
      %v2184 = vpop.f32.mrb[0].mxu0
      %v2185 = vadd.f32 %v1960, %v2184
      %v2186 = vpop.f32.mrb[0].mxu0
      %2187 = vmatprep.mubr.f32.mxu0 0.0
      %2188 = vmatmul.mubr.f32.gmra.mrb[0].mxu0 %v1765
      %v2189 = vpop.f32.mrb[0].mxu0
      %v2190 = vadd.f32 %v1965, %v2189
      %v2191 = vpop.f32.mrb[0].mxu0
      %2192 = vmatprep.mubr.f32.mxu0 0.0
      %2193 = vmatmul.mubr.f32.gmra.mrb[0].mxu0 %v1768
      %v2194 = vpop.f32.mrb[0].mxu0
      %v2195 = vadd.f32 %v1970, %v2194
      %v2196 = vpop.f32.mrb[0].mxu0
      %2197 = vmatprep.mubr.f32.mxu0 0.0
      %2198 = vmatmul.mubr.f32.gmra.mrb[0].mxu0 %v1771
      %v2199 = vpop.f32.mrb[0].mxu0
      %v2200 = vadd.f32 %v1975, %v2199
      %v2201 = vpop.f32.mrb[0].mxu0
      %2202 = vmatprep.mubr.f32.mxu0 0.0
      %2203 = vmatmul.mubr.f32.gmra.mrb[0].mxu0 %v1774
      %v2204 = vpop.f32.mrb[0].mxu0
      %v2205 = vadd.f32 %v1980, %v2204
      %v2206 = vpop.f32.mrb[0].mxu0
      %2207 = vmatprep.mubr.f32.mxu0 0.0
      %2208 = vmatmul.mubr.f32.gmra.mrb[0].mxu0 %v1777
      %v2209 = vpop.f32.mrb[0].mxu0
      %v2210 = vadd.f32 %v1985, %v2209
      %v2211 = vpop.f32.mrb[0].mxu0
      %2212 = vmatprep.mubr.f32.mxu0 0.0
      %2213 = vmatmul.mubr.f32.gmra.mrb[0].mxu0 %v1780
      %v2214 = vpop.f32.mrb[0].mxu0
      %v2215 = vadd.f32 %v1990, %v2214
      %v2216 = vpop.f32.mrb[0].mxu0
      %2217 = vmatprep.mubr.f32.mxu0 0.0
      %2218 = vmatmul.mubr.f32.gmra.mrb[0].mxu0 %v1783
      %v2219 = vpop.f32.mrb[0].mxu0
      %v2220 = vadd.f32 %v1995, %v2219
      %v2221 = vpop.f32.mrb[0].mxu0
      %2222 = vmatprep.mubr.f32.mxu0 0.0
      %2223 = vmatmul.mubr.f32.gmra.mrb[0].mxu0 %v1786
      %v2224 = vpop.f32.mrb[0].mxu0
      %v2225 = vadd.f32 %v2000, %v2224
      %v2226 = vpop.f32.mrb[0].mxu0
      %2227 = vmatprep.mubr.f32.mxu0 0.0
      %2228 = vmatmul.mubr.f32.gmra.mrb[0].mxu0 %v1789
      %v2229 = vpop.f32.mrb[0].mxu0
      %v2230 = vadd.f32 %v2005, %v2229
      %v2231 = vpop.f32.mrb[0].mxu0
      %2232 = vmatprep.mubr.f32.mxu0 0.0
      %2233 = vmatmul.mubr.f32.gmra.mrb[0].mxu0 %v1792
      %v2234 = vpop.f32.mrb[0].mxu0
      %v2235 = vadd.f32 %v2010, %v2234
      %v2236 = vpop.f32.mrb[0].mxu0
      %2237 = vmatprep.mubr.f32.mxu0 0.0
      %2238 = vmatmul.mubr.f32.gmra.mrb[0].mxu0 %v1795
      %v2239 = vpop.f32.mrb[0].mxu0
      %v2240 = vadd.f32 %v2015, %v2239
      %v2241 = vpop.f32.mrb[0].mxu0
      %2242 = vmatprep.mubr.f32.mxu0 0.0
      %2243 = vmatmul.mubr.f32.gmra.mrb[0].mxu0 %v1798
      %v2244 = vpop.f32.mrb[0].mxu0
      %v2245 = vadd.f32 %v2020, %v2244
      %v2246 = vpop.f32.mrb[0].mxu0
      %2247 = vmatprep.mubr.f32.mxu0 0.0
      %2248 = vmatmul.mubr.f32.gmra.mrb[0].mxu0 %v1801
      %v2249 = vpop.f32.mrb[0].mxu0
      %v2250 = vadd.f32 %v2025, %v2249
      %v2251 = vpop.f32.mrb[0].mxu0
      %2252 = vdwg.mxu0
      %v2253 = vmax.f32 %v2095, 0.0
      %v2254 = vmax.f32 %v2100, 0.0
      %v2255 = vmax.f32 %v2105, 0.0
      %v2256 = vmax.f32 %v2110, 0.0
      %v2257 = vmax.f32 %v2115, 0.0
      %v2258 = vmax.f32 %v2120, 0.0
      %v2259 = vmax.f32 %v2125, 0.0
      %v2260 = vmax.f32 %v2130, 0.0
      %v2261 = vmax.f32 %v2135, 0.0
      %v2262 = vmax.f32 %v2140, 0.0
      %v2263 = vmax.f32 %v2145, 0.0
      %v2264 = vmax.f32 %v2150, 0.0
      %v2265 = vmax.f32 %v2155, 0.0
      %v2266 = vmax.f32 %v2160, 0.0
      %v2267 = vmax.f32 %v2165, 0.0
      %v2268 = vmax.f32 %v2170, 0.0
      %v2269 = vmax.f32 %v2175, 0.0
      %v2270 = vmax.f32 %v2180, 0.0
      %v2271 = vmax.f32 %v2185, 0.0
      %v2272 = vmax.f32 %v2190, 0.0
      %v2273 = vmax.f32 %v2195, 0.0
      %v2274 = vmax.f32 %v2200, 0.0
      %v2275 = vmax.f32 %v2205, 0.0
      %v2276 = vmax.f32 %v2210, 0.0
      %v2277 = vmax.f32 %v2215, 0.0
      %v2278 = vmax.f32 %v2220, 0.0
      %v2279 = vmax.f32 %v2225, 0.0
      %v2280 = vmax.f32 %v2230, 0.0
      %v2281 = vmax.f32 %v2235, 0.0
      %v2282 = vmax.f32 %v2240, 0.0
      %v2283 = vmax.f32 %v2245, 0.0
      %v2284 = vmax.f32 %v2250, 0.0
      %s2285 = scalar_lea.vmem [#allocation3], 24
      %2286 = vst.msk [vmem:[%s2285 + $0x1] sm:$0xff] %vm171, %v2253
      %2287 = vst.msk [vmem:[%s2285 + $0x9] sm:$0xff] %vm171, %v2254
      %2288 = vst.msk [vmem:[%s2285 + $0x19] sm:$0xff] %vm171, %v2255
      %2289 = vst.msk [vmem:[%s2285 + $0x21] sm:$0xff] %vm171, %v2256
      %2290 = vst.msk [vmem:[%s2285 + $0x31] sm:$0xff] %vm171, %v2257
      %2291 = vst.msk [vmem:[%s2285 + $0x39] sm:$0xff] %vm171, %v2258
      %2292 = vst.msk [vmem:[%s2285 + $0x49] sm:$0xff] %vm171, %v2259
      %2293 = vst.msk [vmem:[%s2285 + $0x51] sm:$0xff] %vm171, %v2260
      %2294 = vst.msk [vmem:[%s2285 + $0x61] sm:$0xff] %vm171, %v2261
      %2295 = vst.msk [vmem:[%s2285 + $0x69] sm:$0xff] %vm171, %v2262
      %2296 = vst.msk [vmem:[%s2285 + $0x79] sm:$0xff] %vm171, %v2263
      %2297 = vst.msk [vmem:[%s2285 + $0x81] sm:$0xff] %vm171, %v2264
      %2298 = vst.msk [vmem:[%s2285 + $0x91] sm:$0xff] %vm171, %v2265
      %2299 = vst.msk [vmem:[%s2285 + $0x99] sm:$0xff] %vm171, %v2266
      %2300 = vst.msk [vmem:[%s2285 + $0xa9] sm:$0xff] %vm171, %v2267
      %2301 = vst.msk [vmem:[%s2285 + $0xb1] sm:$0xff] %vm171, %v2268
      %2302 = vst.msk [vmem:[%s2285 + $0xc1] sm:$0xff] %vm171, %v2269
      %2303 = vst.msk [vmem:[%s2285 + $0xc9] sm:$0xff] %vm171, %v2270
      %2304 = vst.msk [vmem:[%s2285 + $0xd9] sm:$0xff] %vm171, %v2271
      %2305 = vst.msk [vmem:[%s2285 + $0xe1] sm:$0xff] %vm171, %v2272
      %2306 = vst.msk [vmem:[%s2285 + $0xf1] sm:$0xff] %vm171, %v2273
      %2307 = vst.msk [vmem:[%s2285 + $0xf9] sm:$0xff] %vm171, %v2274
      %2308 = vst.msk [vmem:[%s2285 + $0x109] sm:$0xff] %vm171, %v2275
      %2309 = vst.msk [vmem:[%s2285 + $0x111] sm:$0xff] %vm171, %v2276
      %2310 = vst.msk [vmem:[%s2285 + $0x121] sm:$0xff] %vm171, %v2277
      %2311 = vst.msk [vmem:[%s2285 + $0x129] sm:$0xff] %vm171, %v2278
      %2312 = vst.msk [vmem:[%s2285 + $0x139] sm:$0xff] %vm171, %v2279
      %2313 = vst.msk [vmem:[%s2285 + $0x141] sm:$0xff] %vm171, %v2280
      %2314 = vst.msk [vmem:[%s2285 + $0x151] sm:$0xff] %vm171, %v2281
      %2315 = vst.msk [vmem:[%s2285 + $0x159] sm:$0xff] %vm171, %v2282
      %2316 = vst.msk [vmem:[%s2285 + $0x169] sm:$0xff] %vm171, %v2283
      %2317 = vst.msk [vmem:[%s2285 + $0x171] sm:$0xff] %vm171, %v2284
      %v2318 = vld [vmem:[#allocation3] sm:$0xff]
      %v2319 = vld [vmem:[#allocation3 + $0x8] sm:$0xff]
      %v2320 = vld [vmem:[#allocation3 + $0x10] sm:$0x3]
      %v2321 = vld [vmem:[#allocation3 + $0x18] sm:$0xff]
      %v2322 = vld [vmem:[#allocation3 + $0x20] sm:$0xff]
      %v2323 = vld [vmem:[#allocation3 + $0x28] sm:$0x3]
      %v2324 = vld [vmem:[#allocation3 + $0x30] sm:$0xff]
      %v2325 = vld [vmem:[#allocation3 + $0x38] sm:$0xff]
      %v2326 = vld [vmem:[#allocation3 + $0x40] sm:$0x3]
      %v2327 = vld [vmem:[#allocation3 + $0x48] sm:$0xff]
      %v2328 = vld [vmem:[#allocation3 + $0x50] sm:$0xff]
      %v2329 = vld [vmem:[#allocation3 + $0x58] sm:$0x3]
      %v2330 = vld [vmem:[#allocation3 + $0x60] sm:$0xff]
      %v2331 = vld [vmem:[#allocation3 + $0x68] sm:$0xff]
      %v2332 = vld [vmem:[#allocation3 + $0x70] sm:$0x3]
      %v2333 = vld [vmem:[#allocation3 + $0x78] sm:$0xff]
      %v2334 = vld [vmem:[#allocation3 + $0x80] sm:$0xff]
      %v2335 = vld [vmem:[#allocation3 + $0x88] sm:$0x3]
      %v2336 = vld [vmem:[#allocation3 + $0x90] sm:$0xff]
      %v2337 = vld [vmem:[#allocation3 + $0x98] sm:$0xff]
      %v2338 = vld [vmem:[#allocation3 + $0xa0] sm:$0x3]
      %v2339 = vld [vmem:[#allocation3 + $0xa8] sm:$0xff]
      %v2340 = vld [vmem:[#allocation3 + $0xb0] sm:$0xff]
      %v2341 = vld [vmem:[#allocation3 + $0xb8] sm:$0x3]
      %v2342 = vld [vmem:[#allocation3 + $0xc0] sm:$0xff]
      %v2343 = vld [vmem:[#allocation3 + $0xc8] sm:$0xff]
      %v2344 = vld [vmem:[#allocation3 + $0xd0] sm:$0x3]
      %v2345 = vld [vmem:[#allocation3 + $0xd8] sm:$0xff]
      %v2346 = vld [vmem:[#allocation3 + $0xe0] sm:$0xff]
      %v2347 = vld [vmem:[#allocation3 + $0xe8] sm:$0x3]
      %v2348 = vld [vmem:[#allocation3 + $0xf0] sm:$0xff]
      %v2349 = vld [vmem:[#allocation3 + $0xf8] sm:$0xff]
      %v2350 = vld [vmem:[#allocation3 + $0x100] sm:$0x3]
      %v2351 = vld [vmem:[#allocation3 + $0x108] sm:$0xff]
      %v2352 = vld [vmem:[#allocation3 + $0x110] sm:$0xff]
      %v2353 = vld [vmem:[#allocation3 + $0x118] sm:$0x3]
      %v2354 = vld [vmem:[#allocation3 + $0x120] sm:$0xff]
      %v2355 = vld [vmem:[#allocation3 + $0x128] sm:$0xff]
      %v2356 = vld [vmem:[#allocation3 + $0x130] sm:$0x3]
      %v2357 = vld [vmem:[#allocation3 + $0x138] sm:$0xff]
      %v2358 = vld [vmem:[#allocation3 + $0x140] sm:$0xff]
      %v2359 = vld [vmem:[#allocation3 + $0x148] sm:$0x3]
      %v2360 = vld [vmem:[#allocation3 + $0x150] sm:$0xff]
      %v2361 = vld [vmem:[#allocation3 + $0x158] sm:$0xff]
      %v2362 = vld [vmem:[#allocation3 + $0x160] sm:$0x3]
      %v2363 = vld [vmem:[#allocation3 + $0x168] sm:$0xff]
      %v2364 = vld [vmem:[#allocation3 + $0x170] sm:$0xff]
      %v2365 = vld [vmem:[#allocation3 + $0x178] sm:$0x3]
      %v2366 = vld [vmem:[#allocation3 + $0x180] sm:$0xff]
      %v2367 = vld [vmem:[#allocation3 + $0x188] sm:$0xff]
      %v2368 = vld [vmem:[#allocation3 + $0x190] sm:$0x3]
      %v2369 = vld [vmem:[#allocation3 + $0x198] sm:$0xff]
      %v2370 = vld [vmem:[#allocation3 + $0x1a0] sm:$0xff]
      %v2371 = vld [vmem:[#allocation3 + $0x1a8] sm:$0x3]
      %2372 = vst.msk [vmem:[#allocation4] sm:$0xff] %vm171, %v2318
      %2373 = vst.msk [vmem:[#allocation4 + $0x18] sm:$0xff] %vm171, %v2319
      %2374 = vst.msk [vmem:[#allocation4 + $0x30] sm:$0xff] %vm171, %v2321
      %2375 = vst.msk [vmem:[#allocation4 + $0x48] sm:$0xff] %vm171, %v2322
      %2376 = vst.msk [vmem:[#allocation4 + $0x60] sm:$0xff] %vm171, %v2324
      %2377 = vst.msk [vmem:[#allocation4 + $0x78] sm:$0xff] %vm171, %v2325
      %2378 = vst.msk [vmem:[#allocation4 + $0x90] sm:$0xff] %vm171, %v2327
      %2379 = vst.msk [vmem:[#allocation4 + $0xa8] sm:$0xff] %vm171, %v2328
      %2380 = vst.msk [vmem:[#allocation4 + $0xc0] sm:$0xff] %vm171, %v2330
      %2381 = vst.msk [vmem:[#allocation4 + $0xd8] sm:$0xff] %vm171, %v2331
      %2382 = vst.msk [vmem:[#allocation4 + $0xf0] sm:$0xff] %vm171, %v2333
      %2383 = vst.msk [vmem:[#allocation4 + $0x108] sm:$0xff] %vm171, %v2334
      %2384 = vst.msk [vmem:[#allocation4 + $0x120] sm:$0xff] %vm171, %v2336
      %2385 = vst.msk [vmem:[#allocation4 + $0x138] sm:$0xff] %vm171, %v2337
      %2386 = vst.msk [vmem:[#allocation4 + $0x150] sm:$0xff] %vm171, %v2339
      %2387 = vst.msk [vmem:[#allocation4 + $0x168] sm:$0xff] %vm171, %v2340
      %2388 = vst.msk [vmem:[#allocation4 + $0x180] sm:$0xff] %vm171, %v2342
      %2389 = vst.msk [vmem:[#allocation4 + $0x198] sm:$0xff] %vm171, %v2343
      %2390 = vst.msk [vmem:[#allocation4 + $0x1b0] sm:$0xff] %vm171, %v2345
      %2391 = vst.msk [vmem:[#allocation4 + $0x1c8] sm:$0xff] %vm171, %v2346
      %2392 = vst.msk [vmem:[#allocation4 + $0x1e0] sm:$0xff] %vm171, %v2348
      %2393 = vst.msk [vmem:[#allocation4 + $0x1f8] sm:$0xff] %vm171, %v2349
      %2394 = vst.msk [vmem:[#allocation4 + $0x210] sm:$0xff] %vm171, %v2351
      %2395 = vst.msk [vmem:[#allocation4 + $0x228] sm:$0xff] %vm171, %v2352
      %2396 = vst.msk [vmem:[#allocation4 + $0x240] sm:$0xff] %vm171, %v2354
      %2397 = vst.msk [vmem:[#allocation4 + $0x258] sm:$0xff] %vm171, %v2355
      %2398 = vst.msk [vmem:[#allocation4 + $0x270] sm:$0xff] %vm171, %v2357
      %2399 = vst.msk [vmem:[#allocation4 + $0x288] sm:$0xff] %vm171, %v2358
      %2400 = vst.msk [vmem:[#allocation4 + $0x2a0] sm:$0xff] %vm171, %v2360
      %2401 = vst.msk [vmem:[#allocation4 + $0x2b8] sm:$0xff] %vm171, %v2361
      %2402 = vst.msk [vmem:[#allocation4 + $0x2d0] sm:$0xff] %vm171, %v2363
      %2403 = vst.msk [vmem:[#allocation4 + $0x2e8] sm:$0xff] %vm171, %v2364
      %2436 = vrot.lane.b32.xlu0 %v2321, 96
      %v2437 = vpop.permute.xlu0 %2436
      %2438 = vrot.lane.b32.xlu0 %v2322, 96
      %v2439 = vpop.permute.xlu0 %2438
      %2440 = vrot.lane.b32.xlu0 %v2324, 96
      %v2441 = vpop.permute.xlu0 %2440
      %2442 = vrot.lane.b32.xlu0 %v2325, 96
      %v2443 = vpop.permute.xlu0 %2442
      %2444 = vrot.lane.b32.xlu0 %v2327, 96
      %v2445 = vpop.permute.xlu0 %2444
      %2446 = vrot.lane.b32.xlu0 %v2328, 96
      %v2447 = vpop.permute.xlu0 %2446
      %2448 = vrot.lane.b32.xlu0 %v2330, 96
      %v2449 = vpop.permute.xlu0 %2448
      %2450 = vrot.lane.b32.xlu0 %v2331, 96
      %v2451 = vpop.permute.xlu0 %2450
      %2452 = vrot.lane.b32.xlu0 %v2333, 96
      %v2453 = vpop.permute.xlu0 %2452
      %2454 = vrot.lane.b32.xlu0 %v2334, 96
      %v2455 = vpop.permute.xlu0 %2454
      %2456 = vrot.lane.b32.xlu0 %v2336, 96
      %v2457 = vpop.permute.xlu0 %2456
      %2458 = vrot.lane.b32.xlu0 %v2337, 96
      %v2459 = vpop.permute.xlu0 %2458
      %2460 = vrot.lane.b32.xlu0 %v2339, 96
      %v2461 = vpop.permute.xlu0 %2460
      %2462 = vrot.lane.b32.xlu0 %v2340, 96
      %v2463 = vpop.permute.xlu0 %2462
      %2464 = vrot.lane.b32.xlu0 %v2342, 96
      %v2465 = vpop.permute.xlu0 %2464
      %2466 = vrot.lane.b32.xlu0 %v2343, 96
      %v2467 = vpop.permute.xlu0 %2466
      %2468 = vrot.lane.b32.xlu0 %v2345, 96
      %v2469 = vpop.permute.xlu0 %2468
      %2470 = vrot.lane.b32.xlu0 %v2346, 96
      %v2471 = vpop.permute.xlu0 %2470
      %2472 = vrot.lane.b32.xlu0 %v2348, 96
      %v2473 = vpop.permute.xlu0 %2472
      %2474 = vrot.lane.b32.xlu0 %v2349, 96
      %v2475 = vpop.permute.xlu0 %2474
      %2476 = vrot.lane.b32.xlu0 %v2351, 96
      %v2477 = vpop.permute.xlu0 %2476
      %2478 = vrot.lane.b32.xlu0 %v2352, 96
      %v2479 = vpop.permute.xlu0 %2478
      %2480 = vrot.lane.b32.xlu0 %v2354, 96
      %v2481 = vpop.permute.xlu0 %2480
      %2482 = vrot.lane.b32.xlu0 %v2355, 96
      %v2483 = vpop.permute.xlu0 %2482
      %2484 = vrot.lane.b32.xlu0 %v2357, 96
      %v2485 = vpop.permute.xlu0 %2484
      %2486 = vrot.lane.b32.xlu0 %v2358, 96
      %v2487 = vpop.permute.xlu0 %2486
      %2488 = vrot.lane.b32.xlu0 %v2360, 96
      %v2489 = vpop.permute.xlu0 %2488
      %2490 = vrot.lane.b32.xlu0 %v2361, 96
      %v2491 = vpop.permute.xlu0 %2490
      %2492 = vrot.lane.b32.xlu0 %v2363, 96
      %v2493 = vpop.permute.xlu0 %2492
      %2494 = vrot.lane.b32.xlu0 %v2364, 96
      %v2495 = vpop.permute.xlu0 %2494
      %2496 = vrot.lane.b32.xlu0 %v2366, 96
      %v2497 = vpop.permute.xlu0 %2496
      %2498 = vrot.lane.b32.xlu0 %v2367, 96
      %v2499 = vpop.permute.xlu0 %2498
      %2532 = vst.msk [vmem:[#allocation4] sm:$0xff] %vm561, %v2437
      %2533 = vst.msk [vmem:[#allocation4 + $0x18] sm:$0xff] %vm561, %v2439
      %2534 = vst.msk [vmem:[#allocation4 + $0x30] sm:$0xff] %vm561, %v2441
      %2535 = vst.msk [vmem:[#allocation4 + $0x48] sm:$0xff] %vm561, %v2443
      %2536 = vst.msk [vmem:[#allocation4 + $0x60] sm:$0xff] %vm561, %v2445
      %2537 = vst.msk [vmem:[#allocation4 + $0x78] sm:$0xff] %vm561, %v2447
      %2538 = vst.msk [vmem:[#allocation4 + $0x90] sm:$0xff] %vm561, %v2449
      %2539 = vst.msk [vmem:[#allocation4 + $0xa8] sm:$0xff] %vm561, %v2451
      %2540 = vst.msk [vmem:[#allocation4 + $0xc0] sm:$0xff] %vm561, %v2453
      %2541 = vst.msk [vmem:[#allocation4 + $0xd8] sm:$0xff] %vm561, %v2455
      %2542 = vst.msk [vmem:[#allocation4 + $0xf0] sm:$0xff] %vm561, %v2457
      %2543 = vst.msk [vmem:[#allocation4 + $0x108] sm:$0xff] %vm561, %v2459
      %2544 = vst.msk [vmem:[#allocation4 + $0x120] sm:$0xff] %vm561, %v2461
      %2545 = vst.msk [vmem:[#allocation4 + $0x138] sm:$0xff] %vm561, %v2463
      %2546 = vst.msk [vmem:[#allocation4 + $0x150] sm:$0xff] %vm561, %v2465
      %2547 = vst.msk [vmem:[#allocation4 + $0x168] sm:$0xff] %vm561, %v2467
      %2548 = vst.msk [vmem:[#allocation4 + $0x180] sm:$0xff] %vm561, %v2469
      %2549 = vst.msk [vmem:[#allocation4 + $0x198] sm:$0xff] %vm561, %v2471
      %2550 = vst.msk [vmem:[#allocation4 + $0x1b0] sm:$0xff] %vm561, %v2473
      %2551 = vst.msk [vmem:[#allocation4 + $0x1c8] sm:$0xff] %vm561, %v2475
      %2552 = vst.msk [vmem:[#allocation4 + $0x1e0] sm:$0xff] %vm561, %v2477
      %2553 = vst.msk [vmem:[#allocation4 + $0x1f8] sm:$0xff] %vm561, %v2479
      %2554 = vst.msk [vmem:[#allocation4 + $0x210] sm:$0xff] %vm561, %v2481
      %2555 = vst.msk [vmem:[#allocation4 + $0x228] sm:$0xff] %vm561, %v2483
      %2556 = vst.msk [vmem:[#allocation4 + $0x240] sm:$0xff] %vm561, %v2485
      %2557 = vst.msk [vmem:[#allocation4 + $0x258] sm:$0xff] %vm561, %v2487
      %2558 = vst.msk [vmem:[#allocation4 + $0x270] sm:$0xff] %vm561, %v2489
      %2559 = vst.msk [vmem:[#allocation4 + $0x288] sm:$0xff] %vm561, %v2491
      %2560 = vst.msk [vmem:[#allocation4 + $0x2a0] sm:$0xff] %vm561, %v2493
      %2561 = vst.msk [vmem:[#allocation4 + $0x2b8] sm:$0xff] %vm561, %v2495
      %2562 = vst.msk [vmem:[#allocation4 + $0x2d0] sm:$0xff] %vm561, %v2497
      %2563 = vst.msk [vmem:[#allocation4 + $0x2e8] sm:$0xff] %vm561, %v2499
      %2566 = vrot.lane.b32.xlu0 %v2324, 64
      %v2567 = vpop.permute.xlu0 %2566
      %2568 = vrot.lane.b32.xlu0 %v2325, 64
      %v2569 = vpop.permute.xlu0 %2568
      %2570 = vrot.lane.b32.xlu0 %v2327, 64
      %v2571 = vpop.permute.xlu0 %2570
      %2572 = vrot.lane.b32.xlu0 %v2328, 64
      %v2573 = vpop.permute.xlu0 %2572
      %2574 = vrot.lane.b32.xlu0 %v2330, 64
      %v2575 = vpop.permute.xlu0 %2574
      %2576 = vrot.lane.b32.xlu0 %v2331, 64
      %v2577 = vpop.permute.xlu0 %2576
      %2578 = vrot.lane.b32.xlu0 %v2333, 64
      %v2579 = vpop.permute.xlu0 %2578
      %2580 = vrot.lane.b32.xlu0 %v2334, 64
      %v2581 = vpop.permute.xlu0 %2580
      %2582 = vrot.lane.b32.xlu0 %v2336, 64
      %v2583 = vpop.permute.xlu0 %2582
      %2584 = vrot.lane.b32.xlu0 %v2337, 64
      %v2585 = vpop.permute.xlu0 %2584
      %2586 = vrot.lane.b32.xlu0 %v2339, 64
      %v2587 = vpop.permute.xlu0 %2586
      %2588 = vrot.lane.b32.xlu0 %v2340, 64
      %v2589 = vpop.permute.xlu0 %2588
      %2590 = vrot.lane.b32.xlu0 %v2342, 64
      %v2591 = vpop.permute.xlu0 %2590
      %2592 = vrot.lane.b32.xlu0 %v2343, 64
      %v2593 = vpop.permute.xlu0 %2592
      %2594 = vrot.lane.b32.xlu0 %v2345, 64
      %v2595 = vpop.permute.xlu0 %2594
      %2596 = vrot.lane.b32.xlu0 %v2346, 64
      %v2597 = vpop.permute.xlu0 %2596
      %2598 = vrot.lane.b32.xlu0 %v2348, 64
      %v2599 = vpop.permute.xlu0 %2598
      %2600 = vrot.lane.b32.xlu0 %v2349, 64
      %v2601 = vpop.permute.xlu0 %2600
      %2602 = vrot.lane.b32.xlu0 %v2351, 64
      %v2603 = vpop.permute.xlu0 %2602
      %2604 = vrot.lane.b32.xlu0 %v2352, 64
      %v2605 = vpop.permute.xlu0 %2604
      %2606 = vrot.lane.b32.xlu0 %v2354, 64
      %v2607 = vpop.permute.xlu0 %2606
      %2608 = vrot.lane.b32.xlu0 %v2355, 64
      %v2609 = vpop.permute.xlu0 %2608
      %2610 = vrot.lane.b32.xlu0 %v2357, 64
      %v2611 = vpop.permute.xlu0 %2610
      %2612 = vrot.lane.b32.xlu0 %v2358, 64
      %v2613 = vpop.permute.xlu0 %2612
      %2614 = vrot.lane.b32.xlu0 %v2360, 64
      %v2615 = vpop.permute.xlu0 %2614
      %2616 = vrot.lane.b32.xlu0 %v2361, 64
      %v2617 = vpop.permute.xlu0 %2616
      %2618 = vrot.lane.b32.xlu0 %v2363, 64
      %v2619 = vpop.permute.xlu0 %2618
      %2620 = vrot.lane.b32.xlu0 %v2364, 64
      %v2621 = vpop.permute.xlu0 %2620
      %2622 = vrot.lane.b32.xlu0 %v2366, 64
      %v2623 = vpop.permute.xlu0 %2622
      %2624 = vrot.lane.b32.xlu0 %v2367, 64
      %v2625 = vpop.permute.xlu0 %2624
      %2626 = vrot.lane.b32.xlu0 %v2369, 64
      %v2627 = vpop.permute.xlu0 %2626
      %2628 = vrot.lane.b32.xlu0 %v2370, 64
      %v2629 = vpop.permute.xlu0 %2628
      %2662 = vst.msk [vmem:[#allocation4 + $0x8] sm:$0xff] %vm692, %v2567
      %2663 = vst.msk [vmem:[#allocation4 + $0x20] sm:$0xff] %vm692, %v2569
      %2664 = vst.msk [vmem:[#allocation4 + $0x38] sm:$0xff] %vm692, %v2571
      %2665 = vst.msk [vmem:[#allocation4 + $0x50] sm:$0xff] %vm692, %v2573
      %2666 = vst.msk [vmem:[#allocation4 + $0x68] sm:$0xff] %vm692, %v2575
      %2667 = vst.msk [vmem:[#allocation4 + $0x80] sm:$0xff] %vm692, %v2577
      %2668 = vst.msk [vmem:[#allocation4 + $0x98] sm:$0xff] %vm692, %v2579
      %2669 = vst.msk [vmem:[#allocation4 + $0xb0] sm:$0xff] %vm692, %v2581
      %2670 = vst.msk [vmem:[#allocation4 + $0xc8] sm:$0xff] %vm692, %v2583
      %2671 = vst.msk [vmem:[#allocation4 + $0xe0] sm:$0xff] %vm692, %v2585
      %2672 = vst.msk [vmem:[#allocation4 + $0xf8] sm:$0xff] %vm692, %v2587
      %2673 = vst.msk [vmem:[#allocation4 + $0x110] sm:$0xff] %vm692, %v2589
      %2674 = vst.msk [vmem:[#allocation4 + $0x128] sm:$0xff] %vm692, %v2591
      %2675 = vst.msk [vmem:[#allocation4 + $0x140] sm:$0xff] %vm692, %v2593
      %2676 = vst.msk [vmem:[#allocation4 + $0x158] sm:$0xff] %vm692, %v2595
      %2677 = vst.msk [vmem:[#allocation4 + $0x170] sm:$0xff] %vm692, %v2597
      %2678 = vst.msk [vmem:[#allocation4 + $0x188] sm:$0xff] %vm692, %v2599
      %2679 = vst.msk [vmem:[#allocation4 + $0x1a0] sm:$0xff] %vm692, %v2601
      %2680 = vst.msk [vmem:[#allocation4 + $0x1b8] sm:$0xff] %vm692, %v2603
      %2681 = vst.msk [vmem:[#allocation4 + $0x1d0] sm:$0xff] %vm692, %v2605
      %2682 = vst.msk [vmem:[#allocation4 + $0x1e8] sm:$0xff] %vm692, %v2607
      %2683 = vst.msk [vmem:[#allocation4 + $0x200] sm:$0xff] %vm692, %v2609
      %2684 = vst.msk [vmem:[#allocation4 + $0x218] sm:$0xff] %vm692, %v2611
      %2685 = vst.msk [vmem:[#allocation4 + $0x230] sm:$0xff] %vm692, %v2613
      %2686 = vst.msk [vmem:[#allocation4 + $0x248] sm:$0xff] %vm692, %v2615
      %2687 = vst.msk [vmem:[#allocation4 + $0x260] sm:$0xff] %vm692, %v2617
      %2688 = vst.msk [vmem:[#allocation4 + $0x278] sm:$0xff] %vm692, %v2619
      %2689 = vst.msk [vmem:[#allocation4 + $0x290] sm:$0xff] %vm692, %v2621
      %2690 = vst.msk [vmem:[#allocation4 + $0x2a8] sm:$0xff] %vm692, %v2623
      %2691 = vst.msk [vmem:[#allocation4 + $0x2c0] sm:$0xff] %vm692, %v2625
      %2692 = vst.msk [vmem:[#allocation4 + $0x2d8] sm:$0xff] %vm692, %v2627
      %2693 = vst.msk [vmem:[#allocation4 + $0x2f0] sm:$0xff] %vm692, %v2629
      %v2712 = vrot.slane %v2318, 1
      %v2713 = vrot.slane %v2319, 1
      %v2714 = vsel %vm743, %v2712, %v2713
      %v2715 = vrot.slane %v2320, 1
      %v2716 = vsel %vm743, %v2713, %v2715
      %v2717 = vrot.slane %v2321, 1
      %v2718 = vrot.slane %v2322, 1
      %v2719 = vsel %vm743, %v2717, %v2718
      %v2720 = vrot.slane %v2323, 1
      %v2721 = vsel %vm743, %v2718, %v2720
      %v2722 = vrot.slane %v2324, 1
      %v2723 = vrot.slane %v2325, 1
      %v2724 = vsel %vm743, %v2722, %v2723
      %v2725 = vrot.slane %v2326, 1
      %v2726 = vsel %vm743, %v2723, %v2725
      %v2727 = vrot.slane %v2327, 1
      %v2728 = vrot.slane %v2328, 1
      %v2729 = vsel %vm743, %v2727, %v2728
      %v2730 = vrot.slane %v2329, 1
      %v2731 = vsel %vm743, %v2728, %v2730
      %v2732 = vrot.slane %v2330, 1
      %v2733 = vrot.slane %v2331, 1
      %v2734 = vsel %vm743, %v2732, %v2733
      %v2735 = vrot.slane %v2332, 1
      %v2736 = vsel %vm743, %v2733, %v2735
      %v2737 = vrot.slane %v2333, 1
      %v2738 = vrot.slane %v2334, 1
      %v2739 = vsel %vm743, %v2737, %v2738
      %v2740 = vrot.slane %v2335, 1
      %v2741 = vsel %vm743, %v2738, %v2740
      %v2742 = vrot.slane %v2336, 1
      %v2743 = vrot.slane %v2337, 1
      %v2744 = vsel %vm743, %v2742, %v2743
      %v2745 = vrot.slane %v2338, 1
      %v2746 = vsel %vm743, %v2743, %v2745
      %v2747 = vrot.slane %v2339, 1
      %v2748 = vrot.slane %v2340, 1
      %v2749 = vsel %vm743, %v2747, %v2748
      %v2750 = vrot.slane %v2341, 1
      %v2751 = vsel %vm743, %v2748, %v2750
      %v2752 = vrot.slane %v2342, 1
      %v2753 = vrot.slane %v2343, 1
      %v2754 = vsel %vm743, %v2752, %v2753
      %v2755 = vrot.slane %v2344, 1
      %v2756 = vsel %vm743, %v2753, %v2755
      %v2757 = vrot.slane %v2345, 1
      %v2758 = vrot.slane %v2346, 1
      %v2759 = vsel %vm743, %v2757, %v2758
      %v2760 = vrot.slane %v2347, 1
      %v2761 = vsel %vm743, %v2758, %v2760
      %v2762 = vrot.slane %v2348, 1
      %v2763 = vrot.slane %v2349, 1
      %v2764 = vsel %vm743, %v2762, %v2763
      %v2765 = vrot.slane %v2350, 1
      %v2766 = vsel %vm743, %v2763, %v2765
      %v2767 = vrot.slane %v2351, 1
      %v2768 = vrot.slane %v2352, 1
      %v2769 = vsel %vm743, %v2767, %v2768
      %v2770 = vrot.slane %v2353, 1
      %v2771 = vsel %vm743, %v2768, %v2770
      %v2772 = vrot.slane %v2354, 1
      %v2773 = vrot.slane %v2355, 1
      %v2774 = vsel %vm743, %v2772, %v2773
      %v2775 = vrot.slane %v2356, 1
      %v2776 = vsel %vm743, %v2773, %v2775
      %v2777 = vrot.slane %v2357, 1
      %v2778 = vrot.slane %v2358, 1
      %v2779 = vsel %vm743, %v2777, %v2778
      %v2780 = vrot.slane %v2359, 1
      %v2781 = vsel %vm743, %v2778, %v2780
      %v2782 = vrot.slane %v2360, 1
      %v2783 = vrot.slane %v2361, 1
      %v2784 = vsel %vm743, %v2782, %v2783
      %v2785 = vrot.slane %v2362, 1
      %v2786 = vsel %vm743, %v2783, %v2785
      %v2787 = vrot.slane %v2363, 1
      %v2788 = vrot.slane %v2364, 1
      %v2789 = vsel %vm743, %v2787, %v2788
      %v2790 = vrot.slane %v2365, 1
      %v2791 = vsel %vm743, %v2788, %v2790
      %2792 = vrot.lane.b32.xlu0 %v2714, 32
      %v2793 = vpop.permute.xlu0 %2792
      %2794 = vrot.lane.b32.xlu0 %v2716, 32
      %v2795 = vpop.permute.xlu0 %2794
      %2796 = vrot.lane.b32.xlu0 %v2719, 32
      %v2797 = vpop.permute.xlu0 %2796
      %2798 = vrot.lane.b32.xlu0 %v2721, 32
      %v2799 = vpop.permute.xlu0 %2798
      %2800 = vrot.lane.b32.xlu0 %v2724, 32
      %v2801 = vpop.permute.xlu0 %2800
      %2802 = vrot.lane.b32.xlu0 %v2726, 32
      %v2803 = vpop.permute.xlu0 %2802
      %2804 = vrot.lane.b32.xlu0 %v2729, 32
      %v2805 = vpop.permute.xlu0 %2804
      %2806 = vrot.lane.b32.xlu0 %v2731, 32
      %v2807 = vpop.permute.xlu0 %2806
      %2808 = vrot.lane.b32.xlu0 %v2734, 32
      %v2809 = vpop.permute.xlu0 %2808
      %2810 = vrot.lane.b32.xlu0 %v2736, 32
      %v2811 = vpop.permute.xlu0 %2810
      %2812 = vrot.lane.b32.xlu0 %v2739, 32
      %v2813 = vpop.permute.xlu0 %2812
      %2814 = vrot.lane.b32.xlu0 %v2741, 32
      %v2815 = vpop.permute.xlu0 %2814
      %2816 = vrot.lane.b32.xlu0 %v2744, 32
      %v2817 = vpop.permute.xlu0 %2816
      %2818 = vrot.lane.b32.xlu0 %v2746, 32
      %v2819 = vpop.permute.xlu0 %2818
      %2820 = vrot.lane.b32.xlu0 %v2749, 32
      %v2821 = vpop.permute.xlu0 %2820
      %2822 = vrot.lane.b32.xlu0 %v2751, 32
      %v2823 = vpop.permute.xlu0 %2822
      %2824 = vrot.lane.b32.xlu0 %v2754, 32
      %v2825 = vpop.permute.xlu0 %2824
      %2826 = vrot.lane.b32.xlu0 %v2756, 32
      %v2827 = vpop.permute.xlu0 %2826
      %2828 = vrot.lane.b32.xlu0 %v2759, 32
      %v2829 = vpop.permute.xlu0 %2828
      %2830 = vrot.lane.b32.xlu0 %v2761, 32
      %v2831 = vpop.permute.xlu0 %2830
      %2832 = vrot.lane.b32.xlu0 %v2764, 32
      %v2833 = vpop.permute.xlu0 %2832
      %2834 = vrot.lane.b32.xlu0 %v2766, 32
      %v2835 = vpop.permute.xlu0 %2834
      %2836 = vrot.lane.b32.xlu0 %v2769, 32
      %v2837 = vpop.permute.xlu0 %2836
      %2838 = vrot.lane.b32.xlu0 %v2771, 32
      %v2839 = vpop.permute.xlu0 %2838
      %2840 = vrot.lane.b32.xlu0 %v2774, 32
      %v2841 = vpop.permute.xlu0 %2840
      %2842 = vrot.lane.b32.xlu0 %v2776, 32
      %v2843 = vpop.permute.xlu0 %2842
      %2844 = vrot.lane.b32.xlu0 %v2779, 32
      %v2845 = vpop.permute.xlu0 %2844
      %2846 = vrot.lane.b32.xlu0 %v2781, 32
      %v2847 = vpop.permute.xlu0 %2846
      %2848 = vrot.lane.b32.xlu0 %v2784, 32
      %v2849 = vpop.permute.xlu0 %2848
      %2850 = vrot.lane.b32.xlu0 %v2786, 32
      %v2851 = vpop.permute.xlu0 %2850
      %2852 = vrot.lane.b32.xlu0 %v2789, 32
      %v2853 = vpop.permute.xlu0 %2852
      %2854 = vrot.lane.b32.xlu0 %v2791, 32
      %v2855 = vpop.permute.xlu0 %2854
      %2888 = vst.msk [vmem:[#allocation4] sm:$0xff] %vm920, %v2793
      %2889 = vst.msk [vmem:[#allocation4 + $0x18] sm:$0xff] %vm920, %v2795
      %2890 = vst.msk [vmem:[#allocation4 + $0x30] sm:$0xff] %vm920, %v2797
      %2891 = vst.msk [vmem:[#allocation4 + $0x48] sm:$0xff] %vm920, %v2799
      %2892 = vst.msk [vmem:[#allocation4 + $0x60] sm:$0xff] %vm920, %v2801
      %2893 = vst.msk [vmem:[#allocation4 + $0x78] sm:$0xff] %vm920, %v2803
      %2894 = vst.msk [vmem:[#allocation4 + $0x90] sm:$0xff] %vm920, %v2805
      %2895 = vst.msk [vmem:[#allocation4 + $0xa8] sm:$0xff] %vm920, %v2807
      %2896 = vst.msk [vmem:[#allocation4 + $0xc0] sm:$0xff] %vm920, %v2809
      %2897 = vst.msk [vmem:[#allocation4 + $0xd8] sm:$0xff] %vm920, %v2811
      %2898 = vst.msk [vmem:[#allocation4 + $0xf0] sm:$0xff] %vm920, %v2813
      %2899 = vst.msk [vmem:[#allocation4 + $0x108] sm:$0xff] %vm920, %v2815
      %2900 = vst.msk [vmem:[#allocation4 + $0x120] sm:$0xff] %vm920, %v2817
      %2901 = vst.msk [vmem:[#allocation4 + $0x138] sm:$0xff] %vm920, %v2819
      %2902 = vst.msk [vmem:[#allocation4 + $0x150] sm:$0xff] %vm920, %v2821
      %2903 = vst.msk [vmem:[#allocation4 + $0x168] sm:$0xff] %vm920, %v2823
      %2904 = vst.msk [vmem:[#allocation4 + $0x180] sm:$0xff] %vm920, %v2825
      %2905 = vst.msk [vmem:[#allocation4 + $0x198] sm:$0xff] %vm920, %v2827
      %2906 = vst.msk [vmem:[#allocation4 + $0x1b0] sm:$0xff] %vm920, %v2829
      %2907 = vst.msk [vmem:[#allocation4 + $0x1c8] sm:$0xff] %vm920, %v2831
      %2908 = vst.msk [vmem:[#allocation4 + $0x1e0] sm:$0xff] %vm920, %v2833
      %2909 = vst.msk [vmem:[#allocation4 + $0x1f8] sm:$0xff] %vm920, %v2835
      %2910 = vst.msk [vmem:[#allocation4 + $0x210] sm:$0xff] %vm920, %v2837
      %2911 = vst.msk [vmem:[#allocation4 + $0x228] sm:$0xff] %vm920, %v2839
      %2912 = vst.msk [vmem:[#allocation4 + $0x240] sm:$0xff] %vm920, %v2841
      %2913 = vst.msk [vmem:[#allocation4 + $0x258] sm:$0xff] %vm920, %v2843
      %2914 = vst.msk [vmem:[#allocation4 + $0x270] sm:$0xff] %vm920, %v2845
      %2915 = vst.msk [vmem:[#allocation4 + $0x288] sm:$0xff] %vm920, %v2847
      %2916 = vst.msk [vmem:[#allocation4 + $0x2a0] sm:$0xff] %vm920, %v2849
      %2917 = vst.msk [vmem:[#allocation4 + $0x2b8] sm:$0xff] %vm920, %v2851
      %2918 = vst.msk [vmem:[#allocation4 + $0x2d0] sm:$0xff] %vm920, %v2853
      %2919 = vst.msk [vmem:[#allocation4 + $0x2e8] sm:$0xff] %vm920, %v2855
      %v2921 = vrot.slane %v2366, 1
      %v2922 = vrot.slane %v2367, 1
      %v2923 = vsel %vm743, %v2921, %v2922
      %v2924 = vrot.slane %v2368, 1
      %v2925 = vsel %vm743, %v2922, %v2924
      %2958 = vst.msk [vmem:[#allocation4 + $0x8] sm:$0xff] %vm171, %v2719
      %2959 = vst.msk [vmem:[#allocation4 + $0x20] sm:$0xff] %vm171, %v2721
      %2960 = vst.msk [vmem:[#allocation4 + $0x38] sm:$0xff] %vm171, %v2724
      %2961 = vst.msk [vmem:[#allocation4 + $0x50] sm:$0xff] %vm171, %v2726
      %2962 = vst.msk [vmem:[#allocation4 + $0x68] sm:$0xff] %vm171, %v2729
      %2963 = vst.msk [vmem:[#allocation4 + $0x80] sm:$0xff] %vm171, %v2731
      %2964 = vst.msk [vmem:[#allocation4 + $0x98] sm:$0xff] %vm171, %v2734
      %2965 = vst.msk [vmem:[#allocation4 + $0xb0] sm:$0xff] %vm171, %v2736
      %2966 = vst.msk [vmem:[#allocation4 + $0xc8] sm:$0xff] %vm171, %v2739
      %2967 = vst.msk [vmem:[#allocation4 + $0xe0] sm:$0xff] %vm171, %v2741
      %2968 = vst.msk [vmem:[#allocation4 + $0xf8] sm:$0xff] %vm171, %v2744
      %2969 = vst.msk [vmem:[#allocation4 + $0x110] sm:$0xff] %vm171, %v2746
      %2970 = vst.msk [vmem:[#allocation4 + $0x128] sm:$0xff] %vm171, %v2749
      %2971 = vst.msk [vmem:[#allocation4 + $0x140] sm:$0xff] %vm171, %v2751
      %2972 = vst.msk [vmem:[#allocation4 + $0x158] sm:$0xff] %vm171, %v2754
      %2973 = vst.msk [vmem:[#allocation4 + $0x170] sm:$0xff] %vm171, %v2756
      %2974 = vst.msk [vmem:[#allocation4 + $0x188] sm:$0xff] %vm171, %v2759
      %2975 = vst.msk [vmem:[#allocation4 + $0x1a0] sm:$0xff] %vm171, %v2761
      %2976 = vst.msk [vmem:[#allocation4 + $0x1b8] sm:$0xff] %vm171, %v2764
      %2977 = vst.msk [vmem:[#allocation4 + $0x1d0] sm:$0xff] %vm171, %v2766
      %2978 = vst.msk [vmem:[#allocation4 + $0x1e8] sm:$0xff] %vm171, %v2769
      %2979 = vst.msk [vmem:[#allocation4 + $0x200] sm:$0xff] %vm171, %v2771
      %2980 = vst.msk [vmem:[#allocation4 + $0x218] sm:$0xff] %vm171, %v2774
      %2981 = vst.msk [vmem:[#allocation4 + $0x230] sm:$0xff] %vm171, %v2776
      %2982 = vst.msk [vmem:[#allocation4 + $0x248] sm:$0xff] %vm171, %v2779
      %2983 = vst.msk [vmem:[#allocation4 + $0x260] sm:$0xff] %vm171, %v2781
      %2984 = vst.msk [vmem:[#allocation4 + $0x278] sm:$0xff] %vm171, %v2784
      %2985 = vst.msk [vmem:[#allocation4 + $0x290] sm:$0xff] %vm171, %v2786
      %2986 = vst.msk [vmem:[#allocation4 + $0x2a8] sm:$0xff] %vm171, %v2789
      %2987 = vst.msk [vmem:[#allocation4 + $0x2c0] sm:$0xff] %vm171, %v2791
      %2988 = vst.msk [vmem:[#allocation4 + $0x2d8] sm:$0xff] %vm171, %v2923
      %2989 = vst.msk [vmem:[#allocation4 + $0x2f0] sm:$0xff] %vm171, %v2925
      %v2991 = vrot.slane %v2369, 1
      %v2992 = vrot.slane %v2370, 1
      %v2993 = vsel %vm743, %v2991, %v2992
      %v2994 = vrot.slane %v2371, 1
      %v2995 = vsel %vm743, %v2992, %v2994
      %2996 = vrot.lane.b32.xlu0 %v2724, 96
      %v2997 = vpop.permute.xlu0 %2996
      %2998 = vrot.lane.b32.xlu0 %v2726, 96
      %v2999 = vpop.permute.xlu0 %2998
      %3000 = vrot.lane.b32.xlu0 %v2729, 96
      %v3001 = vpop.permute.xlu0 %3000
      %3002 = vrot.lane.b32.xlu0 %v2731, 96
      %v3003 = vpop.permute.xlu0 %3002
      %3004 = vrot.lane.b32.xlu0 %v2734, 96
      %v3005 = vpop.permute.xlu0 %3004
      %3006 = vrot.lane.b32.xlu0 %v2736, 96
      %v3007 = vpop.permute.xlu0 %3006
      %3008 = vrot.lane.b32.xlu0 %v2739, 96
      %v3009 = vpop.permute.xlu0 %3008
      %3010 = vrot.lane.b32.xlu0 %v2741, 96
      %v3011 = vpop.permute.xlu0 %3010
      %3012 = vrot.lane.b32.xlu0 %v2744, 96
      %v3013 = vpop.permute.xlu0 %3012
      %3014 = vrot.lane.b32.xlu0 %v2746, 96
      %v3015 = vpop.permute.xlu0 %3014
      %3016 = vrot.lane.b32.xlu0 %v2749, 96
      %v3017 = vpop.permute.xlu0 %3016
      %3018 = vrot.lane.b32.xlu0 %v2751, 96
      %v3019 = vpop.permute.xlu0 %3018
      %3020 = vrot.lane.b32.xlu0 %v2754, 96
      %v3021 = vpop.permute.xlu0 %3020
      %3022 = vrot.lane.b32.xlu0 %v2756, 96
      %v3023 = vpop.permute.xlu0 %3022
      %3024 = vrot.lane.b32.xlu0 %v2759, 96
      %v3025 = vpop.permute.xlu0 %3024
      %3026 = vrot.lane.b32.xlu0 %v2761, 96
      %v3027 = vpop.permute.xlu0 %3026
      %3028 = vrot.lane.b32.xlu0 %v2764, 96
      %v3029 = vpop.permute.xlu0 %3028
      %3030 = vrot.lane.b32.xlu0 %v2766, 96
      %v3031 = vpop.permute.xlu0 %3030
      %3032 = vrot.lane.b32.xlu0 %v2769, 96
      %v3033 = vpop.permute.xlu0 %3032
      %3034 = vrot.lane.b32.xlu0 %v2771, 96
      %v3035 = vpop.permute.xlu0 %3034
      %3036 = vrot.lane.b32.xlu0 %v2774, 96
      %v3037 = vpop.permute.xlu0 %3036
      %3038 = vrot.lane.b32.xlu0 %v2776, 96
      %v3039 = vpop.permute.xlu0 %3038
      %3040 = vrot.lane.b32.xlu0 %v2779, 96
      %v3041 = vpop.permute.xlu0 %3040
      %3042 = vrot.lane.b32.xlu0 %v2781, 96
      %v3043 = vpop.permute.xlu0 %3042
      %3044 = vrot.lane.b32.xlu0 %v2784, 96
      %v3045 = vpop.permute.xlu0 %3044
      %3046 = vrot.lane.b32.xlu0 %v2786, 96
      %v3047 = vpop.permute.xlu0 %3046
      %3048 = vrot.lane.b32.xlu0 %v2789, 96
      %v3049 = vpop.permute.xlu0 %3048
      %3050 = vrot.lane.b32.xlu0 %v2791, 96
      %v3051 = vpop.permute.xlu0 %3050
      %3052 = vrot.lane.b32.xlu0 %v2923, 96
      %v3053 = vpop.permute.xlu0 %3052
      %3054 = vrot.lane.b32.xlu0 %v2925, 96
      %v3055 = vpop.permute.xlu0 %3054
      %3056 = vrot.lane.b32.xlu0 %v2993, 96
      %v3057 = vpop.permute.xlu0 %3056
      %3058 = vrot.lane.b32.xlu0 %v2995, 96
      %v3059 = vpop.permute.xlu0 %3058
      %3092 = vst.msk [vmem:[#allocation4 + $0x8] sm:$0xff] %vm561, %v2997
      %3093 = vst.msk [vmem:[#allocation4 + $0x20] sm:$0xff] %vm561, %v2999
      %3094 = vst.msk [vmem:[#allocation4 + $0x38] sm:$0xff] %vm561, %v3001
      %3095 = vst.msk [vmem:[#allocation4 + $0x50] sm:$0xff] %vm561, %v3003
      %3096 = vst.msk [vmem:[#allocation4 + $0x68] sm:$0xff] %vm561, %v3005
      %3097 = vst.msk [vmem:[#allocation4 + $0x80] sm:$0xff] %vm561, %v3007
      %3098 = vst.msk [vmem:[#allocation4 + $0x98] sm:$0xff] %vm561, %v3009
      %3099 = vst.msk [vmem:[#allocation4 + $0xb0] sm:$0xff] %vm561, %v3011
      %3100 = vst.msk [vmem:[#allocation4 + $0xc8] sm:$0xff] %vm561, %v3013
      %3101 = vst.msk [vmem:[#allocation4 + $0xe0] sm:$0xff] %vm561, %v3015
      %3102 = vst.msk [vmem:[#allocation4 + $0xf8] sm:$0xff] %vm561, %v3017
      %3103 = vst.msk [vmem:[#allocation4 + $0x110] sm:$0xff] %vm561, %v3019
      %3104 = vst.msk [vmem:[#allocation4 + $0x128] sm:$0xff] %vm561, %v3021
      %3105 = vst.msk [vmem:[#allocation4 + $0x140] sm:$0xff] %vm561, %v3023
      %3106 = vst.msk [vmem:[#allocation4 + $0x158] sm:$0xff] %vm561, %v3025
      %3107 = vst.msk [vmem:[#allocation4 + $0x170] sm:$0xff] %vm561, %v3027
      %3108 = vst.msk [vmem:[#allocation4 + $0x188] sm:$0xff] %vm561, %v3029
      %3109 = vst.msk [vmem:[#allocation4 + $0x1a0] sm:$0xff] %vm561, %v3031
      %3110 = vst.msk [vmem:[#allocation4 + $0x1b8] sm:$0xff] %vm561, %v3033
      %3111 = vst.msk [vmem:[#allocation4 + $0x1d0] sm:$0xff] %vm561, %v3035
      %3112 = vst.msk [vmem:[#allocation4 + $0x1e8] sm:$0xff] %vm561, %v3037
      %3113 = vst.msk [vmem:[#allocation4 + $0x200] sm:$0xff] %vm561, %v3039
      %3114 = vst.msk [vmem:[#allocation4 + $0x218] sm:$0xff] %vm561, %v3041
      %3115 = vst.msk [vmem:[#allocation4 + $0x230] sm:$0xff] %vm561, %v3043
      %3116 = vst.msk [vmem:[#allocation4 + $0x248] sm:$0xff] %vm561, %v3045
      %3117 = vst.msk [vmem:[#allocation4 + $0x260] sm:$0xff] %vm561, %v3047
      %3118 = vst.msk [vmem:[#allocation4 + $0x278] sm:$0xff] %vm561, %v3049
      %3119 = vst.msk [vmem:[#allocation4 + $0x290] sm:$0xff] %vm561, %v3051
      %3120 = vst.msk [vmem:[#allocation4 + $0x2a8] sm:$0xff] %vm561, %v3053
      %3121 = vst.msk [vmem:[#allocation4 + $0x2c0] sm:$0xff] %vm561, %v3055
      %3122 = vst.msk [vmem:[#allocation4 + $0x2d8] sm:$0xff] %vm561, %v3057
      %3123 = vst.msk [vmem:[#allocation4 + $0x2f0] sm:$0xff] %vm561, %v3059
      %v3124 = vrot.slane %v2318, 2
      %v3125 = vrot.slane %v2319, 2
      %v3126 = vsel %vm1157, %v3124, %v3125
      %v3127 = vrot.slane %v2320, 2
      %v3128 = vsel %vm1157, %v3125, %v3127
      %v3129 = vrot.slane %v2321, 2
      %v3130 = vrot.slane %v2322, 2
      %v3131 = vsel %vm1157, %v3129, %v3130
      %v3132 = vrot.slane %v2323, 2
      %v3133 = vsel %vm1157, %v3130, %v3132
      %v3134 = vrot.slane %v2324, 2
      %v3135 = vrot.slane %v2325, 2
      %v3136 = vsel %vm1157, %v3134, %v3135
      %v3137 = vrot.slane %v2326, 2
      %v3138 = vsel %vm1157, %v3135, %v3137
      %v3139 = vrot.slane %v2327, 2
      %v3140 = vrot.slane %v2328, 2
      %v3141 = vsel %vm1157, %v3139, %v3140
      %v3142 = vrot.slane %v2329, 2
      %v3143 = vsel %vm1157, %v3140, %v3142
      %v3144 = vrot.slane %v2330, 2
      %v3145 = vrot.slane %v2331, 2
      %v3146 = vsel %vm1157, %v3144, %v3145
      %v3147 = vrot.slane %v2332, 2
      %v3148 = vsel %vm1157, %v3145, %v3147
      %v3149 = vrot.slane %v2333, 2
      %v3150 = vrot.slane %v2334, 2
      %v3151 = vsel %vm1157, %v3149, %v3150
      %v3152 = vrot.slane %v2335, 2
      %v3153 = vsel %vm1157, %v3150, %v3152
      %v3154 = vrot.slane %v2336, 2
      %v3155 = vrot.slane %v2337, 2
      %v3156 = vsel %vm1157, %v3154, %v3155
      %v3157 = vrot.slane %v2338, 2
      %v3158 = vsel %vm1157, %v3155, %v3157
      %v3159 = vrot.slane %v2339, 2
      %v3160 = vrot.slane %v2340, 2
      %v3161 = vsel %vm1157, %v3159, %v3160
      %v3162 = vrot.slane %v2341, 2
      %v3163 = vsel %vm1157, %v3160, %v3162
      %v3164 = vrot.slane %v2342, 2
      %v3165 = vrot.slane %v2343, 2
      %v3166 = vsel %vm1157, %v3164, %v3165
      %v3167 = vrot.slane %v2344, 2
      %v3168 = vsel %vm1157, %v3165, %v3167
      %v3169 = vrot.slane %v2345, 2
      %v3170 = vrot.slane %v2346, 2
      %v3171 = vsel %vm1157, %v3169, %v3170
      %v3172 = vrot.slane %v2347, 2
      %v3173 = vsel %vm1157, %v3170, %v3172
      %v3174 = vrot.slane %v2348, 2
      %v3175 = vrot.slane %v2349, 2
      %v3176 = vsel %vm1157, %v3174, %v3175
      %v3177 = vrot.slane %v2350, 2
      %v3178 = vsel %vm1157, %v3175, %v3177
      %v3179 = vrot.slane %v2351, 2
      %v3180 = vrot.slane %v2352, 2
      %v3181 = vsel %vm1157, %v3179, %v3180
      %v3182 = vrot.slane %v2353, 2
      %v3183 = vsel %vm1157, %v3180, %v3182
      %v3184 = vrot.slane %v2354, 2
      %v3185 = vrot.slane %v2355, 2
      %v3186 = vsel %vm1157, %v3184, %v3185
      %v3187 = vrot.slane %v2356, 2
      %v3188 = vsel %vm1157, %v3185, %v3187
      %v3189 = vrot.slane %v2357, 2
      %v3190 = vrot.slane %v2358, 2
      %v3191 = vsel %vm1157, %v3189, %v3190
      %v3192 = vrot.slane %v2359, 2
      %v3193 = vsel %vm1157, %v3190, %v3192
      %v3194 = vrot.slane %v2360, 2
      %v3195 = vrot.slane %v2361, 2
      %v3196 = vsel %vm1157, %v3194, %v3195
      %v3197 = vrot.slane %v2362, 2
      %v3198 = vsel %vm1157, %v3195, %v3197
      %v3199 = vrot.slane %v2363, 2
      %v3200 = vrot.slane %v2364, 2
      %v3201 = vsel %vm1157, %v3199, %v3200
      %v3202 = vrot.slane %v2365, 2
      %v3203 = vsel %vm1157, %v3200, %v3202
      %3204 = vrot.lane.b32.xlu0 %v3126, 64
      %v3205 = vpop.permute.xlu0 %3204
      %3206 = vrot.lane.b32.xlu0 %v3128, 64
      %v3207 = vpop.permute.xlu0 %3206
      %3208 = vrot.lane.b32.xlu0 %v3131, 64
      %v3209 = vpop.permute.xlu0 %3208
      %3210 = vrot.lane.b32.xlu0 %v3133, 64
      %v3211 = vpop.permute.xlu0 %3210
      %3212 = vrot.lane.b32.xlu0 %v3136, 64
      %v3213 = vpop.permute.xlu0 %3212
      %3214 = vrot.lane.b32.xlu0 %v3138, 64
      %v3215 = vpop.permute.xlu0 %3214
      %3216 = vrot.lane.b32.xlu0 %v3141, 64
      %v3217 = vpop.permute.xlu0 %3216
      %3218 = vrot.lane.b32.xlu0 %v3143, 64
      %v3219 = vpop.permute.xlu0 %3218
      %3220 = vrot.lane.b32.xlu0 %v3146, 64
      %v3221 = vpop.permute.xlu0 %3220
      %3222 = vrot.lane.b32.xlu0 %v3148, 64
      %v3223 = vpop.permute.xlu0 %3222
      %3224 = vrot.lane.b32.xlu0 %v3151, 64
      %v3225 = vpop.permute.xlu0 %3224
      %3226 = vrot.lane.b32.xlu0 %v3153, 64
      %v3227 = vpop.permute.xlu0 %3226
      %3228 = vrot.lane.b32.xlu0 %v3156, 64
      %v3229 = vpop.permute.xlu0 %3228
      %3230 = vrot.lane.b32.xlu0 %v3158, 64
      %v3231 = vpop.permute.xlu0 %3230
      %3232 = vrot.lane.b32.xlu0 %v3161, 64
      %v3233 = vpop.permute.xlu0 %3232
      %3234 = vrot.lane.b32.xlu0 %v3163, 64
      %v3235 = vpop.permute.xlu0 %3234
      %3236 = vrot.lane.b32.xlu0 %v3166, 64
      %v3237 = vpop.permute.xlu0 %3236
      %3238 = vrot.lane.b32.xlu0 %v3168, 64
      %v3239 = vpop.permute.xlu0 %3238
      %3240 = vrot.lane.b32.xlu0 %v3171, 64
      %v3241 = vpop.permute.xlu0 %3240
      %3242 = vrot.lane.b32.xlu0 %v3173, 64
      %v3243 = vpop.permute.xlu0 %3242
      %3244 = vrot.lane.b32.xlu0 %v3176, 64
      %v3245 = vpop.permute.xlu0 %3244
      %3246 = vrot.lane.b32.xlu0 %v3178, 64
      %v3247 = vpop.permute.xlu0 %3246
      %3248 = vrot.lane.b32.xlu0 %v3181, 64
      %v3249 = vpop.permute.xlu0 %3248
      %3250 = vrot.lane.b32.xlu0 %v3183, 64
      %v3251 = vpop.permute.xlu0 %3250
      %3252 = vrot.lane.b32.xlu0 %v3186, 64
      %v3253 = vpop.permute.xlu0 %3252
      %3254 = vrot.lane.b32.xlu0 %v3188, 64
      %v3255 = vpop.permute.xlu0 %3254
      %3256 = vrot.lane.b32.xlu0 %v3191, 64
      %v3257 = vpop.permute.xlu0 %3256
      %3258 = vrot.lane.b32.xlu0 %v3193, 64
      %v3259 = vpop.permute.xlu0 %3258
      %3260 = vrot.lane.b32.xlu0 %v3196, 64
      %v3261 = vpop.permute.xlu0 %3260
      %3262 = vrot.lane.b32.xlu0 %v3198, 64
      %v3263 = vpop.permute.xlu0 %3262
      %3264 = vrot.lane.b32.xlu0 %v3201, 64
      %v3265 = vpop.permute.xlu0 %3264
      %3266 = vrot.lane.b32.xlu0 %v3203, 64
      %v3267 = vpop.permute.xlu0 %3266
      %3300 = vst.msk [vmem:[#allocation4] sm:$0xff] %vm692, %v3205
      %3301 = vst.msk [vmem:[#allocation4 + $0x18] sm:$0xff] %vm692, %v3207
      %3302 = vst.msk [vmem:[#allocation4 + $0x30] sm:$0xff] %vm692, %v3209
      %3303 = vst.msk [vmem:[#allocation4 + $0x48] sm:$0xff] %vm692, %v3211
      %3304 = vst.msk [vmem:[#allocation4 + $0x60] sm:$0xff] %vm692, %v3213
      %3305 = vst.msk [vmem:[#allocation4 + $0x78] sm:$0xff] %vm692, %v3215
      %3306 = vst.msk [vmem:[#allocation4 + $0x90] sm:$0xff] %vm692, %v3217
      %3307 = vst.msk [vmem:[#allocation4 + $0xa8] sm:$0xff] %vm692, %v3219
      %3308 = vst.msk [vmem:[#allocation4 + $0xc0] sm:$0xff] %vm692, %v3221
      %3309 = vst.msk [vmem:[#allocation4 + $0xd8] sm:$0xff] %vm692, %v3223
      %3310 = vst.msk [vmem:[#allocation4 + $0xf0] sm:$0xff] %vm692, %v3225
      %3311 = vst.msk [vmem:[#allocation4 + $0x108] sm:$0xff] %vm692, %v3227
      %3312 = vst.msk [vmem:[#allocation4 + $0x120] sm:$0xff] %vm692, %v3229
      %3313 = vst.msk [vmem:[#allocation4 + $0x138] sm:$0xff] %vm692, %v3231
      %3314 = vst.msk [vmem:[#allocation4 + $0x150] sm:$0xff] %vm692, %v3233
      %3315 = vst.msk [vmem:[#allocation4 + $0x168] sm:$0xff] %vm692, %v3235
      %3316 = vst.msk [vmem:[#allocation4 + $0x180] sm:$0xff] %vm692, %v3237
      %3317 = vst.msk [vmem:[#allocation4 + $0x198] sm:$0xff] %vm692, %v3239
      %3318 = vst.msk [vmem:[#allocation4 + $0x1b0] sm:$0xff] %vm692, %v3241
      %3319 = vst.msk [vmem:[#allocation4 + $0x1c8] sm:$0xff] %vm692, %v3243
      %3320 = vst.msk [vmem:[#allocation4 + $0x1e0] sm:$0xff] %vm692, %v3245
      %3321 = vst.msk [vmem:[#allocation4 + $0x1f8] sm:$0xff] %vm692, %v3247
      %3322 = vst.msk [vmem:[#allocation4 + $0x210] sm:$0xff] %vm692, %v3249
      %3323 = vst.msk [vmem:[#allocation4 + $0x228] sm:$0xff] %vm692, %v3251
      %3324 = vst.msk [vmem:[#allocation4 + $0x240] sm:$0xff] %vm692, %v3253
      %3325 = vst.msk [vmem:[#allocation4 + $0x258] sm:$0xff] %vm692, %v3255
      %3326 = vst.msk [vmem:[#allocation4 + $0x270] sm:$0xff] %vm692, %v3257
      %3327 = vst.msk [vmem:[#allocation4 + $0x288] sm:$0xff] %vm692, %v3259
      %3328 = vst.msk [vmem:[#allocation4 + $0x2a0] sm:$0xff] %vm692, %v3261
      %3329 = vst.msk [vmem:[#allocation4 + $0x2b8] sm:$0xff] %vm692, %v3263
      %3330 = vst.msk [vmem:[#allocation4 + $0x2d0] sm:$0xff] %vm692, %v3265
      %3331 = vst.msk [vmem:[#allocation4 + $0x2e8] sm:$0xff] %vm692, %v3267
      %v3332 = vrot.slane %v2366, 2
      %v3333 = vrot.slane %v2367, 2
      %v3334 = vsel %vm1157, %v3332, %v3333
      %v3335 = vrot.slane %v2368, 2
      %v3336 = vsel %vm1157, %v3333, %v3335
      %3337 = vrot.lane.b32.xlu0 %v3131, 32
      %v3338 = vpop.permute.xlu0 %3337
      %3339 = vrot.lane.b32.xlu0 %v3133, 32
      %v3340 = vpop.permute.xlu0 %3339
      %3341 = vrot.lane.b32.xlu0 %v3136, 32
      %v3342 = vpop.permute.xlu0 %3341
      %3343 = vrot.lane.b32.xlu0 %v3138, 32
      %v3344 = vpop.permute.xlu0 %3343
      %3345 = vrot.lane.b32.xlu0 %v3141, 32
      %v3346 = vpop.permute.xlu0 %3345
      %3347 = vrot.lane.b32.xlu0 %v3143, 32
      %v3348 = vpop.permute.xlu0 %3347
      %3349 = vrot.lane.b32.xlu0 %v3146, 32
      %v3350 = vpop.permute.xlu0 %3349
      %3351 = vrot.lane.b32.xlu0 %v3148, 32
      %v3352 = vpop.permute.xlu0 %3351
      %3353 = vrot.lane.b32.xlu0 %v3151, 32
      %v3354 = vpop.permute.xlu0 %3353
      %3355 = vrot.lane.b32.xlu0 %v3153, 32
      %v3356 = vpop.permute.xlu0 %3355
      %3357 = vrot.lane.b32.xlu0 %v3156, 32
      %v3358 = vpop.permute.xlu0 %3357
      %3359 = vrot.lane.b32.xlu0 %v3158, 32
      %v3360 = vpop.permute.xlu0 %3359
      %3361 = vrot.lane.b32.xlu0 %v3161, 32
      %v3362 = vpop.permute.xlu0 %3361
      %3363 = vrot.lane.b32.xlu0 %v3163, 32
      %v3364 = vpop.permute.xlu0 %3363
      %3365 = vrot.lane.b32.xlu0 %v3166, 32
      %v3366 = vpop.permute.xlu0 %3365
      %3367 = vrot.lane.b32.xlu0 %v3168, 32
      %v3368 = vpop.permute.xlu0 %3367
      %3369 = vrot.lane.b32.xlu0 %v3171, 32
      %v3370 = vpop.permute.xlu0 %3369
      %3371 = vrot.lane.b32.xlu0 %v3173, 32
      %v3372 = vpop.permute.xlu0 %3371
      %3373 = vrot.lane.b32.xlu0 %v3176, 32
      %v3374 = vpop.permute.xlu0 %3373
      %3375 = vrot.lane.b32.xlu0 %v3178, 32
      %v3376 = vpop.permute.xlu0 %3375
      %3377 = vrot.lane.b32.xlu0 %v3181, 32
      %v3378 = vpop.permute.xlu0 %3377
      %3379 = vrot.lane.b32.xlu0 %v3183, 32
      %v3380 = vpop.permute.xlu0 %3379
      %3381 = vrot.lane.b32.xlu0 %v3186, 32
      %v3382 = vpop.permute.xlu0 %3381
      %3383 = vrot.lane.b32.xlu0 %v3188, 32
      %v3384 = vpop.permute.xlu0 %3383
      %3385 = vrot.lane.b32.xlu0 %v3191, 32
      %v3386 = vpop.permute.xlu0 %3385
      %3387 = vrot.lane.b32.xlu0 %v3193, 32
      %v3388 = vpop.permute.xlu0 %3387
      %3389 = vrot.lane.b32.xlu0 %v3196, 32
      %v3390 = vpop.permute.xlu0 %3389
      %3391 = vrot.lane.b32.xlu0 %v3198, 32
      %v3392 = vpop.permute.xlu0 %3391
      %3393 = vrot.lane.b32.xlu0 %v3201, 32
      %v3394 = vpop.permute.xlu0 %3393
      %3395 = vrot.lane.b32.xlu0 %v3203, 32
      %v3396 = vpop.permute.xlu0 %3395
      %3397 = vrot.lane.b32.xlu0 %v3334, 32
      %v3398 = vpop.permute.xlu0 %3397
      %3399 = vrot.lane.b32.xlu0 %v3336, 32
      %v3400 = vpop.permute.xlu0 %3399
      %3433 = vst.msk [vmem:[#allocation4 + $0x8] sm:$0xff] %vm920, %v3338
      %3434 = vst.msk [vmem:[#allocation4 + $0x20] sm:$0xff] %vm920, %v3340
      %3435 = vst.msk [vmem:[#allocation4 + $0x38] sm:$0xff] %vm920, %v3342
      %3436 = vst.msk [vmem:[#allocation4 + $0x50] sm:$0xff] %vm920, %v3344
      %3437 = vst.msk [vmem:[#allocation4 + $0x68] sm:$0xff] %vm920, %v3346
      %3438 = vst.msk [vmem:[#allocation4 + $0x80] sm:$0xff] %vm920, %v3348
      %3439 = vst.msk [vmem:[#allocation4 + $0x98] sm:$0xff] %vm920, %v3350
      %3440 = vst.msk [vmem:[#allocation4 + $0xb0] sm:$0xff] %vm920, %v3352
      %3441 = vst.msk [vmem:[#allocation4 + $0xc8] sm:$0xff] %vm920, %v3354
      %3442 = vst.msk [vmem:[#allocation4 + $0xe0] sm:$0xff] %vm920, %v3356
      %3443 = vst.msk [vmem:[#allocation4 + $0xf8] sm:$0xff] %vm920, %v3358
      %3444 = vst.msk [vmem:[#allocation4 + $0x110] sm:$0xff] %vm920, %v3360
      %3445 = vst.msk [vmem:[#allocation4 + $0x128] sm:$0xff] %vm920, %v3362
      %3446 = vst.msk [vmem:[#allocation4 + $0x140] sm:$0xff] %vm920, %v3364
      %3447 = vst.msk [vmem:[#allocation4 + $0x158] sm:$0xff] %vm920, %v3366
      %3448 = vst.msk [vmem:[#allocation4 + $0x170] sm:$0xff] %vm920, %v3368
      %3449 = vst.msk [vmem:[#allocation4 + $0x188] sm:$0xff] %vm920, %v3370
      %3450 = vst.msk [vmem:[#allocation4 + $0x1a0] sm:$0xff] %vm920, %v3372
      %3451 = vst.msk [vmem:[#allocation4 + $0x1b8] sm:$0xff] %vm920, %v3374
      %3452 = vst.msk [vmem:[#allocation4 + $0x1d0] sm:$0xff] %vm920, %v3376
      %3453 = vst.msk [vmem:[#allocation4 + $0x1e8] sm:$0xff] %vm920, %v3378
      %3454 = vst.msk [vmem:[#allocation4 + $0x200] sm:$0xff] %vm920, %v3380
      %3455 = vst.msk [vmem:[#allocation4 + $0x218] sm:$0xff] %vm920, %v3382
      %3456 = vst.msk [vmem:[#allocation4 + $0x230] sm:$0xff] %vm920, %v3384
      %3457 = vst.msk [vmem:[#allocation4 + $0x248] sm:$0xff] %vm920, %v3386
      %3458 = vst.msk [vmem:[#allocation4 + $0x260] sm:$0xff] %vm920, %v3388
      %3459 = vst.msk [vmem:[#allocation4 + $0x278] sm:$0xff] %vm920, %v3390
      %3460 = vst.msk [vmem:[#allocation4 + $0x290] sm:$0xff] %vm920, %v3392
      %3461 = vst.msk [vmem:[#allocation4 + $0x2a8] sm:$0xff] %vm920, %v3394
      %3462 = vst.msk [vmem:[#allocation4 + $0x2c0] sm:$0xff] %vm920, %v3396
      %3463 = vst.msk [vmem:[#allocation4 + $0x2d8] sm:$0xff] %vm920, %v3398
      %3464 = vst.msk [vmem:[#allocation4 + $0x2f0] sm:$0xff] %vm920, %v3400
      %v3465 = vrot.slane %v2369, 2
      %v3466 = vrot.slane %v2370, 2
      %v3467 = vsel %vm1157, %v3465, %v3466
      %v3468 = vrot.slane %v2371, 2
      %v3469 = vsel %vm1157, %v3466, %v3468
      %3502 = vst.msk [vmem:[#allocation4 + $0x10] sm:$0xff] %vm171, %v3136
      %3503 = vst.msk [vmem:[#allocation4 + $0x28] sm:$0xff] %vm171, %v3138
      %3504 = vst.msk [vmem:[#allocation4 + $0x40] sm:$0xff] %vm171, %v3141
      %3505 = vst.msk [vmem:[#allocation4 + $0x58] sm:$0xff] %vm171, %v3143
      %3506 = vst.msk [vmem:[#allocation4 + $0x70] sm:$0xff] %vm171, %v3146
      %3507 = vst.msk [vmem:[#allocation4 + $0x88] sm:$0xff] %vm171, %v3148
      %3508 = vst.msk [vmem:[#allocation4 + $0xa0] sm:$0xff] %vm171, %v3151
      %3509 = vst.msk [vmem:[#allocation4 + $0xb8] sm:$0xff] %vm171, %v3153
      %3510 = vst.msk [vmem:[#allocation4 + $0xd0] sm:$0xff] %vm171, %v3156
      %3511 = vst.msk [vmem:[#allocation4 + $0xe8] sm:$0xff] %vm171, %v3158
      %3512 = vst.msk [vmem:[#allocation4 + $0x100] sm:$0xff] %vm171, %v3161
      %3513 = vst.msk [vmem:[#allocation4 + $0x118] sm:$0xff] %vm171, %v3163
      %3514 = vst.msk [vmem:[#allocation4 + $0x130] sm:$0xff] %vm171, %v3166
      %3515 = vst.msk [vmem:[#allocation4 + $0x148] sm:$0xff] %vm171, %v3168
      %3516 = vst.msk [vmem:[#allocation4 + $0x160] sm:$0xff] %vm171, %v3171
      %3517 = vst.msk [vmem:[#allocation4 + $0x178] sm:$0xff] %vm171, %v3173
      %3518 = vst.msk [vmem:[#allocation4 + $0x190] sm:$0xff] %vm171, %v3176
      %3519 = vst.msk [vmem:[#allocation4 + $0x1a8] sm:$0xff] %vm171, %v3178
      %3520 = vst.msk [vmem:[#allocation4 + $0x1c0] sm:$0xff] %vm171, %v3181
      %3521 = vst.msk [vmem:[#allocation4 + $0x1d8] sm:$0xff] %vm171, %v3183
      %3522 = vst.msk [vmem:[#allocation4 + $0x1f0] sm:$0xff] %vm171, %v3186
      %3523 = vst.msk [vmem:[#allocation4 + $0x208] sm:$0xff] %vm171, %v3188
      %3524 = vst.msk [vmem:[#allocation4 + $0x220] sm:$0xff] %vm171, %v3191
      %3525 = vst.msk [vmem:[#allocation4 + $0x238] sm:$0xff] %vm171, %v3193
      %3526 = vst.msk [vmem:[#allocation4 + $0x250] sm:$0xff] %vm171, %v3196
      %3527 = vst.msk [vmem:[#allocation4 + $0x268] sm:$0xff] %vm171, %v3198
      %3528 = vst.msk [vmem:[#allocation4 + $0x280] sm:$0xff] %vm171, %v3201
      %3529 = vst.msk [vmem:[#allocation4 + $0x298] sm:$0xff] %vm171, %v3203
      %3530 = vst.msk [vmem:[#allocation4 + $0x2b0] sm:$0xff] %vm171, %v3334
      %3531 = vst.msk [vmem:[#allocation4 + $0x2c8] sm:$0xff] %vm171, %v3336
      %3532 = vst.msk [vmem:[#allocation4 + $0x2e0] sm:$0xff] %vm171, %v3467
      %3533 = vst.msk [vmem:[#allocation4 + $0x2f8] sm:$0xff] %vm171, %v3469
      %v3534 = vld [vmem:[#allocation4] sm:$0xff]
      %v3535 = vld [vmem:[#allocation4 + $0x8] sm:$0xff]
      %v3536 = vld [vmem:[#allocation4 + $0x10] sm:$0xff]
      %v3537 = vld [vmem:[#allocation4 + $0x18] sm:$0xff]
      %v3538 = vld [vmem:[#allocation4 + $0x20] sm:$0xff]
      %v3539 = vld [vmem:[#allocation4 + $0x28] sm:$0xff]
      %v3540 = vld [vmem:[#allocation4 + $0x30] sm:$0xff]
      %v3541 = vld [vmem:[#allocation4 + $0x38] sm:$0xff]
      %v3542 = vld [vmem:[#allocation4 + $0x40] sm:$0xff]
      %v3543 = vld [vmem:[#allocation4 + $0x48] sm:$0xff]
      %v3544 = vld [vmem:[#allocation4 + $0x50] sm:$0xff]
      %v3545 = vld [vmem:[#allocation4 + $0x58] sm:$0xff]
      %v3546 = vld [vmem:[#allocation4 + $0x60] sm:$0xff]
      %v3547 = vld [vmem:[#allocation4 + $0x68] sm:$0xff]
      %v3548 = vld [vmem:[#allocation4 + $0x70] sm:$0xff]
      %v3549 = vld [vmem:[#allocation4 + $0x78] sm:$0xff]
      %v3550 = vld [vmem:[#allocation4 + $0x80] sm:$0xff]
      %v3551 = vld [vmem:[#allocation4 + $0x88] sm:$0xff]
      %v3552 = vld [vmem:[#allocation4 + $0x90] sm:$0xff]
      %v3553 = vld [vmem:[#allocation4 + $0x98] sm:$0xff]
      %v3554 = vld [vmem:[#allocation4 + $0xa0] sm:$0xff]
      %v3555 = vld [vmem:[#allocation4 + $0xa8] sm:$0xff]
      %v3556 = vld [vmem:[#allocation4 + $0xb0] sm:$0xff]
      %v3557 = vld [vmem:[#allocation4 + $0xb8] sm:$0xff]
      %v3558 = vld [vmem:[#allocation4 + $0xc0] sm:$0xff]
      %v3559 = vld [vmem:[#allocation4 + $0xc8] sm:$0xff]
      %v3560 = vld [vmem:[#allocation4 + $0xd0] sm:$0xff]
      %v3561 = vld [vmem:[#allocation4 + $0xd8] sm:$0xff]
      %v3562 = vld [vmem:[#allocation4 + $0xe0] sm:$0xff]
      %v3563 = vld [vmem:[#allocation4 + $0xe8] sm:$0xff]
      %v3564 = vld [vmem:[#allocation4 + $0xf0] sm:$0xff]
      %v3565 = vld [vmem:[#allocation4 + $0xf8] sm:$0xff]
      %v3566 = vld [vmem:[#allocation4 + $0x100] sm:$0xff]
      %v3567 = vld [vmem:[#allocation4 + $0x108] sm:$0xff]
      %v3568 = vld [vmem:[#allocation4 + $0x110] sm:$0xff]
      %v3569 = vld [vmem:[#allocation4 + $0x118] sm:$0xff]
      %v3570 = vld [vmem:[#allocation4 + $0x120] sm:$0xff]
      %v3571 = vld [vmem:[#allocation4 + $0x128] sm:$0xff]
      %v3572 = vld [vmem:[#allocation4 + $0x130] sm:$0xff]
      %v3573 = vld [vmem:[#allocation4 + $0x138] sm:$0xff]
      %v3574 = vld [vmem:[#allocation4 + $0x140] sm:$0xff]
      %v3575 = vld [vmem:[#allocation4 + $0x148] sm:$0xff]
      %v3576 = vld [vmem:[#allocation4 + $0x150] sm:$0xff]
      %v3577 = vld [vmem:[#allocation4 + $0x158] sm:$0xff]
      %v3578 = vld [vmem:[#allocation4 + $0x160] sm:$0xff]
      %v3579 = vld [vmem:[#allocation4 + $0x168] sm:$0xff]
      %v3580 = vld [vmem:[#allocation4 + $0x170] sm:$0xff]
      %v3581 = vld [vmem:[#allocation4 + $0x178] sm:$0xff]
      %v3582 = vld [vmem:[#allocation4 + $0x180] sm:$0xff]
      %v3583 = vld [vmem:[#allocation4 + $0x188] sm:$0xff]
      %v3584 = vld [vmem:[#allocation4 + $0x190] sm:$0xff]
      %v3585 = vld [vmem:[#allocation4 + $0x198] sm:$0xff]
      %v3586 = vld [vmem:[#allocation4 + $0x1a0] sm:$0xff]
      %v3587 = vld [vmem:[#allocation4 + $0x1a8] sm:$0xff]
      %v3588 = vld [vmem:[#allocation4 + $0x1b0] sm:$0xff]
      %v3589 = vld [vmem:[#allocation4 + $0x1b8] sm:$0xff]
      %v3590 = vld [vmem:[#allocation4 + $0x1c0] sm:$0xff]
      %v3591 = vld [vmem:[#allocation4 + $0x1c8] sm:$0xff]
      %v3592 = vld [vmem:[#allocation4 + $0x1d0] sm:$0xff]
      %v3593 = vld [vmem:[#allocation4 + $0x1d8] sm:$0xff]
      %v3594 = vld [vmem:[#allocation4 + $0x1e0] sm:$0xff]
      %v3595 = vld [vmem:[#allocation4 + $0x1e8] sm:$0xff]
      %v3596 = vld [vmem:[#allocation4 + $0x1f0] sm:$0xff]
      %v3597 = vld [vmem:[#allocation4 + $0x1f8] sm:$0xff]
      %v3598 = vld [vmem:[#allocation4 + $0x200] sm:$0xff]
      %v3599 = vld [vmem:[#allocation4 + $0x208] sm:$0xff]
      %v3600 = vld [vmem:[#allocation4 + $0x210] sm:$0xff]
      %v3601 = vld [vmem:[#allocation4 + $0x218] sm:$0xff]
      %v3602 = vld [vmem:[#allocation4 + $0x220] sm:$0xff]
      %v3603 = vld [vmem:[#allocation4 + $0x228] sm:$0xff]
      %v3604 = vld [vmem:[#allocation4 + $0x230] sm:$0xff]
      %v3605 = vld [vmem:[#allocation4 + $0x238] sm:$0xff]
      %v3606 = vld [vmem:[#allocation4 + $0x240] sm:$0xff]
      %v3607 = vld [vmem:[#allocation4 + $0x248] sm:$0xff]
      %v3608 = vld [vmem:[#allocation4 + $0x250] sm:$0xff]
      %v3609 = vld [vmem:[#allocation4 + $0x258] sm:$0xff]
      %v3610 = vld [vmem:[#allocation4 + $0x260] sm:$0xff]
      %v3611 = vld [vmem:[#allocation4 + $0x268] sm:$0xff]
      %v3612 = vld [vmem:[#allocation4 + $0x270] sm:$0xff]
      %v3613 = vld [vmem:[#allocation4 + $0x278] sm:$0xff]
      %v3614 = vld [vmem:[#allocation4 + $0x280] sm:$0xff]
      %v3615 = vld [vmem:[#allocation4 + $0x288] sm:$0xff]
      %v3616 = vld [vmem:[#allocation4 + $0x290] sm:$0xff]
      %v3617 = vld [vmem:[#allocation4 + $0x298] sm:$0xff]
      %v3618 = vld [vmem:[#allocation4 + $0x2a0] sm:$0xff]
      %v3619 = vld [vmem:[#allocation4 + $0x2a8] sm:$0xff]
      %v3620 = vld [vmem:[#allocation4 + $0x2b0] sm:$0xff]
      %v3621 = vld [vmem:[#allocation4 + $0x2b8] sm:$0xff]
      %v3622 = vld [vmem:[#allocation4 + $0x2c0] sm:$0xff]
      %v3623 = vld [vmem:[#allocation4 + $0x2c8] sm:$0xff]
      %v3624 = vld [vmem:[#allocation4 + $0x2d0] sm:$0xff]
      %v3625 = vld [vmem:[#allocation4 + $0x2d8] sm:$0xff]
      %v3626 = vld [vmem:[#allocation4 + $0x2e0] sm:$0xff]
      %v3627 = vld [vmem:[#allocation4 + $0x2e8] sm:$0xff]
      %v3628 = vld [vmem:[#allocation4 + $0x2f0] sm:$0xff]
      %v3629 = vld [vmem:[#allocation4 + $0x2f8] sm:$0xff]
      %s3630 = scalar_lea.vmem %s1, 288
      %v3631 = vld [vmem:[%s3630] sm:$0xff]
      %v3632 = vld [vmem:[%s3630 + $0x8] sm:$0xff]
      %v3633 = vld [vmem:[%s3630 + $0x10] sm:$0xff]
      %v3634 = vld [vmem:[%s3630 + $0x18] sm:$0xff]
      %v3635 = vld [vmem:[%s3630 + $0x20] sm:$0xff]
      %v3636 = vld [vmem:[%s3630 + $0x28] sm:$0xff]
      %v3637 = vld [vmem:[%s3630 + $0x30] sm:$0xff]
      %v3638 = vld [vmem:[%s3630 + $0x38] sm:$0xff]
      %v3639 = vld [vmem:[%s3630 + $0x40] sm:$0xff]
      %v3640 = vld [vmem:[%s3630 + $0x48] sm:$0xff]
      %v3641 = vld [vmem:[%s3630 + $0x50] sm:$0xff]
      %v3642 = vld [vmem:[%s3630 + $0x58] sm:$0xff]
      %v3643 = vld [vmem:[%s3630 + $0x60] sm:$0xff]
      %v3644 = vld [vmem:[%s3630 + $0x68] sm:$0xff]
      %v3645 = vld [vmem:[%s3630 + $0x70] sm:$0xff]
      %v3646 = vld [vmem:[%s3630 + $0x78] sm:$0xff]
      %v3647 = vld [vmem:[%s3630 + $0x80] sm:$0xff]
      %v3648 = vld [vmem:[%s3630 + $0x88] sm:$0xff]
      %v3649 = vld [vmem:[%s3630 + $0x90] sm:$0xff]
      %v3650 = vld [vmem:[%s3630 + $0x98] sm:$0xff]
      %v3651 = vld [vmem:[%s3630 + $0xa0] sm:$0xff]
      %v3652 = vld [vmem:[%s3630 + $0xa8] sm:$0xff]
      %v3653 = vld [vmem:[%s3630 + $0xb0] sm:$0xff]
      %v3654 = vld [vmem:[%s3630 + $0xb8] sm:$0xff]
      %v3655 = vld [vmem:[%s3630 + $0xc0] sm:$0xff]
      %v3656 = vld [vmem:[%s3630 + $0xc8] sm:$0xff]
      %v3657 = vld [vmem:[%s3630 + $0xd0] sm:$0xff]
      %v3658 = vld [vmem:[%s3630 + $0xd8] sm:$0xff]
      %v3659 = vld [vmem:[%s3630 + $0xe0] sm:$0xff]
      %v3660 = vld [vmem:[%s3630 + $0xe8] sm:$0xff]
      %v3661 = vld [vmem:[%s3630 + $0xf0] sm:$0xff]
      %v3662 = vld [vmem:[%s3630 + $0xf8] sm:$0xff]
      %v3663 = vld [vmem:[%s3630 + $0x100] sm:$0xff]
      %v3664 = vld [vmem:[%s3630 + $0x108] sm:$0xff]
      %v3665 = vld [vmem:[%s3630 + $0x110] sm:$0xff]
      %v3666 = vld [vmem:[%s3630 + $0x118] sm:$0xff]
      %s3667 = scalar_lea.vmem %s2, 1
      %v3668 = vld [vmem:[%s3667] sm:$0x1]
      %v3670 = vlaneseq
      %v3671 = vshrl.u32 %v3670, 7
      %v3672 = vsub.s32 0, %v3671
      %v3673 = vrot.slane %v3668, %v3672
      %v3676 = vsel %vm171, %v3536, 0
      %v3679 = vsel %vm171, %v3539, 0
      %v3682 = vsel %vm171, %v3542, 0
      %v3685 = vsel %vm171, %v3545, 0
      %v3688 = vsel %vm171, %v3548, 0
      %v3691 = vsel %vm171, %v3551, 0
      %v3694 = vsel %vm171, %v3554, 0
      %v3697 = vsel %vm171, %v3557, 0
      %v3700 = vsel %vm171, %v3560, 0
      %v3703 = vsel %vm171, %v3563, 0
      %v3706 = vsel %vm171, %v3566, 0
      %v3709 = vsel %vm171, %v3569, 0
      %v3712 = vsel %vm171, %v3572, 0
      %v3715 = vsel %vm171, %v3575, 0
      %v3718 = vsel %vm171, %v3578, 0
      %v3721 = vsel %vm171, %v3581, 0
      %v3724 = vsel %vm171, %v3584, 0
      %v3727 = vsel %vm171, %v3587, 0
      %v3730 = vsel %vm171, %v3590, 0
      %v3733 = vsel %vm171, %v3593, 0
      %v3736 = vsel %vm171, %v3596, 0
      %v3739 = vsel %vm171, %v3599, 0
      %v3742 = vsel %vm171, %v3602, 0
      %v3745 = vsel %vm171, %v3605, 0
      %v3748 = vsel %vm171, %v3608, 0
      %v3751 = vsel %vm171, %v3611, 0
      %v3754 = vsel %vm171, %v3614, 0
      %v3757 = vsel %vm171, %v3617, 0
      %v3760 = vsel %vm171, %v3620, 0
      %v3763 = vsel %vm171, %v3623, 0
      %v3766 = vsel %vm171, %v3626, 0
      %v3769 = vsel %vm171, %v3629, 0
      %3771 = vmatprep.subr.mxu0 0.0
      %3772 = vmatpush1.msra.mxu0 %v3631
      %3773 = vmatprep.subr.mxu0 0.0
      %3774 = vmatpush1.msra.mxu0 %v3632
      %3775 = vmatprep.subr.mxu0 0.0
      %3776 = vmatpush1.msra.mxu0 %v3633
      %3777 = vmatprep.subr.mxu0 0.0
      %3778 = vmatpush1.msra.mxu0 %v3634
      %3779 = vmatprep.subr.mxu0 0.0
      %3780 = vmatpush1.msra.mxu0 %v3635
      %3781 = vmatprep.subr.mxu0 0.0
      %3782 = vmatpush1.msra.mxu0 %v3636
      %3783 = vmatprep.subr.mxu0 0.0
      %3784 = vmatpush1.msra.mxu0 %v3637
      %3785 = vmatprep.subr.mxu0 0.0
      %3786 = vmatpush1.msra.mxu0 %v3638
      %3787 = vmatprep.subr.mxu0 0.0
      %3788 = vmatpush1.msra.mxu0 %v3639
      %3789 = vmatprep.subr.mxu0 0.0
      %3790 = vmatpush1.msra.mxu0 %v3640
      %3791 = vmatprep.subr.mxu0 0.0
      %3792 = vmatpush1.msra.mxu0 %v3641
      %3793 = vmatprep.subr.mxu0 0.0
      %3794 = vmatpush1.msra.mxu0 %v3642
      %3795 = vmatprep.subr.mxu0 0.0
      %3796 = vmatpush1.msra.mxu0 %v3643
      %3797 = vmatprep.subr.mxu0 0.0
      %3798 = vmatpush1.msra.mxu0 %v3644
      %3799 = vmatprep.subr.mxu0 0.0
      %3800 = vmatpush1.msra.mxu0 %v3645
      %3801 = vmatprep.subr.mxu0 0.0
      %3802 = vmatpush1.msra.mxu0 %v3646
      %3803 = vmatprep.subr.mxu0 0.0
      %3804 = vmatpush1.msra.mxu0 %v3647
      %3805 = vmatprep.subr.mxu0 0.0
      %3806 = vmatpush1.msra.mxu0 %v3648
      %3807 = vmatprep.subr.mxu0 0.0
      %3808 = vmatpush1.msra.mxu0 %v3649
      %3809 = vmatprep.subr.mxu0 0.0
      %3810 = vmatpush1.msra.mxu0 %v3650
      %3811 = vmatprep.subr.mxu0 0.0
      %3812 = vmatpush1.msra.mxu0 %v3651
      %3813 = vmatprep.subr.mxu0 0.0
      %3814 = vmatpush1.msra.mxu0 %v3652
      %3815 = vmatprep.subr.mxu0 0.0
      %3816 = vmatpush1.msra.mxu0 %v3653
      %3817 = vmatprep.subr.mxu0 0.0
      %3818 = vmatpush1.msra.mxu0 %v3654
      %3819 = vmatprep.subr.mxu0 0.0
      %3820 = vmatpush1.msra.mxu0 %v3655
      %3821 = vmatprep.subr.mxu0 0.0
      %3822 = vmatpush1.msra.mxu0 %v3656
      %3823 = vmatprep.subr.mxu0 0.0
      %3824 = vmatpush1.msra.mxu0 %v3657
      %3825 = vmatprep.subr.mxu0 0.0
      %3826 = vmatpush1.msra.mxu0 %v3658
      %3827 = vmatprep.subr.mxu0 0.0
      %3828 = vmatpush1.msra.mxu0 %v3659
      %3829 = vmatprep.subr.mxu0 0.0
      %3830 = vmatpush1.msra.mxu0 %v3660
      %3831 = vmatprep.subr.mxu0 0.0
      %3832 = vmatpush1.msra.mxu0 %v3661
      %3833 = vmatprep.subr.mxu0 0.0
      %3834 = vmatpush1.msra.mxu0 %v3662
      %3835 = vmatprep.mubr.f32.mxu0 %v3535
      %3836 = vmatmul.mubr.f32.gmra.mrb[0].mxu0 %v3534
      %v3837 = vpop.f32.mrb[0].mxu0
      %v3838 = vadd.f32 %v3673, %v3837
      %v3839 = vpop.f32.mrb[0].mxu0
      %3840 = vmatprep.mubr.f32.mxu0 %v3538
      %3841 = vmatmul.mubr.f32.gmra.mrb[0].mxu0 %v3537
      %v3842 = vpop.f32.mrb[0].mxu0
      %v3843 = vadd.f32 %v3673, %v3842
      %v3844 = vpop.f32.mrb[0].mxu0
      %3845 = vmatprep.mubr.f32.mxu0 %v3541
      %3846 = vmatmul.mubr.f32.gmra.mrb[0].mxu0 %v3540
      %v3847 = vpop.f32.mrb[0].mxu0
      %v3848 = vadd.f32 %v3673, %v3847
      %v3849 = vpop.f32.mrb[0].mxu0
      %3850 = vmatprep.mubr.f32.mxu0 %v3544
      %3851 = vmatmul.mubr.f32.gmra.mrb[0].mxu0 %v3543
      %v3852 = vpop.f32.mrb[0].mxu0
      %v3853 = vadd.f32 %v3673, %v3852
      %v3854 = vpop.f32.mrb[0].mxu0
      %3855 = vmatprep.mubr.f32.mxu0 %v3547
      %3856 = vmatmul.mubr.f32.gmra.mrb[0].mxu0 %v3546
      %v3857 = vpop.f32.mrb[0].mxu0
      %v3858 = vadd.f32 %v3673, %v3857
      %v3859 = vpop.f32.mrb[0].mxu0
      %3860 = vmatprep.mubr.f32.mxu0 %v3550
      %3861 = vmatmul.mubr.f32.gmra.mrb[0].mxu0 %v3549
      %v3862 = vpop.f32.mrb[0].mxu0
      %v3863 = vadd.f32 %v3673, %v3862
      %v3864 = vpop.f32.mrb[0].mxu0
      %3865 = vmatprep.mubr.f32.mxu0 %v3553
      %3866 = vmatmul.mubr.f32.gmra.mrb[0].mxu0 %v3552
      %v3867 = vpop.f32.mrb[0].mxu0
      %v3868 = vadd.f32 %v3673, %v3867
      %v3869 = vpop.f32.mrb[0].mxu0
      %3870 = vmatprep.mubr.f32.mxu0 %v3556
      %3871 = vmatmul.mubr.f32.gmra.mrb[0].mxu0 %v3555
      %v3872 = vpop.f32.mrb[0].mxu0
      %v3873 = vadd.f32 %v3673, %v3872
      %v3874 = vpop.f32.mrb[0].mxu0
      %3875 = vmatprep.mubr.f32.mxu0 %v3559
      %3876 = vmatmul.mubr.f32.gmra.mrb[0].mxu0 %v3558
      %v3877 = vpop.f32.mrb[0].mxu0
      %v3878 = vadd.f32 %v3673, %v3877
      %v3879 = vpop.f32.mrb[0].mxu0
      %3880 = vmatprep.mubr.f32.mxu0 %v3562
      %3881 = vmatmul.mubr.f32.gmra.mrb[0].mxu0 %v3561
      %v3882 = vpop.f32.mrb[0].mxu0
      %v3883 = vadd.f32 %v3673, %v3882
      %v3884 = vpop.f32.mrb[0].mxu0
      %3885 = vmatprep.mubr.f32.mxu0 %v3565
      %3886 = vmatmul.mubr.f32.gmra.mrb[0].mxu0 %v3564
      %v3887 = vpop.f32.mrb[0].mxu0
      %v3888 = vadd.f32 %v3673, %v3887
      %v3889 = vpop.f32.mrb[0].mxu0
      %3890 = vmatprep.mubr.f32.mxu0 %v3568
      %3891 = vmatmul.mubr.f32.gmra.mrb[0].mxu0 %v3567
      %v3892 = vpop.f32.mrb[0].mxu0
      %v3893 = vadd.f32 %v3673, %v3892
      %v3894 = vpop.f32.mrb[0].mxu0
      %3895 = vmatprep.mubr.f32.mxu0 %v3571
      %3896 = vmatmul.mubr.f32.gmra.mrb[0].mxu0 %v3570
      %v3897 = vpop.f32.mrb[0].mxu0
      %v3898 = vadd.f32 %v3673, %v3897
      %v3899 = vpop.f32.mrb[0].mxu0
      %3900 = vmatprep.mubr.f32.mxu0 %v3574
      %3901 = vmatmul.mubr.f32.gmra.mrb[0].mxu0 %v3573
      %v3902 = vpop.f32.mrb[0].mxu0
      %v3903 = vadd.f32 %v3673, %v3902
      %v3904 = vpop.f32.mrb[0].mxu0
      %3905 = vmatprep.mubr.f32.mxu0 %v3577
      %3906 = vmatmul.mubr.f32.gmra.mrb[0].mxu0 %v3576
      %v3907 = vpop.f32.mrb[0].mxu0
      %v3908 = vadd.f32 %v3673, %v3907
      %v3909 = vpop.f32.mrb[0].mxu0
      %3910 = vmatprep.mubr.f32.mxu0 %v3580
      %3911 = vmatmul.mubr.f32.gmra.mrb[0].mxu0 %v3579
      %v3912 = vpop.f32.mrb[0].mxu0
      %v3913 = vadd.f32 %v3673, %v3912
      %v3914 = vpop.f32.mrb[0].mxu0
      %3915 = vmatprep.mubr.f32.mxu0 %v3583
      %3916 = vmatmul.mubr.f32.gmra.mrb[0].mxu0 %v3582
      %v3917 = vpop.f32.mrb[0].mxu0
      %v3918 = vadd.f32 %v3673, %v3917
      %v3919 = vpop.f32.mrb[0].mxu0
      %3920 = vmatprep.mubr.f32.mxu0 %v3586
      %3921 = vmatmul.mubr.f32.gmra.mrb[0].mxu0 %v3585
      %v3922 = vpop.f32.mrb[0].mxu0
      %v3923 = vadd.f32 %v3673, %v3922
      %v3924 = vpop.f32.mrb[0].mxu0
      %3925 = vmatprep.mubr.f32.mxu0 %v3589
      %3926 = vmatmul.mubr.f32.gmra.mrb[0].mxu0 %v3588
      %v3927 = vpop.f32.mrb[0].mxu0
      %v3928 = vadd.f32 %v3673, %v3927
      %v3929 = vpop.f32.mrb[0].mxu0
      %3930 = vmatprep.mubr.f32.mxu0 %v3592
      %3931 = vmatmul.mubr.f32.gmra.mrb[0].mxu0 %v3591
      %v3932 = vpop.f32.mrb[0].mxu0
      %v3933 = vadd.f32 %v3673, %v3932
      %v3934 = vpop.f32.mrb[0].mxu0
      %3935 = vmatprep.mubr.f32.mxu0 %v3595
      %3936 = vmatmul.mubr.f32.gmra.mrb[0].mxu0 %v3594
      %v3937 = vpop.f32.mrb[0].mxu0
      %v3938 = vadd.f32 %v3673, %v3937
      %v3939 = vpop.f32.mrb[0].mxu0
      %3940 = vmatprep.mubr.f32.mxu0 %v3598
      %3941 = vmatmul.mubr.f32.gmra.mrb[0].mxu0 %v3597
      %v3942 = vpop.f32.mrb[0].mxu0
      %v3943 = vadd.f32 %v3673, %v3942
      %v3944 = vpop.f32.mrb[0].mxu0
      %3945 = vmatprep.mubr.f32.mxu0 %v3601
      %3946 = vmatmul.mubr.f32.gmra.mrb[0].mxu0 %v3600
      %v3947 = vpop.f32.mrb[0].mxu0
      %v3948 = vadd.f32 %v3673, %v3947
      %v3949 = vpop.f32.mrb[0].mxu0
      %3950 = vmatprep.mubr.f32.mxu0 %v3604
      %3951 = vmatmul.mubr.f32.gmra.mrb[0].mxu0 %v3603
      %v3952 = vpop.f32.mrb[0].mxu0
      %v3953 = vadd.f32 %v3673, %v3952
      %v3954 = vpop.f32.mrb[0].mxu0
      %3955 = vmatprep.mubr.f32.mxu0 %v3607
      %3956 = vmatmul.mubr.f32.gmra.mrb[0].mxu0 %v3606
      %v3957 = vpop.f32.mrb[0].mxu0
      %v3958 = vadd.f32 %v3673, %v3957
      %v3959 = vpop.f32.mrb[0].mxu0
      %3960 = vmatprep.mubr.f32.mxu0 %v3610
      %3961 = vmatmul.mubr.f32.gmra.mrb[0].mxu0 %v3609
      %v3962 = vpop.f32.mrb[0].mxu0
      %v3963 = vadd.f32 %v3673, %v3962
      %v3964 = vpop.f32.mrb[0].mxu0
      %3965 = vmatprep.mubr.f32.mxu0 %v3613
      %3966 = vmatmul.mubr.f32.gmra.mrb[0].mxu0 %v3612
      %v3967 = vpop.f32.mrb[0].mxu0
      %v3968 = vadd.f32 %v3673, %v3967
      %v3969 = vpop.f32.mrb[0].mxu0
      %3970 = vmatprep.mubr.f32.mxu0 %v3616
      %3971 = vmatmul.mubr.f32.gmra.mrb[0].mxu0 %v3615
      %v3972 = vpop.f32.mrb[0].mxu0
      %v3973 = vadd.f32 %v3673, %v3972
      %v3974 = vpop.f32.mrb[0].mxu0
      %3975 = vmatprep.mubr.f32.mxu0 %v3619
      %3976 = vmatmul.mubr.f32.gmra.mrb[0].mxu0 %v3618
      %v3977 = vpop.f32.mrb[0].mxu0
      %v3978 = vadd.f32 %v3673, %v3977
      %v3979 = vpop.f32.mrb[0].mxu0
      %3980 = vmatprep.mubr.f32.mxu0 %v3622
      %3981 = vmatmul.mubr.f32.gmra.mrb[0].mxu0 %v3621
      %v3982 = vpop.f32.mrb[0].mxu0
      %v3983 = vadd.f32 %v3673, %v3982
      %v3984 = vpop.f32.mrb[0].mxu0
      %3985 = vmatprep.mubr.f32.mxu0 %v3625
      %3986 = vmatmul.mubr.f32.gmra.mrb[0].mxu0 %v3624
      %v3987 = vpop.f32.mrb[0].mxu0
      %v3988 = vadd.f32 %v3673, %v3987
      %v3989 = vpop.f32.mrb[0].mxu0
      %3990 = vmatprep.mubr.f32.mxu0 %v3628
      %3991 = vmatmul.mubr.f32.gmra.mrb[0].mxu0 %v3627
      %v3992 = vpop.f32.mrb[0].mxu0
      %v3993 = vadd.f32 %v3673, %v3992
      %v3994 = vpop.f32.mrb[0].mxu0
      %3995 = vdwg.mxu0
      %3996 = vmatprep.subr.mxu0 0.0
      %3997 = vmatpush1.msra.mxu0 %v3663
      %3998 = vmatprep.subr.mxu0 0.0
      %3999 = vmatpush1.msra.mxu0 %v3664
      %4000 = vmatprep.subr.mxu0 0.0
      %4001 = vmatpush1.msra.mxu0 %v3665
      %4002 = vmatprep.subr.mxu0 0.0
      %4003 = vmatpush1.msra.mxu0 %v3666
      %4004 = vmatprep.subr.mxu0 0.0
      %4005 = vmatpush1.msra.mxu0 0.0
      %4006 = vmatprep.subr.mxu0 0.0
      %4007 = vmatpush1.msra.mxu0 0.0
      %4008 = vmatprep.subr.mxu0 0.0
      %4009 = vmatpush1.msra.mxu0 0.0
      %4010 = vmatprep.subr.mxu0 0.0
      %4011 = vmatpush1.msra.mxu0 0.0
      %4012 = vmatprep.subr.mxu0 0.0
      %4013 = vmatpush1.msra.mxu0 0.0
      %4014 = vmatprep.subr.mxu0 0.0
      %4015 = vmatpush1.msra.mxu0 0.0
      %4016 = vmatprep.subr.mxu0 0.0
      %4017 = vmatpush1.msra.mxu0 0.0
      %4018 = vmatprep.subr.mxu0 0.0
      %4019 = vmatpush1.msra.mxu0 0.0
      %4020 = vmatprep.subr.mxu0 0.0
      %4021 = vmatpush1.msra.mxu0 0.0
      %4022 = vmatprep.subr.mxu0 0.0
      %4023 = vmatpush1.msra.mxu0 0.0
      %4024 = vmatprep.subr.mxu0 0.0
      %4025 = vmatpush1.msra.mxu0 0.0
      %4026 = vmatprep.subr.mxu0 0.0
      %4027 = vmatpush1.msra.mxu0 0.0
      %4028 = vmatprep.subr.mxu0 0.0
      %4029 = vmatpush1.msra.mxu0 0.0
      %4030 = vmatprep.subr.mxu0 0.0
      %4031 = vmatpush1.msra.mxu0 0.0
      %4032 = vmatprep.subr.mxu0 0.0
      %4033 = vmatpush1.msra.mxu0 0.0
      %4034 = vmatprep.subr.mxu0 0.0
      %4035 = vmatpush1.msra.mxu0 0.0
      %4036 = vmatprep.subr.mxu0 0.0
      %4037 = vmatpush1.msra.mxu0 0.0
      %4038 = vmatprep.subr.mxu0 0.0
      %4039 = vmatpush1.msra.mxu0 0.0
      %4040 = vmatprep.subr.mxu0 0.0
      %4041 = vmatpush1.msra.mxu0 0.0
      %4042 = vmatprep.subr.mxu0 0.0
      %4043 = vmatpush1.msra.mxu0 0.0
      %4044 = vmatprep.subr.mxu0 0.0
      %4045 = vmatpush1.msra.mxu0 0.0
      %4046 = vmatprep.subr.mxu0 0.0
      %4047 = vmatpush1.msra.mxu0 0.0
      %4048 = vmatprep.subr.mxu0 0.0
      %4049 = vmatpush1.msra.mxu0 0.0
      %4050 = vmatprep.subr.mxu0 0.0
      %4051 = vmatpush1.msra.mxu0 0.0
      %4052 = vmatprep.subr.mxu0 0.0
      %4053 = vmatpush1.msra.mxu0 0.0
      %4054 = vmatprep.subr.mxu0 0.0
      %4055 = vmatpush1.msra.mxu0 0.0
      %4056 = vmatprep.subr.mxu0 0.0
      %4057 = vmatpush1.msra.mxu0 0.0
      %4058 = vmatprep.subr.mxu0 0.0
      %4059 = vmatpush1.msra.mxu0 0.0
      %4060 = vmatprep.mubr.f32.mxu0 0.0
      %4061 = vmatmul.mubr.f32.gmra.mrb[0].mxu0 %v3676
      %v4062 = vpop.f32.mrb[0].mxu0
      %v4063 = vadd.f32 %v3838, %v4062
      %v4064 = vpop.f32.mrb[0].mxu0
      %4065 = vmatprep.mubr.f32.mxu0 0.0
      %4066 = vmatmul.mubr.f32.gmra.mrb[0].mxu0 %v3679
      %v4067 = vpop.f32.mrb[0].mxu0
      %v4068 = vadd.f32 %v3843, %v4067
      %v4069 = vpop.f32.mrb[0].mxu0
      %4070 = vmatprep.mubr.f32.mxu0 0.0
      %4071 = vmatmul.mubr.f32.gmra.mrb[0].mxu0 %v3682
      %v4072 = vpop.f32.mrb[0].mxu0
      %v4073 = vadd.f32 %v3848, %v4072
      %v4074 = vpop.f32.mrb[0].mxu0
      %4075 = vmatprep.mubr.f32.mxu0 0.0
      %4076 = vmatmul.mubr.f32.gmra.mrb[0].mxu0 %v3685
      %v4077 = vpop.f32.mrb[0].mxu0
      %v4078 = vadd.f32 %v3853, %v4077
      %v4079 = vpop.f32.mrb[0].mxu0
      %4080 = vmatprep.mubr.f32.mxu0 0.0
      %4081 = vmatmul.mubr.f32.gmra.mrb[0].mxu0 %v3688
      %v4082 = vpop.f32.mrb[0].mxu0
      %v4083 = vadd.f32 %v3858, %v4082
      %v4084 = vpop.f32.mrb[0].mxu0
      %4085 = vmatprep.mubr.f32.mxu0 0.0
      %4086 = vmatmul.mubr.f32.gmra.mrb[0].mxu0 %v3691
      %v4087 = vpop.f32.mrb[0].mxu0
      %v4088 = vadd.f32 %v3863, %v4087
      %v4089 = vpop.f32.mrb[0].mxu0
      %4090 = vmatprep.mubr.f32.mxu0 0.0
      %4091 = vmatmul.mubr.f32.gmra.mrb[0].mxu0 %v3694
      %v4092 = vpop.f32.mrb[0].mxu0
      %v4093 = vadd.f32 %v3868, %v4092
      %v4094 = vpop.f32.mrb[0].mxu0
      %4095 = vmatprep.mubr.f32.mxu0 0.0
      %4096 = vmatmul.mubr.f32.gmra.mrb[0].mxu0 %v3697
      %v4097 = vpop.f32.mrb[0].mxu0
      %v4098 = vadd.f32 %v3873, %v4097
      %v4099 = vpop.f32.mrb[0].mxu0
      %4100 = vmatprep.mubr.f32.mxu0 0.0
      %4101 = vmatmul.mubr.f32.gmra.mrb[0].mxu0 %v3700
      %v4102 = vpop.f32.mrb[0].mxu0
      %v4103 = vadd.f32 %v3878, %v4102
      %v4104 = vpop.f32.mrb[0].mxu0
      %4105 = vmatprep.mubr.f32.mxu0 0.0
      %4106 = vmatmul.mubr.f32.gmra.mrb[0].mxu0 %v3703
      %v4107 = vpop.f32.mrb[0].mxu0
      %v4108 = vadd.f32 %v3883, %v4107
      %v4109 = vpop.f32.mrb[0].mxu0
      %4110 = vmatprep.mubr.f32.mxu0 0.0
      %4111 = vmatmul.mubr.f32.gmra.mrb[0].mxu0 %v3706
      %v4112 = vpop.f32.mrb[0].mxu0
      %v4113 = vadd.f32 %v3888, %v4112
      %v4114 = vpop.f32.mrb[0].mxu0
      %4115 = vmatprep.mubr.f32.mxu0 0.0
      %4116 = vmatmul.mubr.f32.gmra.mrb[0].mxu0 %v3709
      %v4117 = vpop.f32.mrb[0].mxu0
      %v4118 = vadd.f32 %v3893, %v4117
      %v4119 = vpop.f32.mrb[0].mxu0
      %4120 = vmatprep.mubr.f32.mxu0 0.0
      %4121 = vmatmul.mubr.f32.gmra.mrb[0].mxu0 %v3712
      %v4122 = vpop.f32.mrb[0].mxu0
      %v4123 = vadd.f32 %v3898, %v4122
      %v4124 = vpop.f32.mrb[0].mxu0
      %4125 = vmatprep.mubr.f32.mxu0 0.0
      %4126 = vmatmul.mubr.f32.gmra.mrb[0].mxu0 %v3715
      %v4127 = vpop.f32.mrb[0].mxu0
      %v4128 = vadd.f32 %v3903, %v4127
      %v4129 = vpop.f32.mrb[0].mxu0
      %4130 = vmatprep.mubr.f32.mxu0 0.0
      %4131 = vmatmul.mubr.f32.gmra.mrb[0].mxu0 %v3718
      %v4132 = vpop.f32.mrb[0].mxu0
      %v4133 = vadd.f32 %v3908, %v4132
      %v4134 = vpop.f32.mrb[0].mxu0
      %4135 = vmatprep.mubr.f32.mxu0 0.0
      %4136 = vmatmul.mubr.f32.gmra.mrb[0].mxu0 %v3721
      %v4137 = vpop.f32.mrb[0].mxu0
      %v4138 = vadd.f32 %v3913, %v4137
      %v4139 = vpop.f32.mrb[0].mxu0
      %4140 = vmatprep.mubr.f32.mxu0 0.0
      %4141 = vmatmul.mubr.f32.gmra.mrb[0].mxu0 %v3724
      %v4142 = vpop.f32.mrb[0].mxu0
      %v4143 = vadd.f32 %v3918, %v4142
      %v4144 = vpop.f32.mrb[0].mxu0
      %4145 = vmatprep.mubr.f32.mxu0 0.0
      %4146 = vmatmul.mubr.f32.gmra.mrb[0].mxu0 %v3727
      %v4147 = vpop.f32.mrb[0].mxu0
      %v4148 = vadd.f32 %v3923, %v4147
      %v4149 = vpop.f32.mrb[0].mxu0
      %4150 = vmatprep.mubr.f32.mxu0 0.0
      %4151 = vmatmul.mubr.f32.gmra.mrb[0].mxu0 %v3730
      %v4152 = vpop.f32.mrb[0].mxu0
      %v4153 = vadd.f32 %v3928, %v4152
      %v4154 = vpop.f32.mrb[0].mxu0
      %4155 = vmatprep.mubr.f32.mxu0 0.0
      %4156 = vmatmul.mubr.f32.gmra.mrb[0].mxu0 %v3733
      %v4157 = vpop.f32.mrb[0].mxu0
      %v4158 = vadd.f32 %v3933, %v4157
      %v4159 = vpop.f32.mrb[0].mxu0
      %4160 = vmatprep.mubr.f32.mxu0 0.0
      %4161 = vmatmul.mubr.f32.gmra.mrb[0].mxu0 %v3736
      %v4162 = vpop.f32.mrb[0].mxu0
      %v4163 = vadd.f32 %v3938, %v4162
      %v4164 = vpop.f32.mrb[0].mxu0
      %4165 = vmatprep.mubr.f32.mxu0 0.0
      %4166 = vmatmul.mubr.f32.gmra.mrb[0].mxu0 %v3739
      %v4167 = vpop.f32.mrb[0].mxu0
      %v4168 = vadd.f32 %v3943, %v4167
      %v4169 = vpop.f32.mrb[0].mxu0
      %4170 = vmatprep.mubr.f32.mxu0 0.0
      %4171 = vmatmul.mubr.f32.gmra.mrb[0].mxu0 %v3742
      %v4172 = vpop.f32.mrb[0].mxu0
      %v4173 = vadd.f32 %v3948, %v4172
      %v4174 = vpop.f32.mrb[0].mxu0
      %4175 = vmatprep.mubr.f32.mxu0 0.0
      %4176 = vmatmul.mubr.f32.gmra.mrb[0].mxu0 %v3745
      %v4177 = vpop.f32.mrb[0].mxu0
      %v4178 = vadd.f32 %v3953, %v4177
      %v4179 = vpop.f32.mrb[0].mxu0
      %4180 = vmatprep.mubr.f32.mxu0 0.0
      %4181 = vmatmul.mubr.f32.gmra.mrb[0].mxu0 %v3748
      %v4182 = vpop.f32.mrb[0].mxu0
      %v4183 = vadd.f32 %v3958, %v4182
      %v4184 = vpop.f32.mrb[0].mxu0
      %4185 = vmatprep.mubr.f32.mxu0 0.0
      %4186 = vmatmul.mubr.f32.gmra.mrb[0].mxu0 %v3751
      %v4187 = vpop.f32.mrb[0].mxu0
      %v4188 = vadd.f32 %v3963, %v4187
      %v4189 = vpop.f32.mrb[0].mxu0
      %4190 = vmatprep.mubr.f32.mxu0 0.0
      %4191 = vmatmul.mubr.f32.gmra.mrb[0].mxu0 %v3754
      %v4192 = vpop.f32.mrb[0].mxu0
      %v4193 = vadd.f32 %v3968, %v4192
      %v4194 = vpop.f32.mrb[0].mxu0
      %4195 = vmatprep.mubr.f32.mxu0 0.0
      %4196 = vmatmul.mubr.f32.gmra.mrb[0].mxu0 %v3757
      %v4197 = vpop.f32.mrb[0].mxu0
      %v4198 = vadd.f32 %v3973, %v4197
      %v4199 = vpop.f32.mrb[0].mxu0
      %4200 = vmatprep.mubr.f32.mxu0 0.0
      %4201 = vmatmul.mubr.f32.gmra.mrb[0].mxu0 %v3760
      %v4202 = vpop.f32.mrb[0].mxu0
      %v4203 = vadd.f32 %v3978, %v4202
      %v4204 = vpop.f32.mrb[0].mxu0
      %4205 = vmatprep.mubr.f32.mxu0 0.0
      %4206 = vmatmul.mubr.f32.gmra.mrb[0].mxu0 %v3763
      %v4207 = vpop.f32.mrb[0].mxu0
      %v4208 = vadd.f32 %v3983, %v4207
      %v4209 = vpop.f32.mrb[0].mxu0
      %4210 = vmatprep.mubr.f32.mxu0 0.0
      %4211 = vmatmul.mubr.f32.gmra.mrb[0].mxu0 %v3766
      %v4212 = vpop.f32.mrb[0].mxu0
      %v4213 = vadd.f32 %v3988, %v4212
      %v4214 = vpop.f32.mrb[0].mxu0
      %4215 = vmatprep.mubr.f32.mxu0 0.0
      %4216 = vmatmul.mubr.f32.gmra.mrb[0].mxu0 %v3769
      %v4217 = vpop.f32.mrb[0].mxu0
      %v4218 = vadd.f32 %v3993, %v4217
      %v4219 = vpop.f32.mrb[0].mxu0
      %4220 = vdwg.mxu0
      %v4221 = vmax.f32 %v4063, 0.0
      %v4222 = vmax.f32 %v4068, 0.0
      %v4223 = vmax.f32 %v4073, 0.0
      %v4224 = vmax.f32 %v4078, 0.0
      %v4225 = vmax.f32 %v4083, 0.0
      %v4226 = vmax.f32 %v4088, 0.0
      %v4227 = vmax.f32 %v4093, 0.0
      %v4228 = vmax.f32 %v4098, 0.0
      %v4229 = vmax.f32 %v4103, 0.0
      %v4230 = vmax.f32 %v4108, 0.0
      %v4231 = vmax.f32 %v4113, 0.0
      %v4232 = vmax.f32 %v4118, 0.0
      %v4233 = vmax.f32 %v4123, 0.0
      %v4234 = vmax.f32 %v4128, 0.0
      %v4235 = vmax.f32 %v4133, 0.0
      %v4236 = vmax.f32 %v4138, 0.0
      %v4237 = vmax.f32 %v4143, 0.0
      %v4238 = vmax.f32 %v4148, 0.0
      %v4239 = vmax.f32 %v4153, 0.0
      %v4240 = vmax.f32 %v4158, 0.0
      %v4241 = vmax.f32 %v4163, 0.0
      %v4242 = vmax.f32 %v4168, 0.0
      %v4243 = vmax.f32 %v4173, 0.0
      %v4244 = vmax.f32 %v4178, 0.0
      %v4245 = vmax.f32 %v4183, 0.0
      %v4246 = vmax.f32 %v4188, 0.0
      %v4247 = vmax.f32 %v4193, 0.0
      %v4248 = vmax.f32 %v4198, 0.0
      %v4249 = vmax.f32 %v4203, 0.0
      %v4250 = vmax.f32 %v4208, 0.0
      %v4251 = vmax.f32 %v4213, 0.0
      %v4252 = vmax.f32 %v4218, 0.0
      %4253 = vst.msk [vmem:[%s313 + $0x1] sm:$0xff] %vm171, %v4221
      %4254 = vst.msk [vmem:[%s313 + $0x9] sm:$0xff] %vm171, %v4222
      %4255 = vst.msk [vmem:[%s313 + $0x19] sm:$0xff] %vm171, %v4223
      %4256 = vst.msk [vmem:[%s313 + $0x21] sm:$0xff] %vm171, %v4224
      %4257 = vst.msk [vmem:[%s313 + $0x31] sm:$0xff] %vm171, %v4225
      %4258 = vst.msk [vmem:[%s313 + $0x39] sm:$0xff] %vm171, %v4226
      %4259 = vst.msk [vmem:[%s313 + $0x49] sm:$0xff] %vm171, %v4227
      %4260 = vst.msk [vmem:[%s313 + $0x51] sm:$0xff] %vm171, %v4228
      %4261 = vst.msk [vmem:[%s313 + $0x61] sm:$0xff] %vm171, %v4229
      %4262 = vst.msk [vmem:[%s313 + $0x69] sm:$0xff] %vm171, %v4230
      %4263 = vst.msk [vmem:[%s313 + $0x79] sm:$0xff] %vm171, %v4231
      %4264 = vst.msk [vmem:[%s313 + $0x81] sm:$0xff] %vm171, %v4232
      %4265 = vst.msk [vmem:[%s313 + $0x91] sm:$0xff] %vm171, %v4233
      %4266 = vst.msk [vmem:[%s313 + $0x99] sm:$0xff] %vm171, %v4234
      %4267 = vst.msk [vmem:[%s313 + $0xa9] sm:$0xff] %vm171, %v4235
      %4268 = vst.msk [vmem:[%s313 + $0xb1] sm:$0xff] %vm171, %v4236
      %4269 = vst.msk [vmem:[%s313 + $0xc1] sm:$0xff] %vm171, %v4237
      %4270 = vst.msk [vmem:[%s313 + $0xc9] sm:$0xff] %vm171, %v4238
      %4271 = vst.msk [vmem:[%s313 + $0xd9] sm:$0xff] %vm171, %v4239
      %4272 = vst.msk [vmem:[%s313 + $0xe1] sm:$0xff] %vm171, %v4240
      %4273 = vst.msk [vmem:[%s313 + $0xf1] sm:$0xff] %vm171, %v4241
      %4274 = vst.msk [vmem:[%s313 + $0xf9] sm:$0xff] %vm171, %v4242
      %4275 = vst.msk [vmem:[%s313 + $0x109] sm:$0xff] %vm171, %v4243
      %4276 = vst.msk [vmem:[%s313 + $0x111] sm:$0xff] %vm171, %v4244
      %4277 = vst.msk [vmem:[%s313 + $0x121] sm:$0xff] %vm171, %v4245
      %4278 = vst.msk [vmem:[%s313 + $0x129] sm:$0xff] %vm171, %v4246
      %4279 = vst.msk [vmem:[%s313 + $0x139] sm:$0xff] %vm171, %v4247
      %4280 = vst.msk [vmem:[%s313 + $0x141] sm:$0xff] %vm171, %v4248
      %4281 = vst.msk [vmem:[%s313 + $0x151] sm:$0xff] %vm171, %v4249
      %4282 = vst.msk [vmem:[%s313 + $0x159] sm:$0xff] %vm171, %v4250
      %4283 = vst.msk [vmem:[%s313 + $0x169] sm:$0xff] %vm171, %v4251
      %4284 = vst.msk [vmem:[%s313 + $0x171] sm:$0xff] %vm171, %v4252
      %v4285 = vld [vmem:[#allocation2] sm:$0xff]
      %v4286 = vld [vmem:[#allocation2 + $0x8] sm:$0xff]
      %v4287 = vld [vmem:[#allocation2 + $0x10] sm:$0x3]
      %v4288 = vld [vmem:[#allocation2 + $0x18] sm:$0xff]
      %v4289 = vld [vmem:[#allocation2 + $0x20] sm:$0xff]
      %v4290 = vld [vmem:[#allocation2 + $0x28] sm:$0x3]
      %v4291 = vld [vmem:[#allocation2 + $0x30] sm:$0xff]
      %v4292 = vld [vmem:[#allocation2 + $0x38] sm:$0xff]
      %v4293 = vld [vmem:[#allocation2 + $0x40] sm:$0x3]
      %v4294 = vld [vmem:[#allocation2 + $0x48] sm:$0xff]
      %v4295 = vld [vmem:[#allocation2 + $0x50] sm:$0xff]
      %v4296 = vld [vmem:[#allocation2 + $0x58] sm:$0x3]
      %v4297 = vld [vmem:[#allocation2 + $0x60] sm:$0xff]
      %v4298 = vld [vmem:[#allocation2 + $0x68] sm:$0xff]
      %v4299 = vld [vmem:[#allocation2 + $0x70] sm:$0x3]
      %v4300 = vld [vmem:[#allocation2 + $0x78] sm:$0xff]
      %v4301 = vld [vmem:[#allocation2 + $0x80] sm:$0xff]
      %v4302 = vld [vmem:[#allocation2 + $0x88] sm:$0x3]
      %v4303 = vld [vmem:[#allocation2 + $0x90] sm:$0xff]
      %v4304 = vld [vmem:[#allocation2 + $0x98] sm:$0xff]
      %v4305 = vld [vmem:[#allocation2 + $0xa0] sm:$0x3]
      %v4306 = vld [vmem:[#allocation2 + $0xa8] sm:$0xff]
      %v4307 = vld [vmem:[#allocation2 + $0xb0] sm:$0xff]
      %v4308 = vld [vmem:[#allocation2 + $0xb8] sm:$0x3]
      %v4309 = vld [vmem:[#allocation2 + $0xc0] sm:$0xff]
      %v4310 = vld [vmem:[#allocation2 + $0xc8] sm:$0xff]
      %v4311 = vld [vmem:[#allocation2 + $0xd0] sm:$0x3]
      %v4312 = vld [vmem:[#allocation2 + $0xd8] sm:$0xff]
      %v4313 = vld [vmem:[#allocation2 + $0xe0] sm:$0xff]
      %v4314 = vld [vmem:[#allocation2 + $0xe8] sm:$0x3]
      %v4315 = vld [vmem:[#allocation2 + $0xf0] sm:$0xff]
      %v4316 = vld [vmem:[#allocation2 + $0xf8] sm:$0xff]
      %v4317 = vld [vmem:[#allocation2 + $0x100] sm:$0x3]
      %v4318 = vld [vmem:[#allocation2 + $0x108] sm:$0xff]
      %v4319 = vld [vmem:[#allocation2 + $0x110] sm:$0xff]
      %v4320 = vld [vmem:[#allocation2 + $0x118] sm:$0x3]
      %v4321 = vld [vmem:[#allocation2 + $0x120] sm:$0xff]
      %v4322 = vld [vmem:[#allocation2 + $0x128] sm:$0xff]
      %v4323 = vld [vmem:[#allocation2 + $0x130] sm:$0x3]
      %v4324 = vld [vmem:[#allocation2 + $0x138] sm:$0xff]
      %v4325 = vld [vmem:[#allocation2 + $0x140] sm:$0xff]
      %v4326 = vld [vmem:[#allocation2 + $0x148] sm:$0x3]
      %v4327 = vld [vmem:[#allocation2 + $0x150] sm:$0xff]
      %v4328 = vld [vmem:[#allocation2 + $0x158] sm:$0xff]
      %v4329 = vld [vmem:[#allocation2 + $0x160] sm:$0x3]
      %v4330 = vld [vmem:[#allocation2 + $0x168] sm:$0xff]
      %v4331 = vld [vmem:[#allocation2 + $0x170] sm:$0xff]
      %v4332 = vld [vmem:[#allocation2 + $0x178] sm:$0x3]
      %v4333 = vld [vmem:[#allocation2 + $0x180] sm:$0xff]
      %v4334 = vld [vmem:[#allocation2 + $0x188] sm:$0xff]
      %v4335 = vld [vmem:[#allocation2 + $0x190] sm:$0x3]
      %v4336 = vld [vmem:[#allocation2 + $0x198] sm:$0xff]
      %v4337 = vld [vmem:[#allocation2 + $0x1a0] sm:$0xff]
      %v4338 = vld [vmem:[#allocation2 + $0x1a8] sm:$0x3]
      %4339 = vst.msk [vmem:[#allocation4] sm:$0xff] %vm171, %v4285
      %4340 = vst.msk [vmem:[#allocation4 + $0x18] sm:$0xff] %vm171, %v4286
      %4341 = vst.msk [vmem:[#allocation4 + $0x30] sm:$0xff] %vm171, %v4288
      %4342 = vst.msk [vmem:[#allocation4 + $0x48] sm:$0xff] %vm171, %v4289
      %4343 = vst.msk [vmem:[#allocation4 + $0x60] sm:$0xff] %vm171, %v4291
      %4344 = vst.msk [vmem:[#allocation4 + $0x78] sm:$0xff] %vm171, %v4292
      %4345 = vst.msk [vmem:[#allocation4 + $0x90] sm:$0xff] %vm171, %v4294
      %4346 = vst.msk [vmem:[#allocation4 + $0xa8] sm:$0xff] %vm171, %v4295
      %4347 = vst.msk [vmem:[#allocation4 + $0xc0] sm:$0xff] %vm171, %v4297
      %4348 = vst.msk [vmem:[#allocation4 + $0xd8] sm:$0xff] %vm171, %v4298
      %4349 = vst.msk [vmem:[#allocation4 + $0xf0] sm:$0xff] %vm171, %v4300
      %4350 = vst.msk [vmem:[#allocation4 + $0x108] sm:$0xff] %vm171, %v4301
      %4351 = vst.msk [vmem:[#allocation4 + $0x120] sm:$0xff] %vm171, %v4303
      %4352 = vst.msk [vmem:[#allocation4 + $0x138] sm:$0xff] %vm171, %v4304
      %4353 = vst.msk [vmem:[#allocation4 + $0x150] sm:$0xff] %vm171, %v4306
      %4354 = vst.msk [vmem:[#allocation4 + $0x168] sm:$0xff] %vm171, %v4307
      %4355 = vst.msk [vmem:[#allocation4 + $0x180] sm:$0xff] %vm171, %v4309
      %4356 = vst.msk [vmem:[#allocation4 + $0x198] sm:$0xff] %vm171, %v4310
      %4357 = vst.msk [vmem:[#allocation4 + $0x1b0] sm:$0xff] %vm171, %v4312
      %4358 = vst.msk [vmem:[#allocation4 + $0x1c8] sm:$0xff] %vm171, %v4313
      %4359 = vst.msk [vmem:[#allocation4 + $0x1e0] sm:$0xff] %vm171, %v4315
      %4360 = vst.msk [vmem:[#allocation4 + $0x1f8] sm:$0xff] %vm171, %v4316
      %4361 = vst.msk [vmem:[#allocation4 + $0x210] sm:$0xff] %vm171, %v4318
      %4362 = vst.msk [vmem:[#allocation4 + $0x228] sm:$0xff] %vm171, %v4319
      %4363 = vst.msk [vmem:[#allocation4 + $0x240] sm:$0xff] %vm171, %v4321
      %4364 = vst.msk [vmem:[#allocation4 + $0x258] sm:$0xff] %vm171, %v4322
      %4365 = vst.msk [vmem:[#allocation4 + $0x270] sm:$0xff] %vm171, %v4324
      %4366 = vst.msk [vmem:[#allocation4 + $0x288] sm:$0xff] %vm171, %v4325
      %4367 = vst.msk [vmem:[#allocation4 + $0x2a0] sm:$0xff] %vm171, %v4327
      %4368 = vst.msk [vmem:[#allocation4 + $0x2b8] sm:$0xff] %vm171, %v4328
      %4369 = vst.msk [vmem:[#allocation4 + $0x2d0] sm:$0xff] %vm171, %v4330
      %4370 = vst.msk [vmem:[#allocation4 + $0x2e8] sm:$0xff] %vm171, %v4331
      %4403 = vrot.lane.b32.xlu0 %v4288, 96
      %v4404 = vpop.permute.xlu0 %4403
      %4405 = vrot.lane.b32.xlu0 %v4289, 96
      %v4406 = vpop.permute.xlu0 %4405
      %4407 = vrot.lane.b32.xlu0 %v4291, 96
      %v4408 = vpop.permute.xlu0 %4407
      %4409 = vrot.lane.b32.xlu0 %v4292, 96
      %v4410 = vpop.permute.xlu0 %4409
      %4411 = vrot.lane.b32.xlu0 %v4294, 96
      %v4412 = vpop.permute.xlu0 %4411
      %4413 = vrot.lane.b32.xlu0 %v4295, 96
      %v4414 = vpop.permute.xlu0 %4413
      %4415 = vrot.lane.b32.xlu0 %v4297, 96
      %v4416 = vpop.permute.xlu0 %4415
      %4417 = vrot.lane.b32.xlu0 %v4298, 96
      %v4418 = vpop.permute.xlu0 %4417
      %4419 = vrot.lane.b32.xlu0 %v4300, 96
      %v4420 = vpop.permute.xlu0 %4419
      %4421 = vrot.lane.b32.xlu0 %v4301, 96
      %v4422 = vpop.permute.xlu0 %4421
      %4423 = vrot.lane.b32.xlu0 %v4303, 96
      %v4424 = vpop.permute.xlu0 %4423
      %4425 = vrot.lane.b32.xlu0 %v4304, 96
      %v4426 = vpop.permute.xlu0 %4425
      %4427 = vrot.lane.b32.xlu0 %v4306, 96
      %v4428 = vpop.permute.xlu0 %4427
      %4429 = vrot.lane.b32.xlu0 %v4307, 96
      %v4430 = vpop.permute.xlu0 %4429
      %4431 = vrot.lane.b32.xlu0 %v4309, 96
      %v4432 = vpop.permute.xlu0 %4431
      %4433 = vrot.lane.b32.xlu0 %v4310, 96
      %v4434 = vpop.permute.xlu0 %4433
      %4435 = vrot.lane.b32.xlu0 %v4312, 96
      %v4436 = vpop.permute.xlu0 %4435
      %4437 = vrot.lane.b32.xlu0 %v4313, 96
      %v4438 = vpop.permute.xlu0 %4437
      %4439 = vrot.lane.b32.xlu0 %v4315, 96
      %v4440 = vpop.permute.xlu0 %4439
      %4441 = vrot.lane.b32.xlu0 %v4316, 96
      %v4442 = vpop.permute.xlu0 %4441
      %4443 = vrot.lane.b32.xlu0 %v4318, 96
      %v4444 = vpop.permute.xlu0 %4443
      %4445 = vrot.lane.b32.xlu0 %v4319, 96
      %v4446 = vpop.permute.xlu0 %4445
      %4447 = vrot.lane.b32.xlu0 %v4321, 96
      %v4448 = vpop.permute.xlu0 %4447
      %4449 = vrot.lane.b32.xlu0 %v4322, 96
      %v4450 = vpop.permute.xlu0 %4449
      %4451 = vrot.lane.b32.xlu0 %v4324, 96
      %v4452 = vpop.permute.xlu0 %4451
      %4453 = vrot.lane.b32.xlu0 %v4325, 96
      %v4454 = vpop.permute.xlu0 %4453
      %4455 = vrot.lane.b32.xlu0 %v4327, 96
      %v4456 = vpop.permute.xlu0 %4455
      %4457 = vrot.lane.b32.xlu0 %v4328, 96
      %v4458 = vpop.permute.xlu0 %4457
      %4459 = vrot.lane.b32.xlu0 %v4330, 96
      %v4460 = vpop.permute.xlu0 %4459
      %4461 = vrot.lane.b32.xlu0 %v4331, 96
      %v4462 = vpop.permute.xlu0 %4461
      %4463 = vrot.lane.b32.xlu0 %v4333, 96
      %v4464 = vpop.permute.xlu0 %4463
      %4465 = vrot.lane.b32.xlu0 %v4334, 96
      %v4466 = vpop.permute.xlu0 %4465
      %4499 = vst.msk [vmem:[#allocation4] sm:$0xff] %vm561, %v4404
      %4500 = vst.msk [vmem:[#allocation4 + $0x18] sm:$0xff] %vm561, %v4406
      %4501 = vst.msk [vmem:[#allocation4 + $0x30] sm:$0xff] %vm561, %v4408
      %4502 = vst.msk [vmem:[#allocation4 + $0x48] sm:$0xff] %vm561, %v4410
      %4503 = vst.msk [vmem:[#allocation4 + $0x60] sm:$0xff] %vm561, %v4412
      %4504 = vst.msk [vmem:[#allocation4 + $0x78] sm:$0xff] %vm561, %v4414
      %4505 = vst.msk [vmem:[#allocation4 + $0x90] sm:$0xff] %vm561, %v4416
      %4506 = vst.msk [vmem:[#allocation4 + $0xa8] sm:$0xff] %vm561, %v4418
      %4507 = vst.msk [vmem:[#allocation4 + $0xc0] sm:$0xff] %vm561, %v4420
      %4508 = vst.msk [vmem:[#allocation4 + $0xd8] sm:$0xff] %vm561, %v4422
      %4509 = vst.msk [vmem:[#allocation4 + $0xf0] sm:$0xff] %vm561, %v4424
      %4510 = vst.msk [vmem:[#allocation4 + $0x108] sm:$0xff] %vm561, %v4426
      %4511 = vst.msk [vmem:[#allocation4 + $0x120] sm:$0xff] %vm561, %v4428
      %4512 = vst.msk [vmem:[#allocation4 + $0x138] sm:$0xff] %vm561, %v4430
      %4513 = vst.msk [vmem:[#allocation4 + $0x150] sm:$0xff] %vm561, %v4432
      %4514 = vst.msk [vmem:[#allocation4 + $0x168] sm:$0xff] %vm561, %v4434
      %4515 = vst.msk [vmem:[#allocation4 + $0x180] sm:$0xff] %vm561, %v4436
      %4516 = vst.msk [vmem:[#allocation4 + $0x198] sm:$0xff] %vm561, %v4438
      %4517 = vst.msk [vmem:[#allocation4 + $0x1b0] sm:$0xff] %vm561, %v4440
      %4518 = vst.msk [vmem:[#allocation4 + $0x1c8] sm:$0xff] %vm561, %v4442
      %4519 = vst.msk [vmem:[#allocation4 + $0x1e0] sm:$0xff] %vm561, %v4444
      %4520 = vst.msk [vmem:[#allocation4 + $0x1f8] sm:$0xff] %vm561, %v4446
      %4521 = vst.msk [vmem:[#allocation4 + $0x210] sm:$0xff] %vm561, %v4448
      %4522 = vst.msk [vmem:[#allocation4 + $0x228] sm:$0xff] %vm561, %v4450
      %4523 = vst.msk [vmem:[#allocation4 + $0x240] sm:$0xff] %vm561, %v4452
      %4524 = vst.msk [vmem:[#allocation4 + $0x258] sm:$0xff] %vm561, %v4454
      %4525 = vst.msk [vmem:[#allocation4 + $0x270] sm:$0xff] %vm561, %v4456
      %4526 = vst.msk [vmem:[#allocation4 + $0x288] sm:$0xff] %vm561, %v4458
      %4527 = vst.msk [vmem:[#allocation4 + $0x2a0] sm:$0xff] %vm561, %v4460
      %4528 = vst.msk [vmem:[#allocation4 + $0x2b8] sm:$0xff] %vm561, %v4462
      %4529 = vst.msk [vmem:[#allocation4 + $0x2d0] sm:$0xff] %vm561, %v4464
      %4530 = vst.msk [vmem:[#allocation4 + $0x2e8] sm:$0xff] %vm561, %v4466
      %4533 = vrot.lane.b32.xlu0 %v4291, 64
      %v4534 = vpop.permute.xlu0 %4533
      %4535 = vrot.lane.b32.xlu0 %v4292, 64
      %v4536 = vpop.permute.xlu0 %4535
      %4537 = vrot.lane.b32.xlu0 %v4294, 64
      %v4538 = vpop.permute.xlu0 %4537
      %4539 = vrot.lane.b32.xlu0 %v4295, 64
      %v4540 = vpop.permute.xlu0 %4539
      %4541 = vrot.lane.b32.xlu0 %v4297, 64
      %v4542 = vpop.permute.xlu0 %4541
      %4543 = vrot.lane.b32.xlu0 %v4298, 64
      %v4544 = vpop.permute.xlu0 %4543
      %4545 = vrot.lane.b32.xlu0 %v4300, 64
      %v4546 = vpop.permute.xlu0 %4545
      %4547 = vrot.lane.b32.xlu0 %v4301, 64
      %v4548 = vpop.permute.xlu0 %4547
      %4549 = vrot.lane.b32.xlu0 %v4303, 64
      %v4550 = vpop.permute.xlu0 %4549
      %4551 = vrot.lane.b32.xlu0 %v4304, 64
      %v4552 = vpop.permute.xlu0 %4551
      %4553 = vrot.lane.b32.xlu0 %v4306, 64
      %v4554 = vpop.permute.xlu0 %4553
      %4555 = vrot.lane.b32.xlu0 %v4307, 64
      %v4556 = vpop.permute.xlu0 %4555
      %4557 = vrot.lane.b32.xlu0 %v4309, 64
      %v4558 = vpop.permute.xlu0 %4557
      %4559 = vrot.lane.b32.xlu0 %v4310, 64
      %v4560 = vpop.permute.xlu0 %4559
      %4561 = vrot.lane.b32.xlu0 %v4312, 64
      %v4562 = vpop.permute.xlu0 %4561
      %4563 = vrot.lane.b32.xlu0 %v4313, 64
      %v4564 = vpop.permute.xlu0 %4563
      %4565 = vrot.lane.b32.xlu0 %v4315, 64
      %v4566 = vpop.permute.xlu0 %4565
      %4567 = vrot.lane.b32.xlu0 %v4316, 64
      %v4568 = vpop.permute.xlu0 %4567
      %4569 = vrot.lane.b32.xlu0 %v4318, 64
      %v4570 = vpop.permute.xlu0 %4569
      %4571 = vrot.lane.b32.xlu0 %v4319, 64
      %v4572 = vpop.permute.xlu0 %4571
      %4573 = vrot.lane.b32.xlu0 %v4321, 64
      %v4574 = vpop.permute.xlu0 %4573
      %4575 = vrot.lane.b32.xlu0 %v4322, 64
      %v4576 = vpop.permute.xlu0 %4575
      %4577 = vrot.lane.b32.xlu0 %v4324, 64
      %v4578 = vpop.permute.xlu0 %4577
      %4579 = vrot.lane.b32.xlu0 %v4325, 64
      %v4580 = vpop.permute.xlu0 %4579
      %4581 = vrot.lane.b32.xlu0 %v4327, 64
      %v4582 = vpop.permute.xlu0 %4581
      %4583 = vrot.lane.b32.xlu0 %v4328, 64
      %v4584 = vpop.permute.xlu0 %4583
      %4585 = vrot.lane.b32.xlu0 %v4330, 64
      %v4586 = vpop.permute.xlu0 %4585
      %4587 = vrot.lane.b32.xlu0 %v4331, 64
      %v4588 = vpop.permute.xlu0 %4587
      %4589 = vrot.lane.b32.xlu0 %v4333, 64
      %v4590 = vpop.permute.xlu0 %4589
      %4591 = vrot.lane.b32.xlu0 %v4334, 64
      %v4592 = vpop.permute.xlu0 %4591
      %4593 = vrot.lane.b32.xlu0 %v4336, 64
      %v4594 = vpop.permute.xlu0 %4593
      %4595 = vrot.lane.b32.xlu0 %v4337, 64
      %v4596 = vpop.permute.xlu0 %4595
      %4629 = vst.msk [vmem:[#allocation4 + $0x8] sm:$0xff] %vm692, %v4534
      %4630 = vst.msk [vmem:[#allocation4 + $0x20] sm:$0xff] %vm692, %v4536
      %4631 = vst.msk [vmem:[#allocation4 + $0x38] sm:$0xff] %vm692, %v4538
      %4632 = vst.msk [vmem:[#allocation4 + $0x50] sm:$0xff] %vm692, %v4540
      %4633 = vst.msk [vmem:[#allocation4 + $0x68] sm:$0xff] %vm692, %v4542
      %4634 = vst.msk [vmem:[#allocation4 + $0x80] sm:$0xff] %vm692, %v4544
      %4635 = vst.msk [vmem:[#allocation4 + $0x98] sm:$0xff] %vm692, %v4546
      %4636 = vst.msk [vmem:[#allocation4 + $0xb0] sm:$0xff] %vm692, %v4548
      %4637 = vst.msk [vmem:[#allocation4 + $0xc8] sm:$0xff] %vm692, %v4550
      %4638 = vst.msk [vmem:[#allocation4 + $0xe0] sm:$0xff] %vm692, %v4552
      %4639 = vst.msk [vmem:[#allocation4 + $0xf8] sm:$0xff] %vm692, %v4554
      %4640 = vst.msk [vmem:[#allocation4 + $0x110] sm:$0xff] %vm692, %v4556
      %4641 = vst.msk [vmem:[#allocation4 + $0x128] sm:$0xff] %vm692, %v4558
      %4642 = vst.msk [vmem:[#allocation4 + $0x140] sm:$0xff] %vm692, %v4560
      %4643 = vst.msk [vmem:[#allocation4 + $0x158] sm:$0xff] %vm692, %v4562
      %4644 = vst.msk [vmem:[#allocation4 + $0x170] sm:$0xff] %vm692, %v4564
      %4645 = vst.msk [vmem:[#allocation4 + $0x188] sm:$0xff] %vm692, %v4566
      %4646 = vst.msk [vmem:[#allocation4 + $0x1a0] sm:$0xff] %vm692, %v4568
      %4647 = vst.msk [vmem:[#allocation4 + $0x1b8] sm:$0xff] %vm692, %v4570
      %4648 = vst.msk [vmem:[#allocation4 + $0x1d0] sm:$0xff] %vm692, %v4572
      %4649 = vst.msk [vmem:[#allocation4 + $0x1e8] sm:$0xff] %vm692, %v4574
      %4650 = vst.msk [vmem:[#allocation4 + $0x200] sm:$0xff] %vm692, %v4576
      %4651 = vst.msk [vmem:[#allocation4 + $0x218] sm:$0xff] %vm692, %v4578
      %4652 = vst.msk [vmem:[#allocation4 + $0x230] sm:$0xff] %vm692, %v4580
      %4653 = vst.msk [vmem:[#allocation4 + $0x248] sm:$0xff] %vm692, %v4582
      %4654 = vst.msk [vmem:[#allocation4 + $0x260] sm:$0xff] %vm692, %v4584
      %4655 = vst.msk [vmem:[#allocation4 + $0x278] sm:$0xff] %vm692, %v4586
      %4656 = vst.msk [vmem:[#allocation4 + $0x290] sm:$0xff] %vm692, %v4588
      %4657 = vst.msk [vmem:[#allocation4 + $0x2a8] sm:$0xff] %vm692, %v4590
      %4658 = vst.msk [vmem:[#allocation4 + $0x2c0] sm:$0xff] %vm692, %v4592
      %4659 = vst.msk [vmem:[#allocation4 + $0x2d8] sm:$0xff] %vm692, %v4594
      %4660 = vst.msk [vmem:[#allocation4 + $0x2f0] sm:$0xff] %vm692, %v4596
      %v4679 = vrot.slane %v4285, 1
      %v4680 = vrot.slane %v4286, 1
      %v4681 = vsel %vm743, %v4679, %v4680
      %v4682 = vrot.slane %v4287, 1
      %v4683 = vsel %vm743, %v4680, %v4682
      %v4684 = vrot.slane %v4288, 1
      %v4685 = vrot.slane %v4289, 1
      %v4686 = vsel %vm743, %v4684, %v4685
      %v4687 = vrot.slane %v4290, 1
      %v4688 = vsel %vm743, %v4685, %v4687
      %v4689 = vrot.slane %v4291, 1
      %v4690 = vrot.slane %v4292, 1
      %v4691 = vsel %vm743, %v4689, %v4690
      %v4692 = vrot.slane %v4293, 1
      %v4693 = vsel %vm743, %v4690, %v4692
      %v4694 = vrot.slane %v4294, 1
      %v4695 = vrot.slane %v4295, 1
      %v4696 = vsel %vm743, %v4694, %v4695
      %v4697 = vrot.slane %v4296, 1
      %v4698 = vsel %vm743, %v4695, %v4697
      %v4699 = vrot.slane %v4297, 1
      %v4700 = vrot.slane %v4298, 1
      %v4701 = vsel %vm743, %v4699, %v4700
      %v4702 = vrot.slane %v4299, 1
      %v4703 = vsel %vm743, %v4700, %v4702
      %v4704 = vrot.slane %v4300, 1
      %v4705 = vrot.slane %v4301, 1
      %v4706 = vsel %vm743, %v4704, %v4705
      %v4707 = vrot.slane %v4302, 1
      %v4708 = vsel %vm743, %v4705, %v4707
      %v4709 = vrot.slane %v4303, 1
      %v4710 = vrot.slane %v4304, 1
      %v4711 = vsel %vm743, %v4709, %v4710
      %v4712 = vrot.slane %v4305, 1
      %v4713 = vsel %vm743, %v4710, %v4712
      %v4714 = vrot.slane %v4306, 1
      %v4715 = vrot.slane %v4307, 1
      %v4716 = vsel %vm743, %v4714, %v4715
      %v4717 = vrot.slane %v4308, 1
      %v4718 = vsel %vm743, %v4715, %v4717
      %v4719 = vrot.slane %v4309, 1
      %v4720 = vrot.slane %v4310, 1
      %v4721 = vsel %vm743, %v4719, %v4720
      %v4722 = vrot.slane %v4311, 1
      %v4723 = vsel %vm743, %v4720, %v4722
      %v4724 = vrot.slane %v4312, 1
      %v4725 = vrot.slane %v4313, 1
      %v4726 = vsel %vm743, %v4724, %v4725
      %v4727 = vrot.slane %v4314, 1
      %v4728 = vsel %vm743, %v4725, %v4727
      %v4729 = vrot.slane %v4315, 1
      %v4730 = vrot.slane %v4316, 1
      %v4731 = vsel %vm743, %v4729, %v4730
      %v4732 = vrot.slane %v4317, 1
      %v4733 = vsel %vm743, %v4730, %v4732
      %v4734 = vrot.slane %v4318, 1
      %v4735 = vrot.slane %v4319, 1
      %v4736 = vsel %vm743, %v4734, %v4735
      %v4737 = vrot.slane %v4320, 1
      %v4738 = vsel %vm743, %v4735, %v4737
      %v4739 = vrot.slane %v4321, 1
      %v4740 = vrot.slane %v4322, 1
      %v4741 = vsel %vm743, %v4739, %v4740
      %v4742 = vrot.slane %v4323, 1
      %v4743 = vsel %vm743, %v4740, %v4742
      %v4744 = vrot.slane %v4324, 1
      %v4745 = vrot.slane %v4325, 1
      %v4746 = vsel %vm743, %v4744, %v4745
      %v4747 = vrot.slane %v4326, 1
      %v4748 = vsel %vm743, %v4745, %v4747
      %v4749 = vrot.slane %v4327, 1
      %v4750 = vrot.slane %v4328, 1
      %v4751 = vsel %vm743, %v4749, %v4750
      %v4752 = vrot.slane %v4329, 1
      %v4753 = vsel %vm743, %v4750, %v4752
      %v4754 = vrot.slane %v4330, 1
      %v4755 = vrot.slane %v4331, 1
      %v4756 = vsel %vm743, %v4754, %v4755
      %v4757 = vrot.slane %v4332, 1
      %v4758 = vsel %vm743, %v4755, %v4757
      %4759 = vrot.lane.b32.xlu0 %v4681, 32
      %v4760 = vpop.permute.xlu0 %4759
      %4761 = vrot.lane.b32.xlu0 %v4683, 32
      %v4762 = vpop.permute.xlu0 %4761
      %4763 = vrot.lane.b32.xlu0 %v4686, 32
      %v4764 = vpop.permute.xlu0 %4763
      %4765 = vrot.lane.b32.xlu0 %v4688, 32
      %v4766 = vpop.permute.xlu0 %4765
      %4767 = vrot.lane.b32.xlu0 %v4691, 32
      %v4768 = vpop.permute.xlu0 %4767
      %4769 = vrot.lane.b32.xlu0 %v4693, 32
      %v4770 = vpop.permute.xlu0 %4769
      %4771 = vrot.lane.b32.xlu0 %v4696, 32
      %v4772 = vpop.permute.xlu0 %4771
      %4773 = vrot.lane.b32.xlu0 %v4698, 32
      %v4774 = vpop.permute.xlu0 %4773
      %4775 = vrot.lane.b32.xlu0 %v4701, 32
      %v4776 = vpop.permute.xlu0 %4775
      %4777 = vrot.lane.b32.xlu0 %v4703, 32
      %v4778 = vpop.permute.xlu0 %4777
      %4779 = vrot.lane.b32.xlu0 %v4706, 32
      %v4780 = vpop.permute.xlu0 %4779
      %4781 = vrot.lane.b32.xlu0 %v4708, 32
      %v4782 = vpop.permute.xlu0 %4781
      %4783 = vrot.lane.b32.xlu0 %v4711, 32
      %v4784 = vpop.permute.xlu0 %4783
      %4785 = vrot.lane.b32.xlu0 %v4713, 32
      %v4786 = vpop.permute.xlu0 %4785
      %4787 = vrot.lane.b32.xlu0 %v4716, 32
      %v4788 = vpop.permute.xlu0 %4787
      %4789 = vrot.lane.b32.xlu0 %v4718, 32
      %v4790 = vpop.permute.xlu0 %4789
      %4791 = vrot.lane.b32.xlu0 %v4721, 32
      %v4792 = vpop.permute.xlu0 %4791
      %4793 = vrot.lane.b32.xlu0 %v4723, 32
      %v4794 = vpop.permute.xlu0 %4793
      %4795 = vrot.lane.b32.xlu0 %v4726, 32
      %v4796 = vpop.permute.xlu0 %4795
      %4797 = vrot.lane.b32.xlu0 %v4728, 32
      %v4798 = vpop.permute.xlu0 %4797
      %4799 = vrot.lane.b32.xlu0 %v4731, 32
      %v4800 = vpop.permute.xlu0 %4799
      %4801 = vrot.lane.b32.xlu0 %v4733, 32
      %v4802 = vpop.permute.xlu0 %4801
      %4803 = vrot.lane.b32.xlu0 %v4736, 32
      %v4804 = vpop.permute.xlu0 %4803
      %4805 = vrot.lane.b32.xlu0 %v4738, 32
      %v4806 = vpop.permute.xlu0 %4805
      %4807 = vrot.lane.b32.xlu0 %v4741, 32
      %v4808 = vpop.permute.xlu0 %4807
      %4809 = vrot.lane.b32.xlu0 %v4743, 32
      %v4810 = vpop.permute.xlu0 %4809
      %4811 = vrot.lane.b32.xlu0 %v4746, 32
      %v4812 = vpop.permute.xlu0 %4811
      %4813 = vrot.lane.b32.xlu0 %v4748, 32
      %v4814 = vpop.permute.xlu0 %4813
      %4815 = vrot.lane.b32.xlu0 %v4751, 32
      %v4816 = vpop.permute.xlu0 %4815
      %4817 = vrot.lane.b32.xlu0 %v4753, 32
      %v4818 = vpop.permute.xlu0 %4817
      %4819 = vrot.lane.b32.xlu0 %v4756, 32
      %v4820 = vpop.permute.xlu0 %4819
      %4821 = vrot.lane.b32.xlu0 %v4758, 32
      %v4822 = vpop.permute.xlu0 %4821
      %4855 = vst.msk [vmem:[#allocation4] sm:$0xff] %vm920, %v4760
      %4856 = vst.msk [vmem:[#allocation4 + $0x18] sm:$0xff] %vm920, %v4762
      %4857 = vst.msk [vmem:[#allocation4 + $0x30] sm:$0xff] %vm920, %v4764
      %4858 = vst.msk [vmem:[#allocation4 + $0x48] sm:$0xff] %vm920, %v4766
      %4859 = vst.msk [vmem:[#allocation4 + $0x60] sm:$0xff] %vm920, %v4768
      %4860 = vst.msk [vmem:[#allocation4 + $0x78] sm:$0xff] %vm920, %v4770
      %4861 = vst.msk [vmem:[#allocation4 + $0x90] sm:$0xff] %vm920, %v4772
      %4862 = vst.msk [vmem:[#allocation4 + $0xa8] sm:$0xff] %vm920, %v4774
      %4863 = vst.msk [vmem:[#allocation4 + $0xc0] sm:$0xff] %vm920, %v4776
      %4864 = vst.msk [vmem:[#allocation4 + $0xd8] sm:$0xff] %vm920, %v4778
      %4865 = vst.msk [vmem:[#allocation4 + $0xf0] sm:$0xff] %vm920, %v4780
      %4866 = vst.msk [vmem:[#allocation4 + $0x108] sm:$0xff] %vm920, %v4782
      %4867 = vst.msk [vmem:[#allocation4 + $0x120] sm:$0xff] %vm920, %v4784
      %4868 = vst.msk [vmem:[#allocation4 + $0x138] sm:$0xff] %vm920, %v4786
      %4869 = vst.msk [vmem:[#allocation4 + $0x150] sm:$0xff] %vm920, %v4788
      %4870 = vst.msk [vmem:[#allocation4 + $0x168] sm:$0xff] %vm920, %v4790
      %4871 = vst.msk [vmem:[#allocation4 + $0x180] sm:$0xff] %vm920, %v4792
      %4872 = vst.msk [vmem:[#allocation4 + $0x198] sm:$0xff] %vm920, %v4794
      %4873 = vst.msk [vmem:[#allocation4 + $0x1b0] sm:$0xff] %vm920, %v4796
      %4874 = vst.msk [vmem:[#allocation4 + $0x1c8] sm:$0xff] %vm920, %v4798
      %4875 = vst.msk [vmem:[#allocation4 + $0x1e0] sm:$0xff] %vm920, %v4800
      %4876 = vst.msk [vmem:[#allocation4 + $0x1f8] sm:$0xff] %vm920, %v4802
      %4877 = vst.msk [vmem:[#allocation4 + $0x210] sm:$0xff] %vm920, %v4804
      %4878 = vst.msk [vmem:[#allocation4 + $0x228] sm:$0xff] %vm920, %v4806
      %4879 = vst.msk [vmem:[#allocation4 + $0x240] sm:$0xff] %vm920, %v4808
      %4880 = vst.msk [vmem:[#allocation4 + $0x258] sm:$0xff] %vm920, %v4810
      %4881 = vst.msk [vmem:[#allocation4 + $0x270] sm:$0xff] %vm920, %v4812
      %4882 = vst.msk [vmem:[#allocation4 + $0x288] sm:$0xff] %vm920, %v4814
      %4883 = vst.msk [vmem:[#allocation4 + $0x2a0] sm:$0xff] %vm920, %v4816
      %4884 = vst.msk [vmem:[#allocation4 + $0x2b8] sm:$0xff] %vm920, %v4818
      %4885 = vst.msk [vmem:[#allocation4 + $0x2d0] sm:$0xff] %vm920, %v4820
      %4886 = vst.msk [vmem:[#allocation4 + $0x2e8] sm:$0xff] %vm920, %v4822
      %v4888 = vrot.slane %v4333, 1
      %v4889 = vrot.slane %v4334, 1
      %v4890 = vsel %vm743, %v4888, %v4889
      %v4891 = vrot.slane %v4335, 1
      %v4892 = vsel %vm743, %v4889, %v4891
      %4925 = vst.msk [vmem:[#allocation4 + $0x8] sm:$0xff] %vm171, %v4686
      %4926 = vst.msk [vmem:[#allocation4 + $0x20] sm:$0xff] %vm171, %v4688
      %4927 = vst.msk [vmem:[#allocation4 + $0x38] sm:$0xff] %vm171, %v4691
      %4928 = vst.msk [vmem:[#allocation4 + $0x50] sm:$0xff] %vm171, %v4693
      %4929 = vst.msk [vmem:[#allocation4 + $0x68] sm:$0xff] %vm171, %v4696
      %4930 = vst.msk [vmem:[#allocation4 + $0x80] sm:$0xff] %vm171, %v4698
      %4931 = vst.msk [vmem:[#allocation4 + $0x98] sm:$0xff] %vm171, %v4701
      %4932 = vst.msk [vmem:[#allocation4 + $0xb0] sm:$0xff] %vm171, %v4703
      %4933 = vst.msk [vmem:[#allocation4 + $0xc8] sm:$0xff] %vm171, %v4706
      %4934 = vst.msk [vmem:[#allocation4 + $0xe0] sm:$0xff] %vm171, %v4708
      %4935 = vst.msk [vmem:[#allocation4 + $0xf8] sm:$0xff] %vm171, %v4711
      %4936 = vst.msk [vmem:[#allocation4 + $0x110] sm:$0xff] %vm171, %v4713
      %4937 = vst.msk [vmem:[#allocation4 + $0x128] sm:$0xff] %vm171, %v4716
      %4938 = vst.msk [vmem:[#allocation4 + $0x140] sm:$0xff] %vm171, %v4718
      %4939 = vst.msk [vmem:[#allocation4 + $0x158] sm:$0xff] %vm171, %v4721
      %4940 = vst.msk [vmem:[#allocation4 + $0x170] sm:$0xff] %vm171, %v4723
      %4941 = vst.msk [vmem:[#allocation4 + $0x188] sm:$0xff] %vm171, %v4726
      %4942 = vst.msk [vmem:[#allocation4 + $0x1a0] sm:$0xff] %vm171, %v4728
      %4943 = vst.msk [vmem:[#allocation4 + $0x1b8] sm:$0xff] %vm171, %v4731
      %4944 = vst.msk [vmem:[#allocation4 + $0x1d0] sm:$0xff] %vm171, %v4733
      %4945 = vst.msk [vmem:[#allocation4 + $0x1e8] sm:$0xff] %vm171, %v4736
      %4946 = vst.msk [vmem:[#allocation4 + $0x200] sm:$0xff] %vm171, %v4738
      %4947 = vst.msk [vmem:[#allocation4 + $0x218] sm:$0xff] %vm171, %v4741
      %4948 = vst.msk [vmem:[#allocation4 + $0x230] sm:$0xff] %vm171, %v4743
      %4949 = vst.msk [vmem:[#allocation4 + $0x248] sm:$0xff] %vm171, %v4746
      %4950 = vst.msk [vmem:[#allocation4 + $0x260] sm:$0xff] %vm171, %v4748
      %4951 = vst.msk [vmem:[#allocation4 + $0x278] sm:$0xff] %vm171, %v4751
      %4952 = vst.msk [vmem:[#allocation4 + $0x290] sm:$0xff] %vm171, %v4753
      %4953 = vst.msk [vmem:[#allocation4 + $0x2a8] sm:$0xff] %vm171, %v4756
      %4954 = vst.msk [vmem:[#allocation4 + $0x2c0] sm:$0xff] %vm171, %v4758
      %4955 = vst.msk [vmem:[#allocation4 + $0x2d8] sm:$0xff] %vm171, %v4890
      %4956 = vst.msk [vmem:[#allocation4 + $0x2f0] sm:$0xff] %vm171, %v4892
      %v4958 = vrot.slane %v4336, 1
      %v4959 = vrot.slane %v4337, 1
      %v4960 = vsel %vm743, %v4958, %v4959
      %v4961 = vrot.slane %v4338, 1
      %v4962 = vsel %vm743, %v4959, %v4961
      %4963 = vrot.lane.b32.xlu0 %v4691, 96
      %v4964 = vpop.permute.xlu0 %4963
      %4965 = vrot.lane.b32.xlu0 %v4693, 96
      %v4966 = vpop.permute.xlu0 %4965
      %4967 = vrot.lane.b32.xlu0 %v4696, 96
      %v4968 = vpop.permute.xlu0 %4967
      %4969 = vrot.lane.b32.xlu0 %v4698, 96
      %v4970 = vpop.permute.xlu0 %4969
      %4971 = vrot.lane.b32.xlu0 %v4701, 96
      %v4972 = vpop.permute.xlu0 %4971
      %4973 = vrot.lane.b32.xlu0 %v4703, 96
      %v4974 = vpop.permute.xlu0 %4973
      %4975 = vrot.lane.b32.xlu0 %v4706, 96
      %v4976 = vpop.permute.xlu0 %4975
      %4977 = vrot.lane.b32.xlu0 %v4708, 96
      %v4978 = vpop.permute.xlu0 %4977
      %4979 = vrot.lane.b32.xlu0 %v4711, 96
      %v4980 = vpop.permute.xlu0 %4979
      %4981 = vrot.lane.b32.xlu0 %v4713, 96
      %v4982 = vpop.permute.xlu0 %4981
      %4983 = vrot.lane.b32.xlu0 %v4716, 96
      %v4984 = vpop.permute.xlu0 %4983
      %4985 = vrot.lane.b32.xlu0 %v4718, 96
      %v4986 = vpop.permute.xlu0 %4985
      %4987 = vrot.lane.b32.xlu0 %v4721, 96
      %v4988 = vpop.permute.xlu0 %4987
      %4989 = vrot.lane.b32.xlu0 %v4723, 96
      %v4990 = vpop.permute.xlu0 %4989
      %4991 = vrot.lane.b32.xlu0 %v4726, 96
      %v4992 = vpop.permute.xlu0 %4991
      %4993 = vrot.lane.b32.xlu0 %v4728, 96
      %v4994 = vpop.permute.xlu0 %4993
      %4995 = vrot.lane.b32.xlu0 %v4731, 96
      %v4996 = vpop.permute.xlu0 %4995
      %4997 = vrot.lane.b32.xlu0 %v4733, 96
      %v4998 = vpop.permute.xlu0 %4997
      %4999 = vrot.lane.b32.xlu0 %v4736, 96
      %v5000 = vpop.permute.xlu0 %4999
      %5001 = vrot.lane.b32.xlu0 %v4738, 96
      %v5002 = vpop.permute.xlu0 %5001
      %5003 = vrot.lane.b32.xlu0 %v4741, 96
      %v5004 = vpop.permute.xlu0 %5003
      %5005 = vrot.lane.b32.xlu0 %v4743, 96
      %v5006 = vpop.permute.xlu0 %5005
      %5007 = vrot.lane.b32.xlu0 %v4746, 96
      %v5008 = vpop.permute.xlu0 %5007
      %5009 = vrot.lane.b32.xlu0 %v4748, 96
      %v5010 = vpop.permute.xlu0 %5009
      %5011 = vrot.lane.b32.xlu0 %v4751, 96
      %v5012 = vpop.permute.xlu0 %5011
      %5013 = vrot.lane.b32.xlu0 %v4753, 96
      %v5014 = vpop.permute.xlu0 %5013
      %5015 = vrot.lane.b32.xlu0 %v4756, 96
      %v5016 = vpop.permute.xlu0 %5015
      %5017 = vrot.lane.b32.xlu0 %v4758, 96
      %v5018 = vpop.permute.xlu0 %5017
      %5019 = vrot.lane.b32.xlu0 %v4890, 96
      %v5020 = vpop.permute.xlu0 %5019
      %5021 = vrot.lane.b32.xlu0 %v4892, 96
      %v5022 = vpop.permute.xlu0 %5021
      %5023 = vrot.lane.b32.xlu0 %v4960, 96
      %v5024 = vpop.permute.xlu0 %5023
      %5025 = vrot.lane.b32.xlu0 %v4962, 96
      %v5026 = vpop.permute.xlu0 %5025
      %5059 = vst.msk [vmem:[#allocation4 + $0x8] sm:$0xff] %vm561, %v4964
      %5060 = vst.msk [vmem:[#allocation4 + $0x20] sm:$0xff] %vm561, %v4966
      %5061 = vst.msk [vmem:[#allocation4 + $0x38] sm:$0xff] %vm561, %v4968
      %5062 = vst.msk [vmem:[#allocation4 + $0x50] sm:$0xff] %vm561, %v4970
      %5063 = vst.msk [vmem:[#allocation4 + $0x68] sm:$0xff] %vm561, %v4972
      %5064 = vst.msk [vmem:[#allocation4 + $0x80] sm:$0xff] %vm561, %v4974
      %5065 = vst.msk [vmem:[#allocation4 + $0x98] sm:$0xff] %vm561, %v4976
      %5066 = vst.msk [vmem:[#allocation4 + $0xb0] sm:$0xff] %vm561, %v4978
      %5067 = vst.msk [vmem:[#allocation4 + $0xc8] sm:$0xff] %vm561, %v4980
      %5068 = vst.msk [vmem:[#allocation4 + $0xe0] sm:$0xff] %vm561, %v4982
      %5069 = vst.msk [vmem:[#allocation4 + $0xf8] sm:$0xff] %vm561, %v4984
      %5070 = vst.msk [vmem:[#allocation4 + $0x110] sm:$0xff] %vm561, %v4986
      %5071 = vst.msk [vmem:[#allocation4 + $0x128] sm:$0xff] %vm561, %v4988
      %5072 = vst.msk [vmem:[#allocation4 + $0x140] sm:$0xff] %vm561, %v4990
      %5073 = vst.msk [vmem:[#allocation4 + $0x158] sm:$0xff] %vm561, %v4992
      %5074 = vst.msk [vmem:[#allocation4 + $0x170] sm:$0xff] %vm561, %v4994
      %5075 = vst.msk [vmem:[#allocation4 + $0x188] sm:$0xff] %vm561, %v4996
      %5076 = vst.msk [vmem:[#allocation4 + $0x1a0] sm:$0xff] %vm561, %v4998
      %5077 = vst.msk [vmem:[#allocation4 + $0x1b8] sm:$0xff] %vm561, %v5000
      %5078 = vst.msk [vmem:[#allocation4 + $0x1d0] sm:$0xff] %vm561, %v5002
      %5079 = vst.msk [vmem:[#allocation4 + $0x1e8] sm:$0xff] %vm561, %v5004
      %5080 = vst.msk [vmem:[#allocation4 + $0x200] sm:$0xff] %vm561, %v5006
      %5081 = vst.msk [vmem:[#allocation4 + $0x218] sm:$0xff] %vm561, %v5008
      %5082 = vst.msk [vmem:[#allocation4 + $0x230] sm:$0xff] %vm561, %v5010
      %5083 = vst.msk [vmem:[#allocation4 + $0x248] sm:$0xff] %vm561, %v5012
      %5084 = vst.msk [vmem:[#allocation4 + $0x260] sm:$0xff] %vm561, %v5014
      %5085 = vst.msk [vmem:[#allocation4 + $0x278] sm:$0xff] %vm561, %v5016
      %5086 = vst.msk [vmem:[#allocation4 + $0x290] sm:$0xff] %vm561, %v5018
      %5087 = vst.msk [vmem:[#allocation4 + $0x2a8] sm:$0xff] %vm561, %v5020
      %5088 = vst.msk [vmem:[#allocation4 + $0x2c0] sm:$0xff] %vm561, %v5022
      %5089 = vst.msk [vmem:[#allocation4 + $0x2d8] sm:$0xff] %vm561, %v5024
      %5090 = vst.msk [vmem:[#allocation4 + $0x2f0] sm:$0xff] %vm561, %v5026
      %v5091 = vrot.slane %v4285, 2
      %v5092 = vrot.slane %v4286, 2
      %v5093 = vsel %vm1157, %v5091, %v5092
      %v5094 = vrot.slane %v4287, 2
      %v5095 = vsel %vm1157, %v5092, %v5094
      %v5096 = vrot.slane %v4288, 2
      %v5097 = vrot.slane %v4289, 2
      %v5098 = vsel %vm1157, %v5096, %v5097
      %v5099 = vrot.slane %v4290, 2
      %v5100 = vsel %vm1157, %v5097, %v5099
      %v5101 = vrot.slane %v4291, 2
      %v5102 = vrot.slane %v4292, 2
      %v5103 = vsel %vm1157, %v5101, %v5102
      %v5104 = vrot.slane %v4293, 2
      %v5105 = vsel %vm1157, %v5102, %v5104
      %v5106 = vrot.slane %v4294, 2
      %v5107 = vrot.slane %v4295, 2
      %v5108 = vsel %vm1157, %v5106, %v5107
      %v5109 = vrot.slane %v4296, 2
      %v5110 = vsel %vm1157, %v5107, %v5109
      %v5111 = vrot.slane %v4297, 2
      %v5112 = vrot.slane %v4298, 2
      %v5113 = vsel %vm1157, %v5111, %v5112
      %v5114 = vrot.slane %v4299, 2
      %v5115 = vsel %vm1157, %v5112, %v5114
      %v5116 = vrot.slane %v4300, 2
      %v5117 = vrot.slane %v4301, 2
      %v5118 = vsel %vm1157, %v5116, %v5117
      %v5119 = vrot.slane %v4302, 2
      %v5120 = vsel %vm1157, %v5117, %v5119
      %v5121 = vrot.slane %v4303, 2
      %v5122 = vrot.slane %v4304, 2
      %v5123 = vsel %vm1157, %v5121, %v5122
      %v5124 = vrot.slane %v4305, 2
      %v5125 = vsel %vm1157, %v5122, %v5124
      %v5126 = vrot.slane %v4306, 2
      %v5127 = vrot.slane %v4307, 2
      %v5128 = vsel %vm1157, %v5126, %v5127
      %v5129 = vrot.slane %v4308, 2
      %v5130 = vsel %vm1157, %v5127, %v5129
      %v5131 = vrot.slane %v4309, 2
      %v5132 = vrot.slane %v4310, 2
      %v5133 = vsel %vm1157, %v5131, %v5132
      %v5134 = vrot.slane %v4311, 2
      %v5135 = vsel %vm1157, %v5132, %v5134
      %v5136 = vrot.slane %v4312, 2
      %v5137 = vrot.slane %v4313, 2
      %v5138 = vsel %vm1157, %v5136, %v5137
      %v5139 = vrot.slane %v4314, 2
      %v5140 = vsel %vm1157, %v5137, %v5139
      %v5141 = vrot.slane %v4315, 2
      %v5142 = vrot.slane %v4316, 2
      %v5143 = vsel %vm1157, %v5141, %v5142
      %v5144 = vrot.slane %v4317, 2
      %v5145 = vsel %vm1157, %v5142, %v5144
      %v5146 = vrot.slane %v4318, 2
      %v5147 = vrot.slane %v4319, 2
      %v5148 = vsel %vm1157, %v5146, %v5147
      %v5149 = vrot.slane %v4320, 2
      %v5150 = vsel %vm1157, %v5147, %v5149
      %v5151 = vrot.slane %v4321, 2
      %v5152 = vrot.slane %v4322, 2
      %v5153 = vsel %vm1157, %v5151, %v5152
      %v5154 = vrot.slane %v4323, 2
      %v5155 = vsel %vm1157, %v5152, %v5154
      %v5156 = vrot.slane %v4324, 2
      %v5157 = vrot.slane %v4325, 2
      %v5158 = vsel %vm1157, %v5156, %v5157
      %v5159 = vrot.slane %v4326, 2
      %v5160 = vsel %vm1157, %v5157, %v5159
      %v5161 = vrot.slane %v4327, 2
      %v5162 = vrot.slane %v4328, 2
      %v5163 = vsel %vm1157, %v5161, %v5162
      %v5164 = vrot.slane %v4329, 2
      %v5165 = vsel %vm1157, %v5162, %v5164
      %v5166 = vrot.slane %v4330, 2
      %v5167 = vrot.slane %v4331, 2
      %v5168 = vsel %vm1157, %v5166, %v5167
      %v5169 = vrot.slane %v4332, 2
      %v5170 = vsel %vm1157, %v5167, %v5169
      %5171 = vrot.lane.b32.xlu0 %v5093, 64
      %v5172 = vpop.permute.xlu0 %5171
      %5173 = vrot.lane.b32.xlu0 %v5095, 64
      %v5174 = vpop.permute.xlu0 %5173
      %5175 = vrot.lane.b32.xlu0 %v5098, 64
      %v5176 = vpop.permute.xlu0 %5175
      %5177 = vrot.lane.b32.xlu0 %v5100, 64
      %v5178 = vpop.permute.xlu0 %5177
      %5179 = vrot.lane.b32.xlu0 %v5103, 64
      %v5180 = vpop.permute.xlu0 %5179
      %5181 = vrot.lane.b32.xlu0 %v5105, 64
      %v5182 = vpop.permute.xlu0 %5181
      %5183 = vrot.lane.b32.xlu0 %v5108, 64
      %v5184 = vpop.permute.xlu0 %5183
      %5185 = vrot.lane.b32.xlu0 %v5110, 64
      %v5186 = vpop.permute.xlu0 %5185
      %5187 = vrot.lane.b32.xlu0 %v5113, 64
      %v5188 = vpop.permute.xlu0 %5187
      %5189 = vrot.lane.b32.xlu0 %v5115, 64
      %v5190 = vpop.permute.xlu0 %5189
      %5191 = vrot.lane.b32.xlu0 %v5118, 64
      %v5192 = vpop.permute.xlu0 %5191
      %5193 = vrot.lane.b32.xlu0 %v5120, 64
      %v5194 = vpop.permute.xlu0 %5193
      %5195 = vrot.lane.b32.xlu0 %v5123, 64
      %v5196 = vpop.permute.xlu0 %5195
      %5197 = vrot.lane.b32.xlu0 %v5125, 64
      %v5198 = vpop.permute.xlu0 %5197
      %5199 = vrot.lane.b32.xlu0 %v5128, 64
      %v5200 = vpop.permute.xlu0 %5199
      %5201 = vrot.lane.b32.xlu0 %v5130, 64
      %v5202 = vpop.permute.xlu0 %5201
      %5203 = vrot.lane.b32.xlu0 %v5133, 64
      %v5204 = vpop.permute.xlu0 %5203
      %5205 = vrot.lane.b32.xlu0 %v5135, 64
      %v5206 = vpop.permute.xlu0 %5205
      %5207 = vrot.lane.b32.xlu0 %v5138, 64
      %v5208 = vpop.permute.xlu0 %5207
      %5209 = vrot.lane.b32.xlu0 %v5140, 64
      %v5210 = vpop.permute.xlu0 %5209
      %5211 = vrot.lane.b32.xlu0 %v5143, 64
      %v5212 = vpop.permute.xlu0 %5211
      %5213 = vrot.lane.b32.xlu0 %v5145, 64
      %v5214 = vpop.permute.xlu0 %5213
      %5215 = vrot.lane.b32.xlu0 %v5148, 64
      %v5216 = vpop.permute.xlu0 %5215
      %5217 = vrot.lane.b32.xlu0 %v5150, 64
      %v5218 = vpop.permute.xlu0 %5217
      %5219 = vrot.lane.b32.xlu0 %v5153, 64
      %v5220 = vpop.permute.xlu0 %5219
      %5221 = vrot.lane.b32.xlu0 %v5155, 64
      %v5222 = vpop.permute.xlu0 %5221
      %5223 = vrot.lane.b32.xlu0 %v5158, 64
      %v5224 = vpop.permute.xlu0 %5223
      %5225 = vrot.lane.b32.xlu0 %v5160, 64
      %v5226 = vpop.permute.xlu0 %5225
      %5227 = vrot.lane.b32.xlu0 %v5163, 64
      %v5228 = vpop.permute.xlu0 %5227
      %5229 = vrot.lane.b32.xlu0 %v5165, 64
      %v5230 = vpop.permute.xlu0 %5229
      %5231 = vrot.lane.b32.xlu0 %v5168, 64
      %v5232 = vpop.permute.xlu0 %5231
      %5233 = vrot.lane.b32.xlu0 %v5170, 64
      %v5234 = vpop.permute.xlu0 %5233
      %5267 = vst.msk [vmem:[#allocation4] sm:$0xff] %vm692, %v5172
      %5268 = vst.msk [vmem:[#allocation4 + $0x18] sm:$0xff] %vm692, %v5174
      %5269 = vst.msk [vmem:[#allocation4 + $0x30] sm:$0xff] %vm692, %v5176
      %5270 = vst.msk [vmem:[#allocation4 + $0x48] sm:$0xff] %vm692, %v5178
      %5271 = vst.msk [vmem:[#allocation4 + $0x60] sm:$0xff] %vm692, %v5180
      %5272 = vst.msk [vmem:[#allocation4 + $0x78] sm:$0xff] %vm692, %v5182
      %5273 = vst.msk [vmem:[#allocation4 + $0x90] sm:$0xff] %vm692, %v5184
      %5274 = vst.msk [vmem:[#allocation4 + $0xa8] sm:$0xff] %vm692, %v5186
      %5275 = vst.msk [vmem:[#allocation4 + $0xc0] sm:$0xff] %vm692, %v5188
      %5276 = vst.msk [vmem:[#allocation4 + $0xd8] sm:$0xff] %vm692, %v5190
      %5277 = vst.msk [vmem:[#allocation4 + $0xf0] sm:$0xff] %vm692, %v5192
      %5278 = vst.msk [vmem:[#allocation4 + $0x108] sm:$0xff] %vm692, %v5194
      %5279 = vst.msk [vmem:[#allocation4 + $0x120] sm:$0xff] %vm692, %v5196
      %5280 = vst.msk [vmem:[#allocation4 + $0x138] sm:$0xff] %vm692, %v5198
      %5281 = vst.msk [vmem:[#allocation4 + $0x150] sm:$0xff] %vm692, %v5200
      %5282 = vst.msk [vmem:[#allocation4 + $0x168] sm:$0xff] %vm692, %v5202
      %5283 = vst.msk [vmem:[#allocation4 + $0x180] sm:$0xff] %vm692, %v5204
      %5284 = vst.msk [vmem:[#allocation4 + $0x198] sm:$0xff] %vm692, %v5206
      %5285 = vst.msk [vmem:[#allocation4 + $0x1b0] sm:$0xff] %vm692, %v5208
      %5286 = vst.msk [vmem:[#allocation4 + $0x1c8] sm:$0xff] %vm692, %v5210
      %5287 = vst.msk [vmem:[#allocation4 + $0x1e0] sm:$0xff] %vm692, %v5212
      %5288 = vst.msk [vmem:[#allocation4 + $0x1f8] sm:$0xff] %vm692, %v5214
      %5289 = vst.msk [vmem:[#allocation4 + $0x210] sm:$0xff] %vm692, %v5216
      %5290 = vst.msk [vmem:[#allocation4 + $0x228] sm:$0xff] %vm692, %v5218
      %5291 = vst.msk [vmem:[#allocation4 + $0x240] sm:$0xff] %vm692, %v5220
      %5292 = vst.msk [vmem:[#allocation4 + $0x258] sm:$0xff] %vm692, %v5222
      %5293 = vst.msk [vmem:[#allocation4 + $0x270] sm:$0xff] %vm692, %v5224
      %5294 = vst.msk [vmem:[#allocation4 + $0x288] sm:$0xff] %vm692, %v5226
      %5295 = vst.msk [vmem:[#allocation4 + $0x2a0] sm:$0xff] %vm692, %v5228
      %5296 = vst.msk [vmem:[#allocation4 + $0x2b8] sm:$0xff] %vm692, %v5230
      %5297 = vst.msk [vmem:[#allocation4 + $0x2d0] sm:$0xff] %vm692, %v5232
      %5298 = vst.msk [vmem:[#allocation4 + $0x2e8] sm:$0xff] %vm692, %v5234
      %v5299 = vrot.slane %v4333, 2
      %v5300 = vrot.slane %v4334, 2
      %v5301 = vsel %vm1157, %v5299, %v5300
      %v5302 = vrot.slane %v4335, 2
      %v5303 = vsel %vm1157, %v5300, %v5302
      %5304 = vrot.lane.b32.xlu0 %v5098, 32
      %v5305 = vpop.permute.xlu0 %5304
      %5306 = vrot.lane.b32.xlu0 %v5100, 32
      %v5307 = vpop.permute.xlu0 %5306
      %5308 = vrot.lane.b32.xlu0 %v5103, 32
      %v5309 = vpop.permute.xlu0 %5308
      %5310 = vrot.lane.b32.xlu0 %v5105, 32
      %v5311 = vpop.permute.xlu0 %5310
      %5312 = vrot.lane.b32.xlu0 %v5108, 32
      %v5313 = vpop.permute.xlu0 %5312
      %5314 = vrot.lane.b32.xlu0 %v5110, 32
      %v5315 = vpop.permute.xlu0 %5314
      %5316 = vrot.lane.b32.xlu0 %v5113, 32
      %v5317 = vpop.permute.xlu0 %5316
      %5318 = vrot.lane.b32.xlu0 %v5115, 32
      %v5319 = vpop.permute.xlu0 %5318
      %5320 = vrot.lane.b32.xlu0 %v5118, 32
      %v5321 = vpop.permute.xlu0 %5320
      %5322 = vrot.lane.b32.xlu0 %v5120, 32
      %v5323 = vpop.permute.xlu0 %5322
      %5324 = vrot.lane.b32.xlu0 %v5123, 32
      %v5325 = vpop.permute.xlu0 %5324
      %5326 = vrot.lane.b32.xlu0 %v5125, 32
      %v5327 = vpop.permute.xlu0 %5326
      %5328 = vrot.lane.b32.xlu0 %v5128, 32
      %v5329 = vpop.permute.xlu0 %5328
      %5330 = vrot.lane.b32.xlu0 %v5130, 32
      %v5331 = vpop.permute.xlu0 %5330
      %5332 = vrot.lane.b32.xlu0 %v5133, 32
      %v5333 = vpop.permute.xlu0 %5332
      %5334 = vrot.lane.b32.xlu0 %v5135, 32
      %v5335 = vpop.permute.xlu0 %5334
      %5336 = vrot.lane.b32.xlu0 %v5138, 32
      %v5337 = vpop.permute.xlu0 %5336
      %5338 = vrot.lane.b32.xlu0 %v5140, 32
      %v5339 = vpop.permute.xlu0 %5338
      %5340 = vrot.lane.b32.xlu0 %v5143, 32
      %v5341 = vpop.permute.xlu0 %5340
      %5342 = vrot.lane.b32.xlu0 %v5145, 32
      %v5343 = vpop.permute.xlu0 %5342
      %5344 = vrot.lane.b32.xlu0 %v5148, 32
      %v5345 = vpop.permute.xlu0 %5344
      %5346 = vrot.lane.b32.xlu0 %v5150, 32
      %v5347 = vpop.permute.xlu0 %5346
      %5348 = vrot.lane.b32.xlu0 %v5153, 32
      %v5349 = vpop.permute.xlu0 %5348
      %5350 = vrot.lane.b32.xlu0 %v5155, 32
      %v5351 = vpop.permute.xlu0 %5350
      %5352 = vrot.lane.b32.xlu0 %v5158, 32
      %v5353 = vpop.permute.xlu0 %5352
      %5354 = vrot.lane.b32.xlu0 %v5160, 32
      %v5355 = vpop.permute.xlu0 %5354
      %5356 = vrot.lane.b32.xlu0 %v5163, 32
      %v5357 = vpop.permute.xlu0 %5356
      %5358 = vrot.lane.b32.xlu0 %v5165, 32
      %v5359 = vpop.permute.xlu0 %5358
      %5360 = vrot.lane.b32.xlu0 %v5168, 32
      %v5361 = vpop.permute.xlu0 %5360
      %5362 = vrot.lane.b32.xlu0 %v5170, 32
      %v5363 = vpop.permute.xlu0 %5362
      %5364 = vrot.lane.b32.xlu0 %v5301, 32
      %v5365 = vpop.permute.xlu0 %5364
      %5366 = vrot.lane.b32.xlu0 %v5303, 32
      %v5367 = vpop.permute.xlu0 %5366
      %5400 = vst.msk [vmem:[#allocation4 + $0x8] sm:$0xff] %vm920, %v5305
      %5401 = vst.msk [vmem:[#allocation4 + $0x20] sm:$0xff] %vm920, %v5307
      %5402 = vst.msk [vmem:[#allocation4 + $0x38] sm:$0xff] %vm920, %v5309
      %5403 = vst.msk [vmem:[#allocation4 + $0x50] sm:$0xff] %vm920, %v5311
      %5404 = vst.msk [vmem:[#allocation4 + $0x68] sm:$0xff] %vm920, %v5313
      %5405 = vst.msk [vmem:[#allocation4 + $0x80] sm:$0xff] %vm920, %v5315
      %5406 = vst.msk [vmem:[#allocation4 + $0x98] sm:$0xff] %vm920, %v5317
      %5407 = vst.msk [vmem:[#allocation4 + $0xb0] sm:$0xff] %vm920, %v5319
      %5408 = vst.msk [vmem:[#allocation4 + $0xc8] sm:$0xff] %vm920, %v5321
      %5409 = vst.msk [vmem:[#allocation4 + $0xe0] sm:$0xff] %vm920, %v5323
      %5410 = vst.msk [vmem:[#allocation4 + $0xf8] sm:$0xff] %vm920, %v5325
      %5411 = vst.msk [vmem:[#allocation4 + $0x110] sm:$0xff] %vm920, %v5327
      %5412 = vst.msk [vmem:[#allocation4 + $0x128] sm:$0xff] %vm920, %v5329
      %5413 = vst.msk [vmem:[#allocation4 + $0x140] sm:$0xff] %vm920, %v5331
      %5414 = vst.msk [vmem:[#allocation4 + $0x158] sm:$0xff] %vm920, %v5333
      %5415 = vst.msk [vmem:[#allocation4 + $0x170] sm:$0xff] %vm920, %v5335
      %5416 = vst.msk [vmem:[#allocation4 + $0x188] sm:$0xff] %vm920, %v5337
      %5417 = vst.msk [vmem:[#allocation4 + $0x1a0] sm:$0xff] %vm920, %v5339
      %5418 = vst.msk [vmem:[#allocation4 + $0x1b8] sm:$0xff] %vm920, %v5341
      %5419 = vst.msk [vmem:[#allocation4 + $0x1d0] sm:$0xff] %vm920, %v5343
      %5420 = vst.msk [vmem:[#allocation4 + $0x1e8] sm:$0xff] %vm920, %v5345
      %5421 = vst.msk [vmem:[#allocation4 + $0x200] sm:$0xff] %vm920, %v5347
      %5422 = vst.msk [vmem:[#allocation4 + $0x218] sm:$0xff] %vm920, %v5349
      %5423 = vst.msk [vmem:[#allocation4 + $0x230] sm:$0xff] %vm920, %v5351
      %5424 = vst.msk [vmem:[#allocation4 + $0x248] sm:$0xff] %vm920, %v5353
      %5425 = vst.msk [vmem:[#allocation4 + $0x260] sm:$0xff] %vm920, %v5355
      %5426 = vst.msk [vmem:[#allocation4 + $0x278] sm:$0xff] %vm920, %v5357
      %5427 = vst.msk [vmem:[#allocation4 + $0x290] sm:$0xff] %vm920, %v5359
      %5428 = vst.msk [vmem:[#allocation4 + $0x2a8] sm:$0xff] %vm920, %v5361
      %5429 = vst.msk [vmem:[#allocation4 + $0x2c0] sm:$0xff] %vm920, %v5363
      %5430 = vst.msk [vmem:[#allocation4 + $0x2d8] sm:$0xff] %vm920, %v5365
      %5431 = vst.msk [vmem:[#allocation4 + $0x2f0] sm:$0xff] %vm920, %v5367
      %v5432 = vrot.slane %v4336, 2
      %v5433 = vrot.slane %v4337, 2
      %v5434 = vsel %vm1157, %v5432, %v5433
      %v5435 = vrot.slane %v4338, 2
      %v5436 = vsel %vm1157, %v5433, %v5435
      %5469 = vst.msk [vmem:[#allocation4 + $0x10] sm:$0xff] %vm171, %v5103
      %5470 = vst.msk [vmem:[#allocation4 + $0x28] sm:$0xff] %vm171, %v5105
      %5471 = vst.msk [vmem:[#allocation4 + $0x40] sm:$0xff] %vm171, %v5108
      %5472 = vst.msk [vmem:[#allocation4 + $0x58] sm:$0xff] %vm171, %v5110
      %5473 = vst.msk [vmem:[#allocation4 + $0x70] sm:$0xff] %vm171, %v5113
      %5474 = vst.msk [vmem:[#allocation4 + $0x88] sm:$0xff] %vm171, %v5115
      %5475 = vst.msk [vmem:[#allocation4 + $0xa0] sm:$0xff] %vm171, %v5118
      %5476 = vst.msk [vmem:[#allocation4 + $0xb8] sm:$0xff] %vm171, %v5120
      %5477 = vst.msk [vmem:[#allocation4 + $0xd0] sm:$0xff] %vm171, %v5123
      %5478 = vst.msk [vmem:[#allocation4 + $0xe8] sm:$0xff] %vm171, %v5125
      %5479 = vst.msk [vmem:[#allocation4 + $0x100] sm:$0xff] %vm171, %v5128
      %5480 = vst.msk [vmem:[#allocation4 + $0x118] sm:$0xff] %vm171, %v5130
      %5481 = vst.msk [vmem:[#allocation4 + $0x130] sm:$0xff] %vm171, %v5133
      %5482 = vst.msk [vmem:[#allocation4 + $0x148] sm:$0xff] %vm171, %v5135
      %5483 = vst.msk [vmem:[#allocation4 + $0x160] sm:$0xff] %vm171, %v5138
      %5484 = vst.msk [vmem:[#allocation4 + $0x178] sm:$0xff] %vm171, %v5140
      %5485 = vst.msk [vmem:[#allocation4 + $0x190] sm:$0xff] %vm171, %v5143
      %5486 = vst.msk [vmem:[#allocation4 + $0x1a8] sm:$0xff] %vm171, %v5145
      %5487 = vst.msk [vmem:[#allocation4 + $0x1c0] sm:$0xff] %vm171, %v5148
      %5488 = vst.msk [vmem:[#allocation4 + $0x1d8] sm:$0xff] %vm171, %v5150
      %5489 = vst.msk [vmem:[#allocation4 + $0x1f0] sm:$0xff] %vm171, %v5153
      %5490 = vst.msk [vmem:[#allocation4 + $0x208] sm:$0xff] %vm171, %v5155
      %5491 = vst.msk [vmem:[#allocation4 + $0x220] sm:$0xff] %vm171, %v5158
      %5492 = vst.msk [vmem:[#allocation4 + $0x238] sm:$0xff] %vm171, %v5160
      %5493 = vst.msk [vmem:[#allocation4 + $0x250] sm:$0xff] %vm171, %v5163
      %5494 = vst.msk [vmem:[#allocation4 + $0x268] sm:$0xff] %vm171, %v5165
      %5495 = vst.msk [vmem:[#allocation4 + $0x280] sm:$0xff] %vm171, %v5168
      %5496 = vst.msk [vmem:[#allocation4 + $0x298] sm:$0xff] %vm171, %v5170
      %5497 = vst.msk [vmem:[#allocation4 + $0x2b0] sm:$0xff] %vm171, %v5301
      %5498 = vst.msk [vmem:[#allocation4 + $0x2c8] sm:$0xff] %vm171, %v5303
      %5499 = vst.msk [vmem:[#allocation4 + $0x2e0] sm:$0xff] %vm171, %v5434
      %5500 = vst.msk [vmem:[#allocation4 + $0x2f8] sm:$0xff] %vm171, %v5436
      %v5501 = vld [vmem:[#allocation4] sm:$0xff]
      %v5502 = vld [vmem:[#allocation4 + $0x8] sm:$0xff]
      %v5503 = vld [vmem:[#allocation4 + $0x10] sm:$0xff]
      %v5504 = vld [vmem:[#allocation4 + $0x18] sm:$0xff]
      %v5505 = vld [vmem:[#allocation4 + $0x20] sm:$0xff]
      %v5506 = vld [vmem:[#allocation4 + $0x28] sm:$0xff]
      %v5507 = vld [vmem:[#allocation4 + $0x30] sm:$0xff]
      %v5508 = vld [vmem:[#allocation4 + $0x38] sm:$0xff]
      %v5509 = vld [vmem:[#allocation4 + $0x40] sm:$0xff]
      %v5510 = vld [vmem:[#allocation4 + $0x48] sm:$0xff]
      %v5511 = vld [vmem:[#allocation4 + $0x50] sm:$0xff]
      %v5512 = vld [vmem:[#allocation4 + $0x58] sm:$0xff]
      %v5513 = vld [vmem:[#allocation4 + $0x60] sm:$0xff]
      %v5514 = vld [vmem:[#allocation4 + $0x68] sm:$0xff]
      %v5515 = vld [vmem:[#allocation4 + $0x70] sm:$0xff]
      %v5516 = vld [vmem:[#allocation4 + $0x78] sm:$0xff]
      %v5517 = vld [vmem:[#allocation4 + $0x80] sm:$0xff]
      %v5518 = vld [vmem:[#allocation4 + $0x88] sm:$0xff]
      %v5519 = vld [vmem:[#allocation4 + $0x90] sm:$0xff]
      %v5520 = vld [vmem:[#allocation4 + $0x98] sm:$0xff]
      %v5521 = vld [vmem:[#allocation4 + $0xa0] sm:$0xff]
      %v5522 = vld [vmem:[#allocation4 + $0xa8] sm:$0xff]
      %v5523 = vld [vmem:[#allocation4 + $0xb0] sm:$0xff]
      %v5524 = vld [vmem:[#allocation4 + $0xb8] sm:$0xff]
      %v5525 = vld [vmem:[#allocation4 + $0xc0] sm:$0xff]
      %v5526 = vld [vmem:[#allocation4 + $0xc8] sm:$0xff]
      %v5527 = vld [vmem:[#allocation4 + $0xd0] sm:$0xff]
      %v5528 = vld [vmem:[#allocation4 + $0xd8] sm:$0xff]
      %v5529 = vld [vmem:[#allocation4 + $0xe0] sm:$0xff]
      %v5530 = vld [vmem:[#allocation4 + $0xe8] sm:$0xff]
      %v5531 = vld [vmem:[#allocation4 + $0xf0] sm:$0xff]
      %v5532 = vld [vmem:[#allocation4 + $0xf8] sm:$0xff]
      %v5533 = vld [vmem:[#allocation4 + $0x100] sm:$0xff]
      %v5534 = vld [vmem:[#allocation4 + $0x108] sm:$0xff]
      %v5535 = vld [vmem:[#allocation4 + $0x110] sm:$0xff]
      %v5536 = vld [vmem:[#allocation4 + $0x118] sm:$0xff]
      %v5537 = vld [vmem:[#allocation4 + $0x120] sm:$0xff]
      %v5538 = vld [vmem:[#allocation4 + $0x128] sm:$0xff]
      %v5539 = vld [vmem:[#allocation4 + $0x130] sm:$0xff]
      %v5540 = vld [vmem:[#allocation4 + $0x138] sm:$0xff]
      %v5541 = vld [vmem:[#allocation4 + $0x140] sm:$0xff]
      %v5542 = vld [vmem:[#allocation4 + $0x148] sm:$0xff]
      %v5543 = vld [vmem:[#allocation4 + $0x150] sm:$0xff]
      %v5544 = vld [vmem:[#allocation4 + $0x158] sm:$0xff]
      %v5545 = vld [vmem:[#allocation4 + $0x160] sm:$0xff]
      %v5546 = vld [vmem:[#allocation4 + $0x168] sm:$0xff]
      %v5547 = vld [vmem:[#allocation4 + $0x170] sm:$0xff]
      %v5548 = vld [vmem:[#allocation4 + $0x178] sm:$0xff]
      %v5549 = vld [vmem:[#allocation4 + $0x180] sm:$0xff]
      %v5550 = vld [vmem:[#allocation4 + $0x188] sm:$0xff]
      %v5551 = vld [vmem:[#allocation4 + $0x190] sm:$0xff]
      %v5552 = vld [vmem:[#allocation4 + $0x198] sm:$0xff]
      %v5553 = vld [vmem:[#allocation4 + $0x1a0] sm:$0xff]
      %v5554 = vld [vmem:[#allocation4 + $0x1a8] sm:$0xff]
      %v5555 = vld [vmem:[#allocation4 + $0x1b0] sm:$0xff]
      %v5556 = vld [vmem:[#allocation4 + $0x1b8] sm:$0xff]
      %v5557 = vld [vmem:[#allocation4 + $0x1c0] sm:$0xff]
      %v5558 = vld [vmem:[#allocation4 + $0x1c8] sm:$0xff]
      %v5559 = vld [vmem:[#allocation4 + $0x1d0] sm:$0xff]
      %v5560 = vld [vmem:[#allocation4 + $0x1d8] sm:$0xff]
      %v5561 = vld [vmem:[#allocation4 + $0x1e0] sm:$0xff]
      %v5562 = vld [vmem:[#allocation4 + $0x1e8] sm:$0xff]
      %v5563 = vld [vmem:[#allocation4 + $0x1f0] sm:$0xff]
      %v5564 = vld [vmem:[#allocation4 + $0x1f8] sm:$0xff]
      %v5565 = vld [vmem:[#allocation4 + $0x200] sm:$0xff]
      %v5566 = vld [vmem:[#allocation4 + $0x208] sm:$0xff]
      %v5567 = vld [vmem:[#allocation4 + $0x210] sm:$0xff]
      %v5568 = vld [vmem:[#allocation4 + $0x218] sm:$0xff]
      %v5569 = vld [vmem:[#allocation4 + $0x220] sm:$0xff]
      %v5570 = vld [vmem:[#allocation4 + $0x228] sm:$0xff]
      %v5571 = vld [vmem:[#allocation4 + $0x230] sm:$0xff]
      %v5572 = vld [vmem:[#allocation4 + $0x238] sm:$0xff]
      %v5573 = vld [vmem:[#allocation4 + $0x240] sm:$0xff]
      %v5574 = vld [vmem:[#allocation4 + $0x248] sm:$0xff]
      %v5575 = vld [vmem:[#allocation4 + $0x250] sm:$0xff]
      %v5576 = vld [vmem:[#allocation4 + $0x258] sm:$0xff]
      %v5577 = vld [vmem:[#allocation4 + $0x260] sm:$0xff]
      %v5578 = vld [vmem:[#allocation4 + $0x268] sm:$0xff]
      %v5579 = vld [vmem:[#allocation4 + $0x270] sm:$0xff]
      %v5580 = vld [vmem:[#allocation4 + $0x278] sm:$0xff]
      %v5581 = vld [vmem:[#allocation4 + $0x280] sm:$0xff]
      %v5582 = vld [vmem:[#allocation4 + $0x288] sm:$0xff]
      %v5583 = vld [vmem:[#allocation4 + $0x290] sm:$0xff]
      %v5584 = vld [vmem:[#allocation4 + $0x298] sm:$0xff]
      %v5585 = vld [vmem:[#allocation4 + $0x2a0] sm:$0xff]
      %v5586 = vld [vmem:[#allocation4 + $0x2a8] sm:$0xff]
      %v5587 = vld [vmem:[#allocation4 + $0x2b0] sm:$0xff]
      %v5588 = vld [vmem:[#allocation4 + $0x2b8] sm:$0xff]
      %v5589 = vld [vmem:[#allocation4 + $0x2c0] sm:$0xff]
      %v5590 = vld [vmem:[#allocation4 + $0x2c8] sm:$0xff]
      %v5591 = vld [vmem:[#allocation4 + $0x2d0] sm:$0xff]
      %v5592 = vld [vmem:[#allocation4 + $0x2d8] sm:$0xff]
      %v5593 = vld [vmem:[#allocation4 + $0x2e0] sm:$0xff]
      %v5594 = vld [vmem:[#allocation4 + $0x2e8] sm:$0xff]
      %v5595 = vld [vmem:[#allocation4 + $0x2f0] sm:$0xff]
      %v5596 = vld [vmem:[#allocation4 + $0x2f8] sm:$0xff]
      %s5597 = scalar_lea.vmem %s1, 576
      %v5598 = vld [vmem:[%s5597] sm:$0xff]
      %v5599 = vld [vmem:[%s5597 + $0x8] sm:$0xff]
      %v5600 = vld [vmem:[%s5597 + $0x10] sm:$0xff]
      %v5601 = vld [vmem:[%s5597 + $0x18] sm:$0xff]
      %v5602 = vld [vmem:[%s5597 + $0x20] sm:$0xff]
      %v5603 = vld [vmem:[%s5597 + $0x28] sm:$0xff]
      %v5604 = vld [vmem:[%s5597 + $0x30] sm:$0xff]
      %v5605 = vld [vmem:[%s5597 + $0x38] sm:$0xff]
      %v5606 = vld [vmem:[%s5597 + $0x40] sm:$0xff]
      %v5607 = vld [vmem:[%s5597 + $0x48] sm:$0xff]
      %v5608 = vld [vmem:[%s5597 + $0x50] sm:$0xff]
      %v5609 = vld [vmem:[%s5597 + $0x58] sm:$0xff]
      %v5610 = vld [vmem:[%s5597 + $0x60] sm:$0xff]
      %v5611 = vld [vmem:[%s5597 + $0x68] sm:$0xff]
      %v5612 = vld [vmem:[%s5597 + $0x70] sm:$0xff]
      %v5613 = vld [vmem:[%s5597 + $0x78] sm:$0xff]
      %v5614 = vld [vmem:[%s5597 + $0x80] sm:$0xff]
      %v5615 = vld [vmem:[%s5597 + $0x88] sm:$0xff]
      %v5616 = vld [vmem:[%s5597 + $0x90] sm:$0xff]
      %v5617 = vld [vmem:[%s5597 + $0x98] sm:$0xff]
      %v5618 = vld [vmem:[%s5597 + $0xa0] sm:$0xff]
      %v5619 = vld [vmem:[%s5597 + $0xa8] sm:$0xff]
      %v5620 = vld [vmem:[%s5597 + $0xb0] sm:$0xff]
      %v5621 = vld [vmem:[%s5597 + $0xb8] sm:$0xff]
      %v5622 = vld [vmem:[%s5597 + $0xc0] sm:$0xff]
      %v5623 = vld [vmem:[%s5597 + $0xc8] sm:$0xff]
      %v5624 = vld [vmem:[%s5597 + $0xd0] sm:$0xff]
      %v5625 = vld [vmem:[%s5597 + $0xd8] sm:$0xff]
      %v5626 = vld [vmem:[%s5597 + $0xe0] sm:$0xff]
      %v5627 = vld [vmem:[%s5597 + $0xe8] sm:$0xff]
      %v5628 = vld [vmem:[%s5597 + $0xf0] sm:$0xff]
      %v5629 = vld [vmem:[%s5597 + $0xf8] sm:$0xff]
      %v5630 = vld [vmem:[%s5597 + $0x100] sm:$0xff]
      %v5631 = vld [vmem:[%s5597 + $0x108] sm:$0xff]
      %v5632 = vld [vmem:[%s5597 + $0x110] sm:$0xff]
      %v5633 = vld [vmem:[%s5597 + $0x118] sm:$0xff]
      %s5634 = scalar_lea.vmem %s2, 2
      %v5635 = vld [vmem:[%s5634] sm:$0x1]
      %v5637 = vlaneseq
      %v5638 = vshrl.u32 %v5637, 7
      %v5639 = vsub.s32 0, %v5638
      %v5640 = vrot.slane %v5635, %v5639
      %v5643 = vsel %vm171, %v5503, 0
      %v5646 = vsel %vm171, %v5506, 0
      %v5649 = vsel %vm171, %v5509, 0
      %v5652 = vsel %vm171, %v5512, 0
      %v5655 = vsel %vm171, %v5515, 0
      %v5658 = vsel %vm171, %v5518, 0
      %v5661 = vsel %vm171, %v5521, 0
      %v5664 = vsel %vm171, %v5524, 0
      %v5667 = vsel %vm171, %v5527, 0
      %v5670 = vsel %vm171, %v5530, 0
      %v5673 = vsel %vm171, %v5533, 0
      %v5676 = vsel %vm171, %v5536, 0
      %v5679 = vsel %vm171, %v5539, 0
      %v5682 = vsel %vm171, %v5542, 0
      %v5685 = vsel %vm171, %v5545, 0
      %v5688 = vsel %vm171, %v5548, 0
      %v5691 = vsel %vm171, %v5551, 0
      %v5694 = vsel %vm171, %v5554, 0
      %v5697 = vsel %vm171, %v5557, 0
      %v5700 = vsel %vm171, %v5560, 0
      %v5703 = vsel %vm171, %v5563, 0
      %v5706 = vsel %vm171, %v5566, 0
      %v5709 = vsel %vm171, %v5569, 0
      %v5712 = vsel %vm171, %v5572, 0
      %v5715 = vsel %vm171, %v5575, 0
      %v5718 = vsel %vm171, %v5578, 0
      %v5721 = vsel %vm171, %v5581, 0
      %v5724 = vsel %vm171, %v5584, 0
      %v5727 = vsel %vm171, %v5587, 0
      %v5730 = vsel %vm171, %v5590, 0
      %v5733 = vsel %vm171, %v5593, 0
      %v5736 = vsel %vm171, %v5596, 0
      %5738 = vmatprep.subr.mxu0 0.0
      %5739 = vmatpush1.msra.mxu0 %v5598
      %5740 = vmatprep.subr.mxu0 0.0
      %5741 = vmatpush1.msra.mxu0 %v5599
      %5742 = vmatprep.subr.mxu0 0.0
      %5743 = vmatpush1.msra.mxu0 %v5600
      %5744 = vmatprep.subr.mxu0 0.0
      %5745 = vmatpush1.msra.mxu0 %v5601
      %5746 = vmatprep.subr.mxu0 0.0
      %5747 = vmatpush1.msra.mxu0 %v5602
      %5748 = vmatprep.subr.mxu0 0.0
      %5749 = vmatpush1.msra.mxu0 %v5603
      %5750 = vmatprep.subr.mxu0 0.0
      %5751 = vmatpush1.msra.mxu0 %v5604
      %5752 = vmatprep.subr.mxu0 0.0
      %5753 = vmatpush1.msra.mxu0 %v5605
      %5754 = vmatprep.subr.mxu0 0.0
      %5755 = vmatpush1.msra.mxu0 %v5606
      %5756 = vmatprep.subr.mxu0 0.0
      %5757 = vmatpush1.msra.mxu0 %v5607
      %5758 = vmatprep.subr.mxu0 0.0
      %5759 = vmatpush1.msra.mxu0 %v5608
      %5760 = vmatprep.subr.mxu0 0.0
      %5761 = vmatpush1.msra.mxu0 %v5609
      %5762 = vmatprep.subr.mxu0 0.0
      %5763 = vmatpush1.msra.mxu0 %v5610
      %5764 = vmatprep.subr.mxu0 0.0
      %5765 = vmatpush1.msra.mxu0 %v5611
      %5766 = vmatprep.subr.mxu0 0.0
      %5767 = vmatpush1.msra.mxu0 %v5612
      %5768 = vmatprep.subr.mxu0 0.0
      %5769 = vmatpush1.msra.mxu0 %v5613
      %5770 = vmatprep.subr.mxu0 0.0
      %5771 = vmatpush1.msra.mxu0 %v5614
      %5772 = vmatprep.subr.mxu0 0.0
      %5773 = vmatpush1.msra.mxu0 %v5615
      %5774 = vmatprep.subr.mxu0 0.0
      %5775 = vmatpush1.msra.mxu0 %v5616
      %5776 = vmatprep.subr.mxu0 0.0
      %5777 = vmatpush1.msra.mxu0 %v5617
      %5778 = vmatprep.subr.mxu0 0.0
      %5779 = vmatpush1.msra.mxu0 %v5618
      %5780 = vmatprep.subr.mxu0 0.0
      %5781 = vmatpush1.msra.mxu0 %v5619
      %5782 = vmatprep.subr.mxu0 0.0
      %5783 = vmatpush1.msra.mxu0 %v5620
      %5784 = vmatprep.subr.mxu0 0.0
      %5785 = vmatpush1.msra.mxu0 %v5621
      %5786 = vmatprep.subr.mxu0 0.0
      %5787 = vmatpush1.msra.mxu0 %v5622
      %5788 = vmatprep.subr.mxu0 0.0
      %5789 = vmatpush1.msra.mxu0 %v5623
      %5790 = vmatprep.subr.mxu0 0.0
      %5791 = vmatpush1.msra.mxu0 %v5624
      %5792 = vmatprep.subr.mxu0 0.0
      %5793 = vmatpush1.msra.mxu0 %v5625
      %5794 = vmatprep.subr.mxu0 0.0
      %5795 = vmatpush1.msra.mxu0 %v5626
      %5796 = vmatprep.subr.mxu0 0.0
      %5797 = vmatpush1.msra.mxu0 %v5627
      %5798 = vmatprep.subr.mxu0 0.0
      %5799 = vmatpush1.msra.mxu0 %v5628
      %5800 = vmatprep.subr.mxu0 0.0
      %5801 = vmatpush1.msra.mxu0 %v5629
      %5802 = vmatprep.mubr.f32.mxu0 %v5502
      %5803 = vmatmul.mubr.f32.gmra.mrb[0].mxu0 %v5501
      %v5804 = vpop.f32.mrb[0].mxu0
      %v5805 = vadd.f32 %v5640, %v5804
      %v5806 = vpop.f32.mrb[0].mxu0
      %5807 = vmatprep.mubr.f32.mxu0 %v5505
      %5808 = vmatmul.mubr.f32.gmra.mrb[0].mxu0 %v5504
      %v5809 = vpop.f32.mrb[0].mxu0
      %v5810 = vadd.f32 %v5640, %v5809
      %v5811 = vpop.f32.mrb[0].mxu0
      %5812 = vmatprep.mubr.f32.mxu0 %v5508
      %5813 = vmatmul.mubr.f32.gmra.mrb[0].mxu0 %v5507
      %v5814 = vpop.f32.mrb[0].mxu0
      %v5815 = vadd.f32 %v5640, %v5814
      %v5816 = vpop.f32.mrb[0].mxu0
      %5817 = vmatprep.mubr.f32.mxu0 %v5511
      %5818 = vmatmul.mubr.f32.gmra.mrb[0].mxu0 %v5510
      %v5819 = vpop.f32.mrb[0].mxu0
      %v5820 = vadd.f32 %v5640, %v5819
      %v5821 = vpop.f32.mrb[0].mxu0
      %5822 = vmatprep.mubr.f32.mxu0 %v5514
      %5823 = vmatmul.mubr.f32.gmra.mrb[0].mxu0 %v5513
      %v5824 = vpop.f32.mrb[0].mxu0
      %v5825 = vadd.f32 %v5640, %v5824
      %v5826 = vpop.f32.mrb[0].mxu0
      %5827 = vmatprep.mubr.f32.mxu0 %v5517
      %5828 = vmatmul.mubr.f32.gmra.mrb[0].mxu0 %v5516
      %v5829 = vpop.f32.mrb[0].mxu0
      %v5830 = vadd.f32 %v5640, %v5829
      %v5831 = vpop.f32.mrb[0].mxu0
      %5832 = vmatprep.mubr.f32.mxu0 %v5520
      %5833 = vmatmul.mubr.f32.gmra.mrb[0].mxu0 %v5519
      %v5834 = vpop.f32.mrb[0].mxu0
      %v5835 = vadd.f32 %v5640, %v5834
      %v5836 = vpop.f32.mrb[0].mxu0
      %5837 = vmatprep.mubr.f32.mxu0 %v5523
      %5838 = vmatmul.mubr.f32.gmra.mrb[0].mxu0 %v5522
      %v5839 = vpop.f32.mrb[0].mxu0
      %v5840 = vadd.f32 %v5640, %v5839
      %v5841 = vpop.f32.mrb[0].mxu0
      %5842 = vmatprep.mubr.f32.mxu0 %v5526
      %5843 = vmatmul.mubr.f32.gmra.mrb[0].mxu0 %v5525
      %v5844 = vpop.f32.mrb[0].mxu0
      %v5845 = vadd.f32 %v5640, %v5844
      %v5846 = vpop.f32.mrb[0].mxu0
      %5847 = vmatprep.mubr.f32.mxu0 %v5529
      %5848 = vmatmul.mubr.f32.gmra.mrb[0].mxu0 %v5528
      %v5849 = vpop.f32.mrb[0].mxu0
      %v5850 = vadd.f32 %v5640, %v5849
      %v5851 = vpop.f32.mrb[0].mxu0
      %5852 = vmatprep.mubr.f32.mxu0 %v5532
      %5853 = vmatmul.mubr.f32.gmra.mrb[0].mxu0 %v5531
      %v5854 = vpop.f32.mrb[0].mxu0
      %v5855 = vadd.f32 %v5640, %v5854
      %v5856 = vpop.f32.mrb[0].mxu0
      %5857 = vmatprep.mubr.f32.mxu0 %v5535
      %5858 = vmatmul.mubr.f32.gmra.mrb[0].mxu0 %v5534
      %v5859 = vpop.f32.mrb[0].mxu0
      %v5860 = vadd.f32 %v5640, %v5859
      %v5861 = vpop.f32.mrb[0].mxu0
      %5862 = vmatprep.mubr.f32.mxu0 %v5538
      %5863 = vmatmul.mubr.f32.gmra.mrb[0].mxu0 %v5537
      %v5864 = vpop.f32.mrb[0].mxu0
      %v5865 = vadd.f32 %v5640, %v5864
      %v5866 = vpop.f32.mrb[0].mxu0
      %5867 = vmatprep.mubr.f32.mxu0 %v5541
      %5868 = vmatmul.mubr.f32.gmra.mrb[0].mxu0 %v5540
      %v5869 = vpop.f32.mrb[0].mxu0
      %v5870 = vadd.f32 %v5640, %v5869
      %v5871 = vpop.f32.mrb[0].mxu0
      %5872 = vmatprep.mubr.f32.mxu0 %v5544
      %5873 = vmatmul.mubr.f32.gmra.mrb[0].mxu0 %v5543
      %v5874 = vpop.f32.mrb[0].mxu0
      %v5875 = vadd.f32 %v5640, %v5874
      %v5876 = vpop.f32.mrb[0].mxu0
      %5877 = vmatprep.mubr.f32.mxu0 %v5547
      %5878 = vmatmul.mubr.f32.gmra.mrb[0].mxu0 %v5546
      %v5879 = vpop.f32.mrb[0].mxu0
      %v5880 = vadd.f32 %v5640, %v5879
      %v5881 = vpop.f32.mrb[0].mxu0
      %5882 = vmatprep.mubr.f32.mxu0 %v5550
      %5883 = vmatmul.mubr.f32.gmra.mrb[0].mxu0 %v5549
      %v5884 = vpop.f32.mrb[0].mxu0
      %v5885 = vadd.f32 %v5640, %v5884
      %v5886 = vpop.f32.mrb[0].mxu0
      %5887 = vmatprep.mubr.f32.mxu0 %v5553
      %5888 = vmatmul.mubr.f32.gmra.mrb[0].mxu0 %v5552
      %v5889 = vpop.f32.mrb[0].mxu0
      %v5890 = vadd.f32 %v5640, %v5889
      %v5891 = vpop.f32.mrb[0].mxu0
      %5892 = vmatprep.mubr.f32.mxu0 %v5556
      %5893 = vmatmul.mubr.f32.gmra.mrb[0].mxu0 %v5555
      %v5894 = vpop.f32.mrb[0].mxu0
      %v5895 = vadd.f32 %v5640, %v5894
      %v5896 = vpop.f32.mrb[0].mxu0
      %5897 = vmatprep.mubr.f32.mxu0 %v5559
      %5898 = vmatmul.mubr.f32.gmra.mrb[0].mxu0 %v5558
      %v5899 = vpop.f32.mrb[0].mxu0
      %v5900 = vadd.f32 %v5640, %v5899
      %v5901 = vpop.f32.mrb[0].mxu0
      %5902 = vmatprep.mubr.f32.mxu0 %v5562
      %5903 = vmatmul.mubr.f32.gmra.mrb[0].mxu0 %v5561
      %v5904 = vpop.f32.mrb[0].mxu0
      %v5905 = vadd.f32 %v5640, %v5904
      %v5906 = vpop.f32.mrb[0].mxu0
      %5907 = vmatprep.mubr.f32.mxu0 %v5565
      %5908 = vmatmul.mubr.f32.gmra.mrb[0].mxu0 %v5564
      %v5909 = vpop.f32.mrb[0].mxu0
      %v5910 = vadd.f32 %v5640, %v5909
      %v5911 = vpop.f32.mrb[0].mxu0
      %5912 = vmatprep.mubr.f32.mxu0 %v5568
      %5913 = vmatmul.mubr.f32.gmra.mrb[0].mxu0 %v5567
      %v5914 = vpop.f32.mrb[0].mxu0
      %v5915 = vadd.f32 %v5640, %v5914
      %v5916 = vpop.f32.mrb[0].mxu0
      %5917 = vmatprep.mubr.f32.mxu0 %v5571
      %5918 = vmatmul.mubr.f32.gmra.mrb[0].mxu0 %v5570
      %v5919 = vpop.f32.mrb[0].mxu0
      %v5920 = vadd.f32 %v5640, %v5919
      %v5921 = vpop.f32.mrb[0].mxu0
      %5922 = vmatprep.mubr.f32.mxu0 %v5574
      %5923 = vmatmul.mubr.f32.gmra.mrb[0].mxu0 %v5573
      %v5924 = vpop.f32.mrb[0].mxu0
      %v5925 = vadd.f32 %v5640, %v5924
      %v5926 = vpop.f32.mrb[0].mxu0
      %5927 = vmatprep.mubr.f32.mxu0 %v5577
      %5928 = vmatmul.mubr.f32.gmra.mrb[0].mxu0 %v5576
      %v5929 = vpop.f32.mrb[0].mxu0
      %v5930 = vadd.f32 %v5640, %v5929
      %v5931 = vpop.f32.mrb[0].mxu0
      %5932 = vmatprep.mubr.f32.mxu0 %v5580
      %5933 = vmatmul.mubr.f32.gmra.mrb[0].mxu0 %v5579
      %v5934 = vpop.f32.mrb[0].mxu0
      %v5935 = vadd.f32 %v5640, %v5934
      %v5936 = vpop.f32.mrb[0].mxu0
      %5937 = vmatprep.mubr.f32.mxu0 %v5583
      %5938 = vmatmul.mubr.f32.gmra.mrb[0].mxu0 %v5582
      %v5939 = vpop.f32.mrb[0].mxu0
      %v5940 = vadd.f32 %v5640, %v5939
      %v5941 = vpop.f32.mrb[0].mxu0
      %5942 = vmatprep.mubr.f32.mxu0 %v5586
      %5943 = vmatmul.mubr.f32.gmra.mrb[0].mxu0 %v5585
      %v5944 = vpop.f32.mrb[0].mxu0
      %v5945 = vadd.f32 %v5640, %v5944
      %v5946 = vpop.f32.mrb[0].mxu0
      %5947 = vmatprep.mubr.f32.mxu0 %v5589
      %5948 = vmatmul.mubr.f32.gmra.mrb[0].mxu0 %v5588
      %v5949 = vpop.f32.mrb[0].mxu0
      %v5950 = vadd.f32 %v5640, %v5949
      %v5951 = vpop.f32.mrb[0].mxu0
      %5952 = vmatprep.mubr.f32.mxu0 %v5592
      %5953 = vmatmul.mubr.f32.gmra.mrb[0].mxu0 %v5591
      %v5954 = vpop.f32.mrb[0].mxu0
      %v5955 = vadd.f32 %v5640, %v5954
      %v5956 = vpop.f32.mrb[0].mxu0
      %5957 = vmatprep.mubr.f32.mxu0 %v5595
      %5958 = vmatmul.mubr.f32.gmra.mrb[0].mxu0 %v5594
      %v5959 = vpop.f32.mrb[0].mxu0
      %v5960 = vadd.f32 %v5640, %v5959
      %v5961 = vpop.f32.mrb[0].mxu0
      %5962 = vdwg.mxu0
      %5963 = vmatprep.subr.mxu0 0.0
      %5964 = vmatpush1.msra.mxu0 %v5630
      %5965 = vmatprep.subr.mxu0 0.0
      %5966 = vmatpush1.msra.mxu0 %v5631
      %5967 = vmatprep.subr.mxu0 0.0
      %5968 = vmatpush1.msra.mxu0 %v5632
      %5969 = vmatprep.subr.mxu0 0.0
      %5970 = vmatpush1.msra.mxu0 %v5633
      %5971 = vmatprep.subr.mxu0 0.0
      %5972 = vmatpush1.msra.mxu0 0.0
      %5973 = vmatprep.subr.mxu0 0.0
      %5974 = vmatpush1.msra.mxu0 0.0
      %5975 = vmatprep.subr.mxu0 0.0
      %5976 = vmatpush1.msra.mxu0 0.0
      %5977 = vmatprep.subr.mxu0 0.0
      %5978 = vmatpush1.msra.mxu0 0.0
      %5979 = vmatprep.subr.mxu0 0.0
      %5980 = vmatpush1.msra.mxu0 0.0
      %5981 = vmatprep.subr.mxu0 0.0
      %5982 = vmatpush1.msra.mxu0 0.0
      %5983 = vmatprep.subr.mxu0 0.0
      %5984 = vmatpush1.msra.mxu0 0.0
      %5985 = vmatprep.subr.mxu0 0.0
      %5986 = vmatpush1.msra.mxu0 0.0
      %5987 = vmatprep.subr.mxu0 0.0
      %5988 = vmatpush1.msra.mxu0 0.0
      %5989 = vmatprep.subr.mxu0 0.0
      %5990 = vmatpush1.msra.mxu0 0.0
      %5991 = vmatprep.subr.mxu0 0.0
      %5992 = vmatpush1.msra.mxu0 0.0
      %5993 = vmatprep.subr.mxu0 0.0
      %5994 = vmatpush1.msra.mxu0 0.0
      %5995 = vmatprep.subr.mxu0 0.0
      %5996 = vmatpush1.msra.mxu0 0.0
      %5997 = vmatprep.subr.mxu0 0.0
      %5998 = vmatpush1.msra.mxu0 0.0
      %5999 = vmatprep.subr.mxu0 0.0
      %6000 = vmatpush1.msra.mxu0 0.0
      %6001 = vmatprep.subr.mxu0 0.0
      %6002 = vmatpush1.msra.mxu0 0.0
      %6003 = vmatprep.subr.mxu0 0.0
      %6004 = vmatpush1.msra.mxu0 0.0
      %6005 = vmatprep.subr.mxu0 0.0
      %6006 = vmatpush1.msra.mxu0 0.0
      %6007 = vmatprep.subr.mxu0 0.0
      %6008 = vmatpush1.msra.mxu0 0.0
      %6009 = vmatprep.subr.mxu0 0.0
      %6010 = vmatpush1.msra.mxu0 0.0
      %6011 = vmatprep.subr.mxu0 0.0
      %6012 = vmatpush1.msra.mxu0 0.0
      %6013 = vmatprep.subr.mxu0 0.0
      %6014 = vmatpush1.msra.mxu0 0.0
      %6015 = vmatprep.subr.mxu0 0.0
      %6016 = vmatpush1.msra.mxu0 0.0
      %6017 = vmatprep.subr.mxu0 0.0
      %6018 = vmatpush1.msra.mxu0 0.0
      %6019 = vmatprep.subr.mxu0 0.0
      %6020 = vmatpush1.msra.mxu0 0.0
      %6021 = vmatprep.subr.mxu0 0.0
      %6022 = vmatpush1.msra.mxu0 0.0
      %6023 = vmatprep.subr.mxu0 0.0
      %6024 = vmatpush1.msra.mxu0 0.0
      %6025 = vmatprep.subr.mxu0 0.0
      %6026 = vmatpush1.msra.mxu0 0.0
      %6027 = vmatprep.mubr.f32.mxu0 0.0
      %6028 = vmatmul.mubr.f32.gmra.mrb[0].mxu0 %v5643
      %v6029 = vpop.f32.mrb[0].mxu0
      %v6030 = vadd.f32 %v5805, %v6029
      %v6031 = vpop.f32.mrb[0].mxu0
      %6032 = vmatprep.mubr.f32.mxu0 0.0
      %6033 = vmatmul.mubr.f32.gmra.mrb[0].mxu0 %v5646
      %v6034 = vpop.f32.mrb[0].mxu0
      %v6035 = vadd.f32 %v5810, %v6034
      %v6036 = vpop.f32.mrb[0].mxu0
      %6037 = vmatprep.mubr.f32.mxu0 0.0
      %6038 = vmatmul.mubr.f32.gmra.mrb[0].mxu0 %v5649
      %v6039 = vpop.f32.mrb[0].mxu0
      %v6040 = vadd.f32 %v5815, %v6039
      %v6041 = vpop.f32.mrb[0].mxu0
      %6042 = vmatprep.mubr.f32.mxu0 0.0
      %6043 = vmatmul.mubr.f32.gmra.mrb[0].mxu0 %v5652
      %v6044 = vpop.f32.mrb[0].mxu0
      %v6045 = vadd.f32 %v5820, %v6044
      %v6046 = vpop.f32.mrb[0].mxu0
      %6047 = vmatprep.mubr.f32.mxu0 0.0
      %6048 = vmatmul.mubr.f32.gmra.mrb[0].mxu0 %v5655
      %v6049 = vpop.f32.mrb[0].mxu0
      %v6050 = vadd.f32 %v5825, %v6049
      %v6051 = vpop.f32.mrb[0].mxu0
      %6052 = vmatprep.mubr.f32.mxu0 0.0
      %6053 = vmatmul.mubr.f32.gmra.mrb[0].mxu0 %v5658
      %v6054 = vpop.f32.mrb[0].mxu0
      %v6055 = vadd.f32 %v5830, %v6054
      %v6056 = vpop.f32.mrb[0].mxu0
      %6057 = vmatprep.mubr.f32.mxu0 0.0
      %6058 = vmatmul.mubr.f32.gmra.mrb[0].mxu0 %v5661
      %v6059 = vpop.f32.mrb[0].mxu0
      %v6060 = vadd.f32 %v5835, %v6059
      %v6061 = vpop.f32.mrb[0].mxu0
      %6062 = vmatprep.mubr.f32.mxu0 0.0
      %6063 = vmatmul.mubr.f32.gmra.mrb[0].mxu0 %v5664
      %v6064 = vpop.f32.mrb[0].mxu0
      %v6065 = vadd.f32 %v5840, %v6064
      %v6066 = vpop.f32.mrb[0].mxu0
      %6067 = vmatprep.mubr.f32.mxu0 0.0
      %6068 = vmatmul.mubr.f32.gmra.mrb[0].mxu0 %v5667
      %v6069 = vpop.f32.mrb[0].mxu0
      %v6070 = vadd.f32 %v5845, %v6069
      %v6071 = vpop.f32.mrb[0].mxu0
      %6072 = vmatprep.mubr.f32.mxu0 0.0
      %6073 = vmatmul.mubr.f32.gmra.mrb[0].mxu0 %v5670
      %v6074 = vpop.f32.mrb[0].mxu0
      %v6075 = vadd.f32 %v5850, %v6074
      %v6076 = vpop.f32.mrb[0].mxu0
      %6077 = vmatprep.mubr.f32.mxu0 0.0
      %6078 = vmatmul.mubr.f32.gmra.mrb[0].mxu0 %v5673
      %v6079 = vpop.f32.mrb[0].mxu0
      %v6080 = vadd.f32 %v5855, %v6079
      %v6081 = vpop.f32.mrb[0].mxu0
      %6082 = vmatprep.mubr.f32.mxu0 0.0
      %6083 = vmatmul.mubr.f32.gmra.mrb[0].mxu0 %v5676
      %v6084 = vpop.f32.mrb[0].mxu0
      %v6085 = vadd.f32 %v5860, %v6084
      %v6086 = vpop.f32.mrb[0].mxu0
      %6087 = vmatprep.mubr.f32.mxu0 0.0
      %6088 = vmatmul.mubr.f32.gmra.mrb[0].mxu0 %v5679
      %v6089 = vpop.f32.mrb[0].mxu0
      %v6090 = vadd.f32 %v5865, %v6089
      %v6091 = vpop.f32.mrb[0].mxu0
      %6092 = vmatprep.mubr.f32.mxu0 0.0
      %6093 = vmatmul.mubr.f32.gmra.mrb[0].mxu0 %v5682
      %v6094 = vpop.f32.mrb[0].mxu0
      %v6095 = vadd.f32 %v5870, %v6094
      %v6096 = vpop.f32.mrb[0].mxu0
      %6097 = vmatprep.mubr.f32.mxu0 0.0
      %6098 = vmatmul.mubr.f32.gmra.mrb[0].mxu0 %v5685
      %v6099 = vpop.f32.mrb[0].mxu0
      %v6100 = vadd.f32 %v5875, %v6099
      %v6101 = vpop.f32.mrb[0].mxu0
      %6102 = vmatprep.mubr.f32.mxu0 0.0
      %6103 = vmatmul.mubr.f32.gmra.mrb[0].mxu0 %v5688
      %v6104 = vpop.f32.mrb[0].mxu0
      %v6105 = vadd.f32 %v5880, %v6104
      %v6106 = vpop.f32.mrb[0].mxu0
      %6107 = vmatprep.mubr.f32.mxu0 0.0
      %6108 = vmatmul.mubr.f32.gmra.mrb[0].mxu0 %v5691
      %v6109 = vpop.f32.mrb[0].mxu0
      %v6110 = vadd.f32 %v5885, %v6109
      %v6111 = vpop.f32.mrb[0].mxu0
      %6112 = vmatprep.mubr.f32.mxu0 0.0
      %6113 = vmatmul.mubr.f32.gmra.mrb[0].mxu0 %v5694
      %v6114 = vpop.f32.mrb[0].mxu0
      %v6115 = vadd.f32 %v5890, %v6114
      %v6116 = vpop.f32.mrb[0].mxu0
      %6117 = vmatprep.mubr.f32.mxu0 0.0
      %6118 = vmatmul.mubr.f32.gmra.mrb[0].mxu0 %v5697
      %v6119 = vpop.f32.mrb[0].mxu0
      %v6120 = vadd.f32 %v5895, %v6119
      %v6121 = vpop.f32.mrb[0].mxu0
      %6122 = vmatprep.mubr.f32.mxu0 0.0
      %6123 = vmatmul.mubr.f32.gmra.mrb[0].mxu0 %v5700
      %v6124 = vpop.f32.mrb[0].mxu0
      %v6125 = vadd.f32 %v5900, %v6124
      %v6126 = vpop.f32.mrb[0].mxu0
      %6127 = vmatprep.mubr.f32.mxu0 0.0
      %6128 = vmatmul.mubr.f32.gmra.mrb[0].mxu0 %v5703
      %v6129 = vpop.f32.mrb[0].mxu0
      %v6130 = vadd.f32 %v5905, %v6129
      %v6131 = vpop.f32.mrb[0].mxu0
      %6132 = vmatprep.mubr.f32.mxu0 0.0
      %6133 = vmatmul.mubr.f32.gmra.mrb[0].mxu0 %v5706
      %v6134 = vpop.f32.mrb[0].mxu0
      %v6135 = vadd.f32 %v5910, %v6134
      %v6136 = vpop.f32.mrb[0].mxu0
      %6137 = vmatprep.mubr.f32.mxu0 0.0
      %6138 = vmatmul.mubr.f32.gmra.mrb[0].mxu0 %v5709
      %v6139 = vpop.f32.mrb[0].mxu0
      %v6140 = vadd.f32 %v5915, %v6139
      %v6141 = vpop.f32.mrb[0].mxu0
      %6142 = vmatprep.mubr.f32.mxu0 0.0
      %6143 = vmatmul.mubr.f32.gmra.mrb[0].mxu0 %v5712
      %v6144 = vpop.f32.mrb[0].mxu0
      %v6145 = vadd.f32 %v5920, %v6144
      %v6146 = vpop.f32.mrb[0].mxu0
      %6147 = vmatprep.mubr.f32.mxu0 0.0
      %6148 = vmatmul.mubr.f32.gmra.mrb[0].mxu0 %v5715
      %v6149 = vpop.f32.mrb[0].mxu0
      %v6150 = vadd.f32 %v5925, %v6149
      %v6151 = vpop.f32.mrb[0].mxu0
      %6152 = vmatprep.mubr.f32.mxu0 0.0
      %6153 = vmatmul.mubr.f32.gmra.mrb[0].mxu0 %v5718
      %v6154 = vpop.f32.mrb[0].mxu0
      %v6155 = vadd.f32 %v5930, %v6154
      %v6156 = vpop.f32.mrb[0].mxu0
      %6157 = vmatprep.mubr.f32.mxu0 0.0
      %6158 = vmatmul.mubr.f32.gmra.mrb[0].mxu0 %v5721
      %v6159 = vpop.f32.mrb[0].mxu0
      %v6160 = vadd.f32 %v5935, %v6159
      %v6161 = vpop.f32.mrb[0].mxu0
      %6162 = vmatprep.mubr.f32.mxu0 0.0
      %6163 = vmatmul.mubr.f32.gmra.mrb[0].mxu0 %v5724
      %v6164 = vpop.f32.mrb[0].mxu0
      %v6165 = vadd.f32 %v5940, %v6164
      %v6166 = vpop.f32.mrb[0].mxu0
      %6167 = vmatprep.mubr.f32.mxu0 0.0
      %6168 = vmatmul.mubr.f32.gmra.mrb[0].mxu0 %v5727
      %v6169 = vpop.f32.mrb[0].mxu0
      %v6170 = vadd.f32 %v5945, %v6169
      %v6171 = vpop.f32.mrb[0].mxu0
      %6172 = vmatprep.mubr.f32.mxu0 0.0
      %6173 = vmatmul.mubr.f32.gmra.mrb[0].mxu0 %v5730
      %v6174 = vpop.f32.mrb[0].mxu0
      %v6175 = vadd.f32 %v5950, %v6174
      %v6176 = vpop.f32.mrb[0].mxu0
      %6177 = vmatprep.mubr.f32.mxu0 0.0
      %6178 = vmatmul.mubr.f32.gmra.mrb[0].mxu0 %v5733
      %v6179 = vpop.f32.mrb[0].mxu0
      %v6180 = vadd.f32 %v5955, %v6179
      %v6181 = vpop.f32.mrb[0].mxu0
      %6182 = vmatprep.mubr.f32.mxu0 0.0
      %6183 = vmatmul.mubr.f32.gmra.mrb[0].mxu0 %v5736
      %v6184 = vpop.f32.mrb[0].mxu0
      %v6185 = vadd.f32 %v5960, %v6184
      %v6186 = vpop.f32.mrb[0].mxu0
      %6187 = vdwg.mxu0
      %v6188 = vmax.f32 %v6030, 0.0
      %v6189 = vmax.f32 %v6035, 0.0
      %v6190 = vmax.f32 %v6040, 0.0
      %v6191 = vmax.f32 %v6045, 0.0
      %v6192 = vmax.f32 %v6050, 0.0
      %v6193 = vmax.f32 %v6055, 0.0
      %v6194 = vmax.f32 %v6060, 0.0
      %v6195 = vmax.f32 %v6065, 0.0
      %v6196 = vmax.f32 %v6070, 0.0
      %v6197 = vmax.f32 %v6075, 0.0
      %v6198 = vmax.f32 %v6080, 0.0
      %v6199 = vmax.f32 %v6085, 0.0
      %v6200 = vmax.f32 %v6090, 0.0
      %v6201 = vmax.f32 %v6095, 0.0
      %v6202 = vmax.f32 %v6100, 0.0
      %v6203 = vmax.f32 %v6105, 0.0
      %v6204 = vmax.f32 %v6110, 0.0
      %v6205 = vmax.f32 %v6115, 0.0
      %v6206 = vmax.f32 %v6120, 0.0
      %v6207 = vmax.f32 %v6125, 0.0
      %v6208 = vmax.f32 %v6130, 0.0
      %v6209 = vmax.f32 %v6135, 0.0
      %v6210 = vmax.f32 %v6140, 0.0
      %v6211 = vmax.f32 %v6145, 0.0
      %v6212 = vmax.f32 %v6150, 0.0
      %v6213 = vmax.f32 %v6155, 0.0
      %v6214 = vmax.f32 %v6160, 0.0
      %v6215 = vmax.f32 %v6165, 0.0
      %v6216 = vmax.f32 %v6170, 0.0
      %v6217 = vmax.f32 %v6175, 0.0
      %v6218 = vmax.f32 %v6180, 0.0
      %v6219 = vmax.f32 %v6185, 0.0
      %6220 = vst.msk [vmem:[%s2285 + $0x1] sm:$0xff] %vm171, %v6188
      %6221 = vst.msk [vmem:[%s2285 + $0x9] sm:$0xff] %vm171, %v6189
      %6222 = vst.msk [vmem:[%s2285 + $0x19] sm:$0xff] %vm171, %v6190
      %6223 = vst.msk [vmem:[%s2285 + $0x21] sm:$0xff] %vm171, %v6191
      %6224 = vst.msk [vmem:[%s2285 + $0x31] sm:$0xff] %vm171, %v6192
      %6225 = vst.msk [vmem:[%s2285 + $0x39] sm:$0xff] %vm171, %v6193
      %6226 = vst.msk [vmem:[%s2285 + $0x49] sm:$0xff] %vm171, %v6194
      %6227 = vst.msk [vmem:[%s2285 + $0x51] sm:$0xff] %vm171, %v6195
      %6228 = vst.msk [vmem:[%s2285 + $0x61] sm:$0xff] %vm171, %v6196
      %6229 = vst.msk [vmem:[%s2285 + $0x69] sm:$0xff] %vm171, %v6197
      %6230 = vst.msk [vmem:[%s2285 + $0x79] sm:$0xff] %vm171, %v6198
      %6231 = vst.msk [vmem:[%s2285 + $0x81] sm:$0xff] %vm171, %v6199
      %6232 = vst.msk [vmem:[%s2285 + $0x91] sm:$0xff] %vm171, %v6200
      %6233 = vst.msk [vmem:[%s2285 + $0x99] sm:$0xff] %vm171, %v6201
      %6234 = vst.msk [vmem:[%s2285 + $0xa9] sm:$0xff] %vm171, %v6202
      %6235 = vst.msk [vmem:[%s2285 + $0xb1] sm:$0xff] %vm171, %v6203
      %6236 = vst.msk [vmem:[%s2285 + $0xc1] sm:$0xff] %vm171, %v6204
      %6237 = vst.msk [vmem:[%s2285 + $0xc9] sm:$0xff] %vm171, %v6205
      %6238 = vst.msk [vmem:[%s2285 + $0xd9] sm:$0xff] %vm171, %v6206
      %6239 = vst.msk [vmem:[%s2285 + $0xe1] sm:$0xff] %vm171, %v6207
      %6240 = vst.msk [vmem:[%s2285 + $0xf1] sm:$0xff] %vm171, %v6208
      %6241 = vst.msk [vmem:[%s2285 + $0xf9] sm:$0xff] %vm171, %v6209
      %6242 = vst.msk [vmem:[%s2285 + $0x109] sm:$0xff] %vm171, %v6210
      %6243 = vst.msk [vmem:[%s2285 + $0x111] sm:$0xff] %vm171, %v6211
      %6244 = vst.msk [vmem:[%s2285 + $0x121] sm:$0xff] %vm171, %v6212
      %6245 = vst.msk [vmem:[%s2285 + $0x129] sm:$0xff] %vm171, %v6213
      %6246 = vst.msk [vmem:[%s2285 + $0x139] sm:$0xff] %vm171, %v6214
      %6247 = vst.msk [vmem:[%s2285 + $0x141] sm:$0xff] %vm171, %v6215
      %6248 = vst.msk [vmem:[%s2285 + $0x151] sm:$0xff] %vm171, %v6216
      %6249 = vst.msk [vmem:[%s2285 + $0x159] sm:$0xff] %vm171, %v6217
      %6250 = vst.msk [vmem:[%s2285 + $0x169] sm:$0xff] %vm171, %v6218
      %6251 = vst.msk [vmem:[%s2285 + $0x171] sm:$0xff] %vm171, %v6219
      %v6252 = vld [vmem:[#allocation3] sm:$0xff]
      %v6253 = vld [vmem:[#allocation3 + $0x8] sm:$0xff]
      %v6254 = vld [vmem:[#allocation3 + $0x10] sm:$0x3]
      %v6255 = vld [vmem:[#allocation3 + $0x18] sm:$0xff]
      %v6256 = vld [vmem:[#allocation3 + $0x20] sm:$0xff]
      %v6257 = vld [vmem:[#allocation3 + $0x28] sm:$0x3]
      %v6258 = vld [vmem:[#allocation3 + $0x30] sm:$0xff]
      %v6259 = vld [vmem:[#allocation3 + $0x38] sm:$0xff]
      %v6260 = vld [vmem:[#allocation3 + $0x40] sm:$0x3]
      %v6261 = vld [vmem:[#allocation3 + $0x48] sm:$0xff]
      %v6262 = vld [vmem:[#allocation3 + $0x50] sm:$0xff]
      %v6263 = vld [vmem:[#allocation3 + $0x58] sm:$0x3]
      %v6264 = vld [vmem:[#allocation3 + $0x60] sm:$0xff]
      %v6265 = vld [vmem:[#allocation3 + $0x68] sm:$0xff]
      %v6266 = vld [vmem:[#allocation3 + $0x70] sm:$0x3]
      %v6267 = vld [vmem:[#allocation3 + $0x78] sm:$0xff]
      %v6268 = vld [vmem:[#allocation3 + $0x80] sm:$0xff]
      %v6269 = vld [vmem:[#allocation3 + $0x88] sm:$0x3]
      %v6270 = vld [vmem:[#allocation3 + $0x90] sm:$0xff]
      %v6271 = vld [vmem:[#allocation3 + $0x98] sm:$0xff]
      %v6272 = vld [vmem:[#allocation3 + $0xa0] sm:$0x3]
      %v6273 = vld [vmem:[#allocation3 + $0xa8] sm:$0xff]
      %v6274 = vld [vmem:[#allocation3 + $0xb0] sm:$0xff]
      %v6275 = vld [vmem:[#allocation3 + $0xb8] sm:$0x3]
      %v6276 = vld [vmem:[#allocation3 + $0xc0] sm:$0xff]
      %v6277 = vld [vmem:[#allocation3 + $0xc8] sm:$0xff]
      %v6278 = vld [vmem:[#allocation3 + $0xd0] sm:$0x3]
      %v6279 = vld [vmem:[#allocation3 + $0xd8] sm:$0xff]
      %v6280 = vld [vmem:[#allocation3 + $0xe0] sm:$0xff]
      %v6281 = vld [vmem:[#allocation3 + $0xe8] sm:$0x3]
      %v6282 = vld [vmem:[#allocation3 + $0xf0] sm:$0xff]
      %v6283 = vld [vmem:[#allocation3 + $0xf8] sm:$0xff]
      %v6284 = vld [vmem:[#allocation3 + $0x100] sm:$0x3]
      %v6285 = vld [vmem:[#allocation3 + $0x108] sm:$0xff]
      %v6286 = vld [vmem:[#allocation3 + $0x110] sm:$0xff]
      %v6287 = vld [vmem:[#allocation3 + $0x118] sm:$0x3]
      %v6288 = vld [vmem:[#allocation3 + $0x120] sm:$0xff]
      %v6289 = vld [vmem:[#allocation3 + $0x128] sm:$0xff]
      %v6290 = vld [vmem:[#allocation3 + $0x130] sm:$0x3]
      %v6291 = vld [vmem:[#allocation3 + $0x138] sm:$0xff]
      %v6292 = vld [vmem:[#allocation3 + $0x140] sm:$0xff]
      %v6293 = vld [vmem:[#allocation3 + $0x148] sm:$0x3]
      %v6294 = vld [vmem:[#allocation3 + $0x150] sm:$0xff]
      %v6295 = vld [vmem:[#allocation3 + $0x158] sm:$0xff]
      %v6296 = vld [vmem:[#allocation3 + $0x160] sm:$0x3]
      %v6297 = vld [vmem:[#allocation3 + $0x168] sm:$0xff]
      %v6298 = vld [vmem:[#allocation3 + $0x170] sm:$0xff]
      %v6299 = vld [vmem:[#allocation3 + $0x178] sm:$0x3]
      %v6300 = vld [vmem:[#allocation3 + $0x180] sm:$0xff]
      %v6301 = vld [vmem:[#allocation3 + $0x188] sm:$0xff]
      %v6302 = vld [vmem:[#allocation3 + $0x190] sm:$0x3]
      %v6303 = vld [vmem:[#allocation3 + $0x198] sm:$0xff]
      %v6304 = vld [vmem:[#allocation3 + $0x1a0] sm:$0xff]
      %v6305 = vld [vmem:[#allocation3 + $0x1a8] sm:$0x3]
      %6306 = vst.msk [vmem:[#allocation4] sm:$0xff] %vm171, %v6252
      %6307 = vst.msk [vmem:[#allocation4 + $0x18] sm:$0xff] %vm171, %v6253
      %6308 = vst.msk [vmem:[#allocation4 + $0x30] sm:$0xff] %vm171, %v6255
      %6309 = vst.msk [vmem:[#allocation4 + $0x48] sm:$0xff] %vm171, %v6256
      %6310 = vst.msk [vmem:[#allocation4 + $0x60] sm:$0xff] %vm171, %v6258
      %6311 = vst.msk [vmem:[#allocation4 + $0x78] sm:$0xff] %vm171, %v6259
      %6312 = vst.msk [vmem:[#allocation4 + $0x90] sm:$0xff] %vm171, %v6261
      %6313 = vst.msk [vmem:[#allocation4 + $0xa8] sm:$0xff] %vm171, %v6262
      %6314 = vst.msk [vmem:[#allocation4 + $0xc0] sm:$0xff] %vm171, %v6264
      %6315 = vst.msk [vmem:[#allocation4 + $0xd8] sm:$0xff] %vm171, %v6265
      %6316 = vst.msk [vmem:[#allocation4 + $0xf0] sm:$0xff] %vm171, %v6267
      %6317 = vst.msk [vmem:[#allocation4 + $0x108] sm:$0xff] %vm171, %v6268
      %6318 = vst.msk [vmem:[#allocation4 + $0x120] sm:$0xff] %vm171, %v6270
      %6319 = vst.msk [vmem:[#allocation4 + $0x138] sm:$0xff] %vm171, %v6271
      %6320 = vst.msk [vmem:[#allocation4 + $0x150] sm:$0xff] %vm171, %v6273
      %6321 = vst.msk [vmem:[#allocation4 + $0x168] sm:$0xff] %vm171, %v6274
      %6322 = vst.msk [vmem:[#allocation4 + $0x180] sm:$0xff] %vm171, %v6276
      %6323 = vst.msk [vmem:[#allocation4 + $0x198] sm:$0xff] %vm171, %v6277
      %6324 = vst.msk [vmem:[#allocation4 + $0x1b0] sm:$0xff] %vm171, %v6279
      %6325 = vst.msk [vmem:[#allocation4 + $0x1c8] sm:$0xff] %vm171, %v6280
      %6326 = vst.msk [vmem:[#allocation4 + $0x1e0] sm:$0xff] %vm171, %v6282
      %6327 = vst.msk [vmem:[#allocation4 + $0x1f8] sm:$0xff] %vm171, %v6283
      %6328 = vst.msk [vmem:[#allocation4 + $0x210] sm:$0xff] %vm171, %v6285
      %6329 = vst.msk [vmem:[#allocation4 + $0x228] sm:$0xff] %vm171, %v6286
      %6330 = vst.msk [vmem:[#allocation4 + $0x240] sm:$0xff] %vm171, %v6288
      %6331 = vst.msk [vmem:[#allocation4 + $0x258] sm:$0xff] %vm171, %v6289
      %6332 = vst.msk [vmem:[#allocation4 + $0x270] sm:$0xff] %vm171, %v6291
      %6333 = vst.msk [vmem:[#allocation4 + $0x288] sm:$0xff] %vm171, %v6292
      %6334 = vst.msk [vmem:[#allocation4 + $0x2a0] sm:$0xff] %vm171, %v6294
      %6335 = vst.msk [vmem:[#allocation4 + $0x2b8] sm:$0xff] %vm171, %v6295
      %6336 = vst.msk [vmem:[#allocation4 + $0x2d0] sm:$0xff] %vm171, %v6297
      %6337 = vst.msk [vmem:[#allocation4 + $0x2e8] sm:$0xff] %vm171, %v6298
      %6370 = vrot.lane.b32.xlu0 %v6255, 96
      %v6371 = vpop.permute.xlu0 %6370
      %6372 = vrot.lane.b32.xlu0 %v6256, 96
      %v6373 = vpop.permute.xlu0 %6372
      %6374 = vrot.lane.b32.xlu0 %v6258, 96
      %v6375 = vpop.permute.xlu0 %6374
      %6376 = vrot.lane.b32.xlu0 %v6259, 96
      %v6377 = vpop.permute.xlu0 %6376
      %6378 = vrot.lane.b32.xlu0 %v6261, 96
      %v6379 = vpop.permute.xlu0 %6378
      %6380 = vrot.lane.b32.xlu0 %v6262, 96
      %v6381 = vpop.permute.xlu0 %6380
      %6382 = vrot.lane.b32.xlu0 %v6264, 96
      %v6383 = vpop.permute.xlu0 %6382
      %6384 = vrot.lane.b32.xlu0 %v6265, 96
      %v6385 = vpop.permute.xlu0 %6384
      %6386 = vrot.lane.b32.xlu0 %v6267, 96
      %v6387 = vpop.permute.xlu0 %6386
      %6388 = vrot.lane.b32.xlu0 %v6268, 96
      %v6389 = vpop.permute.xlu0 %6388
      %6390 = vrot.lane.b32.xlu0 %v6270, 96
      %v6391 = vpop.permute.xlu0 %6390
      %6392 = vrot.lane.b32.xlu0 %v6271, 96
      %v6393 = vpop.permute.xlu0 %6392
      %6394 = vrot.lane.b32.xlu0 %v6273, 96
      %v6395 = vpop.permute.xlu0 %6394
      %6396 = vrot.lane.b32.xlu0 %v6274, 96
      %v6397 = vpop.permute.xlu0 %6396
      %6398 = vrot.lane.b32.xlu0 %v6276, 96
      %v6399 = vpop.permute.xlu0 %6398
      %6400 = vrot.lane.b32.xlu0 %v6277, 96
      %v6401 = vpop.permute.xlu0 %6400
      %6402 = vrot.lane.b32.xlu0 %v6279, 96
      %v6403 = vpop.permute.xlu0 %6402
      %6404 = vrot.lane.b32.xlu0 %v6280, 96
      %v6405 = vpop.permute.xlu0 %6404
      %6406 = vrot.lane.b32.xlu0 %v6282, 96
      %v6407 = vpop.permute.xlu0 %6406
      %6408 = vrot.lane.b32.xlu0 %v6283, 96
      %v6409 = vpop.permute.xlu0 %6408
      %6410 = vrot.lane.b32.xlu0 %v6285, 96
      %v6411 = vpop.permute.xlu0 %6410
      %6412 = vrot.lane.b32.xlu0 %v6286, 96
      %v6413 = vpop.permute.xlu0 %6412
      %6414 = vrot.lane.b32.xlu0 %v6288, 96
      %v6415 = vpop.permute.xlu0 %6414
      %6416 = vrot.lane.b32.xlu0 %v6289, 96
      %v6417 = vpop.permute.xlu0 %6416
      %6418 = vrot.lane.b32.xlu0 %v6291, 96
      %v6419 = vpop.permute.xlu0 %6418
      %6420 = vrot.lane.b32.xlu0 %v6292, 96
      %v6421 = vpop.permute.xlu0 %6420
      %6422 = vrot.lane.b32.xlu0 %v6294, 96
      %v6423 = vpop.permute.xlu0 %6422
      %6424 = vrot.lane.b32.xlu0 %v6295, 96
      %v6425 = vpop.permute.xlu0 %6424
      %6426 = vrot.lane.b32.xlu0 %v6297, 96
      %v6427 = vpop.permute.xlu0 %6426
      %6428 = vrot.lane.b32.xlu0 %v6298, 96
      %v6429 = vpop.permute.xlu0 %6428
      %6430 = vrot.lane.b32.xlu0 %v6300, 96
      %v6431 = vpop.permute.xlu0 %6430
      %6432 = vrot.lane.b32.xlu0 %v6301, 96
      %v6433 = vpop.permute.xlu0 %6432
      %6466 = vst.msk [vmem:[#allocation4] sm:$0xff] %vm561, %v6371
      %6467 = vst.msk [vmem:[#allocation4 + $0x18] sm:$0xff] %vm561, %v6373
      %6468 = vst.msk [vmem:[#allocation4 + $0x30] sm:$0xff] %vm561, %v6375
      %6469 = vst.msk [vmem:[#allocation4 + $0x48] sm:$0xff] %vm561, %v6377
      %6470 = vst.msk [vmem:[#allocation4 + $0x60] sm:$0xff] %vm561, %v6379
      %6471 = vst.msk [vmem:[#allocation4 + $0x78] sm:$0xff] %vm561, %v6381
      %6472 = vst.msk [vmem:[#allocation4 + $0x90] sm:$0xff] %vm561, %v6383
      %6473 = vst.msk [vmem:[#allocation4 + $0xa8] sm:$0xff] %vm561, %v6385
      %6474 = vst.msk [vmem:[#allocation4 + $0xc0] sm:$0xff] %vm561, %v6387
      %6475 = vst.msk [vmem:[#allocation4 + $0xd8] sm:$0xff] %vm561, %v6389
      %6476 = vst.msk [vmem:[#allocation4 + $0xf0] sm:$0xff] %vm561, %v6391
      %6477 = vst.msk [vmem:[#allocation4 + $0x108] sm:$0xff] %vm561, %v6393
      %6478 = vst.msk [vmem:[#allocation4 + $0x120] sm:$0xff] %vm561, %v6395
      %6479 = vst.msk [vmem:[#allocation4 + $0x138] sm:$0xff] %vm561, %v6397
      %6480 = vst.msk [vmem:[#allocation4 + $0x150] sm:$0xff] %vm561, %v6399
      %6481 = vst.msk [vmem:[#allocation4 + $0x168] sm:$0xff] %vm561, %v6401
      %6482 = vst.msk [vmem:[#allocation4 + $0x180] sm:$0xff] %vm561, %v6403
      %6483 = vst.msk [vmem:[#allocation4 + $0x198] sm:$0xff] %vm561, %v6405
      %6484 = vst.msk [vmem:[#allocation4 + $0x1b0] sm:$0xff] %vm561, %v6407
      %6485 = vst.msk [vmem:[#allocation4 + $0x1c8] sm:$0xff] %vm561, %v6409
      %6486 = vst.msk [vmem:[#allocation4 + $0x1e0] sm:$0xff] %vm561, %v6411
      %6487 = vst.msk [vmem:[#allocation4 + $0x1f8] sm:$0xff] %vm561, %v6413
      %6488 = vst.msk [vmem:[#allocation4 + $0x210] sm:$0xff] %vm561, %v6415
      %6489 = vst.msk [vmem:[#allocation4 + $0x228] sm:$0xff] %vm561, %v6417
      %6490 = vst.msk [vmem:[#allocation4 + $0x240] sm:$0xff] %vm561, %v6419
      %6491 = vst.msk [vmem:[#allocation4 + $0x258] sm:$0xff] %vm561, %v6421
      %6492 = vst.msk [vmem:[#allocation4 + $0x270] sm:$0xff] %vm561, %v6423
      %6493 = vst.msk [vmem:[#allocation4 + $0x288] sm:$0xff] %vm561, %v6425
      %6494 = vst.msk [vmem:[#allocation4 + $0x2a0] sm:$0xff] %vm561, %v6427
      %6495 = vst.msk [vmem:[#allocation4 + $0x2b8] sm:$0xff] %vm561, %v6429
      %6496 = vst.msk [vmem:[#allocation4 + $0x2d0] sm:$0xff] %vm561, %v6431
      %6497 = vst.msk [vmem:[#allocation4 + $0x2e8] sm:$0xff] %vm561, %v6433
      %6500 = vrot.lane.b32.xlu0 %v6258, 64
      %v6501 = vpop.permute.xlu0 %6500
      %6502 = vrot.lane.b32.xlu0 %v6259, 64
      %v6503 = vpop.permute.xlu0 %6502
      %6504 = vrot.lane.b32.xlu0 %v6261, 64
      %v6505 = vpop.permute.xlu0 %6504
      %6506 = vrot.lane.b32.xlu0 %v6262, 64
      %v6507 = vpop.permute.xlu0 %6506
      %6508 = vrot.lane.b32.xlu0 %v6264, 64
      %v6509 = vpop.permute.xlu0 %6508
      %6510 = vrot.lane.b32.xlu0 %v6265, 64
      %v6511 = vpop.permute.xlu0 %6510
      %6512 = vrot.lane.b32.xlu0 %v6267, 64
      %v6513 = vpop.permute.xlu0 %6512
      %6514 = vrot.lane.b32.xlu0 %v6268, 64
      %v6515 = vpop.permute.xlu0 %6514
      %6516 = vrot.lane.b32.xlu0 %v6270, 64
      %v6517 = vpop.permute.xlu0 %6516
      %6518 = vrot.lane.b32.xlu0 %v6271, 64
      %v6519 = vpop.permute.xlu0 %6518
      %6520 = vrot.lane.b32.xlu0 %v6273, 64
      %v6521 = vpop.permute.xlu0 %6520
      %6522 = vrot.lane.b32.xlu0 %v6274, 64
      %v6523 = vpop.permute.xlu0 %6522
      %6524 = vrot.lane.b32.xlu0 %v6276, 64
      %v6525 = vpop.permute.xlu0 %6524
      %6526 = vrot.lane.b32.xlu0 %v6277, 64
      %v6527 = vpop.permute.xlu0 %6526
      %6528 = vrot.lane.b32.xlu0 %v6279, 64
      %v6529 = vpop.permute.xlu0 %6528
      %6530 = vrot.lane.b32.xlu0 %v6280, 64
      %v6531 = vpop.permute.xlu0 %6530
      %6532 = vrot.lane.b32.xlu0 %v6282, 64
      %v6533 = vpop.permute.xlu0 %6532
      %6534 = vrot.lane.b32.xlu0 %v6283, 64
      %v6535 = vpop.permute.xlu0 %6534
      %6536 = vrot.lane.b32.xlu0 %v6285, 64
      %v6537 = vpop.permute.xlu0 %6536
      %6538 = vrot.lane.b32.xlu0 %v6286, 64
      %v6539 = vpop.permute.xlu0 %6538
      %6540 = vrot.lane.b32.xlu0 %v6288, 64
      %v6541 = vpop.permute.xlu0 %6540
      %6542 = vrot.lane.b32.xlu0 %v6289, 64
      %v6543 = vpop.permute.xlu0 %6542
      %6544 = vrot.lane.b32.xlu0 %v6291, 64
      %v6545 = vpop.permute.xlu0 %6544
      %6546 = vrot.lane.b32.xlu0 %v6292, 64
      %v6547 = vpop.permute.xlu0 %6546
      %6548 = vrot.lane.b32.xlu0 %v6294, 64
      %v6549 = vpop.permute.xlu0 %6548
      %6550 = vrot.lane.b32.xlu0 %v6295, 64
      %v6551 = vpop.permute.xlu0 %6550
      %6552 = vrot.lane.b32.xlu0 %v6297, 64
      %v6553 = vpop.permute.xlu0 %6552
      %6554 = vrot.lane.b32.xlu0 %v6298, 64
      %v6555 = vpop.permute.xlu0 %6554
      %6556 = vrot.lane.b32.xlu0 %v6300, 64
      %v6557 = vpop.permute.xlu0 %6556
      %6558 = vrot.lane.b32.xlu0 %v6301, 64
      %v6559 = vpop.permute.xlu0 %6558
      %6560 = vrot.lane.b32.xlu0 %v6303, 64
      %v6561 = vpop.permute.xlu0 %6560
      %6562 = vrot.lane.b32.xlu0 %v6304, 64
      %v6563 = vpop.permute.xlu0 %6562
      %6596 = vst.msk [vmem:[#allocation4 + $0x8] sm:$0xff] %vm692, %v6501
      %6597 = vst.msk [vmem:[#allocation4 + $0x20] sm:$0xff] %vm692, %v6503
      %6598 = vst.msk [vmem:[#allocation4 + $0x38] sm:$0xff] %vm692, %v6505
      %6599 = vst.msk [vmem:[#allocation4 + $0x50] sm:$0xff] %vm692, %v6507
      %6600 = vst.msk [vmem:[#allocation4 + $0x68] sm:$0xff] %vm692, %v6509
      %6601 = vst.msk [vmem:[#allocation4 + $0x80] sm:$0xff] %vm692, %v6511
      %6602 = vst.msk [vmem:[#allocation4 + $0x98] sm:$0xff] %vm692, %v6513
      %6603 = vst.msk [vmem:[#allocation4 + $0xb0] sm:$0xff] %vm692, %v6515
      %6604 = vst.msk [vmem:[#allocation4 + $0xc8] sm:$0xff] %vm692, %v6517
      %6605 = vst.msk [vmem:[#allocation4 + $0xe0] sm:$0xff] %vm692, %v6519
      %6606 = vst.msk [vmem:[#allocation4 + $0xf8] sm:$0xff] %vm692, %v6521
      %6607 = vst.msk [vmem:[#allocation4 + $0x110] sm:$0xff] %vm692, %v6523
      %6608 = vst.msk [vmem:[#allocation4 + $0x128] sm:$0xff] %vm692, %v6525
      %6609 = vst.msk [vmem:[#allocation4 + $0x140] sm:$0xff] %vm692, %v6527
      %6610 = vst.msk [vmem:[#allocation4 + $0x158] sm:$0xff] %vm692, %v6529
      %6611 = vst.msk [vmem:[#allocation4 + $0x170] sm:$0xff] %vm692, %v6531
      %6612 = vst.msk [vmem:[#allocation4 + $0x188] sm:$0xff] %vm692, %v6533
      %6613 = vst.msk [vmem:[#allocation4 + $0x1a0] sm:$0xff] %vm692, %v6535
      %6614 = vst.msk [vmem:[#allocation4 + $0x1b8] sm:$0xff] %vm692, %v6537
      %6615 = vst.msk [vmem:[#allocation4 + $0x1d0] sm:$0xff] %vm692, %v6539
      %6616 = vst.msk [vmem:[#allocation4 + $0x1e8] sm:$0xff] %vm692, %v6541
      %6617 = vst.msk [vmem:[#allocation4 + $0x200] sm:$0xff] %vm692, %v6543
      %6618 = vst.msk [vmem:[#allocation4 + $0x218] sm:$0xff] %vm692, %v6545
      %6619 = vst.msk [vmem:[#allocation4 + $0x230] sm:$0xff] %vm692, %v6547
      %6620 = vst.msk [vmem:[#allocation4 + $0x248] sm:$0xff] %vm692, %v6549
      %6621 = vst.msk [vmem:[#allocation4 + $0x260] sm:$0xff] %vm692, %v6551
      %6622 = vst.msk [vmem:[#allocation4 + $0x278] sm:$0xff] %vm692, %v6553
      %6623 = vst.msk [vmem:[#allocation4 + $0x290] sm:$0xff] %vm692, %v6555
      %6624 = vst.msk [vmem:[#allocation4 + $0x2a8] sm:$0xff] %vm692, %v6557
      %6625 = vst.msk [vmem:[#allocation4 + $0x2c0] sm:$0xff] %vm692, %v6559
      %6626 = vst.msk [vmem:[#allocation4 + $0x2d8] sm:$0xff] %vm692, %v6561
      %6627 = vst.msk [vmem:[#allocation4 + $0x2f0] sm:$0xff] %vm692, %v6563
      %v6646 = vrot.slane %v6252, 1
      %v6647 = vrot.slane %v6253, 1
      %v6648 = vsel %vm743, %v6646, %v6647
      %v6649 = vrot.slane %v6254, 1
      %v6650 = vsel %vm743, %v6647, %v6649
      %v6651 = vrot.slane %v6255, 1
      %v6652 = vrot.slane %v6256, 1
      %v6653 = vsel %vm743, %v6651, %v6652
      %v6654 = vrot.slane %v6257, 1
      %v6655 = vsel %vm743, %v6652, %v6654
      %v6656 = vrot.slane %v6258, 1
      %v6657 = vrot.slane %v6259, 1
      %v6658 = vsel %vm743, %v6656, %v6657
      %v6659 = vrot.slane %v6260, 1
      %v6660 = vsel %vm743, %v6657, %v6659
      %v6661 = vrot.slane %v6261, 1
      %v6662 = vrot.slane %v6262, 1
      %v6663 = vsel %vm743, %v6661, %v6662
      %v6664 = vrot.slane %v6263, 1
      %v6665 = vsel %vm743, %v6662, %v6664
      %v6666 = vrot.slane %v6264, 1
      %v6667 = vrot.slane %v6265, 1
      %v6668 = vsel %vm743, %v6666, %v6667
      %v6669 = vrot.slane %v6266, 1
      %v6670 = vsel %vm743, %v6667, %v6669
      %v6671 = vrot.slane %v6267, 1
      %v6672 = vrot.slane %v6268, 1
      %v6673 = vsel %vm743, %v6671, %v6672
      %v6674 = vrot.slane %v6269, 1
      %v6675 = vsel %vm743, %v6672, %v6674
      %v6676 = vrot.slane %v6270, 1
      %v6677 = vrot.slane %v6271, 1
      %v6678 = vsel %vm743, %v6676, %v6677
      %v6679 = vrot.slane %v6272, 1
      %v6680 = vsel %vm743, %v6677, %v6679
      %v6681 = vrot.slane %v6273, 1
      %v6682 = vrot.slane %v6274, 1
      %v6683 = vsel %vm743, %v6681, %v6682
      %v6684 = vrot.slane %v6275, 1
      %v6685 = vsel %vm743, %v6682, %v6684
      %v6686 = vrot.slane %v6276, 1
      %v6687 = vrot.slane %v6277, 1
      %v6688 = vsel %vm743, %v6686, %v6687
      %v6689 = vrot.slane %v6278, 1
      %v6690 = vsel %vm743, %v6687, %v6689
      %v6691 = vrot.slane %v6279, 1
      %v6692 = vrot.slane %v6280, 1
      %v6693 = vsel %vm743, %v6691, %v6692
      %v6694 = vrot.slane %v6281, 1
      %v6695 = vsel %vm743, %v6692, %v6694
      %v6696 = vrot.slane %v6282, 1
      %v6697 = vrot.slane %v6283, 1
      %v6698 = vsel %vm743, %v6696, %v6697
      %v6699 = vrot.slane %v6284, 1
      %v6700 = vsel %vm743, %v6697, %v6699
      %v6701 = vrot.slane %v6285, 1
      %v6702 = vrot.slane %v6286, 1
      %v6703 = vsel %vm743, %v6701, %v6702
      %v6704 = vrot.slane %v6287, 1
      %v6705 = vsel %vm743, %v6702, %v6704
      %v6706 = vrot.slane %v6288, 1
      %v6707 = vrot.slane %v6289, 1
      %v6708 = vsel %vm743, %v6706, %v6707
      %v6709 = vrot.slane %v6290, 1
      %v6710 = vsel %vm743, %v6707, %v6709
      %v6711 = vrot.slane %v6291, 1
      %v6712 = vrot.slane %v6292, 1
      %v6713 = vsel %vm743, %v6711, %v6712
      %v6714 = vrot.slane %v6293, 1
      %v6715 = vsel %vm743, %v6712, %v6714
      %v6716 = vrot.slane %v6294, 1
      %v6717 = vrot.slane %v6295, 1
      %v6718 = vsel %vm743, %v6716, %v6717
      %v6719 = vrot.slane %v6296, 1
      %v6720 = vsel %vm743, %v6717, %v6719
      %v6721 = vrot.slane %v6297, 1
      %v6722 = vrot.slane %v6298, 1
      %v6723 = vsel %vm743, %v6721, %v6722
      %v6724 = vrot.slane %v6299, 1
      %v6725 = vsel %vm743, %v6722, %v6724
      %6726 = vrot.lane.b32.xlu0 %v6648, 32
      %v6727 = vpop.permute.xlu0 %6726
      %6728 = vrot.lane.b32.xlu0 %v6650, 32
      %v6729 = vpop.permute.xlu0 %6728
      %6730 = vrot.lane.b32.xlu0 %v6653, 32
      %v6731 = vpop.permute.xlu0 %6730
      %6732 = vrot.lane.b32.xlu0 %v6655, 32
      %v6733 = vpop.permute.xlu0 %6732
      %6734 = vrot.lane.b32.xlu0 %v6658, 32
      %v6735 = vpop.permute.xlu0 %6734
      %6736 = vrot.lane.b32.xlu0 %v6660, 32
      %v6737 = vpop.permute.xlu0 %6736
      %6738 = vrot.lane.b32.xlu0 %v6663, 32
      %v6739 = vpop.permute.xlu0 %6738
      %6740 = vrot.lane.b32.xlu0 %v6665, 32
      %v6741 = vpop.permute.xlu0 %6740
      %6742 = vrot.lane.b32.xlu0 %v6668, 32
      %v6743 = vpop.permute.xlu0 %6742
      %6744 = vrot.lane.b32.xlu0 %v6670, 32
      %v6745 = vpop.permute.xlu0 %6744
      %6746 = vrot.lane.b32.xlu0 %v6673, 32
      %v6747 = vpop.permute.xlu0 %6746
      %6748 = vrot.lane.b32.xlu0 %v6675, 32
      %v6749 = vpop.permute.xlu0 %6748
      %6750 = vrot.lane.b32.xlu0 %v6678, 32
      %v6751 = vpop.permute.xlu0 %6750
      %6752 = vrot.lane.b32.xlu0 %v6680, 32
      %v6753 = vpop.permute.xlu0 %6752
      %6754 = vrot.lane.b32.xlu0 %v6683, 32
      %v6755 = vpop.permute.xlu0 %6754
      %6756 = vrot.lane.b32.xlu0 %v6685, 32
      %v6757 = vpop.permute.xlu0 %6756
      %6758 = vrot.lane.b32.xlu0 %v6688, 32
      %v6759 = vpop.permute.xlu0 %6758
      %6760 = vrot.lane.b32.xlu0 %v6690, 32
      %v6761 = vpop.permute.xlu0 %6760
      %6762 = vrot.lane.b32.xlu0 %v6693, 32
      %v6763 = vpop.permute.xlu0 %6762
      %6764 = vrot.lane.b32.xlu0 %v6695, 32
      %v6765 = vpop.permute.xlu0 %6764
      %6766 = vrot.lane.b32.xlu0 %v6698, 32
      %v6767 = vpop.permute.xlu0 %6766
      %6768 = vrot.lane.b32.xlu0 %v6700, 32
      %v6769 = vpop.permute.xlu0 %6768
      %6770 = vrot.lane.b32.xlu0 %v6703, 32
      %v6771 = vpop.permute.xlu0 %6770
      %6772 = vrot.lane.b32.xlu0 %v6705, 32
      %v6773 = vpop.permute.xlu0 %6772
      %6774 = vrot.lane.b32.xlu0 %v6708, 32
      %v6775 = vpop.permute.xlu0 %6774
      %6776 = vrot.lane.b32.xlu0 %v6710, 32
      %v6777 = vpop.permute.xlu0 %6776
      %6778 = vrot.lane.b32.xlu0 %v6713, 32
      %v6779 = vpop.permute.xlu0 %6778
      %6780 = vrot.lane.b32.xlu0 %v6715, 32
      %v6781 = vpop.permute.xlu0 %6780
      %6782 = vrot.lane.b32.xlu0 %v6718, 32
      %v6783 = vpop.permute.xlu0 %6782
      %6784 = vrot.lane.b32.xlu0 %v6720, 32
      %v6785 = vpop.permute.xlu0 %6784
      %6786 = vrot.lane.b32.xlu0 %v6723, 32
      %v6787 = vpop.permute.xlu0 %6786
      %6788 = vrot.lane.b32.xlu0 %v6725, 32
      %v6789 = vpop.permute.xlu0 %6788
      %6822 = vst.msk [vmem:[#allocation4] sm:$0xff] %vm920, %v6727
      %6823 = vst.msk [vmem:[#allocation4 + $0x18] sm:$0xff] %vm920, %v6729
      %6824 = vst.msk [vmem:[#allocation4 + $0x30] sm:$0xff] %vm920, %v6731
      %6825 = vst.msk [vmem:[#allocation4 + $0x48] sm:$0xff] %vm920, %v6733
      %6826 = vst.msk [vmem:[#allocation4 + $0x60] sm:$0xff] %vm920, %v6735
      %6827 = vst.msk [vmem:[#allocation4 + $0x78] sm:$0xff] %vm920, %v6737
      %6828 = vst.msk [vmem:[#allocation4 + $0x90] sm:$0xff] %vm920, %v6739
      %6829 = vst.msk [vmem:[#allocation4 + $0xa8] sm:$0xff] %vm920, %v6741
      %6830 = vst.msk [vmem:[#allocation4 + $0xc0] sm:$0xff] %vm920, %v6743
      %6831 = vst.msk [vmem:[#allocation4 + $0xd8] sm:$0xff] %vm920, %v6745
      %6832 = vst.msk [vmem:[#allocation4 + $0xf0] sm:$0xff] %vm920, %v6747
      %6833 = vst.msk [vmem:[#allocation4 + $0x108] sm:$0xff] %vm920, %v6749
      %6834 = vst.msk [vmem:[#allocation4 + $0x120] sm:$0xff] %vm920, %v6751
      %6835 = vst.msk [vmem:[#allocation4 + $0x138] sm:$0xff] %vm920, %v6753
      %6836 = vst.msk [vmem:[#allocation4 + $0x150] sm:$0xff] %vm920, %v6755
      %6837 = vst.msk [vmem:[#allocation4 + $0x168] sm:$0xff] %vm920, %v6757
      %6838 = vst.msk [vmem:[#allocation4 + $0x180] sm:$0xff] %vm920, %v6759
      %6839 = vst.msk [vmem:[#allocation4 + $0x198] sm:$0xff] %vm920, %v6761
      %6840 = vst.msk [vmem:[#allocation4 + $0x1b0] sm:$0xff] %vm920, %v6763
      %6841 = vst.msk [vmem:[#allocation4 + $0x1c8] sm:$0xff] %vm920, %v6765
      %6842 = vst.msk [vmem:[#allocation4 + $0x1e0] sm:$0xff] %vm920, %v6767
      %6843 = vst.msk [vmem:[#allocation4 + $0x1f8] sm:$0xff] %vm920, %v6769
      %6844 = vst.msk [vmem:[#allocation4 + $0x210] sm:$0xff] %vm920, %v6771
      %6845 = vst.msk [vmem:[#allocation4 + $0x228] sm:$0xff] %vm920, %v6773
      %6846 = vst.msk [vmem:[#allocation4 + $0x240] sm:$0xff] %vm920, %v6775
      %6847 = vst.msk [vmem:[#allocation4 + $0x258] sm:$0xff] %vm920, %v6777
      %6848 = vst.msk [vmem:[#allocation4 + $0x270] sm:$0xff] %vm920, %v6779
      %6849 = vst.msk [vmem:[#allocation4 + $0x288] sm:$0xff] %vm920, %v6781
      %6850 = vst.msk [vmem:[#allocation4 + $0x2a0] sm:$0xff] %vm920, %v6783
      %6851 = vst.msk [vmem:[#allocation4 + $0x2b8] sm:$0xff] %vm920, %v6785
      %6852 = vst.msk [vmem:[#allocation4 + $0x2d0] sm:$0xff] %vm920, %v6787
      %6853 = vst.msk [vmem:[#allocation4 + $0x2e8] sm:$0xff] %vm920, %v6789
      %v6855 = vrot.slane %v6300, 1
      %v6856 = vrot.slane %v6301, 1
      %v6857 = vsel %vm743, %v6855, %v6856
      %v6858 = vrot.slane %v6302, 1
      %v6859 = vsel %vm743, %v6856, %v6858
      %6892 = vst.msk [vmem:[#allocation4 + $0x8] sm:$0xff] %vm171, %v6653
      %6893 = vst.msk [vmem:[#allocation4 + $0x20] sm:$0xff] %vm171, %v6655
      %6894 = vst.msk [vmem:[#allocation4 + $0x38] sm:$0xff] %vm171, %v6658
      %6895 = vst.msk [vmem:[#allocation4 + $0x50] sm:$0xff] %vm171, %v6660
      %6896 = vst.msk [vmem:[#allocation4 + $0x68] sm:$0xff] %vm171, %v6663
      %6897 = vst.msk [vmem:[#allocation4 + $0x80] sm:$0xff] %vm171, %v6665
      %6898 = vst.msk [vmem:[#allocation4 + $0x98] sm:$0xff] %vm171, %v6668
      %6899 = vst.msk [vmem:[#allocation4 + $0xb0] sm:$0xff] %vm171, %v6670
      %6900 = vst.msk [vmem:[#allocation4 + $0xc8] sm:$0xff] %vm171, %v6673
      %6901 = vst.msk [vmem:[#allocation4 + $0xe0] sm:$0xff] %vm171, %v6675
      %6902 = vst.msk [vmem:[#allocation4 + $0xf8] sm:$0xff] %vm171, %v6678
      %6903 = vst.msk [vmem:[#allocation4 + $0x110] sm:$0xff] %vm171, %v6680
      %6904 = vst.msk [vmem:[#allocation4 + $0x128] sm:$0xff] %vm171, %v6683
      %6905 = vst.msk [vmem:[#allocation4 + $0x140] sm:$0xff] %vm171, %v6685
      %6906 = vst.msk [vmem:[#allocation4 + $0x158] sm:$0xff] %vm171, %v6688
      %6907 = vst.msk [vmem:[#allocation4 + $0x170] sm:$0xff] %vm171, %v6690
      %6908 = vst.msk [vmem:[#allocation4 + $0x188] sm:$0xff] %vm171, %v6693
      %6909 = vst.msk [vmem:[#allocation4 + $0x1a0] sm:$0xff] %vm171, %v6695
      %6910 = vst.msk [vmem:[#allocation4 + $0x1b8] sm:$0xff] %vm171, %v6698
      %6911 = vst.msk [vmem:[#allocation4 + $0x1d0] sm:$0xff] %vm171, %v6700
      %6912 = vst.msk [vmem:[#allocation4 + $0x1e8] sm:$0xff] %vm171, %v6703
      %6913 = vst.msk [vmem:[#allocation4 + $0x200] sm:$0xff] %vm171, %v6705
      %6914 = vst.msk [vmem:[#allocation4 + $0x218] sm:$0xff] %vm171, %v6708
      %6915 = vst.msk [vmem:[#allocation4 + $0x230] sm:$0xff] %vm171, %v6710
      %6916 = vst.msk [vmem:[#allocation4 + $0x248] sm:$0xff] %vm171, %v6713
      %6917 = vst.msk [vmem:[#allocation4 + $0x260] sm:$0xff] %vm171, %v6715
      %6918 = vst.msk [vmem:[#allocation4 + $0x278] sm:$0xff] %vm171, %v6718
      %6919 = vst.msk [vmem:[#allocation4 + $0x290] sm:$0xff] %vm171, %v6720
      %6920 = vst.msk [vmem:[#allocation4 + $0x2a8] sm:$0xff] %vm171, %v6723
      %6921 = vst.msk [vmem:[#allocation4 + $0x2c0] sm:$0xff] %vm171, %v6725
      %6922 = vst.msk [vmem:[#allocation4 + $0x2d8] sm:$0xff] %vm171, %v6857
      %6923 = vst.msk [vmem:[#allocation4 + $0x2f0] sm:$0xff] %vm171, %v6859
      %v6925 = vrot.slane %v6303, 1
      %v6926 = vrot.slane %v6304, 1
      %v6927 = vsel %vm743, %v6925, %v6926
      %v6928 = vrot.slane %v6305, 1
      %v6929 = vsel %vm743, %v6926, %v6928
      %6930 = vrot.lane.b32.xlu0 %v6658, 96
      %v6931 = vpop.permute.xlu0 %6930
      %6932 = vrot.lane.b32.xlu0 %v6660, 96
      %v6933 = vpop.permute.xlu0 %6932
      %6934 = vrot.lane.b32.xlu0 %v6663, 96
      %v6935 = vpop.permute.xlu0 %6934
      %6936 = vrot.lane.b32.xlu0 %v6665, 96
      %v6937 = vpop.permute.xlu0 %6936
      %6938 = vrot.lane.b32.xlu0 %v6668, 96
      %v6939 = vpop.permute.xlu0 %6938
      %6940 = vrot.lane.b32.xlu0 %v6670, 96
      %v6941 = vpop.permute.xlu0 %6940
      %6942 = vrot.lane.b32.xlu0 %v6673, 96
      %v6943 = vpop.permute.xlu0 %6942
      %6944 = vrot.lane.b32.xlu0 %v6675, 96
      %v6945 = vpop.permute.xlu0 %6944
      %6946 = vrot.lane.b32.xlu0 %v6678, 96
      %v6947 = vpop.permute.xlu0 %6946
      %6948 = vrot.lane.b32.xlu0 %v6680, 96
      %v6949 = vpop.permute.xlu0 %6948
      %6950 = vrot.lane.b32.xlu0 %v6683, 96
      %v6951 = vpop.permute.xlu0 %6950
      %6952 = vrot.lane.b32.xlu0 %v6685, 96
      %v6953 = vpop.permute.xlu0 %6952
      %6954 = vrot.lane.b32.xlu0 %v6688, 96
      %v6955 = vpop.permute.xlu0 %6954
      %6956 = vrot.lane.b32.xlu0 %v6690, 96
      %v6957 = vpop.permute.xlu0 %6956
      %6958 = vrot.lane.b32.xlu0 %v6693, 96
      %v6959 = vpop.permute.xlu0 %6958
      %6960 = vrot.lane.b32.xlu0 %v6695, 96
      %v6961 = vpop.permute.xlu0 %6960
      %6962 = vrot.lane.b32.xlu0 %v6698, 96
      %v6963 = vpop.permute.xlu0 %6962
      %6964 = vrot.lane.b32.xlu0 %v6700, 96
      %v6965 = vpop.permute.xlu0 %6964
      %6966 = vrot.lane.b32.xlu0 %v6703, 96
      %v6967 = vpop.permute.xlu0 %6966
      %6968 = vrot.lane.b32.xlu0 %v6705, 96
      %v6969 = vpop.permute.xlu0 %6968
      %6970 = vrot.lane.b32.xlu0 %v6708, 96
      %v6971 = vpop.permute.xlu0 %6970
      %6972 = vrot.lane.b32.xlu0 %v6710, 96
      %v6973 = vpop.permute.xlu0 %6972
      %6974 = vrot.lane.b32.xlu0 %v6713, 96
      %v6975 = vpop.permute.xlu0 %6974
      %6976 = vrot.lane.b32.xlu0 %v6715, 96
      %v6977 = vpop.permute.xlu0 %6976
      %6978 = vrot.lane.b32.xlu0 %v6718, 96
      %v6979 = vpop.permute.xlu0 %6978
      %6980 = vrot.lane.b32.xlu0 %v6720, 96
      %v6981 = vpop.permute.xlu0 %6980
      %6982 = vrot.lane.b32.xlu0 %v6723, 96
      %v6983 = vpop.permute.xlu0 %6982
      %6984 = vrot.lane.b32.xlu0 %v6725, 96
      %v6985 = vpop.permute.xlu0 %6984
      %6986 = vrot.lane.b32.xlu0 %v6857, 96
      %v6987 = vpop.permute.xlu0 %6986
      %6988 = vrot.lane.b32.xlu0 %v6859, 96
      %v6989 = vpop.permute.xlu0 %6988
      %6990 = vrot.lane.b32.xlu0 %v6927, 96
      %v6991 = vpop.permute.xlu0 %6990
      %6992 = vrot.lane.b32.xlu0 %v6929, 96
      %v6993 = vpop.permute.xlu0 %6992
      %7026 = vst.msk [vmem:[#allocation4 + $0x8] sm:$0xff] %vm561, %v6931
      %7027 = vst.msk [vmem:[#allocation4 + $0x20] sm:$0xff] %vm561, %v6933
      %7028 = vst.msk [vmem:[#allocation4 + $0x38] sm:$0xff] %vm561, %v6935
      %7029 = vst.msk [vmem:[#allocation4 + $0x50] sm:$0xff] %vm561, %v6937
      %7030 = vst.msk [vmem:[#allocation4 + $0x68] sm:$0xff] %vm561, %v6939
      %7031 = vst.msk [vmem:[#allocation4 + $0x80] sm:$0xff] %vm561, %v6941
      %7032 = vst.msk [vmem:[#allocation4 + $0x98] sm:$0xff] %vm561, %v6943
      %7033 = vst.msk [vmem:[#allocation4 + $0xb0] sm:$0xff] %vm561, %v6945
      %7034 = vst.msk [vmem:[#allocation4 + $0xc8] sm:$0xff] %vm561, %v6947
      %7035 = vst.msk [vmem:[#allocation4 + $0xe0] sm:$0xff] %vm561, %v6949
      %7036 = vst.msk [vmem:[#allocation4 + $0xf8] sm:$0xff] %vm561, %v6951
      %7037 = vst.msk [vmem:[#allocation4 + $0x110] sm:$0xff] %vm561, %v6953
      %7038 = vst.msk [vmem:[#allocation4 + $0x128] sm:$0xff] %vm561, %v6955
      %7039 = vst.msk [vmem:[#allocation4 + $0x140] sm:$0xff] %vm561, %v6957
      %7040 = vst.msk [vmem:[#allocation4 + $0x158] sm:$0xff] %vm561, %v6959
      %7041 = vst.msk [vmem:[#allocation4 + $0x170] sm:$0xff] %vm561, %v6961
      %7042 = vst.msk [vmem:[#allocation4 + $0x188] sm:$0xff] %vm561, %v6963
      %7043 = vst.msk [vmem:[#allocation4 + $0x1a0] sm:$0xff] %vm561, %v6965
      %7044 = vst.msk [vmem:[#allocation4 + $0x1b8] sm:$0xff] %vm561, %v6967
      %7045 = vst.msk [vmem:[#allocation4 + $0x1d0] sm:$0xff] %vm561, %v6969
      %7046 = vst.msk [vmem:[#allocation4 + $0x1e8] sm:$0xff] %vm561, %v6971
      %7047 = vst.msk [vmem:[#allocation4 + $0x200] sm:$0xff] %vm561, %v6973
      %7048 = vst.msk [vmem:[#allocation4 + $0x218] sm:$0xff] %vm561, %v6975
      %7049 = vst.msk [vmem:[#allocation4 + $0x230] sm:$0xff] %vm561, %v6977
      %7050 = vst.msk [vmem:[#allocation4 + $0x248] sm:$0xff] %vm561, %v6979
      %7051 = vst.msk [vmem:[#allocation4 + $0x260] sm:$0xff] %vm561, %v6981
      %7052 = vst.msk [vmem:[#allocation4 + $0x278] sm:$0xff] %vm561, %v6983
      %7053 = vst.msk [vmem:[#allocation4 + $0x290] sm:$0xff] %vm561, %v6985
      %7054 = vst.msk [vmem:[#allocation4 + $0x2a8] sm:$0xff] %vm561, %v6987
      %7055 = vst.msk [vmem:[#allocation4 + $0x2c0] sm:$0xff] %vm561, %v6989
      %7056 = vst.msk [vmem:[#allocation4 + $0x2d8] sm:$0xff] %vm561, %v6991
      %7057 = vst.msk [vmem:[#allocation4 + $0x2f0] sm:$0xff] %vm561, %v6993
      %v7058 = vrot.slane %v6252, 2
      %v7059 = vrot.slane %v6253, 2
      %v7060 = vsel %vm1157, %v7058, %v7059
      %v7061 = vrot.slane %v6254, 2
      %v7062 = vsel %vm1157, %v7059, %v7061
      %v7063 = vrot.slane %v6255, 2
      %v7064 = vrot.slane %v6256, 2
      %v7065 = vsel %vm1157, %v7063, %v7064
      %v7066 = vrot.slane %v6257, 2
      %v7067 = vsel %vm1157, %v7064, %v7066
      %v7068 = vrot.slane %v6258, 2
      %v7069 = vrot.slane %v6259, 2
      %v7070 = vsel %vm1157, %v7068, %v7069
      %v7071 = vrot.slane %v6260, 2
      %v7072 = vsel %vm1157, %v7069, %v7071
      %v7073 = vrot.slane %v6261, 2
      %v7074 = vrot.slane %v6262, 2
      %v7075 = vsel %vm1157, %v7073, %v7074
      %v7076 = vrot.slane %v6263, 2
      %v7077 = vsel %vm1157, %v7074, %v7076
      %v7078 = vrot.slane %v6264, 2
      %v7079 = vrot.slane %v6265, 2
      %v7080 = vsel %vm1157, %v7078, %v7079
      %v7081 = vrot.slane %v6266, 2
      %v7082 = vsel %vm1157, %v7079, %v7081
      %v7083 = vrot.slane %v6267, 2
      %v7084 = vrot.slane %v6268, 2
      %v7085 = vsel %vm1157, %v7083, %v7084
      %v7086 = vrot.slane %v6269, 2
      %v7087 = vsel %vm1157, %v7084, %v7086
      %v7088 = vrot.slane %v6270, 2
      %v7089 = vrot.slane %v6271, 2
      %v7090 = vsel %vm1157, %v7088, %v7089
      %v7091 = vrot.slane %v6272, 2
      %v7092 = vsel %vm1157, %v7089, %v7091
      %v7093 = vrot.slane %v6273, 2
      %v7094 = vrot.slane %v6274, 2
      %v7095 = vsel %vm1157, %v7093, %v7094
      %v7096 = vrot.slane %v6275, 2
      %v7097 = vsel %vm1157, %v7094, %v7096
      %v7098 = vrot.slane %v6276, 2
      %v7099 = vrot.slane %v6277, 2
      %v7100 = vsel %vm1157, %v7098, %v7099
      %v7101 = vrot.slane %v6278, 2
      %v7102 = vsel %vm1157, %v7099, %v7101
      %v7103 = vrot.slane %v6279, 2
      %v7104 = vrot.slane %v6280, 2
      %v7105 = vsel %vm1157, %v7103, %v7104
      %v7106 = vrot.slane %v6281, 2
      %v7107 = vsel %vm1157, %v7104, %v7106
      %v7108 = vrot.slane %v6282, 2
      %v7109 = vrot.slane %v6283, 2
      %v7110 = vsel %vm1157, %v7108, %v7109
      %v7111 = vrot.slane %v6284, 2
      %v7112 = vsel %vm1157, %v7109, %v7111
      %v7113 = vrot.slane %v6285, 2
      %v7114 = vrot.slane %v6286, 2
      %v7115 = vsel %vm1157, %v7113, %v7114
      %v7116 = vrot.slane %v6287, 2
      %v7117 = vsel %vm1157, %v7114, %v7116
      %v7118 = vrot.slane %v6288, 2
      %v7119 = vrot.slane %v6289, 2
      %v7120 = vsel %vm1157, %v7118, %v7119
      %v7121 = vrot.slane %v6290, 2
      %v7122 = vsel %vm1157, %v7119, %v7121
      %v7123 = vrot.slane %v6291, 2
      %v7124 = vrot.slane %v6292, 2
      %v7125 = vsel %vm1157, %v7123, %v7124
      %v7126 = vrot.slane %v6293, 2
      %v7127 = vsel %vm1157, %v7124, %v7126
      %v7128 = vrot.slane %v6294, 2
      %v7129 = vrot.slane %v6295, 2
      %v7130 = vsel %vm1157, %v7128, %v7129
      %v7131 = vrot.slane %v6296, 2
      %v7132 = vsel %vm1157, %v7129, %v7131
      %v7133 = vrot.slane %v6297, 2
      %v7134 = vrot.slane %v6298, 2
      %v7135 = vsel %vm1157, %v7133, %v7134
      %v7136 = vrot.slane %v6299, 2
      %v7137 = vsel %vm1157, %v7134, %v7136
      %7138 = vrot.lane.b32.xlu0 %v7060, 64
      %v7139 = vpop.permute.xlu0 %7138
      %7140 = vrot.lane.b32.xlu0 %v7062, 64
      %v7141 = vpop.permute.xlu0 %7140
      %7142 = vrot.lane.b32.xlu0 %v7065, 64
      %v7143 = vpop.permute.xlu0 %7142
      %7144 = vrot.lane.b32.xlu0 %v7067, 64
      %v7145 = vpop.permute.xlu0 %7144
      %7146 = vrot.lane.b32.xlu0 %v7070, 64
      %v7147 = vpop.permute.xlu0 %7146
      %7148 = vrot.lane.b32.xlu0 %v7072, 64
      %v7149 = vpop.permute.xlu0 %7148
      %7150 = vrot.lane.b32.xlu0 %v7075, 64
      %v7151 = vpop.permute.xlu0 %7150
      %7152 = vrot.lane.b32.xlu0 %v7077, 64
      %v7153 = vpop.permute.xlu0 %7152
      %7154 = vrot.lane.b32.xlu0 %v7080, 64
      %v7155 = vpop.permute.xlu0 %7154
      %7156 = vrot.lane.b32.xlu0 %v7082, 64
      %v7157 = vpop.permute.xlu0 %7156
      %7158 = vrot.lane.b32.xlu0 %v7085, 64
      %v7159 = vpop.permute.xlu0 %7158
      %7160 = vrot.lane.b32.xlu0 %v7087, 64
      %v7161 = vpop.permute.xlu0 %7160
      %7162 = vrot.lane.b32.xlu0 %v7090, 64
      %v7163 = vpop.permute.xlu0 %7162
      %7164 = vrot.lane.b32.xlu0 %v7092, 64
      %v7165 = vpop.permute.xlu0 %7164
      %7166 = vrot.lane.b32.xlu0 %v7095, 64
      %v7167 = vpop.permute.xlu0 %7166
      %7168 = vrot.lane.b32.xlu0 %v7097, 64
      %v7169 = vpop.permute.xlu0 %7168
      %7170 = vrot.lane.b32.xlu0 %v7100, 64
      %v7171 = vpop.permute.xlu0 %7170
      %7172 = vrot.lane.b32.xlu0 %v7102, 64
      %v7173 = vpop.permute.xlu0 %7172
      %7174 = vrot.lane.b32.xlu0 %v7105, 64
      %v7175 = vpop.permute.xlu0 %7174
      %7176 = vrot.lane.b32.xlu0 %v7107, 64
      %v7177 = vpop.permute.xlu0 %7176
      %7178 = vrot.lane.b32.xlu0 %v7110, 64
      %v7179 = vpop.permute.xlu0 %7178
      %7180 = vrot.lane.b32.xlu0 %v7112, 64
      %v7181 = vpop.permute.xlu0 %7180
      %7182 = vrot.lane.b32.xlu0 %v7115, 64
      %v7183 = vpop.permute.xlu0 %7182
      %7184 = vrot.lane.b32.xlu0 %v7117, 64
      %v7185 = vpop.permute.xlu0 %7184
      %7186 = vrot.lane.b32.xlu0 %v7120, 64
      %v7187 = vpop.permute.xlu0 %7186
      %7188 = vrot.lane.b32.xlu0 %v7122, 64
      %v7189 = vpop.permute.xlu0 %7188
      %7190 = vrot.lane.b32.xlu0 %v7125, 64
      %v7191 = vpop.permute.xlu0 %7190
      %7192 = vrot.lane.b32.xlu0 %v7127, 64
      %v7193 = vpop.permute.xlu0 %7192
      %7194 = vrot.lane.b32.xlu0 %v7130, 64
      %v7195 = vpop.permute.xlu0 %7194
      %7196 = vrot.lane.b32.xlu0 %v7132, 64
      %v7197 = vpop.permute.xlu0 %7196
      %7198 = vrot.lane.b32.xlu0 %v7135, 64
      %v7199 = vpop.permute.xlu0 %7198
      %7200 = vrot.lane.b32.xlu0 %v7137, 64
      %v7201 = vpop.permute.xlu0 %7200
      %7234 = vst.msk [vmem:[#allocation4] sm:$0xff] %vm692, %v7139
      %7235 = vst.msk [vmem:[#allocation4 + $0x18] sm:$0xff] %vm692, %v7141
      %7236 = vst.msk [vmem:[#allocation4 + $0x30] sm:$0xff] %vm692, %v7143
      %7237 = vst.msk [vmem:[#allocation4 + $0x48] sm:$0xff] %vm692, %v7145
      %7238 = vst.msk [vmem:[#allocation4 + $0x60] sm:$0xff] %vm692, %v7147
      %7239 = vst.msk [vmem:[#allocation4 + $0x78] sm:$0xff] %vm692, %v7149
      %7240 = vst.msk [vmem:[#allocation4 + $0x90] sm:$0xff] %vm692, %v7151
      %7241 = vst.msk [vmem:[#allocation4 + $0xa8] sm:$0xff] %vm692, %v7153
      %7242 = vst.msk [vmem:[#allocation4 + $0xc0] sm:$0xff] %vm692, %v7155
      %7243 = vst.msk [vmem:[#allocation4 + $0xd8] sm:$0xff] %vm692, %v7157
      %7244 = vst.msk [vmem:[#allocation4 + $0xf0] sm:$0xff] %vm692, %v7159
      %7245 = vst.msk [vmem:[#allocation4 + $0x108] sm:$0xff] %vm692, %v7161
      %7246 = vst.msk [vmem:[#allocation4 + $0x120] sm:$0xff] %vm692, %v7163
      %7247 = vst.msk [vmem:[#allocation4 + $0x138] sm:$0xff] %vm692, %v7165
      %7248 = vst.msk [vmem:[#allocation4 + $0x150] sm:$0xff] %vm692, %v7167
      %7249 = vst.msk [vmem:[#allocation4 + $0x168] sm:$0xff] %vm692, %v7169
      %7250 = vst.msk [vmem:[#allocation4 + $0x180] sm:$0xff] %vm692, %v7171
      %7251 = vst.msk [vmem:[#allocation4 + $0x198] sm:$0xff] %vm692, %v7173
      %7252 = vst.msk [vmem:[#allocation4 + $0x1b0] sm:$0xff] %vm692, %v7175
      %7253 = vst.msk [vmem:[#allocation4 + $0x1c8] sm:$0xff] %vm692, %v7177
      %7254 = vst.msk [vmem:[#allocation4 + $0x1e0] sm:$0xff] %vm692, %v7179
      %7255 = vst.msk [vmem:[#allocation4 + $0x1f8] sm:$0xff] %vm692, %v7181
      %7256 = vst.msk [vmem:[#allocation4 + $0x210] sm:$0xff] %vm692, %v7183
      %7257 = vst.msk [vmem:[#allocation4 + $0x228] sm:$0xff] %vm692, %v7185
      %7258 = vst.msk [vmem:[#allocation4 + $0x240] sm:$0xff] %vm692, %v7187
      %7259 = vst.msk [vmem:[#allocation4 + $0x258] sm:$0xff] %vm692, %v7189
      %7260 = vst.msk [vmem:[#allocation4 + $0x270] sm:$0xff] %vm692, %v7191
      %7261 = vst.msk [vmem:[#allocation4 + $0x288] sm:$0xff] %vm692, %v7193
      %7262 = vst.msk [vmem:[#allocation4 + $0x2a0] sm:$0xff] %vm692, %v7195
      %7263 = vst.msk [vmem:[#allocation4 + $0x2b8] sm:$0xff] %vm692, %v7197
      %7264 = vst.msk [vmem:[#allocation4 + $0x2d0] sm:$0xff] %vm692, %v7199
      %7265 = vst.msk [vmem:[#allocation4 + $0x2e8] sm:$0xff] %vm692, %v7201
      %v7266 = vrot.slane %v6300, 2
      %v7267 = vrot.slane %v6301, 2
      %v7268 = vsel %vm1157, %v7266, %v7267
      %v7269 = vrot.slane %v6302, 2
      %v7270 = vsel %vm1157, %v7267, %v7269
      %7271 = vrot.lane.b32.xlu0 %v7065, 32
      %v7272 = vpop.permute.xlu0 %7271
      %7273 = vrot.lane.b32.xlu0 %v7067, 32
      %v7274 = vpop.permute.xlu0 %7273
      %7275 = vrot.lane.b32.xlu0 %v7070, 32
      %v7276 = vpop.permute.xlu0 %7275
      %7277 = vrot.lane.b32.xlu0 %v7072, 32
      %v7278 = vpop.permute.xlu0 %7277
      %7279 = vrot.lane.b32.xlu0 %v7075, 32
      %v7280 = vpop.permute.xlu0 %7279
      %7281 = vrot.lane.b32.xlu0 %v7077, 32
      %v7282 = vpop.permute.xlu0 %7281
      %7283 = vrot.lane.b32.xlu0 %v7080, 32
      %v7284 = vpop.permute.xlu0 %7283
      %7285 = vrot.lane.b32.xlu0 %v7082, 32
      %v7286 = vpop.permute.xlu0 %7285
      %7287 = vrot.lane.b32.xlu0 %v7085, 32
      %v7288 = vpop.permute.xlu0 %7287
      %7289 = vrot.lane.b32.xlu0 %v7087, 32
      %v7290 = vpop.permute.xlu0 %7289
      %7291 = vrot.lane.b32.xlu0 %v7090, 32
      %v7292 = vpop.permute.xlu0 %7291
      %7293 = vrot.lane.b32.xlu0 %v7092, 32
      %v7294 = vpop.permute.xlu0 %7293
      %7295 = vrot.lane.b32.xlu0 %v7095, 32
      %v7296 = vpop.permute.xlu0 %7295
      %7297 = vrot.lane.b32.xlu0 %v7097, 32
      %v7298 = vpop.permute.xlu0 %7297
      %7299 = vrot.lane.b32.xlu0 %v7100, 32
      %v7300 = vpop.permute.xlu0 %7299
      %7301 = vrot.lane.b32.xlu0 %v7102, 32
      %v7302 = vpop.permute.xlu0 %7301
      %7303 = vrot.lane.b32.xlu0 %v7105, 32
      %v7304 = vpop.permute.xlu0 %7303
      %7305 = vrot.lane.b32.xlu0 %v7107, 32
      %v7306 = vpop.permute.xlu0 %7305
      %7307 = vrot.lane.b32.xlu0 %v7110, 32
      %v7308 = vpop.permute.xlu0 %7307
      %7309 = vrot.lane.b32.xlu0 %v7112, 32
      %v7310 = vpop.permute.xlu0 %7309
      %7311 = vrot.lane.b32.xlu0 %v7115, 32
      %v7312 = vpop.permute.xlu0 %7311
      %7313 = vrot.lane.b32.xlu0 %v7117, 32
      %v7314 = vpop.permute.xlu0 %7313
      %7315 = vrot.lane.b32.xlu0 %v7120, 32
      %v7316 = vpop.permute.xlu0 %7315
      %7317 = vrot.lane.b32.xlu0 %v7122, 32
      %v7318 = vpop.permute.xlu0 %7317
      %7319 = vrot.lane.b32.xlu0 %v7125, 32
      %v7320 = vpop.permute.xlu0 %7319
      %7321 = vrot.lane.b32.xlu0 %v7127, 32
      %v7322 = vpop.permute.xlu0 %7321
      %7323 = vrot.lane.b32.xlu0 %v7130, 32
      %v7324 = vpop.permute.xlu0 %7323
      %7325 = vrot.lane.b32.xlu0 %v7132, 32
      %v7326 = vpop.permute.xlu0 %7325
      %7327 = vrot.lane.b32.xlu0 %v7135, 32
      %v7328 = vpop.permute.xlu0 %7327
      %7329 = vrot.lane.b32.xlu0 %v7137, 32
      %v7330 = vpop.permute.xlu0 %7329
      %7331 = vrot.lane.b32.xlu0 %v7268, 32
      %v7332 = vpop.permute.xlu0 %7331
      %7333 = vrot.lane.b32.xlu0 %v7270, 32
      %v7334 = vpop.permute.xlu0 %7333
      %7367 = vst.msk [vmem:[#allocation4 + $0x8] sm:$0xff] %vm920, %v7272
      %7368 = vst.msk [vmem:[#allocation4 + $0x20] sm:$0xff] %vm920, %v7274
      %7369 = vst.msk [vmem:[#allocation4 + $0x38] sm:$0xff] %vm920, %v7276
      %7370 = vst.msk [vmem:[#allocation4 + $0x50] sm:$0xff] %vm920, %v7278
      %7371 = vst.msk [vmem:[#allocation4 + $0x68] sm:$0xff] %vm920, %v7280
      %7372 = vst.msk [vmem:[#allocation4 + $0x80] sm:$0xff] %vm920, %v7282
      %7373 = vst.msk [vmem:[#allocation4 + $0x98] sm:$0xff] %vm920, %v7284
      %7374 = vst.msk [vmem:[#allocation4 + $0xb0] sm:$0xff] %vm920, %v7286
      %7375 = vst.msk [vmem:[#allocation4 + $0xc8] sm:$0xff] %vm920, %v7288
      %7376 = vst.msk [vmem:[#allocation4 + $0xe0] sm:$0xff] %vm920, %v7290
      %7377 = vst.msk [vmem:[#allocation4 + $0xf8] sm:$0xff] %vm920, %v7292
      %7378 = vst.msk [vmem:[#allocation4 + $0x110] sm:$0xff] %vm920, %v7294
      %7379 = vst.msk [vmem:[#allocation4 + $0x128] sm:$0xff] %vm920, %v7296
      %7380 = vst.msk [vmem:[#allocation4 + $0x140] sm:$0xff] %vm920, %v7298
      %7381 = vst.msk [vmem:[#allocation4 + $0x158] sm:$0xff] %vm920, %v7300
      %7382 = vst.msk [vmem:[#allocation4 + $0x170] sm:$0xff] %vm920, %v7302
      %7383 = vst.msk [vmem:[#allocation4 + $0x188] sm:$0xff] %vm920, %v7304
      %7384 = vst.msk [vmem:[#allocation4 + $0x1a0] sm:$0xff] %vm920, %v7306
      %7385 = vst.msk [vmem:[#allocation4 + $0x1b8] sm:$0xff] %vm920, %v7308
      %7386 = vst.msk [vmem:[#allocation4 + $0x1d0] sm:$0xff] %vm920, %v7310
      %7387 = vst.msk [vmem:[#allocation4 + $0x1e8] sm:$0xff] %vm920, %v7312
      %7388 = vst.msk [vmem:[#allocation4 + $0x200] sm:$0xff] %vm920, %v7314
      %7389 = vst.msk [vmem:[#allocation4 + $0x218] sm:$0xff] %vm920, %v7316
      %7390 = vst.msk [vmem:[#allocation4 + $0x230] sm:$0xff] %vm920, %v7318
      %7391 = vst.msk [vmem:[#allocation4 + $0x248] sm:$0xff] %vm920, %v7320
      %7392 = vst.msk [vmem:[#allocation4 + $0x260] sm:$0xff] %vm920, %v7322
      %7393 = vst.msk [vmem:[#allocation4 + $0x278] sm:$0xff] %vm920, %v7324
      %7394 = vst.msk [vmem:[#allocation4 + $0x290] sm:$0xff] %vm920, %v7326
      %7395 = vst.msk [vmem:[#allocation4 + $0x2a8] sm:$0xff] %vm920, %v7328
      %7396 = vst.msk [vmem:[#allocation4 + $0x2c0] sm:$0xff] %vm920, %v7330
      %7397 = vst.msk [vmem:[#allocation4 + $0x2d8] sm:$0xff] %vm920, %v7332
      %7398 = vst.msk [vmem:[#allocation4 + $0x2f0] sm:$0xff] %vm920, %v7334
      %v7399 = vrot.slane %v6303, 2
      %v7400 = vrot.slane %v6304, 2
      %v7401 = vsel %vm1157, %v7399, %v7400
      %v7402 = vrot.slane %v6305, 2
      %v7403 = vsel %vm1157, %v7400, %v7402
      %7436 = vst.msk [vmem:[#allocation4 + $0x10] sm:$0xff] %vm171, %v7070
      %7437 = vst.msk [vmem:[#allocation4 + $0x28] sm:$0xff] %vm171, %v7072
      %7438 = vst.msk [vmem:[#allocation4 + $0x40] sm:$0xff] %vm171, %v7075
      %7439 = vst.msk [vmem:[#allocation4 + $0x58] sm:$0xff] %vm171, %v7077
      %7440 = vst.msk [vmem:[#allocation4 + $0x70] sm:$0xff] %vm171, %v7080
      %7441 = vst.msk [vmem:[#allocation4 + $0x88] sm:$0xff] %vm171, %v7082
      %7442 = vst.msk [vmem:[#allocation4 + $0xa0] sm:$0xff] %vm171, %v7085
      %7443 = vst.msk [vmem:[#allocation4 + $0xb8] sm:$0xff] %vm171, %v7087
      %7444 = vst.msk [vmem:[#allocation4 + $0xd0] sm:$0xff] %vm171, %v7090
      %7445 = vst.msk [vmem:[#allocation4 + $0xe8] sm:$0xff] %vm171, %v7092
      %7446 = vst.msk [vmem:[#allocation4 + $0x100] sm:$0xff] %vm171, %v7095
      %7447 = vst.msk [vmem:[#allocation4 + $0x118] sm:$0xff] %vm171, %v7097
      %7448 = vst.msk [vmem:[#allocation4 + $0x130] sm:$0xff] %vm171, %v7100
      %7449 = vst.msk [vmem:[#allocation4 + $0x148] sm:$0xff] %vm171, %v7102
      %7450 = vst.msk [vmem:[#allocation4 + $0x160] sm:$0xff] %vm171, %v7105
      %7451 = vst.msk [vmem:[#allocation4 + $0x178] sm:$0xff] %vm171, %v7107
      %7452 = vst.msk [vmem:[#allocation4 + $0x190] sm:$0xff] %vm171, %v7110
      %7453 = vst.msk [vmem:[#allocation4 + $0x1a8] sm:$0xff] %vm171, %v7112
      %7454 = vst.msk [vmem:[#allocation4 + $0x1c0] sm:$0xff] %vm171, %v7115
      %7455 = vst.msk [vmem:[#allocation4 + $0x1d8] sm:$0xff] %vm171, %v7117
      %7456 = vst.msk [vmem:[#allocation4 + $0x1f0] sm:$0xff] %vm171, %v7120
      %7457 = vst.msk [vmem:[#allocation4 + $0x208] sm:$0xff] %vm171, %v7122
      %7458 = vst.msk [vmem:[#allocation4 + $0x220] sm:$0xff] %vm171, %v7125
      %7459 = vst.msk [vmem:[#allocation4 + $0x238] sm:$0xff] %vm171, %v7127
      %7460 = vst.msk [vmem:[#allocation4 + $0x250] sm:$0xff] %vm171, %v7130
      %7461 = vst.msk [vmem:[#allocation4 + $0x268] sm:$0xff] %vm171, %v7132
      %7462 = vst.msk [vmem:[#allocation4 + $0x280] sm:$0xff] %vm171, %v7135
      %7463 = vst.msk [vmem:[#allocation4 + $0x298] sm:$0xff] %vm171, %v7137
      %7464 = vst.msk [vmem:[#allocation4 + $0x2b0] sm:$0xff] %vm171, %v7268
      %7465 = vst.msk [vmem:[#allocation4 + $0x2c8] sm:$0xff] %vm171, %v7270
      %7466 = vst.msk [vmem:[#allocation4 + $0x2e0] sm:$0xff] %vm171, %v7401
      %7467 = vst.msk [vmem:[#allocation4 + $0x2f8] sm:$0xff] %vm171, %v7403
      %v7468 = vld [vmem:[#allocation4] sm:$0xff]
      %v7469 = vld [vmem:[#allocation4 + $0x8] sm:$0xff]
      %v7470 = vld [vmem:[#allocation4 + $0x10] sm:$0xff]
      %v7471 = vld [vmem:[#allocation4 + $0x18] sm:$0xff]
      %v7472 = vld [vmem:[#allocation4 + $0x20] sm:$0xff]
      %v7473 = vld [vmem:[#allocation4 + $0x28] sm:$0xff]
      %v7474 = vld [vmem:[#allocation4 + $0x30] sm:$0xff]
      %v7475 = vld [vmem:[#allocation4 + $0x38] sm:$0xff]
      %v7476 = vld [vmem:[#allocation4 + $0x40] sm:$0xff]
      %v7477 = vld [vmem:[#allocation4 + $0x48] sm:$0xff]
      %v7478 = vld [vmem:[#allocation4 + $0x50] sm:$0xff]
      %v7479 = vld [vmem:[#allocation4 + $0x58] sm:$0xff]
      %v7480 = vld [vmem:[#allocation4 + $0x60] sm:$0xff]
      %v7481 = vld [vmem:[#allocation4 + $0x68] sm:$0xff]
      %v7482 = vld [vmem:[#allocation4 + $0x70] sm:$0xff]
      %v7483 = vld [vmem:[#allocation4 + $0x78] sm:$0xff]
      %v7484 = vld [vmem:[#allocation4 + $0x80] sm:$0xff]
      %v7485 = vld [vmem:[#allocation4 + $0x88] sm:$0xff]
      %v7486 = vld [vmem:[#allocation4 + $0x90] sm:$0xff]
      %v7487 = vld [vmem:[#allocation4 + $0x98] sm:$0xff]
      %v7488 = vld [vmem:[#allocation4 + $0xa0] sm:$0xff]
      %v7489 = vld [vmem:[#allocation4 + $0xa8] sm:$0xff]
      %v7490 = vld [vmem:[#allocation4 + $0xb0] sm:$0xff]
      %v7491 = vld [vmem:[#allocation4 + $0xb8] sm:$0xff]
      %v7492 = vld [vmem:[#allocation4 + $0xc0] sm:$0xff]
      %v7493 = vld [vmem:[#allocation4 + $0xc8] sm:$0xff]
      %v7494 = vld [vmem:[#allocation4 + $0xd0] sm:$0xff]
      %v7495 = vld [vmem:[#allocation4 + $0xd8] sm:$0xff]
      %v7496 = vld [vmem:[#allocation4 + $0xe0] sm:$0xff]
      %v7497 = vld [vmem:[#allocation4 + $0xe8] sm:$0xff]
      %v7498 = vld [vmem:[#allocation4 + $0xf0] sm:$0xff]
      %v7499 = vld [vmem:[#allocation4 + $0xf8] sm:$0xff]
      %v7500 = vld [vmem:[#allocation4 + $0x100] sm:$0xff]
      %v7501 = vld [vmem:[#allocation4 + $0x108] sm:$0xff]
      %v7502 = vld [vmem:[#allocation4 + $0x110] sm:$0xff]
      %v7503 = vld [vmem:[#allocation4 + $0x118] sm:$0xff]
      %v7504 = vld [vmem:[#allocation4 + $0x120] sm:$0xff]
      %v7505 = vld [vmem:[#allocation4 + $0x128] sm:$0xff]
      %v7506 = vld [vmem:[#allocation4 + $0x130] sm:$0xff]
      %v7507 = vld [vmem:[#allocation4 + $0x138] sm:$0xff]
      %v7508 = vld [vmem:[#allocation4 + $0x140] sm:$0xff]
      %v7509 = vld [vmem:[#allocation4 + $0x148] sm:$0xff]
      %v7510 = vld [vmem:[#allocation4 + $0x150] sm:$0xff]
      %v7511 = vld [vmem:[#allocation4 + $0x158] sm:$0xff]
      %v7512 = vld [vmem:[#allocation4 + $0x160] sm:$0xff]
      %v7513 = vld [vmem:[#allocation4 + $0x168] sm:$0xff]
      %v7514 = vld [vmem:[#allocation4 + $0x170] sm:$0xff]
      %v7515 = vld [vmem:[#allocation4 + $0x178] sm:$0xff]
      %v7516 = vld [vmem:[#allocation4 + $0x180] sm:$0xff]
      %v7517 = vld [vmem:[#allocation4 + $0x188] sm:$0xff]
      %v7518 = vld [vmem:[#allocation4 + $0x190] sm:$0xff]
      %v7519 = vld [vmem:[#allocation4 + $0x198] sm:$0xff]
      %v7520 = vld [vmem:[#allocation4 + $0x1a0] sm:$0xff]
      %v7521 = vld [vmem:[#allocation4 + $0x1a8] sm:$0xff]
      %v7522 = vld [vmem:[#allocation4 + $0x1b0] sm:$0xff]
      %v7523 = vld [vmem:[#allocation4 + $0x1b8] sm:$0xff]
      %v7524 = vld [vmem:[#allocation4 + $0x1c0] sm:$0xff]
      %v7525 = vld [vmem:[#allocation4 + $0x1c8] sm:$0xff]
      %v7526 = vld [vmem:[#allocation4 + $0x1d0] sm:$0xff]
      %v7527 = vld [vmem:[#allocation4 + $0x1d8] sm:$0xff]
      %v7528 = vld [vmem:[#allocation4 + $0x1e0] sm:$0xff]
      %v7529 = vld [vmem:[#allocation4 + $0x1e8] sm:$0xff]
      %v7530 = vld [vmem:[#allocation4 + $0x1f0] sm:$0xff]
      %v7531 = vld [vmem:[#allocation4 + $0x1f8] sm:$0xff]
      %v7532 = vld [vmem:[#allocation4 + $0x200] sm:$0xff]
      %v7533 = vld [vmem:[#allocation4 + $0x208] sm:$0xff]
      %v7534 = vld [vmem:[#allocation4 + $0x210] sm:$0xff]
      %v7535 = vld [vmem:[#allocation4 + $0x218] sm:$0xff]
      %v7536 = vld [vmem:[#allocation4 + $0x220] sm:$0xff]
      %v7537 = vld [vmem:[#allocation4 + $0x228] sm:$0xff]
      %v7538 = vld [vmem:[#allocation4 + $0x230] sm:$0xff]
      %v7539 = vld [vmem:[#allocation4 + $0x238] sm:$0xff]
      %v7540 = vld [vmem:[#allocation4 + $0x240] sm:$0xff]
      %v7541 = vld [vmem:[#allocation4 + $0x248] sm:$0xff]
      %v7542 = vld [vmem:[#allocation4 + $0x250] sm:$0xff]
      %v7543 = vld [vmem:[#allocation4 + $0x258] sm:$0xff]
      %v7544 = vld [vmem:[#allocation4 + $0x260] sm:$0xff]
      %v7545 = vld [vmem:[#allocation4 + $0x268] sm:$0xff]
      %v7546 = vld [vmem:[#allocation4 + $0x270] sm:$0xff]
      %v7547 = vld [vmem:[#allocation4 + $0x278] sm:$0xff]
      %v7548 = vld [vmem:[#allocation4 + $0x280] sm:$0xff]
      %v7549 = vld [vmem:[#allocation4 + $0x288] sm:$0xff]
      %v7550 = vld [vmem:[#allocation4 + $0x290] sm:$0xff]
      %v7551 = vld [vmem:[#allocation4 + $0x298] sm:$0xff]
      %v7552 = vld [vmem:[#allocation4 + $0x2a0] sm:$0xff]
      %v7553 = vld [vmem:[#allocation4 + $0x2a8] sm:$0xff]
      %v7554 = vld [vmem:[#allocation4 + $0x2b0] sm:$0xff]
      %v7555 = vld [vmem:[#allocation4 + $0x2b8] sm:$0xff]
      %v7556 = vld [vmem:[#allocation4 + $0x2c0] sm:$0xff]
      %v7557 = vld [vmem:[#allocation4 + $0x2c8] sm:$0xff]
      %v7558 = vld [vmem:[#allocation4 + $0x2d0] sm:$0xff]
      %v7559 = vld [vmem:[#allocation4 + $0x2d8] sm:$0xff]
      %v7560 = vld [vmem:[#allocation4 + $0x2e0] sm:$0xff]
      %v7561 = vld [vmem:[#allocation4 + $0x2e8] sm:$0xff]
      %v7562 = vld [vmem:[#allocation4 + $0x2f0] sm:$0xff]
      %v7563 = vld [vmem:[#allocation4 + $0x2f8] sm:$0xff]
      %s7564 = scalar_lea.vmem %s1, 864
      %v7565 = vld [vmem:[%s7564] sm:$0xff]
      %v7566 = vld [vmem:[%s7564 + $0x8] sm:$0xff]
      %v7567 = vld [vmem:[%s7564 + $0x10] sm:$0xff]
      %v7568 = vld [vmem:[%s7564 + $0x18] sm:$0xff]
      %v7569 = vld [vmem:[%s7564 + $0x20] sm:$0xff]
      %v7570 = vld [vmem:[%s7564 + $0x28] sm:$0xff]
      %v7571 = vld [vmem:[%s7564 + $0x30] sm:$0xff]
      %v7572 = vld [vmem:[%s7564 + $0x38] sm:$0xff]
      %v7573 = vld [vmem:[%s7564 + $0x40] sm:$0xff]
      %v7574 = vld [vmem:[%s7564 + $0x48] sm:$0xff]
      %v7575 = vld [vmem:[%s7564 + $0x50] sm:$0xff]
      %v7576 = vld [vmem:[%s7564 + $0x58] sm:$0xff]
      %v7577 = vld [vmem:[%s7564 + $0x60] sm:$0xff]
      %v7578 = vld [vmem:[%s7564 + $0x68] sm:$0xff]
      %v7579 = vld [vmem:[%s7564 + $0x70] sm:$0xff]
      %v7580 = vld [vmem:[%s7564 + $0x78] sm:$0xff]
      %v7581 = vld [vmem:[%s7564 + $0x80] sm:$0xff]
      %v7582 = vld [vmem:[%s7564 + $0x88] sm:$0xff]
      %v7583 = vld [vmem:[%s7564 + $0x90] sm:$0xff]
      %v7584 = vld [vmem:[%s7564 + $0x98] sm:$0xff]
      %v7585 = vld [vmem:[%s7564 + $0xa0] sm:$0xff]
      %v7586 = vld [vmem:[%s7564 + $0xa8] sm:$0xff]
      %v7587 = vld [vmem:[%s7564 + $0xb0] sm:$0xff]
      %v7588 = vld [vmem:[%s7564 + $0xb8] sm:$0xff]
      %v7589 = vld [vmem:[%s7564 + $0xc0] sm:$0xff]
      %v7590 = vld [vmem:[%s7564 + $0xc8] sm:$0xff]
      %v7591 = vld [vmem:[%s7564 + $0xd0] sm:$0xff]
      %v7592 = vld [vmem:[%s7564 + $0xd8] sm:$0xff]
      %v7593 = vld [vmem:[%s7564 + $0xe0] sm:$0xff]
      %v7594 = vld [vmem:[%s7564 + $0xe8] sm:$0xff]
      %v7595 = vld [vmem:[%s7564 + $0xf0] sm:$0xff]
      %v7596 = vld [vmem:[%s7564 + $0xf8] sm:$0xff]
      %v7597 = vld [vmem:[%s7564 + $0x100] sm:$0xff]
      %v7598 = vld [vmem:[%s7564 + $0x108] sm:$0xff]
      %v7599 = vld [vmem:[%s7564 + $0x110] sm:$0xff]
      %v7600 = vld [vmem:[%s7564 + $0x118] sm:$0xff]
      %s7601 = scalar_lea.vmem %s2, 3
      %v7602 = vld [vmem:[%s7601] sm:$0x1]
      %v7604 = vlaneseq
      %v7605 = vshrl.u32 %v7604, 7
      %v7606 = vsub.s32 0, %v7605
      %v7607 = vrot.slane %v7602, %v7606
      %v7610 = vsel %vm171, %v7470, 0
      %v7613 = vsel %vm171, %v7473, 0
      %v7616 = vsel %vm171, %v7476, 0
      %v7619 = vsel %vm171, %v7479, 0
      %v7622 = vsel %vm171, %v7482, 0
      %v7625 = vsel %vm171, %v7485, 0
      %v7628 = vsel %vm171, %v7488, 0
      %v7631 = vsel %vm171, %v7491, 0
      %v7634 = vsel %vm171, %v7494, 0
      %v7637 = vsel %vm171, %v7497, 0
      %v7640 = vsel %vm171, %v7500, 0
      %v7643 = vsel %vm171, %v7503, 0
      %v7646 = vsel %vm171, %v7506, 0
      %v7649 = vsel %vm171, %v7509, 0
      %v7652 = vsel %vm171, %v7512, 0
      %v7655 = vsel %vm171, %v7515, 0
      %v7658 = vsel %vm171, %v7518, 0
      %v7661 = vsel %vm171, %v7521, 0
      %v7664 = vsel %vm171, %v7524, 0
      %v7667 = vsel %vm171, %v7527, 0
      %v7670 = vsel %vm171, %v7530, 0
      %v7673 = vsel %vm171, %v7533, 0
      %v7676 = vsel %vm171, %v7536, 0
      %v7679 = vsel %vm171, %v7539, 0
      %v7682 = vsel %vm171, %v7542, 0
      %v7685 = vsel %vm171, %v7545, 0
      %v7688 = vsel %vm171, %v7548, 0
      %v7691 = vsel %vm171, %v7551, 0
      %v7694 = vsel %vm171, %v7554, 0
      %v7697 = vsel %vm171, %v7557, 0
      %v7700 = vsel %vm171, %v7560, 0
      %v7703 = vsel %vm171, %v7563, 0
      %7705 = vmatprep.subr.mxu0 0.0
      %7706 = vmatpush1.msra.mxu0 %v7565
      %7707 = vmatprep.subr.mxu0 0.0
      %7708 = vmatpush1.msra.mxu0 %v7566
      %7709 = vmatprep.subr.mxu0 0.0
      %7710 = vmatpush1.msra.mxu0 %v7567
      %7711 = vmatprep.subr.mxu0 0.0
      %7712 = vmatpush1.msra.mxu0 %v7568
      %7713 = vmatprep.subr.mxu0 0.0
      %7714 = vmatpush1.msra.mxu0 %v7569
      %7715 = vmatprep.subr.mxu0 0.0
      %7716 = vmatpush1.msra.mxu0 %v7570
      %7717 = vmatprep.subr.mxu0 0.0
      %7718 = vmatpush1.msra.mxu0 %v7571
      %7719 = vmatprep.subr.mxu0 0.0
      %7720 = vmatpush1.msra.mxu0 %v7572
      %7721 = vmatprep.subr.mxu0 0.0
      %7722 = vmatpush1.msra.mxu0 %v7573
      %7723 = vmatprep.subr.mxu0 0.0
      %7724 = vmatpush1.msra.mxu0 %v7574
      %7725 = vmatprep.subr.mxu0 0.0
      %7726 = vmatpush1.msra.mxu0 %v7575
      %7727 = vmatprep.subr.mxu0 0.0
      %7728 = vmatpush1.msra.mxu0 %v7576
      %7729 = vmatprep.subr.mxu0 0.0
      %7730 = vmatpush1.msra.mxu0 %v7577
      %7731 = vmatprep.subr.mxu0 0.0
      %7732 = vmatpush1.msra.mxu0 %v7578
      %7733 = vmatprep.subr.mxu0 0.0
      %7734 = vmatpush1.msra.mxu0 %v7579
      %7735 = vmatprep.subr.mxu0 0.0
      %7736 = vmatpush1.msra.mxu0 %v7580
      %7737 = vmatprep.subr.mxu0 0.0
      %7738 = vmatpush1.msra.mxu0 %v7581
      %7739 = vmatprep.subr.mxu0 0.0
      %7740 = vmatpush1.msra.mxu0 %v7582
      %7741 = vmatprep.subr.mxu0 0.0
      %7742 = vmatpush1.msra.mxu0 %v7583
      %7743 = vmatprep.subr.mxu0 0.0
      %7744 = vmatpush1.msra.mxu0 %v7584
      %7745 = vmatprep.subr.mxu0 0.0
      %7746 = vmatpush1.msra.mxu0 %v7585
      %7747 = vmatprep.subr.mxu0 0.0
      %7748 = vmatpush1.msra.mxu0 %v7586
      %7749 = vmatprep.subr.mxu0 0.0
      %7750 = vmatpush1.msra.mxu0 %v7587
      %7751 = vmatprep.subr.mxu0 0.0
      %7752 = vmatpush1.msra.mxu0 %v7588
      %7753 = vmatprep.subr.mxu0 0.0
      %7754 = vmatpush1.msra.mxu0 %v7589
      %7755 = vmatprep.subr.mxu0 0.0
      %7756 = vmatpush1.msra.mxu0 %v7590
      %7757 = vmatprep.subr.mxu0 0.0
      %7758 = vmatpush1.msra.mxu0 %v7591
      %7759 = vmatprep.subr.mxu0 0.0
      %7760 = vmatpush1.msra.mxu0 %v7592
      %7761 = vmatprep.subr.mxu0 0.0
      %7762 = vmatpush1.msra.mxu0 %v7593
      %7763 = vmatprep.subr.mxu0 0.0
      %7764 = vmatpush1.msra.mxu0 %v7594
      %7765 = vmatprep.subr.mxu0 0.0
      %7766 = vmatpush1.msra.mxu0 %v7595
      %7767 = vmatprep.subr.mxu0 0.0
      %7768 = vmatpush1.msra.mxu0 %v7596
      %7769 = vmatprep.mubr.f32.mxu0 %v7469
      %7770 = vmatmul.mubr.f32.gmra.mrb[0].mxu0 %v7468
      %v7771 = vpop.f32.mrb[0].mxu0
      %v7772 = vadd.f32 %v7607, %v7771
      %v7773 = vpop.f32.mrb[0].mxu0
      %7774 = vmatprep.mubr.f32.mxu0 %v7472
      %7775 = vmatmul.mubr.f32.gmra.mrb[0].mxu0 %v7471
      %v7776 = vpop.f32.mrb[0].mxu0
      %v7777 = vadd.f32 %v7607, %v7776
      %v7778 = vpop.f32.mrb[0].mxu0
      %7779 = vmatprep.mubr.f32.mxu0 %v7475
      %7780 = vmatmul.mubr.f32.gmra.mrb[0].mxu0 %v7474
      %v7781 = vpop.f32.mrb[0].mxu0
      %v7782 = vadd.f32 %v7607, %v7781
      %v7783 = vpop.f32.mrb[0].mxu0
      %7784 = vmatprep.mubr.f32.mxu0 %v7478
      %7785 = vmatmul.mubr.f32.gmra.mrb[0].mxu0 %v7477
      %v7786 = vpop.f32.mrb[0].mxu0
      %v7787 = vadd.f32 %v7607, %v7786
      %v7788 = vpop.f32.mrb[0].mxu0
      %7789 = vmatprep.mubr.f32.mxu0 %v7481
      %7790 = vmatmul.mubr.f32.gmra.mrb[0].mxu0 %v7480
      %v7791 = vpop.f32.mrb[0].mxu0
      %v7792 = vadd.f32 %v7607, %v7791
      %v7793 = vpop.f32.mrb[0].mxu0
      %7794 = vmatprep.mubr.f32.mxu0 %v7484
      %7795 = vmatmul.mubr.f32.gmra.mrb[0].mxu0 %v7483
      %v7796 = vpop.f32.mrb[0].mxu0
      %v7797 = vadd.f32 %v7607, %v7796
      %v7798 = vpop.f32.mrb[0].mxu0
      %7799 = vmatprep.mubr.f32.mxu0 %v7487
      %7800 = vmatmul.mubr.f32.gmra.mrb[0].mxu0 %v7486
      %v7801 = vpop.f32.mrb[0].mxu0
      %v7802 = vadd.f32 %v7607, %v7801
      %v7803 = vpop.f32.mrb[0].mxu0
      %7804 = vmatprep.mubr.f32.mxu0 %v7490
      %7805 = vmatmul.mubr.f32.gmra.mrb[0].mxu0 %v7489
      %v7806 = vpop.f32.mrb[0].mxu0
      %v7807 = vadd.f32 %v7607, %v7806
      %v7808 = vpop.f32.mrb[0].mxu0
      %7809 = vmatprep.mubr.f32.mxu0 %v7493
      %7810 = vmatmul.mubr.f32.gmra.mrb[0].mxu0 %v7492
      %v7811 = vpop.f32.mrb[0].mxu0
      %v7812 = vadd.f32 %v7607, %v7811
      %v7813 = vpop.f32.mrb[0].mxu0
      %7814 = vmatprep.mubr.f32.mxu0 %v7496
      %7815 = vmatmul.mubr.f32.gmra.mrb[0].mxu0 %v7495
      %v7816 = vpop.f32.mrb[0].mxu0
      %v7817 = vadd.f32 %v7607, %v7816
      %v7818 = vpop.f32.mrb[0].mxu0
      %7819 = vmatprep.mubr.f32.mxu0 %v7499
      %7820 = vmatmul.mubr.f32.gmra.mrb[0].mxu0 %v7498
      %v7821 = vpop.f32.mrb[0].mxu0
      %v7822 = vadd.f32 %v7607, %v7821
      %v7823 = vpop.f32.mrb[0].mxu0
      %7824 = vmatprep.mubr.f32.mxu0 %v7502
      %7825 = vmatmul.mubr.f32.gmra.mrb[0].mxu0 %v7501
      %v7826 = vpop.f32.mrb[0].mxu0
      %v7827 = vadd.f32 %v7607, %v7826
      %v7828 = vpop.f32.mrb[0].mxu0
      %7829 = vmatprep.mubr.f32.mxu0 %v7505
      %7830 = vmatmul.mubr.f32.gmra.mrb[0].mxu0 %v7504
      %v7831 = vpop.f32.mrb[0].mxu0
      %v7832 = vadd.f32 %v7607, %v7831
      %v7833 = vpop.f32.mrb[0].mxu0
      %7834 = vmatprep.mubr.f32.mxu0 %v7508
      %7835 = vmatmul.mubr.f32.gmra.mrb[0].mxu0 %v7507
      %v7836 = vpop.f32.mrb[0].mxu0
      %v7837 = vadd.f32 %v7607, %v7836
      %v7838 = vpop.f32.mrb[0].mxu0
      %7839 = vmatprep.mubr.f32.mxu0 %v7511
      %7840 = vmatmul.mubr.f32.gmra.mrb[0].mxu0 %v7510
      %v7841 = vpop.f32.mrb[0].mxu0
      %v7842 = vadd.f32 %v7607, %v7841
      %v7843 = vpop.f32.mrb[0].mxu0
      %7844 = vmatprep.mubr.f32.mxu0 %v7514
      %7845 = vmatmul.mubr.f32.gmra.mrb[0].mxu0 %v7513
      %v7846 = vpop.f32.mrb[0].mxu0
      %v7847 = vadd.f32 %v7607, %v7846
      %v7848 = vpop.f32.mrb[0].mxu0
      %7849 = vmatprep.mubr.f32.mxu0 %v7517
      %7850 = vmatmul.mubr.f32.gmra.mrb[0].mxu0 %v7516
      %v7851 = vpop.f32.mrb[0].mxu0
      %v7852 = vadd.f32 %v7607, %v7851
      %v7853 = vpop.f32.mrb[0].mxu0
      %7854 = vmatprep.mubr.f32.mxu0 %v7520
      %7855 = vmatmul.mubr.f32.gmra.mrb[0].mxu0 %v7519
      %v7856 = vpop.f32.mrb[0].mxu0
      %v7857 = vadd.f32 %v7607, %v7856
      %v7858 = vpop.f32.mrb[0].mxu0
      %7859 = vmatprep.mubr.f32.mxu0 %v7523
      %7860 = vmatmul.mubr.f32.gmra.mrb[0].mxu0 %v7522
      %v7861 = vpop.f32.mrb[0].mxu0
      %v7862 = vadd.f32 %v7607, %v7861
      %v7863 = vpop.f32.mrb[0].mxu0
      %7864 = vmatprep.mubr.f32.mxu0 %v7526
      %7865 = vmatmul.mubr.f32.gmra.mrb[0].mxu0 %v7525
      %v7866 = vpop.f32.mrb[0].mxu0
      %v7867 = vadd.f32 %v7607, %v7866
      %v7868 = vpop.f32.mrb[0].mxu0
      %7869 = vmatprep.mubr.f32.mxu0 %v7529
      %7870 = vmatmul.mubr.f32.gmra.mrb[0].mxu0 %v7528
      %v7871 = vpop.f32.mrb[0].mxu0
      %v7872 = vadd.f32 %v7607, %v7871
      %v7873 = vpop.f32.mrb[0].mxu0
      %7874 = vmatprep.mubr.f32.mxu0 %v7532
      %7875 = vmatmul.mubr.f32.gmra.mrb[0].mxu0 %v7531
      %v7876 = vpop.f32.mrb[0].mxu0
      %v7877 = vadd.f32 %v7607, %v7876
      %v7878 = vpop.f32.mrb[0].mxu0
      %7879 = vmatprep.mubr.f32.mxu0 %v7535
      %7880 = vmatmul.mubr.f32.gmra.mrb[0].mxu0 %v7534
      %v7881 = vpop.f32.mrb[0].mxu0
      %v7882 = vadd.f32 %v7607, %v7881
      %v7883 = vpop.f32.mrb[0].mxu0
      %7884 = vmatprep.mubr.f32.mxu0 %v7538
      %7885 = vmatmul.mubr.f32.gmra.mrb[0].mxu0 %v7537
      %v7886 = vpop.f32.mrb[0].mxu0
      %v7887 = vadd.f32 %v7607, %v7886
      %v7888 = vpop.f32.mrb[0].mxu0
      %7889 = vmatprep.mubr.f32.mxu0 %v7541
      %7890 = vmatmul.mubr.f32.gmra.mrb[0].mxu0 %v7540
      %v7891 = vpop.f32.mrb[0].mxu0
      %v7892 = vadd.f32 %v7607, %v7891
      %v7893 = vpop.f32.mrb[0].mxu0
      %7894 = vmatprep.mubr.f32.mxu0 %v7544
      %7895 = vmatmul.mubr.f32.gmra.mrb[0].mxu0 %v7543
      %v7896 = vpop.f32.mrb[0].mxu0
      %v7897 = vadd.f32 %v7607, %v7896
      %v7898 = vpop.f32.mrb[0].mxu0
      %7899 = vmatprep.mubr.f32.mxu0 %v7547
      %7900 = vmatmul.mubr.f32.gmra.mrb[0].mxu0 %v7546
      %v7901 = vpop.f32.mrb[0].mxu0
      %v7902 = vadd.f32 %v7607, %v7901
      %v7903 = vpop.f32.mrb[0].mxu0
      %7904 = vmatprep.mubr.f32.mxu0 %v7550
      %7905 = vmatmul.mubr.f32.gmra.mrb[0].mxu0 %v7549
      %v7906 = vpop.f32.mrb[0].mxu0
      %v7907 = vadd.f32 %v7607, %v7906
      %v7908 = vpop.f32.mrb[0].mxu0
      %7909 = vmatprep.mubr.f32.mxu0 %v7553
      %7910 = vmatmul.mubr.f32.gmra.mrb[0].mxu0 %v7552
      %v7911 = vpop.f32.mrb[0].mxu0
      %v7912 = vadd.f32 %v7607, %v7911
      %v7913 = vpop.f32.mrb[0].mxu0
      %7914 = vmatprep.mubr.f32.mxu0 %v7556
      %7915 = vmatmul.mubr.f32.gmra.mrb[0].mxu0 %v7555
      %v7916 = vpop.f32.mrb[0].mxu0
      %v7917 = vadd.f32 %v7607, %v7916
      %v7918 = vpop.f32.mrb[0].mxu0
      %7919 = vmatprep.mubr.f32.mxu0 %v7559
      %7920 = vmatmul.mubr.f32.gmra.mrb[0].mxu0 %v7558
      %v7921 = vpop.f32.mrb[0].mxu0
      %v7922 = vadd.f32 %v7607, %v7921
      %v7923 = vpop.f32.mrb[0].mxu0
      %7924 = vmatprep.mubr.f32.mxu0 %v7562
      %7925 = vmatmul.mubr.f32.gmra.mrb[0].mxu0 %v7561
      %v7926 = vpop.f32.mrb[0].mxu0
      %v7927 = vadd.f32 %v7607, %v7926
      %v7928 = vpop.f32.mrb[0].mxu0
      %7929 = vdwg.mxu0
      %7930 = vmatprep.subr.mxu0 0.0
      %7931 = vmatpush1.msra.mxu0 %v7597
      %7932 = vmatprep.subr.mxu0 0.0
      %7933 = vmatpush1.msra.mxu0 %v7598
      %7934 = vmatprep.subr.mxu0 0.0
      %7935 = vmatpush1.msra.mxu0 %v7599
      %7936 = vmatprep.subr.mxu0 0.0
      %7937 = vmatpush1.msra.mxu0 %v7600
      %7938 = vmatprep.subr.mxu0 0.0
      %7939 = vmatpush1.msra.mxu0 0.0
      %7940 = vmatprep.subr.mxu0 0.0
      %7941 = vmatpush1.msra.mxu0 0.0
      %7942 = vmatprep.subr.mxu0 0.0
      %7943 = vmatpush1.msra.mxu0 0.0
      %7944 = vmatprep.subr.mxu0 0.0
      %7945 = vmatpush1.msra.mxu0 0.0
      %7946 = vmatprep.subr.mxu0 0.0
      %7947 = vmatpush1.msra.mxu0 0.0
      %7948 = vmatprep.subr.mxu0 0.0
      %7949 = vmatpush1.msra.mxu0 0.0
      %7950 = vmatprep.subr.mxu0 0.0
      %7951 = vmatpush1.msra.mxu0 0.0
      %7952 = vmatprep.subr.mxu0 0.0
      %7953 = vmatpush1.msra.mxu0 0.0
      %7954 = vmatprep.subr.mxu0 0.0
      %7955 = vmatpush1.msra.mxu0 0.0
      %7956 = vmatprep.subr.mxu0 0.0
      %7957 = vmatpush1.msra.mxu0 0.0
      %7958 = vmatprep.subr.mxu0 0.0
      %7959 = vmatpush1.msra.mxu0 0.0
      %7960 = vmatprep.subr.mxu0 0.0
      %7961 = vmatpush1.msra.mxu0 0.0
      %7962 = vmatprep.subr.mxu0 0.0
      %7963 = vmatpush1.msra.mxu0 0.0
      %7964 = vmatprep.subr.mxu0 0.0
      %7965 = vmatpush1.msra.mxu0 0.0
      %7966 = vmatprep.subr.mxu0 0.0
      %7967 = vmatpush1.msra.mxu0 0.0
      %7968 = vmatprep.subr.mxu0 0.0
      %7969 = vmatpush1.msra.mxu0 0.0
      %7970 = vmatprep.subr.mxu0 0.0
      %7971 = vmatpush1.msra.mxu0 0.0
      %7972 = vmatprep.subr.mxu0 0.0
      %7973 = vmatpush1.msra.mxu0 0.0
      %7974 = vmatprep.subr.mxu0 0.0
      %7975 = vmatpush1.msra.mxu0 0.0
      %7976 = vmatprep.subr.mxu0 0.0
      %7977 = vmatpush1.msra.mxu0 0.0
      %7978 = vmatprep.subr.mxu0 0.0
      %7979 = vmatpush1.msra.mxu0 0.0
      %7980 = vmatprep.subr.mxu0 0.0
      %7981 = vmatpush1.msra.mxu0 0.0
      %7982 = vmatprep.subr.mxu0 0.0
      %7983 = vmatpush1.msra.mxu0 0.0
      %7984 = vmatprep.subr.mxu0 0.0
      %7985 = vmatpush1.msra.mxu0 0.0
      %7986 = vmatprep.subr.mxu0 0.0
      %7987 = vmatpush1.msra.mxu0 0.0
      %7988 = vmatprep.subr.mxu0 0.0
      %7989 = vmatpush1.msra.mxu0 0.0
      %7990 = vmatprep.subr.mxu0 0.0
      %7991 = vmatpush1.msra.mxu0 0.0
      %7992 = vmatprep.subr.mxu0 0.0
      %7993 = vmatpush1.msra.mxu0 0.0
      %7994 = vmatprep.mubr.f32.mxu0 0.0
      %7995 = vmatmul.mubr.f32.gmra.mrb[0].mxu0 %v7610
      %v7996 = vpop.f32.mrb[0].mxu0
      %v7997 = vadd.f32 %v7772, %v7996
      %v7998 = vpop.f32.mrb[0].mxu0
      %7999 = vmatprep.mubr.f32.mxu0 0.0
      %8000 = vmatmul.mubr.f32.gmra.mrb[0].mxu0 %v7613
      %v8001 = vpop.f32.mrb[0].mxu0
      %v8002 = vadd.f32 %v7777, %v8001
      %v8003 = vpop.f32.mrb[0].mxu0
      %8004 = vmatprep.mubr.f32.mxu0 0.0
      %8005 = vmatmul.mubr.f32.gmra.mrb[0].mxu0 %v7616
      %v8006 = vpop.f32.mrb[0].mxu0
      %v8007 = vadd.f32 %v7782, %v8006
      %v8008 = vpop.f32.mrb[0].mxu0
      %8009 = vmatprep.mubr.f32.mxu0 0.0
      %8010 = vmatmul.mubr.f32.gmra.mrb[0].mxu0 %v7619
      %v8011 = vpop.f32.mrb[0].mxu0
      %v8012 = vadd.f32 %v7787, %v8011
      %v8013 = vpop.f32.mrb[0].mxu0
      %8014 = vmatprep.mubr.f32.mxu0 0.0
      %8015 = vmatmul.mubr.f32.gmra.mrb[0].mxu0 %v7622
      %v8016 = vpop.f32.mrb[0].mxu0
      %v8017 = vadd.f32 %v7792, %v8016
      %v8018 = vpop.f32.mrb[0].mxu0
      %8019 = vmatprep.mubr.f32.mxu0 0.0
      %8020 = vmatmul.mubr.f32.gmra.mrb[0].mxu0 %v7625
      %v8021 = vpop.f32.mrb[0].mxu0
      %v8022 = vadd.f32 %v7797, %v8021
      %v8023 = vpop.f32.mrb[0].mxu0
      %8024 = vmatprep.mubr.f32.mxu0 0.0
      %8025 = vmatmul.mubr.f32.gmra.mrb[0].mxu0 %v7628
      %v8026 = vpop.f32.mrb[0].mxu0
      %v8027 = vadd.f32 %v7802, %v8026
      %v8028 = vpop.f32.mrb[0].mxu0
      %8029 = vmatprep.mubr.f32.mxu0 0.0
      %8030 = vmatmul.mubr.f32.gmra.mrb[0].mxu0 %v7631
      %v8031 = vpop.f32.mrb[0].mxu0
      %v8032 = vadd.f32 %v7807, %v8031
      %v8033 = vpop.f32.mrb[0].mxu0
      %8034 = vmatprep.mubr.f32.mxu0 0.0
      %8035 = vmatmul.mubr.f32.gmra.mrb[0].mxu0 %v7634
      %v8036 = vpop.f32.mrb[0].mxu0
      %v8037 = vadd.f32 %v7812, %v8036
      %v8038 = vpop.f32.mrb[0].mxu0
      %8039 = vmatprep.mubr.f32.mxu0 0.0
      %8040 = vmatmul.mubr.f32.gmra.mrb[0].mxu0 %v7637
      %v8041 = vpop.f32.mrb[0].mxu0
      %v8042 = vadd.f32 %v7817, %v8041
      %v8043 = vpop.f32.mrb[0].mxu0
      %8044 = vmatprep.mubr.f32.mxu0 0.0
      %8045 = vmatmul.mubr.f32.gmra.mrb[0].mxu0 %v7640
      %v8046 = vpop.f32.mrb[0].mxu0
      %v8047 = vadd.f32 %v7822, %v8046
      %v8048 = vpop.f32.mrb[0].mxu0
      %8049 = vmatprep.mubr.f32.mxu0 0.0
      %8050 = vmatmul.mubr.f32.gmra.mrb[0].mxu0 %v7643
      %v8051 = vpop.f32.mrb[0].mxu0
      %v8052 = vadd.f32 %v7827, %v8051
      %v8053 = vpop.f32.mrb[0].mxu0
      %8054 = vmatprep.mubr.f32.mxu0 0.0
      %8055 = vmatmul.mubr.f32.gmra.mrb[0].mxu0 %v7646
      %v8056 = vpop.f32.mrb[0].mxu0
      %v8057 = vadd.f32 %v7832, %v8056
      %v8058 = vpop.f32.mrb[0].mxu0
      %8059 = vmatprep.mubr.f32.mxu0 0.0
      %8060 = vmatmul.mubr.f32.gmra.mrb[0].mxu0 %v7649
      %v8061 = vpop.f32.mrb[0].mxu0
      %v8062 = vadd.f32 %v7837, %v8061
      %v8063 = vpop.f32.mrb[0].mxu0
      %8064 = vmatprep.mubr.f32.mxu0 0.0
      %8065 = vmatmul.mubr.f32.gmra.mrb[0].mxu0 %v7652
      %v8066 = vpop.f32.mrb[0].mxu0
      %v8067 = vadd.f32 %v7842, %v8066
      %v8068 = vpop.f32.mrb[0].mxu0
      %8069 = vmatprep.mubr.f32.mxu0 0.0
      %8070 = vmatmul.mubr.f32.gmra.mrb[0].mxu0 %v7655
      %v8071 = vpop.f32.mrb[0].mxu0
      %v8072 = vadd.f32 %v7847, %v8071
      %v8073 = vpop.f32.mrb[0].mxu0
      %8074 = vmatprep.mubr.f32.mxu0 0.0
      %8075 = vmatmul.mubr.f32.gmra.mrb[0].mxu0 %v7658
      %v8076 = vpop.f32.mrb[0].mxu0
      %v8077 = vadd.f32 %v7852, %v8076
      %v8078 = vpop.f32.mrb[0].mxu0
      %8079 = vmatprep.mubr.f32.mxu0 0.0
      %8080 = vmatmul.mubr.f32.gmra.mrb[0].mxu0 %v7661
      %v8081 = vpop.f32.mrb[0].mxu0
      %v8082 = vadd.f32 %v7857, %v8081
      %v8083 = vpop.f32.mrb[0].mxu0
      %8084 = vmatprep.mubr.f32.mxu0 0.0
      %8085 = vmatmul.mubr.f32.gmra.mrb[0].mxu0 %v7664
      %v8086 = vpop.f32.mrb[0].mxu0
      %v8087 = vadd.f32 %v7862, %v8086
      %v8088 = vpop.f32.mrb[0].mxu0
      %8089 = vmatprep.mubr.f32.mxu0 0.0
      %8090 = vmatmul.mubr.f32.gmra.mrb[0].mxu0 %v7667
      %v8091 = vpop.f32.mrb[0].mxu0
      %v8092 = vadd.f32 %v7867, %v8091
      %v8093 = vpop.f32.mrb[0].mxu0
      %8094 = vmatprep.mubr.f32.mxu0 0.0
      %8095 = vmatmul.mubr.f32.gmra.mrb[0].mxu0 %v7670
      %v8096 = vpop.f32.mrb[0].mxu0
      %v8097 = vadd.f32 %v7872, %v8096
      %v8098 = vpop.f32.mrb[0].mxu0
      %8099 = vmatprep.mubr.f32.mxu0 0.0
      %8100 = vmatmul.mubr.f32.gmra.mrb[0].mxu0 %v7673
      %v8101 = vpop.f32.mrb[0].mxu0
      %v8102 = vadd.f32 %v7877, %v8101
      %v8103 = vpop.f32.mrb[0].mxu0
      %8104 = vmatprep.mubr.f32.mxu0 0.0
      %8105 = vmatmul.mubr.f32.gmra.mrb[0].mxu0 %v7676
      %v8106 = vpop.f32.mrb[0].mxu0
      %v8107 = vadd.f32 %v7882, %v8106
      %v8108 = vpop.f32.mrb[0].mxu0
      %8109 = vmatprep.mubr.f32.mxu0 0.0
      %8110 = vmatmul.mubr.f32.gmra.mrb[0].mxu0 %v7679
      %v8111 = vpop.f32.mrb[0].mxu0
      %v8112 = vadd.f32 %v7887, %v8111
      %v8113 = vpop.f32.mrb[0].mxu0
      %8114 = vmatprep.mubr.f32.mxu0 0.0
      %8115 = vmatmul.mubr.f32.gmra.mrb[0].mxu0 %v7682
      %v8116 = vpop.f32.mrb[0].mxu0
      %v8117 = vadd.f32 %v7892, %v8116
      %v8118 = vpop.f32.mrb[0].mxu0
      %8119 = vmatprep.mubr.f32.mxu0 0.0
      %8120 = vmatmul.mubr.f32.gmra.mrb[0].mxu0 %v7685
      %v8121 = vpop.f32.mrb[0].mxu0
      %v8122 = vadd.f32 %v7897, %v8121
      %v8123 = vpop.f32.mrb[0].mxu0
      %8124 = vmatprep.mubr.f32.mxu0 0.0
      %8125 = vmatmul.mubr.f32.gmra.mrb[0].mxu0 %v7688
      %v8126 = vpop.f32.mrb[0].mxu0
      %v8127 = vadd.f32 %v7902, %v8126
      %v8128 = vpop.f32.mrb[0].mxu0
      %8129 = vmatprep.mubr.f32.mxu0 0.0
      %8130 = vmatmul.mubr.f32.gmra.mrb[0].mxu0 %v7691
      %v8131 = vpop.f32.mrb[0].mxu0
      %v8132 = vadd.f32 %v7907, %v8131
      %v8133 = vpop.f32.mrb[0].mxu0
      %8134 = vmatprep.mubr.f32.mxu0 0.0
      %8135 = vmatmul.mubr.f32.gmra.mrb[0].mxu0 %v7694
      %v8136 = vpop.f32.mrb[0].mxu0
      %v8137 = vadd.f32 %v7912, %v8136
      %v8138 = vpop.f32.mrb[0].mxu0
      %8139 = vmatprep.mubr.f32.mxu0 0.0
      %8140 = vmatmul.mubr.f32.gmra.mrb[0].mxu0 %v7697
      %v8141 = vpop.f32.mrb[0].mxu0
      %v8142 = vadd.f32 %v7917, %v8141
      %v8143 = vpop.f32.mrb[0].mxu0
      %8144 = vmatprep.mubr.f32.mxu0 0.0
      %8145 = vmatmul.mubr.f32.gmra.mrb[0].mxu0 %v7700
      %v8146 = vpop.f32.mrb[0].mxu0
      %v8147 = vadd.f32 %v7922, %v8146
      %v8148 = vpop.f32.mrb[0].mxu0
      %8149 = vmatprep.mubr.f32.mxu0 0.0
      %8150 = vmatmul.mubr.f32.gmra.mrb[0].mxu0 %v7703
      %v8151 = vpop.f32.mrb[0].mxu0
      %v8152 = vadd.f32 %v7927, %v8151
      %v8153 = vpop.f32.mrb[0].mxu0
      %8154 = vdwg.mxu0
      %v8155 = vmax.f32 %v7997, 0.0
      %v8156 = vmax.f32 %v8002, 0.0
      %v8157 = vmax.f32 %v8007, 0.0
      %v8158 = vmax.f32 %v8012, 0.0
      %v8159 = vmax.f32 %v8017, 0.0
      %v8160 = vmax.f32 %v8022, 0.0
      %v8161 = vmax.f32 %v8027, 0.0
      %v8162 = vmax.f32 %v8032, 0.0
      %v8163 = vmax.f32 %v8037, 0.0
      %v8164 = vmax.f32 %v8042, 0.0
      %v8165 = vmax.f32 %v8047, 0.0
      %v8166 = vmax.f32 %v8052, 0.0
      %v8167 = vmax.f32 %v8057, 0.0
      %v8168 = vmax.f32 %v8062, 0.0
      %v8169 = vmax.f32 %v8067, 0.0
      %v8170 = vmax.f32 %v8072, 0.0
      %v8171 = vmax.f32 %v8077, 0.0
      %v8172 = vmax.f32 %v8082, 0.0
      %v8173 = vmax.f32 %v8087, 0.0
      %v8174 = vmax.f32 %v8092, 0.0
      %v8175 = vmax.f32 %v8097, 0.0
      %v8176 = vmax.f32 %v8102, 0.0
      %v8177 = vmax.f32 %v8107, 0.0
      %v8178 = vmax.f32 %v8112, 0.0
      %v8179 = vmax.f32 %v8117, 0.0
      %v8180 = vmax.f32 %v8122, 0.0
      %v8181 = vmax.f32 %v8127, 0.0
      %v8182 = vmax.f32 %v8132, 0.0
      %v8183 = vmax.f32 %v8137, 0.0
      %v8184 = vmax.f32 %v8142, 0.0
      %v8185 = vmax.f32 %v8147, 0.0
      %v8186 = vmax.f32 %v8152, 0.0
      %8187 = vst.msk [vmem:[%s313 + $0x1] sm:$0xff] %vm171, %v8155
      %8188 = vst.msk [vmem:[%s313 + $0x9] sm:$0xff] %vm171, %v8156
      %8189 = vst.msk [vmem:[%s313 + $0x19] sm:$0xff] %vm171, %v8157
      %8190 = vst.msk [vmem:[%s313 + $0x21] sm:$0xff] %vm171, %v8158
      %8191 = vst.msk [vmem:[%s313 + $0x31] sm:$0xff] %vm171, %v8159
      %8192 = vst.msk [vmem:[%s313 + $0x39] sm:$0xff] %vm171, %v8160
      %8193 = vst.msk [vmem:[%s313 + $0x49] sm:$0xff] %vm171, %v8161
      %8194 = vst.msk [vmem:[%s313 + $0x51] sm:$0xff] %vm171, %v8162
      %8195 = vst.msk [vmem:[%s313 + $0x61] sm:$0xff] %vm171, %v8163
      %8196 = vst.msk [vmem:[%s313 + $0x69] sm:$0xff] %vm171, %v8164
      %8197 = vst.msk [vmem:[%s313 + $0x79] sm:$0xff] %vm171, %v8165
      %8198 = vst.msk [vmem:[%s313 + $0x81] sm:$0xff] %vm171, %v8166
      %8199 = vst.msk [vmem:[%s313 + $0x91] sm:$0xff] %vm171, %v8167
      %8200 = vst.msk [vmem:[%s313 + $0x99] sm:$0xff] %vm171, %v8168
      %8201 = vst.msk [vmem:[%s313 + $0xa9] sm:$0xff] %vm171, %v8169
      %8202 = vst.msk [vmem:[%s313 + $0xb1] sm:$0xff] %vm171, %v8170
      %8203 = vst.msk [vmem:[%s313 + $0xc1] sm:$0xff] %vm171, %v8171
      %8204 = vst.msk [vmem:[%s313 + $0xc9] sm:$0xff] %vm171, %v8172
      %8205 = vst.msk [vmem:[%s313 + $0xd9] sm:$0xff] %vm171, %v8173
      %8206 = vst.msk [vmem:[%s313 + $0xe1] sm:$0xff] %vm171, %v8174
      %8207 = vst.msk [vmem:[%s313 + $0xf1] sm:$0xff] %vm171, %v8175
      %8208 = vst.msk [vmem:[%s313 + $0xf9] sm:$0xff] %vm171, %v8176
      %8209 = vst.msk [vmem:[%s313 + $0x109] sm:$0xff] %vm171, %v8177
      %8210 = vst.msk [vmem:[%s313 + $0x111] sm:$0xff] %vm171, %v8178
      %8211 = vst.msk [vmem:[%s313 + $0x121] sm:$0xff] %vm171, %v8179
      %8212 = vst.msk [vmem:[%s313 + $0x129] sm:$0xff] %vm171, %v8180
      %8213 = vst.msk [vmem:[%s313 + $0x139] sm:$0xff] %vm171, %v8181
      %8214 = vst.msk [vmem:[%s313 + $0x141] sm:$0xff] %vm171, %v8182
      %8215 = vst.msk [vmem:[%s313 + $0x151] sm:$0xff] %vm171, %v8183
      %8216 = vst.msk [vmem:[%s313 + $0x159] sm:$0xff] %vm171, %v8184
      %8217 = vst.msk [vmem:[%s313 + $0x169] sm:$0xff] %vm171, %v8185
      %8218 = vst.msk [vmem:[%s313 + $0x171] sm:$0xff] %vm171, %v8186
      %v8219 = vld [vmem:[#allocation2] sm:$0xff]
      %v8220 = vld [vmem:[#allocation2 + $0x8] sm:$0xff]
      %v8221 = vld [vmem:[#allocation2 + $0x10] sm:$0x3]
      %v8222 = vld [vmem:[#allocation2 + $0x18] sm:$0xff]
      %v8223 = vld [vmem:[#allocation2 + $0x20] sm:$0xff]
      %v8224 = vld [vmem:[#allocation2 + $0x28] sm:$0x3]
      %v8225 = vld [vmem:[#allocation2 + $0x30] sm:$0xff]
      %v8226 = vld [vmem:[#allocation2 + $0x38] sm:$0xff]
      %v8227 = vld [vmem:[#allocation2 + $0x40] sm:$0x3]
      %v8228 = vld [vmem:[#allocation2 + $0x48] sm:$0xff]
      %v8229 = vld [vmem:[#allocation2 + $0x50] sm:$0xff]
      %v8230 = vld [vmem:[#allocation2 + $0x58] sm:$0x3]
      %v8231 = vld [vmem:[#allocation2 + $0x60] sm:$0xff]
      %v8232 = vld [vmem:[#allocation2 + $0x68] sm:$0xff]
      %v8233 = vld [vmem:[#allocation2 + $0x70] sm:$0x3]
      %v8234 = vld [vmem:[#allocation2 + $0x78] sm:$0xff]
      %v8235 = vld [vmem:[#allocation2 + $0x80] sm:$0xff]
      %v8236 = vld [vmem:[#allocation2 + $0x88] sm:$0x3]
      %v8237 = vld [vmem:[#allocation2 + $0x90] sm:$0xff]
      %v8238 = vld [vmem:[#allocation2 + $0x98] sm:$0xff]
      %v8239 = vld [vmem:[#allocation2 + $0xa0] sm:$0x3]
      %v8240 = vld [vmem:[#allocation2 + $0xa8] sm:$0xff]
      %v8241 = vld [vmem:[#allocation2 + $0xb0] sm:$0xff]
      %v8242 = vld [vmem:[#allocation2 + $0xb8] sm:$0x3]
      %v8243 = vld [vmem:[#allocation2 + $0xc0] sm:$0xff]
      %v8244 = vld [vmem:[#allocation2 + $0xc8] sm:$0xff]
      %v8245 = vld [vmem:[#allocation2 + $0xd0] sm:$0x3]
      %v8246 = vld [vmem:[#allocation2 + $0xd8] sm:$0xff]
      %v8247 = vld [vmem:[#allocation2 + $0xe0] sm:$0xff]
      %v8248 = vld [vmem:[#allocation2 + $0xe8] sm:$0x3]
      %v8249 = vld [vmem:[#allocation2 + $0xf0] sm:$0xff]
      %v8250 = vld [vmem:[#allocation2 + $0xf8] sm:$0xff]
      %v8251 = vld [vmem:[#allocation2 + $0x100] sm:$0x3]
      %v8252 = vld [vmem:[#allocation2 + $0x108] sm:$0xff]
      %v8253 = vld [vmem:[#allocation2 + $0x110] sm:$0xff]
      %v8254 = vld [vmem:[#allocation2 + $0x118] sm:$0x3]
      %v8255 = vld [vmem:[#allocation2 + $0x120] sm:$0xff]
      %v8256 = vld [vmem:[#allocation2 + $0x128] sm:$0xff]
      %v8257 = vld [vmem:[#allocation2 + $0x130] sm:$0x3]
      %v8258 = vld [vmem:[#allocation2 + $0x138] sm:$0xff]
      %v8259 = vld [vmem:[#allocation2 + $0x140] sm:$0xff]
      %v8260 = vld [vmem:[#allocation2 + $0x148] sm:$0x3]
      %v8261 = vld [vmem:[#allocation2 + $0x150] sm:$0xff]
      %v8262 = vld [vmem:[#allocation2 + $0x158] sm:$0xff]
      %v8263 = vld [vmem:[#allocation2 + $0x160] sm:$0x3]
      %v8264 = vld [vmem:[#allocation2 + $0x168] sm:$0xff]
      %v8265 = vld [vmem:[#allocation2 + $0x170] sm:$0xff]
      %v8266 = vld [vmem:[#allocation2 + $0x178] sm:$0x3]
      %v8267 = vld [vmem:[#allocation2 + $0x180] sm:$0xff]
      %v8268 = vld [vmem:[#allocation2 + $0x188] sm:$0xff]
      %v8269 = vld [vmem:[#allocation2 + $0x190] sm:$0x3]
      %v8270 = vld [vmem:[#allocation2 + $0x198] sm:$0xff]
      %v8271 = vld [vmem:[#allocation2 + $0x1a0] sm:$0xff]
      %v8272 = vld [vmem:[#allocation2 + $0x1a8] sm:$0x3]
      %8273 = vst.msk [vmem:[#allocation4] sm:$0xff] %vm171, %v8219
      %8274 = vst.msk [vmem:[#allocation4 + $0x18] sm:$0xff] %vm171, %v8220
      %8275 = vst.msk [vmem:[#allocation4 + $0x30] sm:$0xff] %vm171, %v8222
      %8276 = vst.msk [vmem:[#allocation4 + $0x48] sm:$0xff] %vm171, %v8223
      %8277 = vst.msk [vmem:[#allocation4 + $0x60] sm:$0xff] %vm171, %v8225
      %8278 = vst.msk [vmem:[#allocation4 + $0x78] sm:$0xff] %vm171, %v8226
      %8279 = vst.msk [vmem:[#allocation4 + $0x90] sm:$0xff] %vm171, %v8228
      %8280 = vst.msk [vmem:[#allocation4 + $0xa8] sm:$0xff] %vm171, %v8229
      %8281 = vst.msk [vmem:[#allocation4 + $0xc0] sm:$0xff] %vm171, %v8231
      %8282 = vst.msk [vmem:[#allocation4 + $0xd8] sm:$0xff] %vm171, %v8232
      %8283 = vst.msk [vmem:[#allocation4 + $0xf0] sm:$0xff] %vm171, %v8234
      %8284 = vst.msk [vmem:[#allocation4 + $0x108] sm:$0xff] %vm171, %v8235
      %8285 = vst.msk [vmem:[#allocation4 + $0x120] sm:$0xff] %vm171, %v8237
      %8286 = vst.msk [vmem:[#allocation4 + $0x138] sm:$0xff] %vm171, %v8238
      %8287 = vst.msk [vmem:[#allocation4 + $0x150] sm:$0xff] %vm171, %v8240
      %8288 = vst.msk [vmem:[#allocation4 + $0x168] sm:$0xff] %vm171, %v8241
      %8289 = vst.msk [vmem:[#allocation4 + $0x180] sm:$0xff] %vm171, %v8243
      %8290 = vst.msk [vmem:[#allocation4 + $0x198] sm:$0xff] %vm171, %v8244
      %8291 = vst.msk [vmem:[#allocation4 + $0x1b0] sm:$0xff] %vm171, %v8246
      %8292 = vst.msk [vmem:[#allocation4 + $0x1c8] sm:$0xff] %vm171, %v8247
      %8293 = vst.msk [vmem:[#allocation4 + $0x1e0] sm:$0xff] %vm171, %v8249
      %8294 = vst.msk [vmem:[#allocation4 + $0x1f8] sm:$0xff] %vm171, %v8250
      %8295 = vst.msk [vmem:[#allocation4 + $0x210] sm:$0xff] %vm171, %v8252
      %8296 = vst.msk [vmem:[#allocation4 + $0x228] sm:$0xff] %vm171, %v8253
      %8297 = vst.msk [vmem:[#allocation4 + $0x240] sm:$0xff] %vm171, %v8255
      %8298 = vst.msk [vmem:[#allocation4 + $0x258] sm:$0xff] %vm171, %v8256
      %8299 = vst.msk [vmem:[#allocation4 + $0x270] sm:$0xff] %vm171, %v8258
      %8300 = vst.msk [vmem:[#allocation4 + $0x288] sm:$0xff] %vm171, %v8259
      %8301 = vst.msk [vmem:[#allocation4 + $0x2a0] sm:$0xff] %vm171, %v8261
      %8302 = vst.msk [vmem:[#allocation4 + $0x2b8] sm:$0xff] %vm171, %v8262
      %8303 = vst.msk [vmem:[#allocation4 + $0x2d0] sm:$0xff] %vm171, %v8264
      %8304 = vst.msk [vmem:[#allocation4 + $0x2e8] sm:$0xff] %vm171, %v8265
      %8337 = vrot.lane.b32.xlu0 %v8222, 96
      %v8338 = vpop.permute.xlu0 %8337
      %8339 = vrot.lane.b32.xlu0 %v8223, 96
      %v8340 = vpop.permute.xlu0 %8339
      %8341 = vrot.lane.b32.xlu0 %v8225, 96
      %v8342 = vpop.permute.xlu0 %8341
      %8343 = vrot.lane.b32.xlu0 %v8226, 96
      %v8344 = vpop.permute.xlu0 %8343
      %8345 = vrot.lane.b32.xlu0 %v8228, 96
      %v8346 = vpop.permute.xlu0 %8345
      %8347 = vrot.lane.b32.xlu0 %v8229, 96
      %v8348 = vpop.permute.xlu0 %8347
      %8349 = vrot.lane.b32.xlu0 %v8231, 96
      %v8350 = vpop.permute.xlu0 %8349
      %8351 = vrot.lane.b32.xlu0 %v8232, 96
      %v8352 = vpop.permute.xlu0 %8351
      %8353 = vrot.lane.b32.xlu0 %v8234, 96
      %v8354 = vpop.permute.xlu0 %8353
      %8355 = vrot.lane.b32.xlu0 %v8235, 96
      %v8356 = vpop.permute.xlu0 %8355
      %8357 = vrot.lane.b32.xlu0 %v8237, 96
      %v8358 = vpop.permute.xlu0 %8357
      %8359 = vrot.lane.b32.xlu0 %v8238, 96
      %v8360 = vpop.permute.xlu0 %8359
      %8361 = vrot.lane.b32.xlu0 %v8240, 96
      %v8362 = vpop.permute.xlu0 %8361
      %8363 = vrot.lane.b32.xlu0 %v8241, 96
      %v8364 = vpop.permute.xlu0 %8363
      %8365 = vrot.lane.b32.xlu0 %v8243, 96
      %v8366 = vpop.permute.xlu0 %8365
      %8367 = vrot.lane.b32.xlu0 %v8244, 96
      %v8368 = vpop.permute.xlu0 %8367
      %8369 = vrot.lane.b32.xlu0 %v8246, 96
      %v8370 = vpop.permute.xlu0 %8369
      %8371 = vrot.lane.b32.xlu0 %v8247, 96
      %v8372 = vpop.permute.xlu0 %8371
      %8373 = vrot.lane.b32.xlu0 %v8249, 96
      %v8374 = vpop.permute.xlu0 %8373
      %8375 = vrot.lane.b32.xlu0 %v8250, 96
      %v8376 = vpop.permute.xlu0 %8375
      %8377 = vrot.lane.b32.xlu0 %v8252, 96
      %v8378 = vpop.permute.xlu0 %8377
      %8379 = vrot.lane.b32.xlu0 %v8253, 96
      %v8380 = vpop.permute.xlu0 %8379
      %8381 = vrot.lane.b32.xlu0 %v8255, 96
      %v8382 = vpop.permute.xlu0 %8381
      %8383 = vrot.lane.b32.xlu0 %v8256, 96
      %v8384 = vpop.permute.xlu0 %8383
      %8385 = vrot.lane.b32.xlu0 %v8258, 96
      %v8386 = vpop.permute.xlu0 %8385
      %8387 = vrot.lane.b32.xlu0 %v8259, 96
      %v8388 = vpop.permute.xlu0 %8387
      %8389 = vrot.lane.b32.xlu0 %v8261, 96
      %v8390 = vpop.permute.xlu0 %8389
      %8391 = vrot.lane.b32.xlu0 %v8262, 96
      %v8392 = vpop.permute.xlu0 %8391
      %8393 = vrot.lane.b32.xlu0 %v8264, 96
      %v8394 = vpop.permute.xlu0 %8393
      %8395 = vrot.lane.b32.xlu0 %v8265, 96
      %v8396 = vpop.permute.xlu0 %8395
      %8397 = vrot.lane.b32.xlu0 %v8267, 96
      %v8398 = vpop.permute.xlu0 %8397
      %8399 = vrot.lane.b32.xlu0 %v8268, 96
      %v8400 = vpop.permute.xlu0 %8399
      %8433 = vst.msk [vmem:[#allocation4] sm:$0xff] %vm561, %v8338
      %8434 = vst.msk [vmem:[#allocation4 + $0x18] sm:$0xff] %vm561, %v8340
      %8435 = vst.msk [vmem:[#allocation4 + $0x30] sm:$0xff] %vm561, %v8342
      %8436 = vst.msk [vmem:[#allocation4 + $0x48] sm:$0xff] %vm561, %v8344
      %8437 = vst.msk [vmem:[#allocation4 + $0x60] sm:$0xff] %vm561, %v8346
      %8438 = vst.msk [vmem:[#allocation4 + $0x78] sm:$0xff] %vm561, %v8348
      %8439 = vst.msk [vmem:[#allocation4 + $0x90] sm:$0xff] %vm561, %v8350
      %8440 = vst.msk [vmem:[#allocation4 + $0xa8] sm:$0xff] %vm561, %v8352
      %8441 = vst.msk [vmem:[#allocation4 + $0xc0] sm:$0xff] %vm561, %v8354
      %8442 = vst.msk [vmem:[#allocation4 + $0xd8] sm:$0xff] %vm561, %v8356
      %8443 = vst.msk [vmem:[#allocation4 + $0xf0] sm:$0xff] %vm561, %v8358
      %8444 = vst.msk [vmem:[#allocation4 + $0x108] sm:$0xff] %vm561, %v8360
      %8445 = vst.msk [vmem:[#allocation4 + $0x120] sm:$0xff] %vm561, %v8362
      %8446 = vst.msk [vmem:[#allocation4 + $0x138] sm:$0xff] %vm561, %v8364
      %8447 = vst.msk [vmem:[#allocation4 + $0x150] sm:$0xff] %vm561, %v8366
      %8448 = vst.msk [vmem:[#allocation4 + $0x168] sm:$0xff] %vm561, %v8368
      %8449 = vst.msk [vmem:[#allocation4 + $0x180] sm:$0xff] %vm561, %v8370
      %8450 = vst.msk [vmem:[#allocation4 + $0x198] sm:$0xff] %vm561, %v8372
      %8451 = vst.msk [vmem:[#allocation4 + $0x1b0] sm:$0xff] %vm561, %v8374
      %8452 = vst.msk [vmem:[#allocation4 + $0x1c8] sm:$0xff] %vm561, %v8376
      %8453 = vst.msk [vmem:[#allocation4 + $0x1e0] sm:$0xff] %vm561, %v8378
      %8454 = vst.msk [vmem:[#allocation4 + $0x1f8] sm:$0xff] %vm561, %v8380
      %8455 = vst.msk [vmem:[#allocation4 + $0x210] sm:$0xff] %vm561, %v8382
      %8456 = vst.msk [vmem:[#allocation4 + $0x228] sm:$0xff] %vm561, %v8384
      %8457 = vst.msk [vmem:[#allocation4 + $0x240] sm:$0xff] %vm561, %v8386
      %8458 = vst.msk [vmem:[#allocation4 + $0x258] sm:$0xff] %vm561, %v8388
      %8459 = vst.msk [vmem:[#allocation4 + $0x270] sm:$0xff] %vm561, %v8390
      %8460 = vst.msk [vmem:[#allocation4 + $0x288] sm:$0xff] %vm561, %v8392
      %8461 = vst.msk [vmem:[#allocation4 + $0x2a0] sm:$0xff] %vm561, %v8394
      %8462 = vst.msk [vmem:[#allocation4 + $0x2b8] sm:$0xff] %vm561, %v8396
      %8463 = vst.msk [vmem:[#allocation4 + $0x2d0] sm:$0xff] %vm561, %v8398
      %8464 = vst.msk [vmem:[#allocation4 + $0x2e8] sm:$0xff] %vm561, %v8400
      %8467 = vrot.lane.b32.xlu0 %v8225, 64
      %v8468 = vpop.permute.xlu0 %8467
      %8469 = vrot.lane.b32.xlu0 %v8226, 64
      %v8470 = vpop.permute.xlu0 %8469
      %8471 = vrot.lane.b32.xlu0 %v8228, 64
      %v8472 = vpop.permute.xlu0 %8471
      %8473 = vrot.lane.b32.xlu0 %v8229, 64
      %v8474 = vpop.permute.xlu0 %8473
      %8475 = vrot.lane.b32.xlu0 %v8231, 64
      %v8476 = vpop.permute.xlu0 %8475
      %8477 = vrot.lane.b32.xlu0 %v8232, 64
      %v8478 = vpop.permute.xlu0 %8477
      %8479 = vrot.lane.b32.xlu0 %v8234, 64
      %v8480 = vpop.permute.xlu0 %8479
      %8481 = vrot.lane.b32.xlu0 %v8235, 64
      %v8482 = vpop.permute.xlu0 %8481
      %8483 = vrot.lane.b32.xlu0 %v8237, 64
      %v8484 = vpop.permute.xlu0 %8483
      %8485 = vrot.lane.b32.xlu0 %v8238, 64
      %v8486 = vpop.permute.xlu0 %8485
      %8487 = vrot.lane.b32.xlu0 %v8240, 64
      %v8488 = vpop.permute.xlu0 %8487
      %8489 = vrot.lane.b32.xlu0 %v8241, 64
      %v8490 = vpop.permute.xlu0 %8489
      %8491 = vrot.lane.b32.xlu0 %v8243, 64
      %v8492 = vpop.permute.xlu0 %8491
      %8493 = vrot.lane.b32.xlu0 %v8244, 64
      %v8494 = vpop.permute.xlu0 %8493
      %8495 = vrot.lane.b32.xlu0 %v8246, 64
      %v8496 = vpop.permute.xlu0 %8495
      %8497 = vrot.lane.b32.xlu0 %v8247, 64
      %v8498 = vpop.permute.xlu0 %8497
      %8499 = vrot.lane.b32.xlu0 %v8249, 64
      %v8500 = vpop.permute.xlu0 %8499
      %8501 = vrot.lane.b32.xlu0 %v8250, 64
      %v8502 = vpop.permute.xlu0 %8501
      %8503 = vrot.lane.b32.xlu0 %v8252, 64
      %v8504 = vpop.permute.xlu0 %8503
      %8505 = vrot.lane.b32.xlu0 %v8253, 64
      %v8506 = vpop.permute.xlu0 %8505
      %8507 = vrot.lane.b32.xlu0 %v8255, 64
      %v8508 = vpop.permute.xlu0 %8507
      %8509 = vrot.lane.b32.xlu0 %v8256, 64
      %v8510 = vpop.permute.xlu0 %8509
      %8511 = vrot.lane.b32.xlu0 %v8258, 64
      %v8512 = vpop.permute.xlu0 %8511
      %8513 = vrot.lane.b32.xlu0 %v8259, 64
      %v8514 = vpop.permute.xlu0 %8513
      %8515 = vrot.lane.b32.xlu0 %v8261, 64
      %v8516 = vpop.permute.xlu0 %8515
      %8517 = vrot.lane.b32.xlu0 %v8262, 64
      %v8518 = vpop.permute.xlu0 %8517
      %8519 = vrot.lane.b32.xlu0 %v8264, 64
      %v8520 = vpop.permute.xlu0 %8519
      %8521 = vrot.lane.b32.xlu0 %v8265, 64
      %v8522 = vpop.permute.xlu0 %8521
      %8523 = vrot.lane.b32.xlu0 %v8267, 64
      %v8524 = vpop.permute.xlu0 %8523
      %8525 = vrot.lane.b32.xlu0 %v8268, 64
      %v8526 = vpop.permute.xlu0 %8525
      %8527 = vrot.lane.b32.xlu0 %v8270, 64
      %v8528 = vpop.permute.xlu0 %8527
      %8529 = vrot.lane.b32.xlu0 %v8271, 64
      %v8530 = vpop.permute.xlu0 %8529
      %8563 = vst.msk [vmem:[#allocation4 + $0x8] sm:$0xff] %vm692, %v8468
      %8564 = vst.msk [vmem:[#allocation4 + $0x20] sm:$0xff] %vm692, %v8470
      %8565 = vst.msk [vmem:[#allocation4 + $0x38] sm:$0xff] %vm692, %v8472
      %8566 = vst.msk [vmem:[#allocation4 + $0x50] sm:$0xff] %vm692, %v8474
      %8567 = vst.msk [vmem:[#allocation4 + $0x68] sm:$0xff] %vm692, %v8476
      %8568 = vst.msk [vmem:[#allocation4 + $0x80] sm:$0xff] %vm692, %v8478
      %8569 = vst.msk [vmem:[#allocation4 + $0x98] sm:$0xff] %vm692, %v8480
      %8570 = vst.msk [vmem:[#allocation4 + $0xb0] sm:$0xff] %vm692, %v8482
      %8571 = vst.msk [vmem:[#allocation4 + $0xc8] sm:$0xff] %vm692, %v8484
      %8572 = vst.msk [vmem:[#allocation4 + $0xe0] sm:$0xff] %vm692, %v8486
      %8573 = vst.msk [vmem:[#allocation4 + $0xf8] sm:$0xff] %vm692, %v8488
      %8574 = vst.msk [vmem:[#allocation4 + $0x110] sm:$0xff] %vm692, %v8490
      %8575 = vst.msk [vmem:[#allocation4 + $0x128] sm:$0xff] %vm692, %v8492
      %8576 = vst.msk [vmem:[#allocation4 + $0x140] sm:$0xff] %vm692, %v8494
      %8577 = vst.msk [vmem:[#allocation4 + $0x158] sm:$0xff] %vm692, %v8496
      %8578 = vst.msk [vmem:[#allocation4 + $0x170] sm:$0xff] %vm692, %v8498
      %8579 = vst.msk [vmem:[#allocation4 + $0x188] sm:$0xff] %vm692, %v8500
      %8580 = vst.msk [vmem:[#allocation4 + $0x1a0] sm:$0xff] %vm692, %v8502
      %8581 = vst.msk [vmem:[#allocation4 + $0x1b8] sm:$0xff] %vm692, %v8504
      %8582 = vst.msk [vmem:[#allocation4 + $0x1d0] sm:$0xff] %vm692, %v8506
      %8583 = vst.msk [vmem:[#allocation4 + $0x1e8] sm:$0xff] %vm692, %v8508
      %8584 = vst.msk [vmem:[#allocation4 + $0x200] sm:$0xff] %vm692, %v8510
      %8585 = vst.msk [vmem:[#allocation4 + $0x218] sm:$0xff] %vm692, %v8512
      %8586 = vst.msk [vmem:[#allocation4 + $0x230] sm:$0xff] %vm692, %v8514
      %8587 = vst.msk [vmem:[#allocation4 + $0x248] sm:$0xff] %vm692, %v8516
      %8588 = vst.msk [vmem:[#allocation4 + $0x260] sm:$0xff] %vm692, %v8518
      %8589 = vst.msk [vmem:[#allocation4 + $0x278] sm:$0xff] %vm692, %v8520
      %8590 = vst.msk [vmem:[#allocation4 + $0x290] sm:$0xff] %vm692, %v8522
      %8591 = vst.msk [vmem:[#allocation4 + $0x2a8] sm:$0xff] %vm692, %v8524
      %8592 = vst.msk [vmem:[#allocation4 + $0x2c0] sm:$0xff] %vm692, %v8526
      %8593 = vst.msk [vmem:[#allocation4 + $0x2d8] sm:$0xff] %vm692, %v8528
      %8594 = vst.msk [vmem:[#allocation4 + $0x2f0] sm:$0xff] %vm692, %v8530
      %v8613 = vrot.slane %v8219, 1
      %v8614 = vrot.slane %v8220, 1
      %v8615 = vsel %vm743, %v8613, %v8614
      %v8616 = vrot.slane %v8221, 1
      %v8617 = vsel %vm743, %v8614, %v8616
      %v8618 = vrot.slane %v8222, 1
      %v8619 = vrot.slane %v8223, 1
      %v8620 = vsel %vm743, %v8618, %v8619
      %v8621 = vrot.slane %v8224, 1
      %v8622 = vsel %vm743, %v8619, %v8621
      %v8623 = vrot.slane %v8225, 1
      %v8624 = vrot.slane %v8226, 1
      %v8625 = vsel %vm743, %v8623, %v8624
      %v8626 = vrot.slane %v8227, 1
      %v8627 = vsel %vm743, %v8624, %v8626
      %v8628 = vrot.slane %v8228, 1
      %v8629 = vrot.slane %v8229, 1
      %v8630 = vsel %vm743, %v8628, %v8629
      %v8631 = vrot.slane %v8230, 1
      %v8632 = vsel %vm743, %v8629, %v8631
      %v8633 = vrot.slane %v8231, 1
      %v8634 = vrot.slane %v8232, 1
      %v8635 = vsel %vm743, %v8633, %v8634
      %v8636 = vrot.slane %v8233, 1
      %v8637 = vsel %vm743, %v8634, %v8636
      %v8638 = vrot.slane %v8234, 1
      %v8639 = vrot.slane %v8235, 1
      %v8640 = vsel %vm743, %v8638, %v8639
      %v8641 = vrot.slane %v8236, 1
      %v8642 = vsel %vm743, %v8639, %v8641
      %v8643 = vrot.slane %v8237, 1
      %v8644 = vrot.slane %v8238, 1
      %v8645 = vsel %vm743, %v8643, %v8644
      %v8646 = vrot.slane %v8239, 1
      %v8647 = vsel %vm743, %v8644, %v8646
      %v8648 = vrot.slane %v8240, 1
      %v8649 = vrot.slane %v8241, 1
      %v8650 = vsel %vm743, %v8648, %v8649
      %v8651 = vrot.slane %v8242, 1
      %v8652 = vsel %vm743, %v8649, %v8651
      %v8653 = vrot.slane %v8243, 1
      %v8654 = vrot.slane %v8244, 1
      %v8655 = vsel %vm743, %v8653, %v8654
      %v8656 = vrot.slane %v8245, 1
      %v8657 = vsel %vm743, %v8654, %v8656
      %v8658 = vrot.slane %v8246, 1
      %v8659 = vrot.slane %v8247, 1
      %v8660 = vsel %vm743, %v8658, %v8659
      %v8661 = vrot.slane %v8248, 1
      %v8662 = vsel %vm743, %v8659, %v8661
      %v8663 = vrot.slane %v8249, 1
      %v8664 = vrot.slane %v8250, 1
      %v8665 = vsel %vm743, %v8663, %v8664
      %v8666 = vrot.slane %v8251, 1
      %v8667 = vsel %vm743, %v8664, %v8666
      %v8668 = vrot.slane %v8252, 1
      %v8669 = vrot.slane %v8253, 1
      %v8670 = vsel %vm743, %v8668, %v8669
      %v8671 = vrot.slane %v8254, 1
      %v8672 = vsel %vm743, %v8669, %v8671
      %v8673 = vrot.slane %v8255, 1
      %v8674 = vrot.slane %v8256, 1
      %v8675 = vsel %vm743, %v8673, %v8674
      %v8676 = vrot.slane %v8257, 1
      %v8677 = vsel %vm743, %v8674, %v8676
      %v8678 = vrot.slane %v8258, 1
      %v8679 = vrot.slane %v8259, 1
      %v8680 = vsel %vm743, %v8678, %v8679
      %v8681 = vrot.slane %v8260, 1
      %v8682 = vsel %vm743, %v8679, %v8681
      %v8683 = vrot.slane %v8261, 1
      %v8684 = vrot.slane %v8262, 1
      %v8685 = vsel %vm743, %v8683, %v8684
      %v8686 = vrot.slane %v8263, 1
      %v8687 = vsel %vm743, %v8684, %v8686
      %v8688 = vrot.slane %v8264, 1
      %v8689 = vrot.slane %v8265, 1
      %v8690 = vsel %vm743, %v8688, %v8689
      %v8691 = vrot.slane %v8266, 1
      %v8692 = vsel %vm743, %v8689, %v8691
      %8693 = vrot.lane.b32.xlu0 %v8615, 32
      %v8694 = vpop.permute.xlu0 %8693
      %8695 = vrot.lane.b32.xlu0 %v8617, 32
      %v8696 = vpop.permute.xlu0 %8695
      %8697 = vrot.lane.b32.xlu0 %v8620, 32
      %v8698 = vpop.permute.xlu0 %8697
      %8699 = vrot.lane.b32.xlu0 %v8622, 32
      %v8700 = vpop.permute.xlu0 %8699
      %8701 = vrot.lane.b32.xlu0 %v8625, 32
      %v8702 = vpop.permute.xlu0 %8701
      %8703 = vrot.lane.b32.xlu0 %v8627, 32
      %v8704 = vpop.permute.xlu0 %8703
      %8705 = vrot.lane.b32.xlu0 %v8630, 32
      %v8706 = vpop.permute.xlu0 %8705
      %8707 = vrot.lane.b32.xlu0 %v8632, 32
      %v8708 = vpop.permute.xlu0 %8707
      %8709 = vrot.lane.b32.xlu0 %v8635, 32
      %v8710 = vpop.permute.xlu0 %8709
      %8711 = vrot.lane.b32.xlu0 %v8637, 32
      %v8712 = vpop.permute.xlu0 %8711
      %8713 = vrot.lane.b32.xlu0 %v8640, 32
      %v8714 = vpop.permute.xlu0 %8713
      %8715 = vrot.lane.b32.xlu0 %v8642, 32
      %v8716 = vpop.permute.xlu0 %8715
      %8717 = vrot.lane.b32.xlu0 %v8645, 32
      %v8718 = vpop.permute.xlu0 %8717
      %8719 = vrot.lane.b32.xlu0 %v8647, 32
      %v8720 = vpop.permute.xlu0 %8719
      %8721 = vrot.lane.b32.xlu0 %v8650, 32
      %v8722 = vpop.permute.xlu0 %8721
      %8723 = vrot.lane.b32.xlu0 %v8652, 32
      %v8724 = vpop.permute.xlu0 %8723
      %8725 = vrot.lane.b32.xlu0 %v8655, 32
      %v8726 = vpop.permute.xlu0 %8725
      %8727 = vrot.lane.b32.xlu0 %v8657, 32
      %v8728 = vpop.permute.xlu0 %8727
      %8729 = vrot.lane.b32.xlu0 %v8660, 32
      %v8730 = vpop.permute.xlu0 %8729
      %8731 = vrot.lane.b32.xlu0 %v8662, 32
      %v8732 = vpop.permute.xlu0 %8731
      %8733 = vrot.lane.b32.xlu0 %v8665, 32
      %v8734 = vpop.permute.xlu0 %8733
      %8735 = vrot.lane.b32.xlu0 %v8667, 32
      %v8736 = vpop.permute.xlu0 %8735
      %8737 = vrot.lane.b32.xlu0 %v8670, 32
      %v8738 = vpop.permute.xlu0 %8737
      %8739 = vrot.lane.b32.xlu0 %v8672, 32
      %v8740 = vpop.permute.xlu0 %8739
      %8741 = vrot.lane.b32.xlu0 %v8675, 32
      %v8742 = vpop.permute.xlu0 %8741
      %8743 = vrot.lane.b32.xlu0 %v8677, 32
      %v8744 = vpop.permute.xlu0 %8743
      %8745 = vrot.lane.b32.xlu0 %v8680, 32
      %v8746 = vpop.permute.xlu0 %8745
      %8747 = vrot.lane.b32.xlu0 %v8682, 32
      %v8748 = vpop.permute.xlu0 %8747
      %8749 = vrot.lane.b32.xlu0 %v8685, 32
      %v8750 = vpop.permute.xlu0 %8749
      %8751 = vrot.lane.b32.xlu0 %v8687, 32
      %v8752 = vpop.permute.xlu0 %8751
      %8753 = vrot.lane.b32.xlu0 %v8690, 32
      %v8754 = vpop.permute.xlu0 %8753
      %8755 = vrot.lane.b32.xlu0 %v8692, 32
      %v8756 = vpop.permute.xlu0 %8755
      %8789 = vst.msk [vmem:[#allocation4] sm:$0xff] %vm920, %v8694
      %8790 = vst.msk [vmem:[#allocation4 + $0x18] sm:$0xff] %vm920, %v8696
      %8791 = vst.msk [vmem:[#allocation4 + $0x30] sm:$0xff] %vm920, %v8698
      %8792 = vst.msk [vmem:[#allocation4 + $0x48] sm:$0xff] %vm920, %v8700
      %8793 = vst.msk [vmem:[#allocation4 + $0x60] sm:$0xff] %vm920, %v8702
      %8794 = vst.msk [vmem:[#allocation4 + $0x78] sm:$0xff] %vm920, %v8704
      %8795 = vst.msk [vmem:[#allocation4 + $0x90] sm:$0xff] %vm920, %v8706
      %8796 = vst.msk [vmem:[#allocation4 + $0xa8] sm:$0xff] %vm920, %v8708
      %8797 = vst.msk [vmem:[#allocation4 + $0xc0] sm:$0xff] %vm920, %v8710
      %8798 = vst.msk [vmem:[#allocation4 + $0xd8] sm:$0xff] %vm920, %v8712
      %8799 = vst.msk [vmem:[#allocation4 + $0xf0] sm:$0xff] %vm920, %v8714
      %8800 = vst.msk [vmem:[#allocation4 + $0x108] sm:$0xff] %vm920, %v8716
      %8801 = vst.msk [vmem:[#allocation4 + $0x120] sm:$0xff] %vm920, %v8718
      %8802 = vst.msk [vmem:[#allocation4 + $0x138] sm:$0xff] %vm920, %v8720
      %8803 = vst.msk [vmem:[#allocation4 + $0x150] sm:$0xff] %vm920, %v8722
      %8804 = vst.msk [vmem:[#allocation4 + $0x168] sm:$0xff] %vm920, %v8724
      %8805 = vst.msk [vmem:[#allocation4 + $0x180] sm:$0xff] %vm920, %v8726
      %8806 = vst.msk [vmem:[#allocation4 + $0x198] sm:$0xff] %vm920, %v8728
      %8807 = vst.msk [vmem:[#allocation4 + $0x1b0] sm:$0xff] %vm920, %v8730
      %8808 = vst.msk [vmem:[#allocation4 + $0x1c8] sm:$0xff] %vm920, %v8732
      %8809 = vst.msk [vmem:[#allocation4 + $0x1e0] sm:$0xff] %vm920, %v8734
      %8810 = vst.msk [vmem:[#allocation4 + $0x1f8] sm:$0xff] %vm920, %v8736
      %8811 = vst.msk [vmem:[#allocation4 + $0x210] sm:$0xff] %vm920, %v8738
      %8812 = vst.msk [vmem:[#allocation4 + $0x228] sm:$0xff] %vm920, %v8740
      %8813 = vst.msk [vmem:[#allocation4 + $0x240] sm:$0xff] %vm920, %v8742
      %8814 = vst.msk [vmem:[#allocation4 + $0x258] sm:$0xff] %vm920, %v8744
      %8815 = vst.msk [vmem:[#allocation4 + $0x270] sm:$0xff] %vm920, %v8746
      %8816 = vst.msk [vmem:[#allocation4 + $0x288] sm:$0xff] %vm920, %v8748
      %8817 = vst.msk [vmem:[#allocation4 + $0x2a0] sm:$0xff] %vm920, %v8750
      %8818 = vst.msk [vmem:[#allocation4 + $0x2b8] sm:$0xff] %vm920, %v8752
      %8819 = vst.msk [vmem:[#allocation4 + $0x2d0] sm:$0xff] %vm920, %v8754
      %8820 = vst.msk [vmem:[#allocation4 + $0x2e8] sm:$0xff] %vm920, %v8756
      %v8822 = vrot.slane %v8267, 1
      %v8823 = vrot.slane %v8268, 1
      %v8824 = vsel %vm743, %v8822, %v8823
      %v8825 = vrot.slane %v8269, 1
      %v8826 = vsel %vm743, %v8823, %v8825
      %8859 = vst.msk [vmem:[#allocation4 + $0x8] sm:$0xff] %vm171, %v8620
      %8860 = vst.msk [vmem:[#allocation4 + $0x20] sm:$0xff] %vm171, %v8622
      %8861 = vst.msk [vmem:[#allocation4 + $0x38] sm:$0xff] %vm171, %v8625
      %8862 = vst.msk [vmem:[#allocation4 + $0x50] sm:$0xff] %vm171, %v8627
      %8863 = vst.msk [vmem:[#allocation4 + $0x68] sm:$0xff] %vm171, %v8630
      %8864 = vst.msk [vmem:[#allocation4 + $0x80] sm:$0xff] %vm171, %v8632
      %8865 = vst.msk [vmem:[#allocation4 + $0x98] sm:$0xff] %vm171, %v8635
      %8866 = vst.msk [vmem:[#allocation4 + $0xb0] sm:$0xff] %vm171, %v8637
      %8867 = vst.msk [vmem:[#allocation4 + $0xc8] sm:$0xff] %vm171, %v8640
      %8868 = vst.msk [vmem:[#allocation4 + $0xe0] sm:$0xff] %vm171, %v8642
      %8869 = vst.msk [vmem:[#allocation4 + $0xf8] sm:$0xff] %vm171, %v8645
      %8870 = vst.msk [vmem:[#allocation4 + $0x110] sm:$0xff] %vm171, %v8647
      %8871 = vst.msk [vmem:[#allocation4 + $0x128] sm:$0xff] %vm171, %v8650
      %8872 = vst.msk [vmem:[#allocation4 + $0x140] sm:$0xff] %vm171, %v8652
      %8873 = vst.msk [vmem:[#allocation4 + $0x158] sm:$0xff] %vm171, %v8655
      %8874 = vst.msk [vmem:[#allocation4 + $0x170] sm:$0xff] %vm171, %v8657
      %8875 = vst.msk [vmem:[#allocation4 + $0x188] sm:$0xff] %vm171, %v8660
      %8876 = vst.msk [vmem:[#allocation4 + $0x1a0] sm:$0xff] %vm171, %v8662
      %8877 = vst.msk [vmem:[#allocation4 + $0x1b8] sm:$0xff] %vm171, %v8665
      %8878 = vst.msk [vmem:[#allocation4 + $0x1d0] sm:$0xff] %vm171, %v8667
      %8879 = vst.msk [vmem:[#allocation4 + $0x1e8] sm:$0xff] %vm171, %v8670
      %8880 = vst.msk [vmem:[#allocation4 + $0x200] sm:$0xff] %vm171, %v8672
      %8881 = vst.msk [vmem:[#allocation4 + $0x218] sm:$0xff] %vm171, %v8675
      %8882 = vst.msk [vmem:[#allocation4 + $0x230] sm:$0xff] %vm171, %v8677
      %8883 = vst.msk [vmem:[#allocation4 + $0x248] sm:$0xff] %vm171, %v8680
      %8884 = vst.msk [vmem:[#allocation4 + $0x260] sm:$0xff] %vm171, %v8682
      %8885 = vst.msk [vmem:[#allocation4 + $0x278] sm:$0xff] %vm171, %v8685
      %8886 = vst.msk [vmem:[#allocation4 + $0x290] sm:$0xff] %vm171, %v8687
      %8887 = vst.msk [vmem:[#allocation4 + $0x2a8] sm:$0xff] %vm171, %v8690
      %8888 = vst.msk [vmem:[#allocation4 + $0x2c0] sm:$0xff] %vm171, %v8692
      %8889 = vst.msk [vmem:[#allocation4 + $0x2d8] sm:$0xff] %vm171, %v8824
      %8890 = vst.msk [vmem:[#allocation4 + $0x2f0] sm:$0xff] %vm171, %v8826
      %v8892 = vrot.slane %v8270, 1
      %v8893 = vrot.slane %v8271, 1
      %v8894 = vsel %vm743, %v8892, %v8893
      %v8895 = vrot.slane %v8272, 1
      %v8896 = vsel %vm743, %v8893, %v8895
      %8897 = vrot.lane.b32.xlu0 %v8625, 96
      %v8898 = vpop.permute.xlu0 %8897
      %8899 = vrot.lane.b32.xlu0 %v8627, 96
      %v8900 = vpop.permute.xlu0 %8899
      %8901 = vrot.lane.b32.xlu0 %v8630, 96
      %v8902 = vpop.permute.xlu0 %8901
      %8903 = vrot.lane.b32.xlu0 %v8632, 96
      %v8904 = vpop.permute.xlu0 %8903
      %8905 = vrot.lane.b32.xlu0 %v8635, 96
      %v8906 = vpop.permute.xlu0 %8905
      %8907 = vrot.lane.b32.xlu0 %v8637, 96
      %v8908 = vpop.permute.xlu0 %8907
      %8909 = vrot.lane.b32.xlu0 %v8640, 96
      %v8910 = vpop.permute.xlu0 %8909
      %8911 = vrot.lane.b32.xlu0 %v8642, 96
      %v8912 = vpop.permute.xlu0 %8911
      %8913 = vrot.lane.b32.xlu0 %v8645, 96
      %v8914 = vpop.permute.xlu0 %8913
      %8915 = vrot.lane.b32.xlu0 %v8647, 96
      %v8916 = vpop.permute.xlu0 %8915
      %8917 = vrot.lane.b32.xlu0 %v8650, 96
      %v8918 = vpop.permute.xlu0 %8917
      %8919 = vrot.lane.b32.xlu0 %v8652, 96
      %v8920 = vpop.permute.xlu0 %8919
      %8921 = vrot.lane.b32.xlu0 %v8655, 96
      %v8922 = vpop.permute.xlu0 %8921
      %8923 = vrot.lane.b32.xlu0 %v8657, 96
      %v8924 = vpop.permute.xlu0 %8923
      %8925 = vrot.lane.b32.xlu0 %v8660, 96
      %v8926 = vpop.permute.xlu0 %8925
      %8927 = vrot.lane.b32.xlu0 %v8662, 96
      %v8928 = vpop.permute.xlu0 %8927
      %8929 = vrot.lane.b32.xlu0 %v8665, 96
      %v8930 = vpop.permute.xlu0 %8929
      %8931 = vrot.lane.b32.xlu0 %v8667, 96
      %v8932 = vpop.permute.xlu0 %8931
      %8933 = vrot.lane.b32.xlu0 %v8670, 96
      %v8934 = vpop.permute.xlu0 %8933
      %8935 = vrot.lane.b32.xlu0 %v8672, 96
      %v8936 = vpop.permute.xlu0 %8935
      %8937 = vrot.lane.b32.xlu0 %v8675, 96
      %v8938 = vpop.permute.xlu0 %8937
      %8939 = vrot.lane.b32.xlu0 %v8677, 96
      %v8940 = vpop.permute.xlu0 %8939
      %8941 = vrot.lane.b32.xlu0 %v8680, 96
      %v8942 = vpop.permute.xlu0 %8941
      %8943 = vrot.lane.b32.xlu0 %v8682, 96
      %v8944 = vpop.permute.xlu0 %8943
      %8945 = vrot.lane.b32.xlu0 %v8685, 96
      %v8946 = vpop.permute.xlu0 %8945
      %8947 = vrot.lane.b32.xlu0 %v8687, 96
      %v8948 = vpop.permute.xlu0 %8947
      %8949 = vrot.lane.b32.xlu0 %v8690, 96
      %v8950 = vpop.permute.xlu0 %8949
      %8951 = vrot.lane.b32.xlu0 %v8692, 96
      %v8952 = vpop.permute.xlu0 %8951
      %8953 = vrot.lane.b32.xlu0 %v8824, 96
      %v8954 = vpop.permute.xlu0 %8953
      %8955 = vrot.lane.b32.xlu0 %v8826, 96
      %v8956 = vpop.permute.xlu0 %8955
      %8957 = vrot.lane.b32.xlu0 %v8894, 96
      %v8958 = vpop.permute.xlu0 %8957
      %8959 = vrot.lane.b32.xlu0 %v8896, 96
      %v8960 = vpop.permute.xlu0 %8959
      %8993 = vst.msk [vmem:[#allocation4 + $0x8] sm:$0xff] %vm561, %v8898
      %8994 = vst.msk [vmem:[#allocation4 + $0x20] sm:$0xff] %vm561, %v8900
      %8995 = vst.msk [vmem:[#allocation4 + $0x38] sm:$0xff] %vm561, %v8902
      %8996 = vst.msk [vmem:[#allocation4 + $0x50] sm:$0xff] %vm561, %v8904
      %8997 = vst.msk [vmem:[#allocation4 + $0x68] sm:$0xff] %vm561, %v8906
      %8998 = vst.msk [vmem:[#allocation4 + $0x80] sm:$0xff] %vm561, %v8908
      %8999 = vst.msk [vmem:[#allocation4 + $0x98] sm:$0xff] %vm561, %v8910
      %9000 = vst.msk [vmem:[#allocation4 + $0xb0] sm:$0xff] %vm561, %v8912
      %9001 = vst.msk [vmem:[#allocation4 + $0xc8] sm:$0xff] %vm561, %v8914
      %9002 = vst.msk [vmem:[#allocation4 + $0xe0] sm:$0xff] %vm561, %v8916
      %9003 = vst.msk [vmem:[#allocation4 + $0xf8] sm:$0xff] %vm561, %v8918
      %9004 = vst.msk [vmem:[#allocation4 + $0x110] sm:$0xff] %vm561, %v8920
      %9005 = vst.msk [vmem:[#allocation4 + $0x128] sm:$0xff] %vm561, %v8922
      %9006 = vst.msk [vmem:[#allocation4 + $0x140] sm:$0xff] %vm561, %v8924
      %9007 = vst.msk [vmem:[#allocation4 + $0x158] sm:$0xff] %vm561, %v8926
      %9008 = vst.msk [vmem:[#allocation4 + $0x170] sm:$0xff] %vm561, %v8928
      %9009 = vst.msk [vmem:[#allocation4 + $0x188] sm:$0xff] %vm561, %v8930
      %9010 = vst.msk [vmem:[#allocation4 + $0x1a0] sm:$0xff] %vm561, %v8932
      %9011 = vst.msk [vmem:[#allocation4 + $0x1b8] sm:$0xff] %vm561, %v8934
      %9012 = vst.msk [vmem:[#allocation4 + $0x1d0] sm:$0xff] %vm561, %v8936
      %9013 = vst.msk [vmem:[#allocation4 + $0x1e8] sm:$0xff] %vm561, %v8938
      %9014 = vst.msk [vmem:[#allocation4 + $0x200] sm:$0xff] %vm561, %v8940
      %9015 = vst.msk [vmem:[#allocation4 + $0x218] sm:$0xff] %vm561, %v8942
      %9016 = vst.msk [vmem:[#allocation4 + $0x230] sm:$0xff] %vm561, %v8944
      %9017 = vst.msk [vmem:[#allocation4 + $0x248] sm:$0xff] %vm561, %v8946
      %9018 = vst.msk [vmem:[#allocation4 + $0x260] sm:$0xff] %vm561, %v8948
      %9019 = vst.msk [vmem:[#allocation4 + $0x278] sm:$0xff] %vm561, %v8950
      %9020 = vst.msk [vmem:[#allocation4 + $0x290] sm:$0xff] %vm561, %v8952
      %9021 = vst.msk [vmem:[#allocation4 + $0x2a8] sm:$0xff] %vm561, %v8954
      %9022 = vst.msk [vmem:[#allocation4 + $0x2c0] sm:$0xff] %vm561, %v8956
      %9023 = vst.msk [vmem:[#allocation4 + $0x2d8] sm:$0xff] %vm561, %v8958
      %9024 = vst.msk [vmem:[#allocation4 + $0x2f0] sm:$0xff] %vm561, %v8960
      %v9025 = vrot.slane %v8219, 2
      %v9026 = vrot.slane %v8220, 2
      %v9027 = vsel %vm1157, %v9025, %v9026
      %v9028 = vrot.slane %v8221, 2
      %v9029 = vsel %vm1157, %v9026, %v9028
      %v9030 = vrot.slane %v8222, 2
      %v9031 = vrot.slane %v8223, 2
      %v9032 = vsel %vm1157, %v9030, %v9031
      %v9033 = vrot.slane %v8224, 2
      %v9034 = vsel %vm1157, %v9031, %v9033
      %v9035 = vrot.slane %v8225, 2
      %v9036 = vrot.slane %v8226, 2
      %v9037 = vsel %vm1157, %v9035, %v9036
      %v9038 = vrot.slane %v8227, 2
      %v9039 = vsel %vm1157, %v9036, %v9038
      %v9040 = vrot.slane %v8228, 2
      %v9041 = vrot.slane %v8229, 2
      %v9042 = vsel %vm1157, %v9040, %v9041
      %v9043 = vrot.slane %v8230, 2
      %v9044 = vsel %vm1157, %v9041, %v9043
      %v9045 = vrot.slane %v8231, 2
      %v9046 = vrot.slane %v8232, 2
      %v9047 = vsel %vm1157, %v9045, %v9046
      %v9048 = vrot.slane %v8233, 2
      %v9049 = vsel %vm1157, %v9046, %v9048
      %v9050 = vrot.slane %v8234, 2
      %v9051 = vrot.slane %v8235, 2
      %v9052 = vsel %vm1157, %v9050, %v9051
      %v9053 = vrot.slane %v8236, 2
      %v9054 = vsel %vm1157, %v9051, %v9053
      %v9055 = vrot.slane %v8237, 2
      %v9056 = vrot.slane %v8238, 2
      %v9057 = vsel %vm1157, %v9055, %v9056
      %v9058 = vrot.slane %v8239, 2
      %v9059 = vsel %vm1157, %v9056, %v9058
      %v9060 = vrot.slane %v8240, 2
      %v9061 = vrot.slane %v8241, 2
      %v9062 = vsel %vm1157, %v9060, %v9061
      %v9063 = vrot.slane %v8242, 2
      %v9064 = vsel %vm1157, %v9061, %v9063
      %v9065 = vrot.slane %v8243, 2
      %v9066 = vrot.slane %v8244, 2
      %v9067 = vsel %vm1157, %v9065, %v9066
      %v9068 = vrot.slane %v8245, 2
      %v9069 = vsel %vm1157, %v9066, %v9068
      %v9070 = vrot.slane %v8246, 2
      %v9071 = vrot.slane %v8247, 2
      %v9072 = vsel %vm1157, %v9070, %v9071
      %v9073 = vrot.slane %v8248, 2
      %v9074 = vsel %vm1157, %v9071, %v9073
      %v9075 = vrot.slane %v8249, 2
      %v9076 = vrot.slane %v8250, 2
      %v9077 = vsel %vm1157, %v9075, %v9076
      %v9078 = vrot.slane %v8251, 2
      %v9079 = vsel %vm1157, %v9076, %v9078
      %v9080 = vrot.slane %v8252, 2
      %v9081 = vrot.slane %v8253, 2
      %v9082 = vsel %vm1157, %v9080, %v9081
      %v9083 = vrot.slane %v8254, 2
      %v9084 = vsel %vm1157, %v9081, %v9083
      %v9085 = vrot.slane %v8255, 2
      %v9086 = vrot.slane %v8256, 2
      %v9087 = vsel %vm1157, %v9085, %v9086
      %v9088 = vrot.slane %v8257, 2
      %v9089 = vsel %vm1157, %v9086, %v9088
      %v9090 = vrot.slane %v8258, 2
      %v9091 = vrot.slane %v8259, 2
      %v9092 = vsel %vm1157, %v9090, %v9091
      %v9093 = vrot.slane %v8260, 2
      %v9094 = vsel %vm1157, %v9091, %v9093
      %v9095 = vrot.slane %v8261, 2
      %v9096 = vrot.slane %v8262, 2
      %v9097 = vsel %vm1157, %v9095, %v9096
      %v9098 = vrot.slane %v8263, 2
      %v9099 = vsel %vm1157, %v9096, %v9098
      %v9100 = vrot.slane %v8264, 2
      %v9101 = vrot.slane %v8265, 2
      %v9102 = vsel %vm1157, %v9100, %v9101
      %v9103 = vrot.slane %v8266, 2
      %v9104 = vsel %vm1157, %v9101, %v9103
      %9105 = vrot.lane.b32.xlu0 %v9027, 64
      %v9106 = vpop.permute.xlu0 %9105
      %9107 = vrot.lane.b32.xlu0 %v9029, 64
      %v9108 = vpop.permute.xlu0 %9107
      %9109 = vrot.lane.b32.xlu0 %v9032, 64
      %v9110 = vpop.permute.xlu0 %9109
      %9111 = vrot.lane.b32.xlu0 %v9034, 64
      %v9112 = vpop.permute.xlu0 %9111
      %9113 = vrot.lane.b32.xlu0 %v9037, 64
      %v9114 = vpop.permute.xlu0 %9113
      %9115 = vrot.lane.b32.xlu0 %v9039, 64
      %v9116 = vpop.permute.xlu0 %9115
      %9117 = vrot.lane.b32.xlu0 %v9042, 64
      %v9118 = vpop.permute.xlu0 %9117
      %9119 = vrot.lane.b32.xlu0 %v9044, 64
      %v9120 = vpop.permute.xlu0 %9119
      %9121 = vrot.lane.b32.xlu0 %v9047, 64
      %v9122 = vpop.permute.xlu0 %9121
      %9123 = vrot.lane.b32.xlu0 %v9049, 64
      %v9124 = vpop.permute.xlu0 %9123
      %9125 = vrot.lane.b32.xlu0 %v9052, 64
      %v9126 = vpop.permute.xlu0 %9125
      %9127 = vrot.lane.b32.xlu0 %v9054, 64
      %v9128 = vpop.permute.xlu0 %9127
      %9129 = vrot.lane.b32.xlu0 %v9057, 64
      %v9130 = vpop.permute.xlu0 %9129
      %9131 = vrot.lane.b32.xlu0 %v9059, 64
      %v9132 = vpop.permute.xlu0 %9131
      %9133 = vrot.lane.b32.xlu0 %v9062, 64
      %v9134 = vpop.permute.xlu0 %9133
      %9135 = vrot.lane.b32.xlu0 %v9064, 64
      %v9136 = vpop.permute.xlu0 %9135
      %9137 = vrot.lane.b32.xlu0 %v9067, 64
      %v9138 = vpop.permute.xlu0 %9137
      %9139 = vrot.lane.b32.xlu0 %v9069, 64
      %v9140 = vpop.permute.xlu0 %9139
      %9141 = vrot.lane.b32.xlu0 %v9072, 64
      %v9142 = vpop.permute.xlu0 %9141
      %9143 = vrot.lane.b32.xlu0 %v9074, 64
      %v9144 = vpop.permute.xlu0 %9143
      %9145 = vrot.lane.b32.xlu0 %v9077, 64
      %v9146 = vpop.permute.xlu0 %9145
      %9147 = vrot.lane.b32.xlu0 %v9079, 64
      %v9148 = vpop.permute.xlu0 %9147
      %9149 = vrot.lane.b32.xlu0 %v9082, 64
      %v9150 = vpop.permute.xlu0 %9149
      %9151 = vrot.lane.b32.xlu0 %v9084, 64
      %v9152 = vpop.permute.xlu0 %9151
      %9153 = vrot.lane.b32.xlu0 %v9087, 64
      %v9154 = vpop.permute.xlu0 %9153
      %9155 = vrot.lane.b32.xlu0 %v9089, 64
      %v9156 = vpop.permute.xlu0 %9155
      %9157 = vrot.lane.b32.xlu0 %v9092, 64
      %v9158 = vpop.permute.xlu0 %9157
      %9159 = vrot.lane.b32.xlu0 %v9094, 64
      %v9160 = vpop.permute.xlu0 %9159
      %9161 = vrot.lane.b32.xlu0 %v9097, 64
      %v9162 = vpop.permute.xlu0 %9161
      %9163 = vrot.lane.b32.xlu0 %v9099, 64
      %v9164 = vpop.permute.xlu0 %9163
      %9165 = vrot.lane.b32.xlu0 %v9102, 64
      %v9166 = vpop.permute.xlu0 %9165
      %9167 = vrot.lane.b32.xlu0 %v9104, 64
      %v9168 = vpop.permute.xlu0 %9167
      %9201 = vst.msk [vmem:[#allocation4] sm:$0xff] %vm692, %v9106
      %9202 = vst.msk [vmem:[#allocation4 + $0x18] sm:$0xff] %vm692, %v9108
      %9203 = vst.msk [vmem:[#allocation4 + $0x30] sm:$0xff] %vm692, %v9110
      %9204 = vst.msk [vmem:[#allocation4 + $0x48] sm:$0xff] %vm692, %v9112
      %9205 = vst.msk [vmem:[#allocation4 + $0x60] sm:$0xff] %vm692, %v9114
      %9206 = vst.msk [vmem:[#allocation4 + $0x78] sm:$0xff] %vm692, %v9116
      %9207 = vst.msk [vmem:[#allocation4 + $0x90] sm:$0xff] %vm692, %v9118
      %9208 = vst.msk [vmem:[#allocation4 + $0xa8] sm:$0xff] %vm692, %v9120
      %9209 = vst.msk [vmem:[#allocation4 + $0xc0] sm:$0xff] %vm692, %v9122
      %9210 = vst.msk [vmem:[#allocation4 + $0xd8] sm:$0xff] %vm692, %v9124
      %9211 = vst.msk [vmem:[#allocation4 + $0xf0] sm:$0xff] %vm692, %v9126
      %9212 = vst.msk [vmem:[#allocation4 + $0x108] sm:$0xff] %vm692, %v9128
      %9213 = vst.msk [vmem:[#allocation4 + $0x120] sm:$0xff] %vm692, %v9130
      %9214 = vst.msk [vmem:[#allocation4 + $0x138] sm:$0xff] %vm692, %v9132
      %9215 = vst.msk [vmem:[#allocation4 + $0x150] sm:$0xff] %vm692, %v9134
      %9216 = vst.msk [vmem:[#allocation4 + $0x168] sm:$0xff] %vm692, %v9136
      %9217 = vst.msk [vmem:[#allocation4 + $0x180] sm:$0xff] %vm692, %v9138
      %9218 = vst.msk [vmem:[#allocation4 + $0x198] sm:$0xff] %vm692, %v9140
      %9219 = vst.msk [vmem:[#allocation4 + $0x1b0] sm:$0xff] %vm692, %v9142
      %9220 = vst.msk [vmem:[#allocation4 + $0x1c8] sm:$0xff] %vm692, %v9144
      %9221 = vst.msk [vmem:[#allocation4 + $0x1e0] sm:$0xff] %vm692, %v9146
      %9222 = vst.msk [vmem:[#allocation4 + $0x1f8] sm:$0xff] %vm692, %v9148
      %9223 = vst.msk [vmem:[#allocation4 + $0x210] sm:$0xff] %vm692, %v9150
      %9224 = vst.msk [vmem:[#allocation4 + $0x228] sm:$0xff] %vm692, %v9152
      %9225 = vst.msk [vmem:[#allocation4 + $0x240] sm:$0xff] %vm692, %v9154
      %9226 = vst.msk [vmem:[#allocation4 + $0x258] sm:$0xff] %vm692, %v9156
      %9227 = vst.msk [vmem:[#allocation4 + $0x270] sm:$0xff] %vm692, %v9158
      %9228 = vst.msk [vmem:[#allocation4 + $0x288] sm:$0xff] %vm692, %v9160
      %9229 = vst.msk [vmem:[#allocation4 + $0x2a0] sm:$0xff] %vm692, %v9162
      %9230 = vst.msk [vmem:[#allocation4 + $0x2b8] sm:$0xff] %vm692, %v9164
      %9231 = vst.msk [vmem:[#allocation4 + $0x2d0] sm:$0xff] %vm692, %v9166
      %9232 = vst.msk [vmem:[#allocation4 + $0x2e8] sm:$0xff] %vm692, %v9168
      %v9233 = vrot.slane %v8267, 2
      %v9234 = vrot.slane %v8268, 2
      %v9235 = vsel %vm1157, %v9233, %v9234
      %v9236 = vrot.slane %v8269, 2
      %v9237 = vsel %vm1157, %v9234, %v9236
      %9238 = vrot.lane.b32.xlu0 %v9032, 32
      %v9239 = vpop.permute.xlu0 %9238
      %9240 = vrot.lane.b32.xlu0 %v9034, 32
      %v9241 = vpop.permute.xlu0 %9240
      %9242 = vrot.lane.b32.xlu0 %v9037, 32
      %v9243 = vpop.permute.xlu0 %9242
      %9244 = vrot.lane.b32.xlu0 %v9039, 32
      %v9245 = vpop.permute.xlu0 %9244
      %9246 = vrot.lane.b32.xlu0 %v9042, 32
      %v9247 = vpop.permute.xlu0 %9246
      %9248 = vrot.lane.b32.xlu0 %v9044, 32
      %v9249 = vpop.permute.xlu0 %9248
      %9250 = vrot.lane.b32.xlu0 %v9047, 32
      %v9251 = vpop.permute.xlu0 %9250
      %9252 = vrot.lane.b32.xlu0 %v9049, 32
      %v9253 = vpop.permute.xlu0 %9252
      %9254 = vrot.lane.b32.xlu0 %v9052, 32
      %v9255 = vpop.permute.xlu0 %9254
      %9256 = vrot.lane.b32.xlu0 %v9054, 32
      %v9257 = vpop.permute.xlu0 %9256
      %9258 = vrot.lane.b32.xlu0 %v9057, 32
      %v9259 = vpop.permute.xlu0 %9258
      %9260 = vrot.lane.b32.xlu0 %v9059, 32
      %v9261 = vpop.permute.xlu0 %9260
      %9262 = vrot.lane.b32.xlu0 %v9062, 32
      %v9263 = vpop.permute.xlu0 %9262
      %9264 = vrot.lane.b32.xlu0 %v9064, 32
      %v9265 = vpop.permute.xlu0 %9264
      %9266 = vrot.lane.b32.xlu0 %v9067, 32
      %v9267 = vpop.permute.xlu0 %9266
      %9268 = vrot.lane.b32.xlu0 %v9069, 32
      %v9269 = vpop.permute.xlu0 %9268
      %9270 = vrot.lane.b32.xlu0 %v9072, 32
      %v9271 = vpop.permute.xlu0 %9270
      %9272 = vrot.lane.b32.xlu0 %v9074, 32
      %v9273 = vpop.permute.xlu0 %9272
      %9274 = vrot.lane.b32.xlu0 %v9077, 32
      %v9275 = vpop.permute.xlu0 %9274
      %9276 = vrot.lane.b32.xlu0 %v9079, 32
      %v9277 = vpop.permute.xlu0 %9276
      %9278 = vrot.lane.b32.xlu0 %v9082, 32
      %v9279 = vpop.permute.xlu0 %9278
      %9280 = vrot.lane.b32.xlu0 %v9084, 32
      %v9281 = vpop.permute.xlu0 %9280
      %9282 = vrot.lane.b32.xlu0 %v9087, 32
      %v9283 = vpop.permute.xlu0 %9282
      %9284 = vrot.lane.b32.xlu0 %v9089, 32
      %v9285 = vpop.permute.xlu0 %9284
      %9286 = vrot.lane.b32.xlu0 %v9092, 32
      %v9287 = vpop.permute.xlu0 %9286
      %9288 = vrot.lane.b32.xlu0 %v9094, 32
      %v9289 = vpop.permute.xlu0 %9288
      %9290 = vrot.lane.b32.xlu0 %v9097, 32
      %v9291 = vpop.permute.xlu0 %9290
      %9292 = vrot.lane.b32.xlu0 %v9099, 32
      %v9293 = vpop.permute.xlu0 %9292
      %9294 = vrot.lane.b32.xlu0 %v9102, 32
      %v9295 = vpop.permute.xlu0 %9294
      %9296 = vrot.lane.b32.xlu0 %v9104, 32
      %v9297 = vpop.permute.xlu0 %9296
      %9298 = vrot.lane.b32.xlu0 %v9235, 32
      %v9299 = vpop.permute.xlu0 %9298
      %9300 = vrot.lane.b32.xlu0 %v9237, 32
      %v9301 = vpop.permute.xlu0 %9300
      %9334 = vst.msk [vmem:[#allocation4 + $0x8] sm:$0xff] %vm920, %v9239
      %9335 = vst.msk [vmem:[#allocation4 + $0x20] sm:$0xff] %vm920, %v9241
      %9336 = vst.msk [vmem:[#allocation4 + $0x38] sm:$0xff] %vm920, %v9243
      %9337 = vst.msk [vmem:[#allocation4 + $0x50] sm:$0xff] %vm920, %v9245
      %9338 = vst.msk [vmem:[#allocation4 + $0x68] sm:$0xff] %vm920, %v9247
      %9339 = vst.msk [vmem:[#allocation4 + $0x80] sm:$0xff] %vm920, %v9249
      %9340 = vst.msk [vmem:[#allocation4 + $0x98] sm:$0xff] %vm920, %v9251
      %9341 = vst.msk [vmem:[#allocation4 + $0xb0] sm:$0xff] %vm920, %v9253
      %9342 = vst.msk [vmem:[#allocation4 + $0xc8] sm:$0xff] %vm920, %v9255
      %9343 = vst.msk [vmem:[#allocation4 + $0xe0] sm:$0xff] %vm920, %v9257
      %9344 = vst.msk [vmem:[#allocation4 + $0xf8] sm:$0xff] %vm920, %v9259
      %9345 = vst.msk [vmem:[#allocation4 + $0x110] sm:$0xff] %vm920, %v9261
      %9346 = vst.msk [vmem:[#allocation4 + $0x128] sm:$0xff] %vm920, %v9263
      %9347 = vst.msk [vmem:[#allocation4 + $0x140] sm:$0xff] %vm920, %v9265
      %9348 = vst.msk [vmem:[#allocation4 + $0x158] sm:$0xff] %vm920, %v9267
      %9349 = vst.msk [vmem:[#allocation4 + $0x170] sm:$0xff] %vm920, %v9269
      %9350 = vst.msk [vmem:[#allocation4 + $0x188] sm:$0xff] %vm920, %v9271
      %9351 = vst.msk [vmem:[#allocation4 + $0x1a0] sm:$0xff] %vm920, %v9273
      %9352 = vst.msk [vmem:[#allocation4 + $0x1b8] sm:$0xff] %vm920, %v9275
      %9353 = vst.msk [vmem:[#allocation4 + $0x1d0] sm:$0xff] %vm920, %v9277
      %9354 = vst.msk [vmem:[#allocation4 + $0x1e8] sm:$0xff] %vm920, %v9279
      %9355 = vst.msk [vmem:[#allocation4 + $0x200] sm:$0xff] %vm920, %v9281
      %9356 = vst.msk [vmem:[#allocation4 + $0x218] sm:$0xff] %vm920, %v9283
      %9357 = vst.msk [vmem:[#allocation4 + $0x230] sm:$0xff] %vm920, %v9285
      %9358 = vst.msk [vmem:[#allocation4 + $0x248] sm:$0xff] %vm920, %v9287
      %9359 = vst.msk [vmem:[#allocation4 + $0x260] sm:$0xff] %vm920, %v9289
      %9360 = vst.msk [vmem:[#allocation4 + $0x278] sm:$0xff] %vm920, %v9291
      %9361 = vst.msk [vmem:[#allocation4 + $0x290] sm:$0xff] %vm920, %v9293
      %9362 = vst.msk [vmem:[#allocation4 + $0x2a8] sm:$0xff] %vm920, %v9295
      %9363 = vst.msk [vmem:[#allocation4 + $0x2c0] sm:$0xff] %vm920, %v9297
      %9364 = vst.msk [vmem:[#allocation4 + $0x2d8] sm:$0xff] %vm920, %v9299
      %9365 = vst.msk [vmem:[#allocation4 + $0x2f0] sm:$0xff] %vm920, %v9301
      %v9366 = vrot.slane %v8270, 2
      %v9367 = vrot.slane %v8271, 2
      %v9368 = vsel %vm1157, %v9366, %v9367
      %v9369 = vrot.slane %v8272, 2
      %v9370 = vsel %vm1157, %v9367, %v9369
      %9403 = vst.msk [vmem:[#allocation4 + $0x10] sm:$0xff] %vm171, %v9037
      %9404 = vst.msk [vmem:[#allocation4 + $0x28] sm:$0xff] %vm171, %v9039
      %9405 = vst.msk [vmem:[#allocation4 + $0x40] sm:$0xff] %vm171, %v9042
      %9406 = vst.msk [vmem:[#allocation4 + $0x58] sm:$0xff] %vm171, %v9044
      %9407 = vst.msk [vmem:[#allocation4 + $0x70] sm:$0xff] %vm171, %v9047
      %9408 = vst.msk [vmem:[#allocation4 + $0x88] sm:$0xff] %vm171, %v9049
      %9409 = vst.msk [vmem:[#allocation4 + $0xa0] sm:$0xff] %vm171, %v9052
      %9410 = vst.msk [vmem:[#allocation4 + $0xb8] sm:$0xff] %vm171, %v9054
      %9411 = vst.msk [vmem:[#allocation4 + $0xd0] sm:$0xff] %vm171, %v9057
      %9412 = vst.msk [vmem:[#allocation4 + $0xe8] sm:$0xff] %vm171, %v9059
      %9413 = vst.msk [vmem:[#allocation4 + $0x100] sm:$0xff] %vm171, %v9062
      %9414 = vst.msk [vmem:[#allocation4 + $0x118] sm:$0xff] %vm171, %v9064
      %9415 = vst.msk [vmem:[#allocation4 + $0x130] sm:$0xff] %vm171, %v9067
      %9416 = vst.msk [vmem:[#allocation4 + $0x148] sm:$0xff] %vm171, %v9069
      %9417 = vst.msk [vmem:[#allocation4 + $0x160] sm:$0xff] %vm171, %v9072
      %9418 = vst.msk [vmem:[#allocation4 + $0x178] sm:$0xff] %vm171, %v9074
      %9419 = vst.msk [vmem:[#allocation4 + $0x190] sm:$0xff] %vm171, %v9077
      %9420 = vst.msk [vmem:[#allocation4 + $0x1a8] sm:$0xff] %vm171, %v9079
      %9421 = vst.msk [vmem:[#allocation4 + $0x1c0] sm:$0xff] %vm171, %v9082
      %9422 = vst.msk [vmem:[#allocation4 + $0x1d8] sm:$0xff] %vm171, %v9084
      %9423 = vst.msk [vmem:[#allocation4 + $0x1f0] sm:$0xff] %vm171, %v9087
      %9424 = vst.msk [vmem:[#allocation4 + $0x208] sm:$0xff] %vm171, %v9089
      %9425 = vst.msk [vmem:[#allocation4 + $0x220] sm:$0xff] %vm171, %v9092
      %9426 = vst.msk [vmem:[#allocation4 + $0x238] sm:$0xff] %vm171, %v9094
      %9427 = vst.msk [vmem:[#allocation4 + $0x250] sm:$0xff] %vm171, %v9097
      %9428 = vst.msk [vmem:[#allocation4 + $0x268] sm:$0xff] %vm171, %v9099
      %9429 = vst.msk [vmem:[#allocation4 + $0x280] sm:$0xff] %vm171, %v9102
      %9430 = vst.msk [vmem:[#allocation4 + $0x298] sm:$0xff] %vm171, %v9104
      %9431 = vst.msk [vmem:[#allocation4 + $0x2b0] sm:$0xff] %vm171, %v9235
      %9432 = vst.msk [vmem:[#allocation4 + $0x2c8] sm:$0xff] %vm171, %v9237
      %9433 = vst.msk [vmem:[#allocation4 + $0x2e0] sm:$0xff] %vm171, %v9368
      %9434 = vst.msk [vmem:[#allocation4 + $0x2f8] sm:$0xff] %vm171, %v9370
      %v9435 = vld [vmem:[#allocation4] sm:$0xff]
      %v9436 = vld [vmem:[#allocation4 + $0x8] sm:$0xff]
      %v9437 = vld [vmem:[#allocation4 + $0x10] sm:$0xff]
      %v9438 = vld [vmem:[#allocation4 + $0x18] sm:$0xff]
      %v9439 = vld [vmem:[#allocation4 + $0x20] sm:$0xff]
      %v9440 = vld [vmem:[#allocation4 + $0x28] sm:$0xff]
      %v9441 = vld [vmem:[#allocation4 + $0x30] sm:$0xff]
      %v9442 = vld [vmem:[#allocation4 + $0x38] sm:$0xff]
      %v9443 = vld [vmem:[#allocation4 + $0x40] sm:$0xff]
      %v9444 = vld [vmem:[#allocation4 + $0x48] sm:$0xff]
      %v9445 = vld [vmem:[#allocation4 + $0x50] sm:$0xff]
      %v9446 = vld [vmem:[#allocation4 + $0x58] sm:$0xff]
      %v9447 = vld [vmem:[#allocation4 + $0x60] sm:$0xff]
      %v9448 = vld [vmem:[#allocation4 + $0x68] sm:$0xff]
      %v9449 = vld [vmem:[#allocation4 + $0x70] sm:$0xff]
      %v9450 = vld [vmem:[#allocation4 + $0x78] sm:$0xff]
      %v9451 = vld [vmem:[#allocation4 + $0x80] sm:$0xff]
      %v9452 = vld [vmem:[#allocation4 + $0x88] sm:$0xff]
      %v9453 = vld [vmem:[#allocation4 + $0x90] sm:$0xff]
      %v9454 = vld [vmem:[#allocation4 + $0x98] sm:$0xff]
      %v9455 = vld [vmem:[#allocation4 + $0xa0] sm:$0xff]
      %v9456 = vld [vmem:[#allocation4 + $0xa8] sm:$0xff]
      %v9457 = vld [vmem:[#allocation4 + $0xb0] sm:$0xff]
      %v9458 = vld [vmem:[#allocation4 + $0xb8] sm:$0xff]
      %v9459 = vld [vmem:[#allocation4 + $0xc0] sm:$0xff]
      %v9460 = vld [vmem:[#allocation4 + $0xc8] sm:$0xff]
      %v9461 = vld [vmem:[#allocation4 + $0xd0] sm:$0xff]
      %v9462 = vld [vmem:[#allocation4 + $0xd8] sm:$0xff]
      %v9463 = vld [vmem:[#allocation4 + $0xe0] sm:$0xff]
      %v9464 = vld [vmem:[#allocation4 + $0xe8] sm:$0xff]
      %v9465 = vld [vmem:[#allocation4 + $0xf0] sm:$0xff]
      %v9466 = vld [vmem:[#allocation4 + $0xf8] sm:$0xff]
      %v9467 = vld [vmem:[#allocation4 + $0x100] sm:$0xff]
      %v9468 = vld [vmem:[#allocation4 + $0x108] sm:$0xff]
      %v9469 = vld [vmem:[#allocation4 + $0x110] sm:$0xff]
      %v9470 = vld [vmem:[#allocation4 + $0x118] sm:$0xff]
      %v9471 = vld [vmem:[#allocation4 + $0x120] sm:$0xff]
      %v9472 = vld [vmem:[#allocation4 + $0x128] sm:$0xff]
      %v9473 = vld [vmem:[#allocation4 + $0x130] sm:$0xff]
      %v9474 = vld [vmem:[#allocation4 + $0x138] sm:$0xff]
      %v9475 = vld [vmem:[#allocation4 + $0x140] sm:$0xff]
      %v9476 = vld [vmem:[#allocation4 + $0x148] sm:$0xff]
      %v9477 = vld [vmem:[#allocation4 + $0x150] sm:$0xff]
      %v9478 = vld [vmem:[#allocation4 + $0x158] sm:$0xff]
      %v9479 = vld [vmem:[#allocation4 + $0x160] sm:$0xff]
      %v9480 = vld [vmem:[#allocation4 + $0x168] sm:$0xff]
      %v9481 = vld [vmem:[#allocation4 + $0x170] sm:$0xff]
      %v9482 = vld [vmem:[#allocation4 + $0x178] sm:$0xff]
      %v9483 = vld [vmem:[#allocation4 + $0x180] sm:$0xff]
      %v9484 = vld [vmem:[#allocation4 + $0x188] sm:$0xff]
      %v9485 = vld [vmem:[#allocation4 + $0x190] sm:$0xff]
      %v9486 = vld [vmem:[#allocation4 + $0x198] sm:$0xff]
      %v9487 = vld [vmem:[#allocation4 + $0x1a0] sm:$0xff]
      %v9488 = vld [vmem:[#allocation4 + $0x1a8] sm:$0xff]
      %v9489 = vld [vmem:[#allocation4 + $0x1b0] sm:$0xff]
      %v9490 = vld [vmem:[#allocation4 + $0x1b8] sm:$0xff]
      %v9491 = vld [vmem:[#allocation4 + $0x1c0] sm:$0xff]
      %v9492 = vld [vmem:[#allocation4 + $0x1c8] sm:$0xff]
      %v9493 = vld [vmem:[#allocation4 + $0x1d0] sm:$0xff]
      %v9494 = vld [vmem:[#allocation4 + $0x1d8] sm:$0xff]
      %v9495 = vld [vmem:[#allocation4 + $0x1e0] sm:$0xff]
      %v9496 = vld [vmem:[#allocation4 + $0x1e8] sm:$0xff]
      %v9497 = vld [vmem:[#allocation4 + $0x1f0] sm:$0xff]
      %v9498 = vld [vmem:[#allocation4 + $0x1f8] sm:$0xff]
      %v9499 = vld [vmem:[#allocation4 + $0x200] sm:$0xff]
      %v9500 = vld [vmem:[#allocation4 + $0x208] sm:$0xff]
      %v9501 = vld [vmem:[#allocation4 + $0x210] sm:$0xff]
      %v9502 = vld [vmem:[#allocation4 + $0x218] sm:$0xff]
      %v9503 = vld [vmem:[#allocation4 + $0x220] sm:$0xff]
      %v9504 = vld [vmem:[#allocation4 + $0x228] sm:$0xff]
      %v9505 = vld [vmem:[#allocation4 + $0x230] sm:$0xff]
      %v9506 = vld [vmem:[#allocation4 + $0x238] sm:$0xff]
      %v9507 = vld [vmem:[#allocation4 + $0x240] sm:$0xff]
      %v9508 = vld [vmem:[#allocation4 + $0x248] sm:$0xff]
      %v9509 = vld [vmem:[#allocation4 + $0x250] sm:$0xff]
      %v9510 = vld [vmem:[#allocation4 + $0x258] sm:$0xff]
      %v9511 = vld [vmem:[#allocation4 + $0x260] sm:$0xff]
      %v9512 = vld [vmem:[#allocation4 + $0x268] sm:$0xff]
      %v9513 = vld [vmem:[#allocation4 + $0x270] sm:$0xff]
      %v9514 = vld [vmem:[#allocation4 + $0x278] sm:$0xff]
      %v9515 = vld [vmem:[#allocation4 + $0x280] sm:$0xff]
      %v9516 = vld [vmem:[#allocation4 + $0x288] sm:$0xff]
      %v9517 = vld [vmem:[#allocation4 + $0x290] sm:$0xff]
      %v9518 = vld [vmem:[#allocation4 + $0x298] sm:$0xff]
      %v9519 = vld [vmem:[#allocation4 + $0x2a0] sm:$0xff]
      %v9520 = vld [vmem:[#allocation4 + $0x2a8] sm:$0xff]
      %v9521 = vld [vmem:[#allocation4 + $0x2b0] sm:$0xff]
      %v9522 = vld [vmem:[#allocation4 + $0x2b8] sm:$0xff]
      %v9523 = vld [vmem:[#allocation4 + $0x2c0] sm:$0xff]
      %v9524 = vld [vmem:[#allocation4 + $0x2c8] sm:$0xff]
      %v9525 = vld [vmem:[#allocation4 + $0x2d0] sm:$0xff]
      %v9526 = vld [vmem:[#allocation4 + $0x2d8] sm:$0xff]
      %v9527 = vld [vmem:[#allocation4 + $0x2e0] sm:$0xff]
      %v9528 = vld [vmem:[#allocation4 + $0x2e8] sm:$0xff]
      %v9529 = vld [vmem:[#allocation4 + $0x2f0] sm:$0xff]
      %v9530 = vld [vmem:[#allocation4 + $0x2f8] sm:$0xff]
      %s9531 = scalar_lea.vmem %s1, 1152
      %v9532 = vld [vmem:[%s9531] sm:$0xff]
      %v9533 = vld [vmem:[%s9531 + $0x8] sm:$0xff]
      %v9534 = vld [vmem:[%s9531 + $0x10] sm:$0xff]
      %v9535 = vld [vmem:[%s9531 + $0x18] sm:$0xff]
      %v9536 = vld [vmem:[%s9531 + $0x20] sm:$0xff]
      %v9537 = vld [vmem:[%s9531 + $0x28] sm:$0xff]
      %v9538 = vld [vmem:[%s9531 + $0x30] sm:$0xff]
      %v9539 = vld [vmem:[%s9531 + $0x38] sm:$0xff]
      %v9540 = vld [vmem:[%s9531 + $0x40] sm:$0xff]
      %v9541 = vld [vmem:[%s9531 + $0x48] sm:$0xff]
      %v9542 = vld [vmem:[%s9531 + $0x50] sm:$0xff]
      %v9543 = vld [vmem:[%s9531 + $0x58] sm:$0xff]
      %v9544 = vld [vmem:[%s9531 + $0x60] sm:$0xff]
      %v9545 = vld [vmem:[%s9531 + $0x68] sm:$0xff]
      %v9546 = vld [vmem:[%s9531 + $0x70] sm:$0xff]
      %v9547 = vld [vmem:[%s9531 + $0x78] sm:$0xff]
      %v9548 = vld [vmem:[%s9531 + $0x80] sm:$0xff]
      %v9549 = vld [vmem:[%s9531 + $0x88] sm:$0xff]
      %v9550 = vld [vmem:[%s9531 + $0x90] sm:$0xff]
      %v9551 = vld [vmem:[%s9531 + $0x98] sm:$0xff]
      %v9552 = vld [vmem:[%s9531 + $0xa0] sm:$0xff]
      %v9553 = vld [vmem:[%s9531 + $0xa8] sm:$0xff]
      %v9554 = vld [vmem:[%s9531 + $0xb0] sm:$0xff]
      %v9555 = vld [vmem:[%s9531 + $0xb8] sm:$0xff]
      %v9556 = vld [vmem:[%s9531 + $0xc0] sm:$0xff]
      %v9557 = vld [vmem:[%s9531 + $0xc8] sm:$0xff]
      %v9558 = vld [vmem:[%s9531 + $0xd0] sm:$0xff]
      %v9559 = vld [vmem:[%s9531 + $0xd8] sm:$0xff]
      %v9560 = vld [vmem:[%s9531 + $0xe0] sm:$0xff]
      %v9561 = vld [vmem:[%s9531 + $0xe8] sm:$0xff]
      %v9562 = vld [vmem:[%s9531 + $0xf0] sm:$0xff]
      %v9563 = vld [vmem:[%s9531 + $0xf8] sm:$0xff]
      %v9564 = vld [vmem:[%s9531 + $0x100] sm:$0xff]
      %v9565 = vld [vmem:[%s9531 + $0x108] sm:$0xff]
      %v9566 = vld [vmem:[%s9531 + $0x110] sm:$0xff]
      %v9567 = vld [vmem:[%s9531 + $0x118] sm:$0xff]
      %s9568 = scalar_lea.vmem %s2, 4
      %v9569 = vld [vmem:[%s9568] sm:$0x1]
      %v9571 = vlaneseq
      %v9572 = vshrl.u32 %v9571, 7
      %v9573 = vsub.s32 0, %v9572
      %v9574 = vrot.slane %v9569, %v9573
      %v9577 = vsel %vm171, %v9437, 0
      %v9580 = vsel %vm171, %v9440, 0
      %v9583 = vsel %vm171, %v9443, 0
      %v9586 = vsel %vm171, %v9446, 0
      %v9589 = vsel %vm171, %v9449, 0
      %v9592 = vsel %vm171, %v9452, 0
      %v9595 = vsel %vm171, %v9455, 0
      %v9598 = vsel %vm171, %v9458, 0
      %v9601 = vsel %vm171, %v9461, 0
      %v9604 = vsel %vm171, %v9464, 0
      %v9607 = vsel %vm171, %v9467, 0
      %v9610 = vsel %vm171, %v9470, 0
      %v9613 = vsel %vm171, %v9473, 0
      %v9616 = vsel %vm171, %v9476, 0
      %v9619 = vsel %vm171, %v9479, 0
      %v9622 = vsel %vm171, %v9482, 0
      %v9625 = vsel %vm171, %v9485, 0
      %v9628 = vsel %vm171, %v9488, 0
      %v9631 = vsel %vm171, %v9491, 0
      %v9634 = vsel %vm171, %v9494, 0
      %v9637 = vsel %vm171, %v9497, 0
      %v9640 = vsel %vm171, %v9500, 0
      %v9643 = vsel %vm171, %v9503, 0
      %v9646 = vsel %vm171, %v9506, 0
      %v9649 = vsel %vm171, %v9509, 0
      %v9652 = vsel %vm171, %v9512, 0
      %v9655 = vsel %vm171, %v9515, 0
      %v9658 = vsel %vm171, %v9518, 0
      %v9661 = vsel %vm171, %v9521, 0
      %v9664 = vsel %vm171, %v9524, 0
      %v9667 = vsel %vm171, %v9527, 0
      %v9670 = vsel %vm171, %v9530, 0
      %9672 = vmatprep.subr.mxu0 0.0
      %9673 = vmatpush1.msra.mxu0 %v9532
      %9674 = vmatprep.subr.mxu0 0.0
      %9675 = vmatpush1.msra.mxu0 %v9533
      %9676 = vmatprep.subr.mxu0 0.0
      %9677 = vmatpush1.msra.mxu0 %v9534
      %9678 = vmatprep.subr.mxu0 0.0
      %9679 = vmatpush1.msra.mxu0 %v9535
      %9680 = vmatprep.subr.mxu0 0.0
      %9681 = vmatpush1.msra.mxu0 %v9536
      %9682 = vmatprep.subr.mxu0 0.0
      %9683 = vmatpush1.msra.mxu0 %v9537
      %9684 = vmatprep.subr.mxu0 0.0
      %9685 = vmatpush1.msra.mxu0 %v9538
      %9686 = vmatprep.subr.mxu0 0.0
      %9687 = vmatpush1.msra.mxu0 %v9539
      %9688 = vmatprep.subr.mxu0 0.0
      %9689 = vmatpush1.msra.mxu0 %v9540
      %9690 = vmatprep.subr.mxu0 0.0
      %9691 = vmatpush1.msra.mxu0 %v9541
      %9692 = vmatprep.subr.mxu0 0.0
      %9693 = vmatpush1.msra.mxu0 %v9542
      %9694 = vmatprep.subr.mxu0 0.0
      %9695 = vmatpush1.msra.mxu0 %v9543
      %9696 = vmatprep.subr.mxu0 0.0
      %9697 = vmatpush1.msra.mxu0 %v9544
      %9698 = vmatprep.subr.mxu0 0.0
      %9699 = vmatpush1.msra.mxu0 %v9545
      %9700 = vmatprep.subr.mxu0 0.0
      %9701 = vmatpush1.msra.mxu0 %v9546
      %9702 = vmatprep.subr.mxu0 0.0
      %9703 = vmatpush1.msra.mxu0 %v9547
      %9704 = vmatprep.subr.mxu0 0.0
      %9705 = vmatpush1.msra.mxu0 %v9548
      %9706 = vmatprep.subr.mxu0 0.0
      %9707 = vmatpush1.msra.mxu0 %v9549
      %9708 = vmatprep.subr.mxu0 0.0
      %9709 = vmatpush1.msra.mxu0 %v9550
      %9710 = vmatprep.subr.mxu0 0.0
      %9711 = vmatpush1.msra.mxu0 %v9551
      %9712 = vmatprep.subr.mxu0 0.0
      %9713 = vmatpush1.msra.mxu0 %v9552
      %9714 = vmatprep.subr.mxu0 0.0
      %9715 = vmatpush1.msra.mxu0 %v9553
      %9716 = vmatprep.subr.mxu0 0.0
      %9717 = vmatpush1.msra.mxu0 %v9554
      %9718 = vmatprep.subr.mxu0 0.0
      %9719 = vmatpush1.msra.mxu0 %v9555
      %9720 = vmatprep.subr.mxu0 0.0
      %9721 = vmatpush1.msra.mxu0 %v9556
      %9722 = vmatprep.subr.mxu0 0.0
      %9723 = vmatpush1.msra.mxu0 %v9557
      %9724 = vmatprep.subr.mxu0 0.0
      %9725 = vmatpush1.msra.mxu0 %v9558
      %9726 = vmatprep.subr.mxu0 0.0
      %9727 = vmatpush1.msra.mxu0 %v9559
      %9728 = vmatprep.subr.mxu0 0.0
      %9729 = vmatpush1.msra.mxu0 %v9560
      %9730 = vmatprep.subr.mxu0 0.0
      %9731 = vmatpush1.msra.mxu0 %v9561
      %9732 = vmatprep.subr.mxu0 0.0
      %9733 = vmatpush1.msra.mxu0 %v9562
      %9734 = vmatprep.subr.mxu0 0.0
      %9735 = vmatpush1.msra.mxu0 %v9563
      %9736 = vmatprep.mubr.f32.mxu0 %v9436
      %9737 = vmatmul.mubr.f32.gmra.mrb[0].mxu0 %v9435
      %v9738 = vpop.f32.mrb[0].mxu0
      %v9739 = vadd.f32 %v9574, %v9738
      %v9740 = vpop.f32.mrb[0].mxu0
      %9741 = vmatprep.mubr.f32.mxu0 %v9439
      %9742 = vmatmul.mubr.f32.gmra.mrb[0].mxu0 %v9438
      %v9743 = vpop.f32.mrb[0].mxu0
      %v9744 = vadd.f32 %v9574, %v9743
      %v9745 = vpop.f32.mrb[0].mxu0
      %9746 = vmatprep.mubr.f32.mxu0 %v9442
      %9747 = vmatmul.mubr.f32.gmra.mrb[0].mxu0 %v9441
      %v9748 = vpop.f32.mrb[0].mxu0
      %v9749 = vadd.f32 %v9574, %v9748
      %v9750 = vpop.f32.mrb[0].mxu0
      %9751 = vmatprep.mubr.f32.mxu0 %v9445
      %9752 = vmatmul.mubr.f32.gmra.mrb[0].mxu0 %v9444
      %v9753 = vpop.f32.mrb[0].mxu0
      %v9754 = vadd.f32 %v9574, %v9753
      %v9755 = vpop.f32.mrb[0].mxu0
      %9756 = vmatprep.mubr.f32.mxu0 %v9448
      %9757 = vmatmul.mubr.f32.gmra.mrb[0].mxu0 %v9447
      %v9758 = vpop.f32.mrb[0].mxu0
      %v9759 = vadd.f32 %v9574, %v9758
      %v9760 = vpop.f32.mrb[0].mxu0
      %9761 = vmatprep.mubr.f32.mxu0 %v9451
      %9762 = vmatmul.mubr.f32.gmra.mrb[0].mxu0 %v9450
      %v9763 = vpop.f32.mrb[0].mxu0
      %v9764 = vadd.f32 %v9574, %v9763
      %v9765 = vpop.f32.mrb[0].mxu0
      %9766 = vmatprep.mubr.f32.mxu0 %v9454
      %9767 = vmatmul.mubr.f32.gmra.mrb[0].mxu0 %v9453
      %v9768 = vpop.f32.mrb[0].mxu0
      %v9769 = vadd.f32 %v9574, %v9768
      %v9770 = vpop.f32.mrb[0].mxu0
      %9771 = vmatprep.mubr.f32.mxu0 %v9457
      %9772 = vmatmul.mubr.f32.gmra.mrb[0].mxu0 %v9456
      %v9773 = vpop.f32.mrb[0].mxu0
      %v9774 = vadd.f32 %v9574, %v9773
      %v9775 = vpop.f32.mrb[0].mxu0
      %9776 = vmatprep.mubr.f32.mxu0 %v9460
      %9777 = vmatmul.mubr.f32.gmra.mrb[0].mxu0 %v9459
      %v9778 = vpop.f32.mrb[0].mxu0
      %v9779 = vadd.f32 %v9574, %v9778
      %v9780 = vpop.f32.mrb[0].mxu0
      %9781 = vmatprep.mubr.f32.mxu0 %v9463
      %9782 = vmatmul.mubr.f32.gmra.mrb[0].mxu0 %v9462
      %v9783 = vpop.f32.mrb[0].mxu0
      %v9784 = vadd.f32 %v9574, %v9783
      %v9785 = vpop.f32.mrb[0].mxu0
      %9786 = vmatprep.mubr.f32.mxu0 %v9466
      %9787 = vmatmul.mubr.f32.gmra.mrb[0].mxu0 %v9465
      %v9788 = vpop.f32.mrb[0].mxu0
      %v9789 = vadd.f32 %v9574, %v9788
      %v9790 = vpop.f32.mrb[0].mxu0
      %9791 = vmatprep.mubr.f32.mxu0 %v9469
      %9792 = vmatmul.mubr.f32.gmra.mrb[0].mxu0 %v9468
      %v9793 = vpop.f32.mrb[0].mxu0
      %v9794 = vadd.f32 %v9574, %v9793
      %v9795 = vpop.f32.mrb[0].mxu0
      %9796 = vmatprep.mubr.f32.mxu0 %v9472
      %9797 = vmatmul.mubr.f32.gmra.mrb[0].mxu0 %v9471
      %v9798 = vpop.f32.mrb[0].mxu0
      %v9799 = vadd.f32 %v9574, %v9798
      %v9800 = vpop.f32.mrb[0].mxu0
      %9801 = vmatprep.mubr.f32.mxu0 %v9475
      %9802 = vmatmul.mubr.f32.gmra.mrb[0].mxu0 %v9474
      %v9803 = vpop.f32.mrb[0].mxu0
      %v9804 = vadd.f32 %v9574, %v9803
      %v9805 = vpop.f32.mrb[0].mxu0
      %9806 = vmatprep.mubr.f32.mxu0 %v9478
      %9807 = vmatmul.mubr.f32.gmra.mrb[0].mxu0 %v9477
      %v9808 = vpop.f32.mrb[0].mxu0
      %v9809 = vadd.f32 %v9574, %v9808
      %v9810 = vpop.f32.mrb[0].mxu0
      %9811 = vmatprep.mubr.f32.mxu0 %v9481
      %9812 = vmatmul.mubr.f32.gmra.mrb[0].mxu0 %v9480
      %v9813 = vpop.f32.mrb[0].mxu0
      %v9814 = vadd.f32 %v9574, %v9813
      %v9815 = vpop.f32.mrb[0].mxu0
      %9816 = vmatprep.mubr.f32.mxu0 %v9484
      %9817 = vmatmul.mubr.f32.gmra.mrb[0].mxu0 %v9483
      %v9818 = vpop.f32.mrb[0].mxu0
      %v9819 = vadd.f32 %v9574, %v9818
      %v9820 = vpop.f32.mrb[0].mxu0
      %9821 = vmatprep.mubr.f32.mxu0 %v9487
      %9822 = vmatmul.mubr.f32.gmra.mrb[0].mxu0 %v9486
      %v9823 = vpop.f32.mrb[0].mxu0
      %v9824 = vadd.f32 %v9574, %v9823
      %v9825 = vpop.f32.mrb[0].mxu0
      %9826 = vmatprep.mubr.f32.mxu0 %v9490
      %9827 = vmatmul.mubr.f32.gmra.mrb[0].mxu0 %v9489
      %v9828 = vpop.f32.mrb[0].mxu0
      %v9829 = vadd.f32 %v9574, %v9828
      %v9830 = vpop.f32.mrb[0].mxu0
      %9831 = vmatprep.mubr.f32.mxu0 %v9493
      %9832 = vmatmul.mubr.f32.gmra.mrb[0].mxu0 %v9492
      %v9833 = vpop.f32.mrb[0].mxu0
      %v9834 = vadd.f32 %v9574, %v9833
      %v9835 = vpop.f32.mrb[0].mxu0
      %9836 = vmatprep.mubr.f32.mxu0 %v9496
      %9837 = vmatmul.mubr.f32.gmra.mrb[0].mxu0 %v9495
      %v9838 = vpop.f32.mrb[0].mxu0
      %v9839 = vadd.f32 %v9574, %v9838
      %v9840 = vpop.f32.mrb[0].mxu0
      %9841 = vmatprep.mubr.f32.mxu0 %v9499
      %9842 = vmatmul.mubr.f32.gmra.mrb[0].mxu0 %v9498
      %v9843 = vpop.f32.mrb[0].mxu0
      %v9844 = vadd.f32 %v9574, %v9843
      %v9845 = vpop.f32.mrb[0].mxu0
      %9846 = vmatprep.mubr.f32.mxu0 %v9502
      %9847 = vmatmul.mubr.f32.gmra.mrb[0].mxu0 %v9501
      %v9848 = vpop.f32.mrb[0].mxu0
      %v9849 = vadd.f32 %v9574, %v9848
      %v9850 = vpop.f32.mrb[0].mxu0
      %9851 = vmatprep.mubr.f32.mxu0 %v9505
      %9852 = vmatmul.mubr.f32.gmra.mrb[0].mxu0 %v9504
      %v9853 = vpop.f32.mrb[0].mxu0
      %v9854 = vadd.f32 %v9574, %v9853
      %v9855 = vpop.f32.mrb[0].mxu0
      %9856 = vmatprep.mubr.f32.mxu0 %v9508
      %9857 = vmatmul.mubr.f32.gmra.mrb[0].mxu0 %v9507
      %v9858 = vpop.f32.mrb[0].mxu0
      %v9859 = vadd.f32 %v9574, %v9858
      %v9860 = vpop.f32.mrb[0].mxu0
      %9861 = vmatprep.mubr.f32.mxu0 %v9511
      %9862 = vmatmul.mubr.f32.gmra.mrb[0].mxu0 %v9510
      %v9863 = vpop.f32.mrb[0].mxu0
      %v9864 = vadd.f32 %v9574, %v9863
      %v9865 = vpop.f32.mrb[0].mxu0
      %9866 = vmatprep.mubr.f32.mxu0 %v9514
      %9867 = vmatmul.mubr.f32.gmra.mrb[0].mxu0 %v9513
      %v9868 = vpop.f32.mrb[0].mxu0
      %v9869 = vadd.f32 %v9574, %v9868
      %v9870 = vpop.f32.mrb[0].mxu0
      %9871 = vmatprep.mubr.f32.mxu0 %v9517
      %9872 = vmatmul.mubr.f32.gmra.mrb[0].mxu0 %v9516
      %v9873 = vpop.f32.mrb[0].mxu0
      %v9874 = vadd.f32 %v9574, %v9873
      %v9875 = vpop.f32.mrb[0].mxu0
      %9876 = vmatprep.mubr.f32.mxu0 %v9520
      %9877 = vmatmul.mubr.f32.gmra.mrb[0].mxu0 %v9519
      %v9878 = vpop.f32.mrb[0].mxu0
      %v9879 = vadd.f32 %v9574, %v9878
      %v9880 = vpop.f32.mrb[0].mxu0
      %9881 = vmatprep.mubr.f32.mxu0 %v9523
      %9882 = vmatmul.mubr.f32.gmra.mrb[0].mxu0 %v9522
      %v9883 = vpop.f32.mrb[0].mxu0
      %v9884 = vadd.f32 %v9574, %v9883
      %v9885 = vpop.f32.mrb[0].mxu0
      %9886 = vmatprep.mubr.f32.mxu0 %v9526
      %9887 = vmatmul.mubr.f32.gmra.mrb[0].mxu0 %v9525
      %v9888 = vpop.f32.mrb[0].mxu0
      %v9889 = vadd.f32 %v9574, %v9888
      %v9890 = vpop.f32.mrb[0].mxu0
      %9891 = vmatprep.mubr.f32.mxu0 %v9529
      %9892 = vmatmul.mubr.f32.gmra.mrb[0].mxu0 %v9528
      %v9893 = vpop.f32.mrb[0].mxu0
      %v9894 = vadd.f32 %v9574, %v9893
      %v9895 = vpop.f32.mrb[0].mxu0
      %9896 = vdwg.mxu0
      %9897 = vmatprep.subr.mxu0 0.0
      %9898 = vmatpush1.msra.mxu0 %v9564
      %9899 = vmatprep.subr.mxu0 0.0
      %9900 = vmatpush1.msra.mxu0 %v9565
      %9901 = vmatprep.subr.mxu0 0.0
      %9902 = vmatpush1.msra.mxu0 %v9566
      %9903 = vmatprep.subr.mxu0 0.0
      %9904 = vmatpush1.msra.mxu0 %v9567
      %9905 = vmatprep.subr.mxu0 0.0
      %9906 = vmatpush1.msra.mxu0 0.0
      %9907 = vmatprep.subr.mxu0 0.0
      %9908 = vmatpush1.msra.mxu0 0.0
      %9909 = vmatprep.subr.mxu0 0.0
      %9910 = vmatpush1.msra.mxu0 0.0
      %9911 = vmatprep.subr.mxu0 0.0
      %9912 = vmatpush1.msra.mxu0 0.0
      %9913 = vmatprep.subr.mxu0 0.0
      %9914 = vmatpush1.msra.mxu0 0.0
      %9915 = vmatprep.subr.mxu0 0.0
      %9916 = vmatpush1.msra.mxu0 0.0
      %9917 = vmatprep.subr.mxu0 0.0
      %9918 = vmatpush1.msra.mxu0 0.0
      %9919 = vmatprep.subr.mxu0 0.0
      %9920 = vmatpush1.msra.mxu0 0.0
      %9921 = vmatprep.subr.mxu0 0.0
      %9922 = vmatpush1.msra.mxu0 0.0
      %9923 = vmatprep.subr.mxu0 0.0
      %9924 = vmatpush1.msra.mxu0 0.0
      %9925 = vmatprep.subr.mxu0 0.0
      %9926 = vmatpush1.msra.mxu0 0.0
      %9927 = vmatprep.subr.mxu0 0.0
      %9928 = vmatpush1.msra.mxu0 0.0
      %9929 = vmatprep.subr.mxu0 0.0
      %9930 = vmatpush1.msra.mxu0 0.0
      %9931 = vmatprep.subr.mxu0 0.0
      %9932 = vmatpush1.msra.mxu0 0.0
      %9933 = vmatprep.subr.mxu0 0.0
      %9934 = vmatpush1.msra.mxu0 0.0
      %9935 = vmatprep.subr.mxu0 0.0
      %9936 = vmatpush1.msra.mxu0 0.0
      %9937 = vmatprep.subr.mxu0 0.0
      %9938 = vmatpush1.msra.mxu0 0.0
      %9939 = vmatprep.subr.mxu0 0.0
      %9940 = vmatpush1.msra.mxu0 0.0
      %9941 = vmatprep.subr.mxu0 0.0
      %9942 = vmatpush1.msra.mxu0 0.0
      %9943 = vmatprep.subr.mxu0 0.0
      %9944 = vmatpush1.msra.mxu0 0.0
      %9945 = vmatprep.subr.mxu0 0.0
      %9946 = vmatpush1.msra.mxu0 0.0
      %9947 = vmatprep.subr.mxu0 0.0
      %9948 = vmatpush1.msra.mxu0 0.0
      %9949 = vmatprep.subr.mxu0 0.0
      %9950 = vmatpush1.msra.mxu0 0.0
      %9951 = vmatprep.subr.mxu0 0.0
      %9952 = vmatpush1.msra.mxu0 0.0
      %9953 = vmatprep.subr.mxu0 0.0
      %9954 = vmatpush1.msra.mxu0 0.0
      %9955 = vmatprep.subr.mxu0 0.0
      %9956 = vmatpush1.msra.mxu0 0.0
      %9957 = vmatprep.subr.mxu0 0.0
      %9958 = vmatpush1.msra.mxu0 0.0
      %9959 = vmatprep.subr.mxu0 0.0
      %9960 = vmatpush1.msra.mxu0 0.0
      %9961 = vmatprep.mubr.f32.mxu0 0.0
      %9962 = vmatmul.mubr.f32.gmra.mrb[0].mxu0 %v9577
      %v9963 = vpop.f32.mrb[0].mxu0
      %v9964 = vadd.f32 %v9739, %v9963
      %v9965 = vpop.f32.mrb[0].mxu0
      %9966 = vmatprep.mubr.f32.mxu0 0.0
      %9967 = vmatmul.mubr.f32.gmra.mrb[0].mxu0 %v9580
      %v9968 = vpop.f32.mrb[0].mxu0
      %v9969 = vadd.f32 %v9744, %v9968
      %v9970 = vpop.f32.mrb[0].mxu0
      %9971 = vmatprep.mubr.f32.mxu0 0.0
      %9972 = vmatmul.mubr.f32.gmra.mrb[0].mxu0 %v9583
      %v9973 = vpop.f32.mrb[0].mxu0
      %v9974 = vadd.f32 %v9749, %v9973
      %v9975 = vpop.f32.mrb[0].mxu0
      %9976 = vmatprep.mubr.f32.mxu0 0.0
      %9977 = vmatmul.mubr.f32.gmra.mrb[0].mxu0 %v9586
      %v9978 = vpop.f32.mrb[0].mxu0
      %v9979 = vadd.f32 %v9754, %v9978
      %v9980 = vpop.f32.mrb[0].mxu0
      %9981 = vmatprep.mubr.f32.mxu0 0.0
      %9982 = vmatmul.mubr.f32.gmra.mrb[0].mxu0 %v9589
      %v9983 = vpop.f32.mrb[0].mxu0
      %v9984 = vadd.f32 %v9759, %v9983
      %v9985 = vpop.f32.mrb[0].mxu0
      %9986 = vmatprep.mubr.f32.mxu0 0.0
      %9987 = vmatmul.mubr.f32.gmra.mrb[0].mxu0 %v9592
      %v9988 = vpop.f32.mrb[0].mxu0
      %v9989 = vadd.f32 %v9764, %v9988
      %v9990 = vpop.f32.mrb[0].mxu0
      %9991 = vmatprep.mubr.f32.mxu0 0.0
      %9992 = vmatmul.mubr.f32.gmra.mrb[0].mxu0 %v9595
      %v9993 = vpop.f32.mrb[0].mxu0
      %v9994 = vadd.f32 %v9769, %v9993
      %v9995 = vpop.f32.mrb[0].mxu0
      %9996 = vmatprep.mubr.f32.mxu0 0.0
      %9997 = vmatmul.mubr.f32.gmra.mrb[0].mxu0 %v9598
      %v9998 = vpop.f32.mrb[0].mxu0
      %v9999 = vadd.f32 %v9774, %v9998
      %v10000 = vpop.f32.mrb[0].mxu0
      %10001 = vmatprep.mubr.f32.mxu0 0.0
      %10002 = vmatmul.mubr.f32.gmra.mrb[0].mxu0 %v9601
      %v10003 = vpop.f32.mrb[0].mxu0
      %v10004 = vadd.f32 %v9779, %v10003
      %v10005 = vpop.f32.mrb[0].mxu0
      %10006 = vmatprep.mubr.f32.mxu0 0.0
      %10007 = vmatmul.mubr.f32.gmra.mrb[0].mxu0 %v9604
      %v10008 = vpop.f32.mrb[0].mxu0
      %v10009 = vadd.f32 %v9784, %v10008
      %v10010 = vpop.f32.mrb[0].mxu0
      %10011 = vmatprep.mubr.f32.mxu0 0.0
      %10012 = vmatmul.mubr.f32.gmra.mrb[0].mxu0 %v9607
      %v10013 = vpop.f32.mrb[0].mxu0
      %v10014 = vadd.f32 %v9789, %v10013
      %v10015 = vpop.f32.mrb[0].mxu0
      %10016 = vmatprep.mubr.f32.mxu0 0.0
      %10017 = vmatmul.mubr.f32.gmra.mrb[0].mxu0 %v9610
      %v10018 = vpop.f32.mrb[0].mxu0
      %v10019 = vadd.f32 %v9794, %v10018
      %v10020 = vpop.f32.mrb[0].mxu0
      %10021 = vmatprep.mubr.f32.mxu0 0.0
      %10022 = vmatmul.mubr.f32.gmra.mrb[0].mxu0 %v9613
      %v10023 = vpop.f32.mrb[0].mxu0
      %v10024 = vadd.f32 %v9799, %v10023
      %v10025 = vpop.f32.mrb[0].mxu0
      %10026 = vmatprep.mubr.f32.mxu0 0.0
      %10027 = vmatmul.mubr.f32.gmra.mrb[0].mxu0 %v9616
      %v10028 = vpop.f32.mrb[0].mxu0
      %v10029 = vadd.f32 %v9804, %v10028
      %v10030 = vpop.f32.mrb[0].mxu0
      %10031 = vmatprep.mubr.f32.mxu0 0.0
      %10032 = vmatmul.mubr.f32.gmra.mrb[0].mxu0 %v9619
      %v10033 = vpop.f32.mrb[0].mxu0
      %v10034 = vadd.f32 %v9809, %v10033
      %v10035 = vpop.f32.mrb[0].mxu0
      %10036 = vmatprep.mubr.f32.mxu0 0.0
      %10037 = vmatmul.mubr.f32.gmra.mrb[0].mxu0 %v9622
      %v10038 = vpop.f32.mrb[0].mxu0
      %v10039 = vadd.f32 %v9814, %v10038
      %v10040 = vpop.f32.mrb[0].mxu0
      %10041 = vmatprep.mubr.f32.mxu0 0.0
      %10042 = vmatmul.mubr.f32.gmra.mrb[0].mxu0 %v9625
      %v10043 = vpop.f32.mrb[0].mxu0
      %v10044 = vadd.f32 %v9819, %v10043
      %v10045 = vpop.f32.mrb[0].mxu0
      %10046 = vmatprep.mubr.f32.mxu0 0.0
      %10047 = vmatmul.mubr.f32.gmra.mrb[0].mxu0 %v9628
      %v10048 = vpop.f32.mrb[0].mxu0
      %v10049 = vadd.f32 %v9824, %v10048
      %v10050 = vpop.f32.mrb[0].mxu0
      %10051 = vmatprep.mubr.f32.mxu0 0.0
      %10052 = vmatmul.mubr.f32.gmra.mrb[0].mxu0 %v9631
      %v10053 = vpop.f32.mrb[0].mxu0
      %v10054 = vadd.f32 %v9829, %v10053
      %v10055 = vpop.f32.mrb[0].mxu0
      %10056 = vmatprep.mubr.f32.mxu0 0.0
      %10057 = vmatmul.mubr.f32.gmra.mrb[0].mxu0 %v9634
      %v10058 = vpop.f32.mrb[0].mxu0
      %v10059 = vadd.f32 %v9834, %v10058
      %v10060 = vpop.f32.mrb[0].mxu0
      %10061 = vmatprep.mubr.f32.mxu0 0.0
      %10062 = vmatmul.mubr.f32.gmra.mrb[0].mxu0 %v9637
      %v10063 = vpop.f32.mrb[0].mxu0
      %v10064 = vadd.f32 %v9839, %v10063
      %v10065 = vpop.f32.mrb[0].mxu0
      %10066 = vmatprep.mubr.f32.mxu0 0.0
      %10067 = vmatmul.mubr.f32.gmra.mrb[0].mxu0 %v9640
      %v10068 = vpop.f32.mrb[0].mxu0
      %v10069 = vadd.f32 %v9844, %v10068
      %v10070 = vpop.f32.mrb[0].mxu0
      %10071 = vmatprep.mubr.f32.mxu0 0.0
      %10072 = vmatmul.mubr.f32.gmra.mrb[0].mxu0 %v9643
      %v10073 = vpop.f32.mrb[0].mxu0
      %v10074 = vadd.f32 %v9849, %v10073
      %v10075 = vpop.f32.mrb[0].mxu0
      %10076 = vmatprep.mubr.f32.mxu0 0.0
      %10077 = vmatmul.mubr.f32.gmra.mrb[0].mxu0 %v9646
      %v10078 = vpop.f32.mrb[0].mxu0
      %v10079 = vadd.f32 %v9854, %v10078
      %v10080 = vpop.f32.mrb[0].mxu0
      %10081 = vmatprep.mubr.f32.mxu0 0.0
      %10082 = vmatmul.mubr.f32.gmra.mrb[0].mxu0 %v9649
      %v10083 = vpop.f32.mrb[0].mxu0
      %v10084 = vadd.f32 %v9859, %v10083
      %v10085 = vpop.f32.mrb[0].mxu0
      %10086 = vmatprep.mubr.f32.mxu0 0.0
      %10087 = vmatmul.mubr.f32.gmra.mrb[0].mxu0 %v9652
      %v10088 = vpop.f32.mrb[0].mxu0
      %v10089 = vadd.f32 %v9864, %v10088
      %v10090 = vpop.f32.mrb[0].mxu0
      %10091 = vmatprep.mubr.f32.mxu0 0.0
      %10092 = vmatmul.mubr.f32.gmra.mrb[0].mxu0 %v9655
      %v10093 = vpop.f32.mrb[0].mxu0
      %v10094 = vadd.f32 %v9869, %v10093
      %v10095 = vpop.f32.mrb[0].mxu0
      %10096 = vmatprep.mubr.f32.mxu0 0.0
      %10097 = vmatmul.mubr.f32.gmra.mrb[0].mxu0 %v9658
      %v10098 = vpop.f32.mrb[0].mxu0
      %v10099 = vadd.f32 %v9874, %v10098
      %v10100 = vpop.f32.mrb[0].mxu0
      %10101 = vmatprep.mubr.f32.mxu0 0.0
      %10102 = vmatmul.mubr.f32.gmra.mrb[0].mxu0 %v9661
      %v10103 = vpop.f32.mrb[0].mxu0
      %v10104 = vadd.f32 %v9879, %v10103
      %v10105 = vpop.f32.mrb[0].mxu0
      %10106 = vmatprep.mubr.f32.mxu0 0.0
      %10107 = vmatmul.mubr.f32.gmra.mrb[0].mxu0 %v9664
      %v10108 = vpop.f32.mrb[0].mxu0
      %v10109 = vadd.f32 %v9884, %v10108
      %v10110 = vpop.f32.mrb[0].mxu0
      %10111 = vmatprep.mubr.f32.mxu0 0.0
      %10112 = vmatmul.mubr.f32.gmra.mrb[0].mxu0 %v9667
      %v10113 = vpop.f32.mrb[0].mxu0
      %v10114 = vadd.f32 %v9889, %v10113
      %v10115 = vpop.f32.mrb[0].mxu0
      %10116 = vmatprep.mubr.f32.mxu0 0.0
      %10117 = vmatmul.mubr.f32.gmra.mrb[0].mxu0 %v9670
      %v10118 = vpop.f32.mrb[0].mxu0
      %v10119 = vadd.f32 %v9894, %v10118
      %v10120 = vpop.f32.mrb[0].mxu0
      %10121 = vdwg.mxu0
      %v10122 = vsub.f32 %v281, %v9964
      %v10123 = vsub.f32 %v282, %v9969
      %v10124 = vsub.f32 %v283, %v9974
      %v10125 = vsub.f32 %v284, %v9979
      %v10126 = vsub.f32 %v285, %v9984
      %v10127 = vsub.f32 %v286, %v9989
      %v10128 = vsub.f32 %v287, %v9994
      %v10129 = vsub.f32 %v288, %v9999
      %v10130 = vsub.f32 %v289, %v10004
      %v10131 = vsub.f32 %v290, %v10009
      %v10132 = vsub.f32 %v291, %v10014
      %v10133 = vsub.f32 %v292, %v10019
      %v10134 = vsub.f32 %v293, %v10024
      %v10135 = vsub.f32 %v294, %v10029
      %v10136 = vsub.f32 %v295, %v10034
      %v10137 = vsub.f32 %v296, %v10039
      %v10138 = vsub.f32 %v297, %v10044
      %v10139 = vsub.f32 %v298, %v10049
      %v10140 = vsub.f32 %v299, %v10054
      %v10141 = vsub.f32 %v300, %v10059
      %v10142 = vsub.f32 %v301, %v10064
      %v10143 = vsub.f32 %v302, %v10069
      %v10144 = vsub.f32 %v303, %v10074
      %v10145 = vsub.f32 %v304, %v10079
      %v10146 = vsub.f32 %v305, %v10084
      %v10147 = vsub.f32 %v306, %v10089
      %v10148 = vsub.f32 %v307, %v10094
      %v10149 = vsub.f32 %v308, %v10099
      %v10150 = vsub.f32 %v309, %v10104
      %v10151 = vsub.f32 %v310, %v10109
      %v10152 = vsub.f32 %v311, %v10114
      %v10153 = vsub.f32 %v312, %v10119
      %10154 = vst.msk [vmem:[%s170] sm:$0xff] %vm314, %v10122
      %10155 = vst.msk [vmem:[%s170 + $0x8] sm:$0xff] %vm314, %v10123
      %10156 = vst.msk [vmem:[%s170 + $0x10] sm:$0xff] %vm314, %v10124
      %10157 = vst.msk [vmem:[%s170 + $0x18] sm:$0xff] %vm314, %v10125
      %10158 = vst.msk [vmem:[%s170 + $0x20] sm:$0xff] %vm314, %v10126
      %10159 = vst.msk [vmem:[%s170 + $0x28] sm:$0xff] %vm314, %v10127
      %10160 = vst.msk [vmem:[%s170 + $0x30] sm:$0xff] %vm314, %v10128
      %10161 = vst.msk [vmem:[%s170 + $0x38] sm:$0xff] %vm314, %v10129
      %10162 = vst.msk [vmem:[%s170 + $0x40] sm:$0xff] %vm314, %v10130
      %10163 = vst.msk [vmem:[%s170 + $0x48] sm:$0xff] %vm314, %v10131
      %10164 = vst.msk [vmem:[%s170 + $0x50] sm:$0xff] %vm314, %v10132
      %10165 = vst.msk [vmem:[%s170 + $0x58] sm:$0xff] %vm314, %v10133
      %10166 = vst.msk [vmem:[%s170 + $0x60] sm:$0xff] %vm314, %v10134
      %10167 = vst.msk [vmem:[%s170 + $0x68] sm:$0xff] %vm314, %v10135
      %10168 = vst.msk [vmem:[%s170 + $0x70] sm:$0xff] %vm314, %v10136
      %10169 = vst.msk [vmem:[%s170 + $0x78] sm:$0xff] %vm314, %v10137
      %10170 = vst.msk [vmem:[%s170 + $0x80] sm:$0xff] %vm314, %v10138
      %10171 = vst.msk [vmem:[%s170 + $0x88] sm:$0xff] %vm314, %v10139
      %10172 = vst.msk [vmem:[%s170 + $0x90] sm:$0xff] %vm314, %v10140
      %10173 = vst.msk [vmem:[%s170 + $0x98] sm:$0xff] %vm314, %v10141
      %10174 = vst.msk [vmem:[%s170 + $0xa0] sm:$0xff] %vm314, %v10142
      %10175 = vst.msk [vmem:[%s170 + $0xa8] sm:$0xff] %vm314, %v10143
      %10176 = vst.msk [vmem:[%s170 + $0xb0] sm:$0xff] %vm314, %v10144
      %10177 = vst.msk [vmem:[%s170 + $0xb8] sm:$0xff] %vm314, %v10145
      %10178 = vst.msk [vmem:[%s170 + $0xc0] sm:$0xff] %vm314, %v10146
      %10179 = vst.msk [vmem:[%s170 + $0xc8] sm:$0xff] %vm314, %v10147
      %10180 = vst.msk [vmem:[%s170 + $0xd0] sm:$0xff] %vm314, %v10148
      %10181 = vst.msk [vmem:[%s170 + $0xd8] sm:$0xff] %vm314, %v10149
      %10182 = vst.msk [vmem:[%s170 + $0xe0] sm:$0xff] %vm314, %v10150
      %10183 = vst.msk [vmem:[%s170 + $0xe8] sm:$0xff] %vm314, %v10151
      %10184 = vst.msk [vmem:[%s170 + $0xf0] sm:$0xff] %vm314, %v10152
      %10185 = vst.msk [vmem:[%s170 + $0xf8] sm:$0xff] %vm314, %v10153
      %p10186 = scmp.lt.s32.totalorder %s14, 1
      %s10187 = scalar_select %p10186, %s14, 1
      %s10188 = smul.addr %s10187, 32
      %s10189 = smul.addr %s10188, 8
      %s10190 = scalar_lea.vmem %s3, %s10189
      // Predicated region
      $region33: #{tpu_custom_call.1} parent=31 // pred_check
        %p10191 = pneg %p100
      $region34: #{tpu_custom_call.1} parent=31 // pred_check_branch
        %10193 = sbr.rel (%p10191) target = $region36
      $region35: #{tpu_custom_call.1} parent=31 // pred_region
        _
      $region36: #{tpu_custom_call.1} parent=31 // pred_fallthru
        _
    $region32: #{tpu_custom_call.1} parent=5 // pred_fallthru
      _
    %p10194 = scmp.le.s32.totalorder 2, %s9
    // Predicated region
    $region37: #{tpu_custom_call.1} parent=5 // pred_check
      %p10195 = pneg %p10194
    $region38: #{tpu_custom_call.1} parent=5 // pred_check_branch
      %10197 = sbr.rel (%p10195) target = $region40
    $region39: #{tpu_custom_call.1} parent=5 // pred_region
      %s10198 = ssub.s32 %s9, 2
      // Predicated region
      $region41: #{tpu_custom_call.1} parent=39 // pred_check
        %p10199 = pneg %p106
      $region42: #{tpu_custom_call.1} parent=39 // pred_check_branch
        %10201 = sbr.rel (%p10199) target = $region44
      $region43: #{tpu_custom_call.1} parent=39 // pred_region
        %p10202 = scmp.lt.s32.totalorder %s15, 1
        %s10203 = scalar_select %p10202, %s15, 1
        %s10204 = smul.addr %s10203, 32
        %s10205 = smul.addr %s10204, 8
        %s10206 = scalar_lea.vmem %s3, %s10205
      $region44: #{tpu_custom_call.1} parent=39 // pred_fallthru
        _
    $region40: #{tpu_custom_call.1} parent=5 // pred_fallthru
      _
  $region6: #{tpu_custom_call.1} parent=0 // loop_footer
    %s13 = sadd.s32 1, %s9
  $region7: #{tpu_custom_call.1} parent=0 // loop_footer_branch
    %8 = sbr.rel target = $region3
  $region8: #{tpu_custom_call.1} parent=0 // loop_exit
    _

</llo_original>
